<compile_context>
chip_gen: v7x
topology: tpu7x:2x2x1
jax: 0.10.0
libtpu: 0.0.40
codegen_flags: <defaults>
</compile_context>

<pallas_src>
import math

import jax
import jax.numpy as jnp
from jax import lax
from jax.experimental import pallas as pl
from jax.experimental.pallas import tpu as pltpu


# ----------------------------------------------------------------------------
# Pallas kernel
# ----------------------------------------------------------------------------
def _make_kernel(*, n_heads: int, d_head: int, num_groups: int, tq: int):
    inv_sqrt2 = 1.0 / math.sqrt(2.0)
    bf16 = jnp.bfloat16
    f32 = jnp.float32
    Hdh = n_heads * d_head

    def layernorm(z, w, b):                       # eps = 1e-5 (PyTorch default)
        mu = jnp.mean(z, axis=-1, keepdims=True)
        d = z - mu
        va = jnp.mean(d * d, axis=-1, keepdims=True)
        return d * lax.rsqrt(va + 1e-5) * w + b

    def kernel(x_ref,                  # (Bt, S, C)  input tokens (f32)
               gmap_ref,               # (C, G)      one-hot channel->group map
               gn_w, gn_b,             # (1, C)      GroupNorm affine (f32)
               w_in, b_in,             # (C, C) bf16, (1, C) f32    proj_in
               ln1w, ln1b,             # (1, C)      LayerNorm (attn), this layer
               wqkv,                   # (C, 3*Hdh) bf16; Q scale folded in
               wo,                     # (Hdh, C)   bf16 fused output projection
               bo,                     # (1, C)     f32
               ln3w, ln3b,             # (1, C)      LayerNorm (FF), this layer
               wffa, bffa,             # (C, dff) bf16, (1, dff) f32  GeGLU value
               wffg, bffg,             # (C, dff) bf16, (1, dff) f32  GeGLU gate
               wff2, bff2,             # (dff, C) bf16, (1, C) f32    FF out proj
               w_out, b_out,           # (C, C) bf16, (1, C) f32      proj_out
               o_ref,                  # (Bt, S, C)  output tokens (f32)
               h_scr):                 # (Bt, S, C) f32  persistent token state
        l = pl.program_id(1)
        Bt, S, C = h_scr.shape

        # ---- l == 0 prologue: GroupNorm(eps=1e-6) + proj_in (1x1 conv) ------
        @pl.when(l == 0)
        def _():
            gmap = gmap_ref[...]                                     # (C, G)
            cnt = float(S * (C // num_groups))
            w_in_b = w_in[...]
            for bi in range(Bt):
                x_in = x_ref[bi].astype(f32)                         # (S, C)
                # two-pass group stats via lane-friendly (C,G) one-hot matmuls
                s1 = jnp.sum(x_in, axis=0, keepdims=True)            # (1, C)
                gmean = jnp.dot(s1, gmap, preferred_element_type=f32) / cnt
                mean_c = lax.dot_general(gmean, gmap, (((1,), (1,)), ((), ())),
                                         preferred_element_type=f32)
                xc = x_in - mean_c
                s2 = jnp.sum(xc * xc, axis=0, keepdims=True)
                gvar = jnp.dot(s2, gmap, preferred_element_type=f32) / cnt
                var_c = lax.dot_general(gvar, gmap, (((1,), (1,)), ((), ())),
                                        preferred_element_type=f32)
                h0 = xc * lax.rsqrt(var_c + 1e-6) * gn_w[...] + gn_b[...]
                h0 = jnp.dot(h0.astype(bf16), w_in_b,
                             preferred_element_type=f32) + b_in[...]
                h_scr[bi] = h0

        wqkv_b = wqkv[...]
        wo_b = wo[...]
        wffa_b = wffa[...]
        wffg_b = wffg[...]
        wff2_b = wff2[...]
        bo_b = bo[...]

        for bi in range(Bt):
            h = h_scr[bi]                                            # (S, C) f32

            # ---- self-attention: fused QKV projection, per-head core -------
            hn_b = layernorm(h, ln1w[...], ln1b[...]).astype(bf16)
            qkv = jnp.dot(hn_b, wqkv_b,
                          preferred_element_type=f32)                # (S, 3*Hdh)
            k_heads = [qkv[:, Hdh + hh * d_head: Hdh + (hh + 1) * d_head]
                       .astype(bf16) for hh in range(n_heads)]
            v_heads = [qkv[:, 2 * Hdh + hh * d_head: 2 * Hdh + (hh + 1) * d_head]
                       .astype(bf16) for hh in range(n_heads)]

            for q0 in range(0, S, tq):            # bound live score tile (tq,S)
                q1 = min(q0 + tq, S)
                parts = []
                for hh in range(n_heads):
                    qh = qkv[q0:q1, hh * d_head:(hh + 1) * d_head].astype(bf16)
                    att = lax.dot_general(qh, k_heads[hh],
                                          (((1,), (1,)), ((), ())),
                                          preferred_element_type=f32)  # (tq, S)
                    att = att - jnp.max(att, axis=-1, keepdims=True)
                    p = jnp.exp(att)
                    p = p * pl.reciprocal(jnp.sum(p, axis=-1, keepdims=True),
                                          approx=True)
                    parts.append(jnp.dot(p.astype(bf16), v_heads[hh],
                                         preferred_element_type=f32)
                                 .astype(bf16))                       # (tq, dh)
                head_cat = (jnp.concatenate(parts, axis=-1)
                            if n_heads > 1 else parts[0])             # (tq, Hdh)
                chunk = jnp.dot(head_cat, wo_b,
                                preferred_element_type=f32)           # (tq, C)
                new_rows = h[q0:q1] + chunk + bo_b
                if q0 == 0 and q1 == S:
                    h_scr[bi] = new_rows
                else:
                    h_scr[bi, pl.ds(q0, q1 - q0), :] = new_rows

            h = h_scr[bi]

            # ---- GeGLU feed-forward -----------------------------------------
            hn_b = layernorm(h, ln3w[...], ln3b[...]).astype(bf16)
            a = jnp.dot(hn_b, wffa_b, preferred_element_type=f32) + bffa[...]
            g = jnp.dot(hn_b, wffg_b, preferred_element_type=f32) + bffg[...]
            g = g * 0.5 * (1.0 + lax.erf(g * inv_sqrt2))   # exact GELU (F.gelu)
            ff = jnp.dot((a * g).astype(bf16), wff2_b,
                         preferred_element_type=f32) + bff2[...]
            h_scr[bi] = h + ff

        # ---- l == last epilogue: proj_out (1x1 conv) + residual -------------
        @pl.when(l == pl.num_programs(1) - 1)
        def _():
            w_out_b = w_out[...]
            for bi in range(Bt):
                out = jnp.dot(h_scr[bi].astype(bf16), w_out_b,
                              preferred_element_type=f32) + b_out[...]
                o_ref[bi] = (out + x_ref[bi].astype(f32)).astype(o_ref.dtype)

    return kernel


# ----------------------------------------------------------------------------
# Wrapper helpers
# ----------------------------------------------------------------------------
def _pick_tq(S):
    # cap the live (tq, S) score tile; ragged tail handled with static slices
    return S if S <= 512 else 512


def _pick_bt(B, S, C):
    # amortize layer-weight streaming across batch, bounded by a token budget
    budget = 8 * 1024 * 1024
    per_b = 5 * S * C * 4          # h_scr + double-buffered x/out token blocks
    bt_max = max(1, budget // max(per_b, 1))
    bt = 1
    for cand in range(1, B + 1):
        if B % cand == 0 and cand <= bt_max:
            bt = cand
    return bt


def _vmem_limit_bytes(S, C, dff, n_heads, d_head, tq, Bt):
    f32b, bfb = 4, 2
    Hdh = n_heads * d_head
    pad = max(1, 128 // d_head)                 # lane padding of dh-minor buffers
    acts = (Bt * S * C * f32b                   # h_scr
            + 2 * S * C * f32b + S * C * bfb    # working h / hn / hn_b
            + S * 3 * Hdh * f32b                # fused qkv
            + 2 * n_heads * S * d_head * pad * bfb   # per-head k/v slices
            + 2 * tq * S * f32b                 # score + prob tile
            + tq * (Hdh * bfb + C * f32b)       # head_cat + projected chunk
            + 3 * S * dff * f32b)               # GeGLU value / gate / product
    per_layer_w = ((3 * C * Hdh + Hdh * C + 3 * C * dff) * bfb
                   + (6 * C + 2 * dff) * f32b)
    fixed_w = 2 * C * C * bfb + 8 * C * f32b + C * 16 * f32b
    io_blocks = 2 * 2 * Bt * S * C * f32b       # double-buffered x + out blocks
    est = int(1.4 * (acts + 2 * per_layer_w + fixed_w + io_blocks))
    try:
        phys = int(pltpu.get_tpu_info().vmem_capacity_bytes)
    except Exception:
        phys = 64 * 1024 * 1024                 # v7x floor if query unavailable
    cap = (phys * 3) // 4                       # headroom for Pallas's own buffers
    return max(min(32 * 1024 * 1024, cap), min(est, cap))


def _prep_params(params, *, C, n_heads, d_head, num_groups):
    """Restructure module-layout params into kernel layout: bf16 weights,
    fused lane-dense QKV (scale folded into Q), fused output projection,
    GeGLU pre-split into value/gate halves."""
    (gn_w, gn_b, w_in, b_in, ln1w, ln1b, wq, wk, wv, wo, bo,
     ln3w, ln3b, wff1, bff1, wff2, bff2, w_out, b_out) = params
    bf = jnp.bfloat16
    f32 = jnp.float32
    scale = d_head ** -0.5
    G = num_groups
    gs = C // G

    # one-hot channel -> group map for GroupNorm statistics (hoisted from kernel)
    gmap = (jnp.arange(C)[:, None] // gs == jnp.arange(G)[None, :]).astype(f32)

    # fused, lane-dense QKV weight (L, C, 3*Hdh); no dh-minor lane padding
    wqkv = jnp.concatenate([wq.astype(f32) * scale, wk.astype(f32),
                            wv.astype(f32)], axis=-1).astype(bf)
    wo_f = wo.astype(bf)                                   # (L, Hdh, C)

    dff = wff2.shape[1]
    wffa = wff1[:, :, :dff].astype(bf)
    wffg = wff1[:, :, dff:].astype(bf)
    bffa = bff1[:, :, :dff].astype(f32)
    bffg = bff1[:, :, dff:].astype(f32)

    return (gmap,
            gn_w.astype(f32), gn_b.astype(f32),
            w_in.astype(bf), b_in.astype(f32),
            ln1w.astype(f32), ln1b.astype(f32),
            wqkv, wo_f, bo.astype(f32),
            ln3w.astype(f32), ln3b.astype(f32),
            wffa, bffa, wffg, bffg,
            wff2.astype(bf), bff2.astype(f32),
            w_out.astype(bf), b_out.astype(f32))


# ----------------------------------------------------------------------------
# Wrapper (layout glue + pallas_call)
# ----------------------------------------------------------------------------
def spatial_transformer(x_nchw, params, *, n_heads, n_layers,
                        num_groups=16, d_head=32):
    B, C, H, W = x_nchw.shape
    S = H * W
    Hdh = n_heads * d_head
    # NCHW -> (B, S, C)
    x = jnp.transpose(x_nchw, (0, 2, 3, 1)).reshape(B, S, C).astype(jnp.float32)

    ops = _prep_params(params, C=C, n_heads=n_heads, d_head=d_head,
                       num_groups=num_groups)
    dff = ops[12].shape[-1]                      # wffa is (L, C, dff)
    tq = _pick_tq(S)
    Bt = _pick_bt(B, S, C)
    kernel = _make_kernel(n_heads=n_heads, d_head=d_head,
                          num_groups=num_groups, tq=tq)
    G = num_groups

    def _const(shape):
        zeros = (0,) * len(shape)
        return pl.BlockSpec(shape, lambda b, l: zeros)       # grid-invariant param

    def _layer(tail):
        zeros = (0,) * len(tail)
        return pl.BlockSpec((None,) + tail,                  # stream one layer/step
                            lambda b, l: (l,) + zeros)

    in_specs = [
        pl.BlockSpec((Bt, S, C), lambda b, l: (b, 0, 0)),     # x (batch block)
        _const((C, G)),                                       # gmap
        _const((1, C)), _const((1, C)),                       # gn_w, gn_b
        _const((C, C)), _const((1, C)),                       # w_in, b_in
        _layer((1, C)), _layer((1, C)),                       # ln1w, ln1b
        _layer((C, 3 * Hdh)),                                 # wqkv (fused)
        _layer((Hdh, C)),                                     # wo   (fused)
        _layer((1, C)),                                       # bo
        _layer((1, C)), _layer((1, C)),                       # ln3w, ln3b
        _layer((C, dff)), _layer((1, dff)),                   # wffa, bffa
        _layer((C, dff)), _layer((1, dff)),                   # wffg, bffg
        _layer((dff, C)), _layer((1, C)),                     # wff2, bff2
        _const((C, C)), _const((1, C)),                       # w_out, b_out
    ]

    out = pl.pallas_call(
        kernel,
        out_shape=jax.ShapeDtypeStruct((B, S, C), jnp.float32),
        grid=(B // Bt, n_layers),
        in_specs=in_specs,
        out_specs=pl.BlockSpec((Bt, S, C), lambda b, l: (b, 0, 0)),
        scratch_shapes=[pltpu.VMEM((Bt, S, C), jnp.float32)],  # persistent state
        compiler_params=pltpu.CompilerParams(
            dimension_semantics=("parallel", "arbitrary"),
            vmem_limit_bytes=_vmem_limit_bytes(S, C, dff, n_heads, d_head,
                                               tq, Bt)),
    )(x, *ops)

    # (B, S, C) -> NCHW
    return jnp.transpose(out.reshape(B, H, W, C), (0, 3, 1, 2))


# ----------------------------------------------------------------------------
# Deterministic parameter init (module layout; linear/conv weights stored
# pre-transposed so the math is x @ W).
# ----------------------------------------------------------------------------
def init_params(key, C, n_heads, n_layers, d_head=32):
    Da = n_heads * d_head
    dff = 4 * C
    keys = iter(jax.random.split(key, 64))

    def rn(shape, s):
        return s * jax.random.normal(next(keys), shape, jnp.float32)

    params = [
        1.0 + 0.1 * rn((1, C), 1.0),            # GroupNorm weight
        rn((1, C), 0.1),                        # GroupNorm bias
        rn((C, C), 0.05),                       # proj_in  W^T
        rn((1, C), 0.05),                       # proj_in  bias
        1.0 + 0.1 * rn((n_layers, 1, C), 1.0),  # norm1 weight
        rn((n_layers, 1, C), 0.1),              # norm1 bias
        rn((n_layers, C, Da), 0.05),            # to_q W^T
        rn((n_layers, C, Da), 0.05),            # to_k W^T
        rn((n_layers, C, Da), 0.05),            # to_v W^T
        rn((n_layers, Da, C), 0.05),            # to_out W^T
        rn((n_layers, 1, C), 0.05),             # to_out bias
        1.0 + 0.1 * rn((n_layers, 1, C), 1.0),  # norm3 weight
        rn((n_layers, 1, C), 0.1),              # norm3 bias
        rn((n_layers, C, 2 * dff), 0.05),       # GeGLU proj W^T
        rn((n_layers, 1, 2 * dff), 0.05),       # GeGLU proj bias
        rn((n_layers, dff, C), 0.05),           # FF out W^T
        rn((n_layers, 1, C), 0.05),             # FF out bias
        rn((C, C), 0.05),                       # proj_out W^T
        rn((1, C), 0.05),                       # proj_out bias
    ]
    return params


# ----------------------------------------------------------------------------
# Pure-JAX reference (mirrors the PyTorch forward) for correctness checking.
# ----------------------------------------------------------------------------
def ref_forward(x_nchw, params, *, n_heads, n_layers, num_groups=16, d_head=32):
    (gn_w, gn_b, w_in, b_in, ln1w, ln1b, wq, wk, wv, wo, bo,
     ln3w, ln3b, wff1, bff1, wff2, bff2, w_out, b_out) = params
    B, C, H, W = x_nchw.shape
    S = H * W
    x = jnp.transpose(x_nchw, (0, 2, 3, 1)).reshape(B, S, C).astype(jnp.float32)
    x_in = x
    gs = C // num_groups
    xg = x.reshape(B, S, num_groups, gs)
    m = xg.mean(axis=(1, 3), keepdims=True)
    v = ((xg - m) ** 2).mean(axis=(1, 3), keepdims=True)
    h = ((xg - m) / jnp.sqrt(v + 1e-6)).reshape(B, S, C)
    h = h * gn_w.reshape(C) + gn_b.reshape(C)
    h = h @ w_in + b_in.reshape(C)

    def ln(z, w_, b_):
        mu = z.mean(-1, keepdims=True)
        va = ((z - mu) ** 2).mean(-1, keepdims=True)
        return (z - mu) / jnp.sqrt(va + 1e-5) * w_.reshape(-1) + b_.reshape(-1)

    scale = d_head ** -0.5
    for l in range(n_layers):
        hn = ln(h, ln1w[l], ln1b[l])
        q = (hn @ wq[l]).reshape(B, S, n_heads, d_head)
        k = (hn @ wk[l]).reshape(B, S, n_heads, d_head)
        vv = (hn @ wv[l]).reshape(B, S, n_heads, d_head)
        att = jnp.einsum('bihd,bjhd->bhij', q, k) * scale
        att = jax.nn.softmax(att, axis=-1)
        out = jnp.einsum('bhij,bjhd->bihd', att, vv).reshape(B, S, -1)
        h = out @ wo[l] + bo[l].reshape(-1) + h
        hn = ln(h, ln3w[l], ln3b[l])
        proj = hn @ wff1[l] + bff1[l].reshape(-1)
        dff = proj.shape[-1] // 2
        a, gate = proj[..., :dff], proj[..., dff:]
        ff = a * (gate * 0.5 * (1.0 + jax.lax.erf(gate / math.sqrt(2.0))))
        h = ff @ wff2[l] + bff2[l].reshape(-1) + h
    h = h @ w_out + b_out.reshape(C)
    h = h + x_in
    return jnp.transpose(h.reshape(B, H, W, C), (0, 3, 1, 2))


if __name__ == "__main__":
    # Small shapes consistent with the UNET bottom block (n_head=4, d_head=32,
    # channels a multiple of 16 for GroupNorm; C=128 keeps outputs lane-dense).
    B, C, H, W = 2, 128, 8, 8
    n_heads, n_layers = 4, 2

    key = jax.random.PRNGKey(0)
    kx, kp = jax.random.split(key)
    x = jax.random.normal(kx, (B, C, H, W), jnp.float32)
    params = init_params(kp, C, n_heads, n_layers)

    out = spatial_transformer(x, params, n_heads=n_heads, n_layers=n_layers)
    out = jax.block_until_ready(out)

    ref = ref_forward(x, params, n_heads=n_heads, n_layers=n_layers)
    assert out.shape == x.shape
    assert bool(jnp.all(jnp.isfinite(out)))
    max_err = float(jnp.max(jnp.abs(out - ref)))
    ref_scale = float(jnp.max(jnp.abs(ref)))
    # bf16 MXU operands introduce ~1e-2-scale differences vs the f32 reference.
    assert max_err < 2.5e-2 * max(ref_scale, 1.0), \
        f"mismatch vs reference: max_err={max_err}, ref_scale={ref_scale}"
    print("KERNEL_OK")
</pallas_src>

<mosaic_0001>
module attributes {stable_mosaic.version = 11 : i64} {
  func.func @kernel(%arg0: i32, %arg1: i32, %arg2: memref<2x64x128xf32, #tpu.memory_space<vmem>>, %arg3: memref<128x16xf32, #tpu.memory_space<vmem>>, %arg4: memref<1x128xf32, #tpu.memory_space<vmem>>, %arg5: memref<1x128xf32, #tpu.memory_space<vmem>>, %arg6: memref<128x128xbf16, #tpu.memory_space<vmem>>, %arg7: memref<1x128xf32, #tpu.memory_space<vmem>>, %arg8: memref<1x1x128xf32, #tpu.memory_space<vmem>>, %arg9: memref<1x1x128xf32, #tpu.memory_space<vmem>>, %arg10: memref<1x128x384xbf16, #tpu.memory_space<vmem>>, %arg11: memref<1x128x128xbf16, #tpu.memory_space<vmem>>, %arg12: memref<1x1x128xf32, #tpu.memory_space<vmem>>, %arg13: memref<1x1x128xf32, #tpu.memory_space<vmem>>, %arg14: memref<1x1x128xf32, #tpu.memory_space<vmem>>, %arg15: memref<1x128x512xbf16, #tpu.memory_space<vmem>>, %arg16: memref<1x1x512xf32, #tpu.memory_space<vmem>>, %arg17: memref<1x128x512xbf16, #tpu.memory_space<vmem>>, %arg18: memref<1x1x512xf32, #tpu.memory_space<vmem>>, %arg19: memref<1x512x128xbf16, #tpu.memory_space<vmem>>, %arg20: memref<1x1x128xf32, #tpu.memory_space<vmem>>, %arg21: memref<128x128xbf16, #tpu.memory_space<vmem>>, %arg22: memref<1x128xf32, #tpu.memory_space<vmem>>, %arg23: memref<2x64x128xf32, #tpu.memory_space<vmem>>, %arg24: memref<2x64x128xf32, #tpu.memory_space<vmem>>) attributes {dimension_semantics = [#tpu.dimension_semantics<parallel>, #tpu.dimension_semantics<arbitrary>], iteration_bounds = array<i64: 1, 2>, scalar_prefetch = 0 : i64, scratch_operands = 1 : i64, tpu.core_type = #tpu.core_type<tc>, window_params = [{transform_indices = @transform_0, window_bounds = array<i64: 2, 64, 128>}, {pipeline_mode = #tpu.pipeline_mode<synchronous>, transform_indices = @transform_1, window_bounds = array<i64: 128, 16>}, {pipeline_mode = #tpu.pipeline_mode<synchronous>, transform_indices = @transform_2, window_bounds = array<i64: 1, 128>}, {pipeline_mode = #tpu.pipeline_mode<synchronous>, transform_indices = @transform_3, window_bounds = array<i64: 1, 128>}, {pipeline_mode = #tpu.pipeline_mode<synchronous>, transform_indices = @transform_4, window_bounds = array<i64: 128, 128>}, {pipeline_mode = #tpu.pipeline_mode<synchronous>, transform_indices = @transform_5, window_bounds = array<i64: 1, 128>}, {transform_indices = @transform_6, window_bounds = array<i64: 1, 1, 128>}, {transform_indices = @transform_7, window_bounds = array<i64: 1, 1, 128>}, {transform_indices = @transform_8, window_bounds = array<i64: 1, 128, 384>}, {transform_indices = @transform_9, window_bounds = array<i64: 1, 128, 128>}, {transform_indices = @transform_10, window_bounds = array<i64: 1, 1, 128>}, {transform_indices = @transform_11, window_bounds = array<i64: 1, 1, 128>}, {transform_indices = @transform_12, window_bounds = array<i64: 1, 1, 128>}, {transform_indices = @transform_13, window_bounds = array<i64: 1, 128, 512>}, {transform_indices = @transform_14, window_bounds = array<i64: 1, 1, 512>}, {transform_indices = @transform_15, window_bounds = array<i64: 1, 128, 512>}, {transform_indices = @transform_16, window_bounds = array<i64: 1, 1, 512>}, {transform_indices = @transform_17, window_bounds = array<i64: 1, 512, 128>}, {transform_indices = @transform_18, window_bounds = array<i64: 1, 1, 128>}, {pipeline_mode = #tpu.pipeline_mode<synchronous>, transform_indices = @transform_19, window_bounds = array<i64: 128, 128>}, {pipeline_mode = #tpu.pipeline_mode<synchronous>, transform_indices = @transform_20, window_bounds = array<i64: 1, 128>}, {transform_indices = @transform_21, window_bounds = array<i64: 2, 64, 128>}]} {
    %c0_i32 = arith.constant 0 : i32
    %0 = arith.cmpi eq, %arg1, %c0_i32 : i32
    %1 = arith.extui %0 : i1 to i32
    %c0_i32_0 = arith.constant 0 : i32
    %2 = arith.cmpi ne, %1, %c0_i32_0 : i32
    scf.if %2 {
      %c0_151 = arith.constant 0 : index
      %c0_152 = arith.constant 0 : index
      %362 = vector.load %arg3[%c0_151, %c0_152] : memref<128x16xf32, #tpu.memory_space<vmem>>, vector<128x16xf32>
      %c0_153 = arith.constant 0 : index
      %c0_154 = arith.constant 0 : index
      %363 = vector.load %arg6[%c0_153, %c0_154] : memref<128x128xbf16, #tpu.memory_space<vmem>>, vector<128x128xbf16>
      %c0_155 = arith.constant 0 : index
      %c0_156 = arith.constant 0 : index
      %c0_157 = arith.constant 0 : index
      %364 = vector.load %arg2[%c0_155, %c0_156, %c0_157] : memref<2x64x128xf32, #tpu.memory_space<vmem>>, vector<1x64x128xf32>
      %365 = vector.shape_cast %364 : vector<1x64x128xf32> to vector<64x128xf32>
      %cst_158 = arith.constant dense<0.000000e+00> : vector<128xf32>
      %366 = vector.multi_reduction <add>, %365, %cst_158 [0] : vector<64x128xf32> to vector<128xf32>
      %367 = vector.shape_cast %366 : vector<128xf32> to vector<1x128xf32>
      %cst_159 = arith.constant dense<0.000000e+00> : vector<1x16xf32>
      %368 = tpu.matmul %367, %362, %cst_159 {dimension_numbers = #tpu.dot_dimension_numbers<[1], [0], [0], [1], [0, 0, 1, 1], [], []>} : vector<1x128xf32>, vector<128x16xf32>, vector<1x16xf32> -> vector<1x16xf32>
      %cst_160 = arith.constant 5.120000e+02 : f32
      %369 = vector.broadcast %cst_160 : f32 to vector<1x16xf32>
      %370 = arith.divf %368, %369 : vector<1x16xf32>
      %cst_161 = arith.constant dense<0.000000e+00> : vector<1x128xf32>
      %371 = tpu.matmul %370, %362, %cst_161 {dimension_numbers = #tpu.dot_dimension_numbers<[1], [1], [0], [0], [0, 0, 1, 0], [], []>} : vector<1x16xf32>, vector<128x16xf32>, vector<1x128xf32> -> vector<1x128xf32>
      %372 = vector.broadcast %371 : vector<1x128xf32> to vector<64x128xf32>
      %373 = arith.subf %365, %372 : vector<64x128xf32>
      %374 = arith.mulf %373, %373 : vector<64x128xf32>
      %cst_162 = arith.constant dense<0.000000e+00> : vector<128xf32>
      %375 = vector.multi_reduction <add>, %374, %cst_162 [0] : vector<64x128xf32> to vector<128xf32>
      %376 = vector.shape_cast %375 : vector<128xf32> to vector<1x128xf32>
      %cst_163 = arith.constant dense<0.000000e+00> : vector<1x16xf32>
      %377 = tpu.matmul %376, %362, %cst_163 {dimension_numbers = #tpu.dot_dimension_numbers<[1], [0], [0], [1], [0, 0, 1, 1], [], []>} : vector<1x128xf32>, vector<128x16xf32>, vector<1x16xf32> -> vector<1x16xf32>
      %cst_164 = arith.constant 5.120000e+02 : f32
      %378 = vector.broadcast %cst_164 : f32 to vector<1x16xf32>
      %379 = arith.divf %377, %378 : vector<1x16xf32>
      %cst_165 = arith.constant dense<0.000000e+00> : vector<1x128xf32>
      %380 = tpu.matmul %379, %362, %cst_165 {dimension_numbers = #tpu.dot_dimension_numbers<[1], [1], [0], [0], [0, 0, 1, 0], [], []>} : vector<1x16xf32>, vector<128x16xf32>, vector<1x128xf32> -> vector<1x128xf32>
      %cst_166 = arith.constant 9.99999997E-7 : f32
      %381 = vector.broadcast %cst_166 : f32 to vector<1x128xf32>
      %382 = arith.addf %380, %381 : vector<1x128xf32>
      %383 = math.rsqrt %382 : vector<1x128xf32>
      %384 = vector.broadcast %383 : vector<1x128xf32> to vector<64x128xf32>
      %385 = arith.mulf %373, %384 : vector<64x128xf32>
      %c0_167 = arith.constant 0 : index
      %c0_168 = arith.constant 0 : index
      %386 = vector.load %arg4[%c0_167, %c0_168] : memref<1x128xf32, #tpu.memory_space<vmem>>, vector<1x128xf32>
      %387 = vector.broadcast %386 : vector<1x128xf32> to vector<64x128xf32>
      %388 = arith.mulf %385, %387 : vector<64x128xf32>
      %c0_169 = arith.constant 0 : index
      %c0_170 = arith.constant 0 : index
      %389 = vector.load %arg5[%c0_169, %c0_170] : memref<1x128xf32, #tpu.memory_space<vmem>>, vector<1x128xf32>
      %390 = vector.broadcast %389 : vector<1x128xf32> to vector<64x128xf32>
      %391 = arith.addf %388, %390 : vector<64x128xf32>
      %392 = arith.truncf %391 : vector<64x128xf32> to vector<64x128xbf16>
      %cst_171 = arith.constant dense<0.000000e+00> : vector<64x128xf32>
      %393 = tpu.matmul %392, %363, %cst_171 {dimension_numbers = #tpu.dot_dimension_numbers<[1], [0], [0], [1], [0, 0, 1, 1], [], []>} : vector<64x128xbf16>, vector<128x128xbf16>, vector<64x128xf32> -> vector<64x128xf32>
      %c0_172 = arith.constant 0 : index
      %c0_173 = arith.constant 0 : index
      %394 = vector.load %arg7[%c0_172, %c0_173] : memref<1x128xf32, #tpu.memory_space<vmem>>, vector<1x128xf32>
      %395 = vector.broadcast %394 : vector<1x128xf32> to vector<64x128xf32>
      %396 = arith.addf %393, %395 : vector<64x128xf32>
      %c0_174 = arith.constant 0 : index
      %c0_175 = arith.constant 0 : index
      %c0_176 = arith.constant 0 : index
      %397 = vector.load %arg24[%c0_174, %c0_175, %c0_176] : memref<2x64x128xf32, #tpu.memory_space<vmem>>, vector<1x64x128xf32>
      %398 = vector.shape_cast %397 : vector<1x64x128xf32> to vector<64x128xf32>
      %399 = vector.shape_cast %396 : vector<64x128xf32> to vector<1x64x128xf32>
      tpu.vector_store %arg24[%c0_174, %c0_175, %c0_176], %399 {strides = array<i32>} : memref<2x64x128xf32, #tpu.memory_space<vmem>>, vector<1x64x128xf32>,
      %c1_177 = arith.constant 1 : index
      %c0_178 = arith.constant 0 : index
      %c0_179 = arith.constant 0 : index
      %400 = vector.load %arg2[%c1_177, %c0_178, %c0_179] : memref<2x64x128xf32, #tpu.memory_space<vmem>>, vector<1x64x128xf32>
      %401 = vector.shape_cast %400 : vector<1x64x128xf32> to vector<64x128xf32>
      %cst_180 = arith.constant dense<0.000000e+00> : vector<128xf32>
      %402 = vector.multi_reduction <add>, %401, %cst_180 [0] : vector<64x128xf32> to vector<128xf32>
      %403 = vector.shape_cast %402 : vector<128xf32> to vector<1x128xf32>
      %cst_181 = arith.constant dense<0.000000e+00> : vector<1x16xf32>
      %404 = tpu.matmul %403, %362, %cst_181 {dimension_numbers = #tpu.dot_dimension_numbers<[1], [0], [0], [1], [0, 0, 1, 1], [], []>} : vector<1x128xf32>, vector<128x16xf32>, vector<1x16xf32> -> vector<1x16xf32>
      %cst_182 = arith.constant 5.120000e+02 : f32
      %405 = vector.broadcast %cst_182 : f32 to vector<1x16xf32>
      %406 = arith.divf %404, %405 : vector<1x16xf32>
      %cst_183 = arith.constant dense<0.000000e+00> : vector<1x128xf32>
      %407 = tpu.matmul %406, %362, %cst_183 {dimension_numbers = #tpu.dot_dimension_numbers<[1], [1], [0], [0], [0, 0, 1, 0], [], []>} : vector<1x16xf32>, vector<128x16xf32>, vector<1x128xf32> -> vector<1x128xf32>
      %408 = vector.broadcast %407 : vector<1x128xf32> to vector<64x128xf32>
      %409 = arith.subf %401, %408 : vector<64x128xf32>
      %410 = arith.mulf %409, %409 : vector<64x128xf32>
      %cst_184 = arith.constant dense<0.000000e+00> : vector<128xf32>
      %411 = vector.multi_reduction <add>, %410, %cst_184 [0] : vector<64x128xf32> to vector<128xf32>
      %412 = vector.shape_cast %411 : vector<128xf32> to vector<1x128xf32>
      %cst_185 = arith.constant dense<0.000000e+00> : vector<1x16xf32>
      %413 = tpu.matmul %412, %362, %cst_185 {dimension_numbers = #tpu.dot_dimension_numbers<[1], [0], [0], [1], [0, 0, 1, 1], [], []>} : vector<1x128xf32>, vector<128x16xf32>, vector<1x16xf32> -> vector<1x16xf32>
      %cst_186 = arith.constant 5.120000e+02 : f32
      %414 = vector.broadcast %cst_186 : f32 to vector<1x16xf32>
      %415 = arith.divf %413, %414 : vector<1x16xf32>
      %cst_187 = arith.constant dense<0.000000e+00> : vector<1x128xf32>
      %416 = tpu.matmul %415, %362, %cst_187 {dimension_numbers = #tpu.dot_dimension_numbers<[1], [1], [0], [0], [0, 0, 1, 0], [], []>} : vector<1x16xf32>, vector<128x16xf32>, vector<1x128xf32> -> vector<1x128xf32>
      %cst_188 = arith.constant 9.99999997E-7 : f32
      %417 = vector.broadcast %cst_188 : f32 to vector<1x128xf32>
      %418 = arith.addf %416, %417 : vector<1x128xf32>
      %419 = math.rsqrt %418 : vector<1x128xf32>
      %420 = vector.broadcast %419 : vector<1x128xf32> to vector<64x128xf32>
      %421 = arith.mulf %409, %420 : vector<64x128xf32>
      %c0_189 = arith.constant 0 : index
      %c0_190 = arith.constant 0 : index
      %422 = vector.load %arg4[%c0_189, %c0_190] : memref<1x128xf32, #tpu.memory_space<vmem>>, vector<1x128xf32>
      %423 = vector.broadcast %422 : vector<1x128xf32> to vector<64x128xf32>
      %424 = arith.mulf %421, %423 : vector<64x128xf32>
      %c0_191 = arith.constant 0 : index
      %c0_192 = arith.constant 0 : index
      %425 = vector.load %arg5[%c0_191, %c0_192] : memref<1x128xf32, #tpu.memory_space<vmem>>, vector<1x128xf32>
      %426 = vector.broadcast %425 : vector<1x128xf32> to vector<64x128xf32>
      %427 = arith.addf %424, %426 : vector<64x128xf32>
      %428 = arith.truncf %427 : vector<64x128xf32> to vector<64x128xbf16>
      %cst_193 = arith.constant dense<0.000000e+00> : vector<64x128xf32>
      %429 = tpu.matmul %428, %363, %cst_193 {dimension_numbers = #tpu.dot_dimension_numbers<[1], [0], [0], [1], [0, 0, 1, 1], [], []>} : vector<64x128xbf16>, vector<128x128xbf16>, vector<64x128xf32> -> vector<64x128xf32>
      %c0_194 = arith.constant 0 : index
      %c0_195 = arith.constant 0 : index
      %430 = vector.load %arg7[%c0_194, %c0_195] : memref<1x128xf32, #tpu.memory_space<vmem>>, vector<1x128xf32>
      %431 = vector.broadcast %430 : vector<1x128xf32> to vector<64x128xf32>
      %432 = arith.addf %429, %431 : vector<64x128xf32>
      %c1_196 = arith.constant 1 : index
      %c0_197 = arith.constant 0 : index
      %c0_198 = arith.constant 0 : index
      %433 = vector.load %arg24[%c1_196, %c0_197, %c0_198] : memref<2x64x128xf32, #tpu.memory_space<vmem>>, vector<1x64x128xf32>
      %434 = vector.shape_cast %433 : vector<1x64x128xf32> to vector<64x128xf32>
      %435 = vector.shape_cast %432 : vector<64x128xf32> to vector<1x64x128xf32>
      tpu.vector_store %arg24[%c1_196, %c0_197, %c0_198], %435 {strides = array<i32>} : memref<2x64x128xf32, #tpu.memory_space<vmem>>, vector<1x64x128xf32>,
    } else {
    }
    %c0 = arith.constant 0 : index
    %c0_1 = arith.constant 0 : index
    %c0_2 = arith.constant 0 : index
    %3 = vector.load %arg10[%c0, %c0_1, %c0_2] : memref<1x128x384xbf16, #tpu.memory_space<vmem>>, vector<1x128x384xbf16>
    %4 = vector.shape_cast %3 : vector<1x128x384xbf16> to vector<128x384xbf16>
    %c0_3 = arith.constant 0 : index
    %c0_4 = arith.constant 0 : index
    %c0_5 = arith.constant 0 : index
    %5 = vector.load %arg11[%c0_3, %c0_4, %c0_5] : memref<1x128x128xbf16, #tpu.memory_space<vmem>>, vector<1x128x128xbf16>
    %6 = vector.shape_cast %5 : vector<1x128x128xbf16> to vector<128x128xbf16>
    %c0_6 = arith.constant 0 : index
    %c0_7 = arith.constant 0 : index
    %c0_8 = arith.constant 0 : index
    %7 = vector.load %arg15[%c0_6, %c0_7, %c0_8] : memref<1x128x512xbf16, #tpu.memory_space<vmem>>, vector<1x128x512xbf16>
    %8 = vector.shape_cast %7 : vector<1x128x512xbf16> to vector<128x512xbf16>
    %c0_9 = arith.constant 0 : index
    %c0_10 = arith.constant 0 : index
    %c0_11 = arith.constant 0 : index
    %9 = vector.load %arg17[%c0_9, %c0_10, %c0_11] : memref<1x128x512xbf16, #tpu.memory_space<vmem>>, vector<1x128x512xbf16>
    %10 = vector.shape_cast %9 : vector<1x128x512xbf16> to vector<128x512xbf16>
    %c0_12 = arith.constant 0 : index
    %c0_13 = arith.constant 0 : index
    %c0_14 = arith.constant 0 : index
    %11 = vector.load %arg19[%c0_12, %c0_13, %c0_14] : memref<1x512x128xbf16, #tpu.memory_space<vmem>>, vector<1x512x128xbf16>
    %12 = vector.shape_cast %11 : vector<1x512x128xbf16> to vector<512x128xbf16>
    %c0_15 = arith.constant 0 : index
    %c0_16 = arith.constant 0 : index
    %c0_17 = arith.constant 0 : index
    %13 = vector.load %arg12[%c0_15, %c0_16, %c0_17] : memref<1x1x128xf32, #tpu.memory_space<vmem>>, vector<1x1x128xf32>
    %14 = vector.shape_cast %13 : vector<1x1x128xf32> to vector<1x128xf32>
    %c0_18 = arith.constant 0 : index
    %c0_19 = arith.constant 0 : index
    %c0_20 = arith.constant 0 : index
    %15 = vector.load %arg24[%c0_18, %c0_19, %c0_20] : memref<2x64x128xf32, #tpu.memory_space<vmem>>, vector<1x64x128xf32>
    %16 = vector.shape_cast %15 : vector<1x64x128xf32> to vector<64x128xf32>
    %c0_21 = arith.constant 0 : index
    %c0_22 = arith.constant 0 : index
    %c0_23 = arith.constant 0 : index
    %17 = vector.load %arg8[%c0_21, %c0_22, %c0_23] : memref<1x1x128xf32, #tpu.memory_space<vmem>>, vector<1x1x128xf32>
    %18 = vector.shape_cast %17 : vector<1x1x128xf32> to vector<1x128xf32>
    %c0_24 = arith.constant 0 : index
    %c0_25 = arith.constant 0 : index
    %c0_26 = arith.constant 0 : index
    %19 = vector.load %arg9[%c0_24, %c0_25, %c0_26] : memref<1x1x128xf32, #tpu.memory_space<vmem>>, vector<1x1x128xf32>
    %20 = vector.shape_cast %19 : vector<1x1x128xf32> to vector<1x128xf32>
    %cst = arith.constant dense<0.000000e+00> : vector<64xf32>
    %21 = vector.multi_reduction <add>, %16, %cst [1] : vector<64x128xf32> to vector<64xf32>
    %22 = vector.shape_cast %21 : vector<64xf32> to vector<64x1xf32>
    %cst_27 = arith.constant 1.280000e+02 : f32
    %23 = vector.broadcast %cst_27 : f32 to vector<64x1xf32>
    %24 = arith.divf %22, %23 : vector<64x1xf32>
    %25 = vector.broadcast %24 : vector<64x1xf32> to vector<64x128xf32>
    %26 = arith.subf %16, %25 : vector<64x128xf32>
    %27 = arith.mulf %26, %26 : vector<64x128xf32>
    %cst_28 = arith.constant dense<0.000000e+00> : vector<64xf32>
    %28 = vector.multi_reduction <add>, %27, %cst_28 [1] : vector<64x128xf32> to vector<64xf32>
    %29 = vector.shape_cast %28 : vector<64xf32> to vector<64x1xf32>
    %cst_29 = arith.constant 1.280000e+02 : f32
    %30 = vector.broadcast %cst_29 : f32 to vector<64x1xf32>
    %31 = arith.divf %29, %30 : vector<64x1xf32>
    %cst_30 = arith.constant 9.99999974E-6 : f32
    %32 = vector.broadcast %cst_30 : f32 to vector<64x1xf32>
    %33 = arith.addf %31, %32 : vector<64x1xf32>
    %34 = math.rsqrt %33 : vector<64x1xf32>
    %35 = vector.broadcast %34 : vector<64x1xf32> to vector<64x128xf32>
    %36 = arith.mulf %26, %35 : vector<64x128xf32>
    %37 = vector.broadcast %18 : vector<1x128xf32> to vector<64x128xf32>
    %38 = arith.mulf %36, %37 : vector<64x128xf32>
    %39 = vector.broadcast %20 : vector<1x128xf32> to vector<64x128xf32>
    %40 = arith.addf %38, %39 : vector<64x128xf32>
    %41 = arith.truncf %40 : vector<64x128xf32> to vector<64x128xbf16>
    %cst_31 = arith.constant dense<0.000000e+00> : vector<64x384xf32>
    %42 = tpu.matmul %41, %4, %cst_31 {dimension_numbers = #tpu.dot_dimension_numbers<[1], [0], [0], [1], [0, 0, 1, 1], [], []>} : vector<64x128xbf16>, vector<128x384xbf16>, vector<64x384xf32> -> vector<64x384xf32>
    %43 = vector.extract_strided_slice %42 {offsets = [0, 128], sizes = [64, 32], strides = [1, 1]} : vector<64x384xf32> to vector<64x32xf32>
    %44 = arith.truncf %43 : vector<64x32xf32> to vector<64x32xbf16>
    %45 = vector.extract_strided_slice %42 {offsets = [0, 160], sizes = [64, 32], strides = [1, 1]} : vector<64x384xf32> to vector<64x32xf32>
    %46 = arith.truncf %45 : vector<64x32xf32> to vector<64x32xbf16>
    %47 = vector.extract_strided_slice %42 {offsets = [0, 192], sizes = [64, 32], strides = [1, 1]} : vector<64x384xf32> to vector<64x32xf32>
    %48 = arith.truncf %47 : vector<64x32xf32> to vector<64x32xbf16>
    %49 = vector.extract_strided_slice %42 {offsets = [0, 224], sizes = [64, 32], strides = [1, 1]} : vector<64x384xf32> to vector<64x32xf32>
    %50 = arith.truncf %49 : vector<64x32xf32> to vector<64x32xbf16>
    %51 = vector.extract_strided_slice %42 {offsets = [0, 256], sizes = [64, 32], strides = [1, 1]} : vector<64x384xf32> to vector<64x32xf32>
    %52 = arith.truncf %51 : vector<64x32xf32> to vector<64x32xbf16>
    %53 = vector.extract_strided_slice %42 {offsets = [0, 288], sizes = [64, 32], strides = [1, 1]} : vector<64x384xf32> to vector<64x32xf32>
    %54 = arith.truncf %53 : vector<64x32xf32> to vector<64x32xbf16>
    %55 = vector.extract_strided_slice %42 {offsets = [0, 320], sizes = [64, 32], strides = [1, 1]} : vector<64x384xf32> to vector<64x32xf32>
    %56 = arith.truncf %55 : vector<64x32xf32> to vector<64x32xbf16>
    %57 = vector.extract_strided_slice %42 {offsets = [0, 352], sizes = [64, 32], strides = [1, 1]} : vector<64x384xf32> to vector<64x32xf32>
    %58 = arith.truncf %57 : vector<64x32xf32> to vector<64x32xbf16>
    %59 = vector.extract_strided_slice %42 {offsets = [0, 0], sizes = [64, 32], strides = [1, 1]} : vector<64x384xf32> to vector<64x32xf32>
    %60 = arith.truncf %59 : vector<64x32xf32> to vector<64x32xbf16>
    %cst_32 = arith.constant dense<0.000000e+00> : vector<64x64xf32>
    %61 = tpu.matmul %60, %44, %cst_32 {dimension_numbers = #tpu.dot_dimension_numbers<[1], [1], [0], [0], [0, 0, 1, 0], [], []>} : vector<64x32xbf16>, vector<64x32xbf16>, vector<64x64xf32> -> vector<64x64xf32>
    %cst_33 = arith.constant dense<0xFF800000> : vector<64xf32>
    %62 = vector.multi_reduction <maximumf>, %61, %cst_33 [1] : vector<64x64xf32> to vector<64xf32>
    %63 = vector.shape_cast %62 : vector<64xf32> to vector<64x1xf32>
    %64 = vector.broadcast %63 : vector<64x1xf32> to vector<64x64xf32>
    %65 = arith.subf %61, %64 : vector<64x64xf32>
    %66 = math.exp %65 : vector<64x64xf32>
    %cst_34 = arith.constant dense<0.000000e+00> : vector<64xf32>
    %67 = vector.multi_reduction <add>, %66, %cst_34 [1] : vector<64x64xf32> to vector<64xf32>
    %68 = vector.shape_cast %67 : vector<64xf32> to vector<64x1xf32>
    %69 = tpu.reciprocal %68 {approx = true} : vector<64x1xf32> -> vector<64x1xf32>
    %70 = vector.broadcast %69 : vector<64x1xf32> to vector<64x64xf32>
    %71 = arith.mulf %66, %70 : vector<64x64xf32>
    %72 = arith.truncf %71 : vector<64x64xf32> to vector<64x64xbf16>
    %cst_35 = arith.constant dense<0.000000e+00> : vector<64x32xf32>
    %73 = tpu.matmul %72, %52, %cst_35 {dimension_numbers = #tpu.dot_dimension_numbers<[1], [0], [0], [1], [0, 0, 1, 1], [], []>} : vector<64x64xbf16>, vector<64x32xbf16>, vector<64x32xf32> -> vector<64x32xf32>
    %74 = arith.truncf %73 : vector<64x32xf32> to vector<64x32xbf16>
    %75 = vector.extract_strided_slice %42 {offsets = [0, 32], sizes = [64, 32], strides = [1, 1]} : vector<64x384xf32> to vector<64x32xf32>
    %76 = arith.truncf %75 : vector<64x32xf32> to vector<64x32xbf16>
    %cst_36 = arith.constant dense<0.000000e+00> : vector<64x64xf32>
    %77 = tpu.matmul %76, %46, %cst_36 {dimension_numbers = #tpu.dot_dimension_numbers<[1], [1], [0], [0], [0, 0, 1, 0], [], []>} : vector<64x32xbf16>, vector<64x32xbf16>, vector<64x64xf32> -> vector<64x64xf32>
    %cst_37 = arith.constant dense<0xFF800000> : vector<64xf32>
    %78 = vector.multi_reduction <maximumf>, %77, %cst_37 [1] : vector<64x64xf32> to vector<64xf32>
    %79 = vector.shape_cast %78 : vector<64xf32> to vector<64x1xf32>
    %80 = vector.broadcast %79 : vector<64x1xf32> to vector<64x64xf32>
    %81 = arith.subf %77, %80 : vector<64x64xf32>
    %82 = math.exp %81 : vector<64x64xf32>
    %cst_38 = arith.constant dense<0.000000e+00> : vector<64xf32>
    %83 = vector.multi_reduction <add>, %82, %cst_38 [1] : vector<64x64xf32> to vector<64xf32>
    %84 = vector.shape_cast %83 : vector<64xf32> to vector<64x1xf32>
    %85 = tpu.reciprocal %84 {approx = true} : vector<64x1xf32> -> vector<64x1xf32>
    %86 = vector.broadcast %85 : vector<64x1xf32> to vector<64x64xf32>
    %87 = arith.mulf %82, %86 : vector<64x64xf32>
    %88 = arith.truncf %87 : vector<64x64xf32> to vector<64x64xbf16>
    %cst_39 = arith.constant dense<0.000000e+00> : vector<64x32xf32>
    %89 = tpu.matmul %88, %54, %cst_39 {dimension_numbers = #tpu.dot_dimension_numbers<[1], [0], [0], [1], [0, 0, 1, 1], [], []>} : vector<64x64xbf16>, vector<64x32xbf16>, vector<64x32xf32> -> vector<64x32xf32>
    %90 = arith.truncf %89 : vector<64x32xf32> to vector<64x32xbf16>
    %91 = vector.extract_strided_slice %42 {offsets = [0, 64], sizes = [64, 32], strides = [1, 1]} : vector<64x384xf32> to vector<64x32xf32>
    %92 = arith.truncf %91 : vector<64x32xf32> to vector<64x32xbf16>
    %cst_40 = arith.constant dense<0.000000e+00> : vector<64x64xf32>
    %93 = tpu.matmul %92, %48, %cst_40 {dimension_numbers = #tpu.dot_dimension_numbers<[1], [1], [0], [0], [0, 0, 1, 0], [], []>} : vector<64x32xbf16>, vector<64x32xbf16>, vector<64x64xf32> -> vector<64x64xf32>
    %cst_41 = arith.constant dense<0xFF800000> : vector<64xf32>
    %94 = vector.multi_reduction <maximumf>, %93, %cst_41 [1] : vector<64x64xf32> to vector<64xf32>
    %95 = vector.shape_cast %94 : vector<64xf32> to vector<64x1xf32>
    %96 = vector.broadcast %95 : vector<64x1xf32> to vector<64x64xf32>
    %97 = arith.subf %93, %96 : vector<64x64xf32>
    %98 = math.exp %97 : vector<64x64xf32>
    %cst_42 = arith.constant dense<0.000000e+00> : vector<64xf32>
    %99 = vector.multi_reduction <add>, %98, %cst_42 [1] : vector<64x64xf32> to vector<64xf32>
    %100 = vector.shape_cast %99 : vector<64xf32> to vector<64x1xf32>
    %101 = tpu.reciprocal %100 {approx = true} : vector<64x1xf32> -> vector<64x1xf32>
    %102 = vector.broadcast %101 : vector<64x1xf32> to vector<64x64xf32>
    %103 = arith.mulf %98, %102 : vector<64x64xf32>
    %104 = arith.truncf %103 : vector<64x64xf32> to vector<64x64xbf16>
    %cst_43 = arith.constant dense<0.000000e+00> : vector<64x32xf32>
    %105 = tpu.matmul %104, %56, %cst_43 {dimension_numbers = #tpu.dot_dimension_numbers<[1], [0], [0], [1], [0, 0, 1, 1], [], []>} : vector<64x64xbf16>, vector<64x32xbf16>, vector<64x32xf32> -> vector<64x32xf32>
    %106 = arith.truncf %105 : vector<64x32xf32> to vector<64x32xbf16>
    %107 = vector.extract_strided_slice %42 {offsets = [0, 96], sizes = [64, 32], strides = [1, 1]} : vector<64x384xf32> to vector<64x32xf32>
    %108 = arith.truncf %107 : vector<64x32xf32> to vector<64x32xbf16>
    %cst_44 = arith.constant dense<0.000000e+00> : vector<64x64xf32>
    %109 = tpu.matmul %108, %50, %cst_44 {dimension_numbers = #tpu.dot_dimension_numbers<[1], [1], [0], [0], [0, 0, 1, 0], [], []>} : vector<64x32xbf16>, vector<64x32xbf16>, vector<64x64xf32> -> vector<64x64xf32>
    %cst_45 = arith.constant dense<0xFF800000> : vector<64xf32>
    %110 = vector.multi_reduction <maximumf>, %109, %cst_45 [1] : vector<64x64xf32> to vector<64xf32>
    %111 = vector.shape_cast %110 : vector<64xf32> to vector<64x1xf32>
    %112 = vector.broadcast %111 : vector<64x1xf32> to vector<64x64xf32>
    %113 = arith.subf %109, %112 : vector<64x64xf32>
    %114 = math.exp %113 : vector<64x64xf32>
    %cst_46 = arith.constant dense<0.000000e+00> : vector<64xf32>
    %115 = vector.multi_reduction <add>, %114, %cst_46 [1] : vector<64x64xf32> to vector<64xf32>
    %116 = vector.shape_cast %115 : vector<64xf32> to vector<64x1xf32>
    %117 = tpu.reciprocal %116 {approx = true} : vector<64x1xf32> -> vector<64x1xf32>
    %118 = vector.broadcast %117 : vector<64x1xf32> to vector<64x64xf32>
    %119 = arith.mulf %114, %118 : vector<64x64xf32>
    %120 = arith.truncf %119 : vector<64x64xf32> to vector<64x64xbf16>
    %cst_47 = arith.constant dense<0.000000e+00> : vector<64x32xf32>
    %121 = tpu.matmul %120, %58, %cst_47 {dimension_numbers = #tpu.dot_dimension_numbers<[1], [0], [0], [1], [0, 0, 1, 1], [], []>} : vector<64x64xbf16>, vector<64x32xbf16>, vector<64x32xf32> -> vector<64x32xf32>
    %122 = arith.truncf %121 : vector<64x32xf32> to vector<64x32xbf16>
    %123 = tpu.concatenate %74, %90, %106, %122 in 1 : vector<64x32xbf16>, vector<64x32xbf16>, vector<64x32xbf16>, vector<64x32xbf16> -> vector<64x128xbf16>
    %cst_48 = arith.constant dense<0.000000e+00> : vector<64x128xf32>
    %124 = tpu.matmul %123, %6, %cst_48 {dimension_numbers = #tpu.dot_dimension_numbers<[1], [0], [0], [1], [0, 0, 1, 1], [], []>} : vector<64x128xbf16>, vector<128x128xbf16>, vector<64x128xf32> -> vector<64x128xf32>
    %125 = arith.addf %16, %124 : vector<64x128xf32>
    %126 = vector.broadcast %14 : vector<1x128xf32> to vector<64x128xf32>
    %127 = arith.addf %125, %126 : vector<64x128xf32>
    %c0_49 = arith.constant 0 : index
    %c0_50 = arith.constant 0 : index
    %c0_51 = arith.constant 0 : index
    %128 = vector.load %arg24[%c0_49, %c0_50, %c0_51] : memref<2x64x128xf32, #tpu.memory_space<vmem>>, vector<1x64x128xf32>
    %129 = vector.shape_cast %128 : vector<1x64x128xf32> to vector<64x128xf32>
    %130 = vector.shape_cast %127 : vector<64x128xf32> to vector<1x64x128xf32>
    tpu.vector_store %arg24[%c0_49, %c0_50, %c0_51], %130 {strides = array<i32>} : memref<2x64x128xf32, #tpu.memory_space<vmem>>, vector<1x64x128xf32>,
    %c0_52 = arith.constant 0 : index
    %c0_53 = arith.constant 0 : index
    %c0_54 = arith.constant 0 : index
    %131 = vector.load %arg24[%c0_52, %c0_53, %c0_54] : memref<2x64x128xf32, #tpu.memory_space<vmem>>, vector<1x64x128xf32>
    %132 = vector.shape_cast %131 : vector<1x64x128xf32> to vector<64x128xf32>
    %c0_55 = arith.constant 0 : index
    %c0_56 = arith.constant 0 : index
    %c0_57 = arith.constant 0 : index
    %133 = vector.load %arg13[%c0_55, %c0_56, %c0_57] : memref<1x1x128xf32, #tpu.memory_space<vmem>>, vector<1x1x128xf32>
    %134 = vector.shape_cast %133 : vector<1x1x128xf32> to vector<1x128xf32>
    %c0_58 = arith.constant 0 : index
    %c0_59 = arith.constant 0 : index
    %c0_60 = arith.constant 0 : index
    %135 = vector.load %arg14[%c0_58, %c0_59, %c0_60] : memref<1x1x128xf32, #tpu.memory_space<vmem>>, vector<1x1x128xf32>
    %136 = vector.shape_cast %135 : vector<1x1x128xf32> to vector<1x128xf32>
    %cst_61 = arith.constant dense<0.000000e+00> : vector<64xf32>
    %137 = vector.multi_reduction <add>, %132, %cst_61 [1] : vector<64x128xf32> to vector<64xf32>
    %138 = vector.shape_cast %137 : vector<64xf32> to vector<64x1xf32>
    %cst_62 = arith.constant 1.280000e+02 : f32
    %139 = vector.broadcast %cst_62 : f32 to vector<64x1xf32>
    %140 = arith.divf %138, %139 : vector<64x1xf32>
    %141 = vector.broadcast %140 : vector<64x1xf32> to vector<64x128xf32>
    %142 = arith.subf %132, %141 : vector<64x128xf32>
    %143 = arith.mulf %142, %142 : vector<64x128xf32>
    %cst_63 = arith.constant dense<0.000000e+00> : vector<64xf32>
    %144 = vector.multi_reduction <add>, %143, %cst_63 [1] : vector<64x128xf32> to vector<64xf32>
    %145 = vector.shape_cast %144 : vector<64xf32> to vector<64x1xf32>
    %cst_64 = arith.constant 1.280000e+02 : f32
    %146 = vector.broadcast %cst_64 : f32 to vector<64x1xf32>
    %147 = arith.divf %145, %146 : vector<64x1xf32>
    %cst_65 = arith.constant 9.99999974E-6 : f32
    %148 = vector.broadcast %cst_65 : f32 to vector<64x1xf32>
    %149 = arith.addf %147, %148 : vector<64x1xf32>
    %150 = math.rsqrt %149 : vector<64x1xf32>
    %151 = vector.broadcast %150 : vector<64x1xf32> to vector<64x128xf32>
    %152 = arith.mulf %142, %151 : vector<64x128xf32>
    %153 = vector.broadcast %134 : vector<1x128xf32> to vector<64x128xf32>
    %154 = arith.mulf %152, %153 : vector<64x128xf32>
    %155 = vector.broadcast %136 : vector<1x128xf32> to vector<64x128xf32>
    %156 = arith.addf %154, %155 : vector<64x128xf32>
    %157 = arith.truncf %156 : vector<64x128xf32> to vector<64x128xbf16>
    %cst_66 = arith.constant dense<0.000000e+00> : vector<64x512xf32>
    %158 = tpu.matmul %157, %8, %cst_66 {dimension_numbers = #tpu.dot_dimension_numbers<[1], [0], [0], [1], [0, 0, 1, 1], [], []>} : vector<64x128xbf16>, vector<128x512xbf16>, vector<64x512xf32> -> vector<64x512xf32>
    %c0_67 = arith.constant 0 : index
    %c0_68 = arith.constant 0 : index
    %c0_69 = arith.constant 0 : index
    %159 = vector.load %arg16[%c0_67, %c0_68, %c0_69] : memref<1x1x512xf32, #tpu.memory_space<vmem>>, vector<1x1x512xf32>
    %160 = vector.shape_cast %159 : vector<1x1x512xf32> to vector<1x512xf32>
    %161 = vector.broadcast %160 : vector<1x512xf32> to vector<64x512xf32>
    %162 = arith.addf %158, %161 : vector<64x512xf32>
    %cst_70 = arith.constant dense<0.000000e+00> : vector<64x512xf32>
    %163 = tpu.matmul %157, %10, %cst_70 {dimension_numbers = #tpu.dot_dimension_numbers<[1], [0], [0], [1], [0, 0, 1, 1], [], []>} : vector<64x128xbf16>, vector<128x512xbf16>, vector<64x512xf32> -> vector<64x512xf32>
    %c0_71 = arith.constant 0 : index
    %c0_72 = arith.constant 0 : index
    %c0_73 = arith.constant 0 : index
    %164 = vector.load %arg18[%c0_71, %c0_72, %c0_73] : memref<1x1x512xf32, #tpu.memory_space<vmem>>, vector<1x1x512xf32>
    %165 = vector.shape_cast %164 : vector<1x1x512xf32> to vector<1x512xf32>
    %166 = vector.broadcast %165 : vector<1x512xf32> to vector<64x512xf32>
    %167 = arith.addf %163, %166 : vector<64x512xf32>
    %cst_74 = arith.constant 5.000000e-01 : f32
    %168 = vector.broadcast %cst_74 : f32 to vector<64x512xf32>
    %169 = arith.mulf %167, %168 : vector<64x512xf32>
    %cst_75 = arith.constant 0.707106769 : f32
    %170 = vector.broadcast %cst_75 : f32 to vector<64x512xf32>
    %171 = arith.mulf %167, %170 : vector<64x512xf32>
    %172 = math.erf %171 : vector<64x512xf32>
    %cst_76 = arith.constant 1.000000e+00 : f32
    %173 = vector.broadcast %cst_76 : f32 to vector<64x512xf32>
    %174 = arith.addf %173, %172 : vector<64x512xf32>
    %175 = arith.mulf %169, %174 : vector<64x512xf32>
    %176 = arith.mulf %162, %175 : vector<64x512xf32>
    %177 = arith.truncf %176 : vector<64x512xf32> to vector<64x512xbf16>
    %cst_77 = arith.constant dense<0.000000e+00> : vector<64x128xf32>
    %178 = tpu.matmul %177, %12, %cst_77 {dimension_numbers = #tpu.dot_dimension_numbers<[1], [0], [0], [1], [0, 0, 1, 1], [], []>} : vector<64x512xbf16>, vector<512x128xbf16>, vector<64x128xf32> -> vector<64x128xf32>
    %c0_78 = arith.constant 0 : index
    %c0_79 = arith.constant 0 : index
    %c0_80 = arith.constant 0 : index
    %179 = vector.load %arg20[%c0_78, %c0_79, %c0_80] : memref<1x1x128xf32, #tpu.memory_space<vmem>>, vector<1x1x128xf32>
    %180 = vector.shape_cast %179 : vector<1x1x128xf32> to vector<1x128xf32>
    %181 = vector.broadcast %180 : vector<1x128xf32> to vector<64x128xf32>
    %182 = arith.addf %178, %181 : vector<64x128xf32>
    %183 = arith.addf %132, %182 : vector<64x128xf32>
    %c0_81 = arith.constant 0 : index
    %c0_82 = arith.constant 0 : index
    %c0_83 = arith.constant 0 : index
    %184 = vector.load %arg24[%c0_81, %c0_82, %c0_83] : memref<2x64x128xf32, #tpu.memory_space<vmem>>, vector<1x64x128xf32>
    %185 = vector.shape_cast %184 : vector<1x64x128xf32> to vector<64x128xf32>
    %186 = vector.shape_cast %183 : vector<64x128xf32> to vector<1x64x128xf32>
    tpu.vector_store %arg24[%c0_81, %c0_82, %c0_83], %186 {strides = array<i32>} : memref<2x64x128xf32, #tpu.memory_space<vmem>>, vector<1x64x128xf32>,
    %c1 = arith.constant 1 : index
    %c0_84 = arith.constant 0 : index
    %c0_85 = arith.constant 0 : index
    %187 = vector.load %arg24[%c1, %c0_84, %c0_85] : memref<2x64x128xf32, #tpu.memory_space<vmem>>, vector<1x64x128xf32>
    %188 = vector.shape_cast %187 : vector<1x64x128xf32> to vector<64x128xf32>
    %c0_86 = arith.constant 0 : index
    %c0_87 = arith.constant 0 : index
    %c0_88 = arith.constant 0 : index
    %189 = vector.load %arg8[%c0_86, %c0_87, %c0_88] : memref<1x1x128xf32, #tpu.memory_space<vmem>>, vector<1x1x128xf32>
    %190 = vector.shape_cast %189 : vector<1x1x128xf32> to vector<1x128xf32>
    %c0_89 = arith.constant 0 : index
    %c0_90 = arith.constant 0 : index
    %c0_91 = arith.constant 0 : index
    %191 = vector.load %arg9[%c0_89, %c0_90, %c0_91] : memref<1x1x128xf32, #tpu.memory_space<vmem>>, vector<1x1x128xf32>
    %192 = vector.shape_cast %191 : vector<1x1x128xf32> to vector<1x128xf32>
    %cst_92 = arith.constant dense<0.000000e+00> : vector<64xf32>
    %193 = vector.multi_reduction <add>, %188, %cst_92 [1] : vector<64x128xf32> to vector<64xf32>
    %194 = vector.shape_cast %193 : vector<64xf32> to vector<64x1xf32>
    %cst_93 = arith.constant 1.280000e+02 : f32
    %195 = vector.broadcast %cst_93 : f32 to vector<64x1xf32>
    %196 = arith.divf %194, %195 : vector<64x1xf32>
    %197 = vector.broadcast %196 : vector<64x1xf32> to vector<64x128xf32>
    %198 = arith.subf %188, %197 : vector<64x128xf32>
    %199 = arith.mulf %198, %198 : vector<64x128xf32>
    %cst_94 = arith.constant dense<0.000000e+00> : vector<64xf32>
    %200 = vector.multi_reduction <add>, %199, %cst_94 [1] : vector<64x128xf32> to vector<64xf32>
    %201 = vector.shape_cast %200 : vector<64xf32> to vector<64x1xf32>
    %cst_95 = arith.constant 1.280000e+02 : f32
    %202 = vector.broadcast %cst_95 : f32 to vector<64x1xf32>
    %203 = arith.divf %201, %202 : vector<64x1xf32>
    %cst_96 = arith.constant 9.99999974E-6 : f32
    %204 = vector.broadcast %cst_96 : f32 to vector<64x1xf32>
    %205 = arith.addf %203, %204 : vector<64x1xf32>
    %206 = math.rsqrt %205 : vector<64x1xf32>
    %207 = vector.broadcast %206 : vector<64x1xf32> to vector<64x128xf32>
    %208 = arith.mulf %198, %207 : vector<64x128xf32>
    %209 = vector.broadcast %190 : vector<1x128xf32> to vector<64x128xf32>
    %210 = arith.mulf %208, %209 : vector<64x128xf32>
    %211 = vector.broadcast %192 : vector<1x128xf32> to vector<64x128xf32>
    %212 = arith.addf %210, %211 : vector<64x128xf32>
    %213 = arith.truncf %212 : vector<64x128xf32> to vector<64x128xbf16>
    %cst_97 = arith.constant dense<0.000000e+00> : vector<64x384xf32>
    %214 = tpu.matmul %213, %4, %cst_97 {dimension_numbers = #tpu.dot_dimension_numbers<[1], [0], [0], [1], [0, 0, 1, 1], [], []>} : vector<64x128xbf16>, vector<128x384xbf16>, vector<64x384xf32> -> vector<64x384xf32>
    %215 = vector.extract_strided_slice %214 {offsets = [0, 128], sizes = [64, 32], strides = [1, 1]} : vector<64x384xf32> to vector<64x32xf32>
    %216 = arith.truncf %215 : vector<64x32xf32> to vector<64x32xbf16>
    %217 = vector.extract_strided_slice %214 {offsets = [0, 160], sizes = [64, 32], strides = [1, 1]} : vector<64x384xf32> to vector<64x32xf32>
    %218 = arith.truncf %217 : vector<64x32xf32> to vector<64x32xbf16>
    %219 = vector.extract_strided_slice %214 {offsets = [0, 192], sizes = [64, 32], strides = [1, 1]} : vector<64x384xf32> to vector<64x32xf32>
    %220 = arith.truncf %219 : vector<64x32xf32> to vector<64x32xbf16>
    %221 = vector.extract_strided_slice %214 {offsets = [0, 224], sizes = [64, 32], strides = [1, 1]} : vector<64x384xf32> to vector<64x32xf32>
    %222 = arith.truncf %221 : vector<64x32xf32> to vector<64x32xbf16>
    %223 = vector.extract_strided_slice %214 {offsets = [0, 256], sizes = [64, 32], strides = [1, 1]} : vector<64x384xf32> to vector<64x32xf32>
    %224 = arith.truncf %223 : vector<64x32xf32> to vector<64x32xbf16>
    %225 = vector.extract_strided_slice %214 {offsets = [0, 288], sizes = [64, 32], strides = [1, 1]} : vector<64x384xf32> to vector<64x32xf32>
    %226 = arith.truncf %225 : vector<64x32xf32> to vector<64x32xbf16>
    %227 = vector.extract_strided_slice %214 {offsets = [0, 320], sizes = [64, 32], strides = [1, 1]} : vector<64x384xf32> to vector<64x32xf32>
    %228 = arith.truncf %227 : vector<64x32xf32> to vector<64x32xbf16>
    %229 = vector.extract_strided_slice %214 {offsets = [0, 352], sizes = [64, 32], strides = [1, 1]} : vector<64x384xf32> to vector<64x32xf32>
    %230 = arith.truncf %229 : vector<64x32xf32> to vector<64x32xbf16>
    %231 = vector.extract_strided_slice %214 {offsets = [0, 0], sizes = [64, 32], strides = [1, 1]} : vector<64x384xf32> to vector<64x32xf32>
    %232 = arith.truncf %231 : vector<64x32xf32> to vector<64x32xbf16>
    %cst_98 = arith.constant dense<0.000000e+00> : vector<64x64xf32>
    %233 = tpu.matmul %232, %216, %cst_98 {dimension_numbers = #tpu.dot_dimension_numbers<[1], [1], [0], [0], [0, 0, 1, 0], [], []>} : vector<64x32xbf16>, vector<64x32xbf16>, vector<64x64xf32> -> vector<64x64xf32>
    %cst_99 = arith.constant dense<0xFF800000> : vector<64xf32>
    %234 = vector.multi_reduction <maximumf>, %233, %cst_99 [1] : vector<64x64xf32> to vector<64xf32>
    %235 = vector.shape_cast %234 : vector<64xf32> to vector<64x1xf32>
    %236 = vector.broadcast %235 : vector<64x1xf32> to vector<64x64xf32>
    %237 = arith.subf %233, %236 : vector<64x64xf32>
    %238 = math.exp %237 : vector<64x64xf32>
    %cst_100 = arith.constant dense<0.000000e+00> : vector<64xf32>
    %239 = vector.multi_reduction <add>, %238, %cst_100 [1] : vector<64x64xf32> to vector<64xf32>
    %240 = vector.shape_cast %239 : vector<64xf32> to vector<64x1xf32>
    %241 = tpu.reciprocal %240 {approx = true} : vector<64x1xf32> -> vector<64x1xf32>
    %242 = vector.broadcast %241 : vector<64x1xf32> to vector<64x64xf32>
    %243 = arith.mulf %238, %242 : vector<64x64xf32>
    %244 = arith.truncf %243 : vector<64x64xf32> to vector<64x64xbf16>
    %cst_101 = arith.constant dense<0.000000e+00> : vector<64x32xf32>
    %245 = tpu.matmul %244, %224, %cst_101 {dimension_numbers = #tpu.dot_dimension_numbers<[1], [0], [0], [1], [0, 0, 1, 1], [], []>} : vector<64x64xbf16>, vector<64x32xbf16>, vector<64x32xf32> -> vector<64x32xf32>
    %246 = arith.truncf %245 : vector<64x32xf32> to vector<64x32xbf16>
    %247 = vector.extract_strided_slice %214 {offsets = [0, 32], sizes = [64, 32], strides = [1, 1]} : vector<64x384xf32> to vector<64x32xf32>
    %248 = arith.truncf %247 : vector<64x32xf32> to vector<64x32xbf16>
    %cst_102 = arith.constant dense<0.000000e+00> : vector<64x64xf32>
    %249 = tpu.matmul %248, %218, %cst_102 {dimension_numbers = #tpu.dot_dimension_numbers<[1], [1], [0], [0], [0, 0, 1, 0], [], []>} : vector<64x32xbf16>, vector<64x32xbf16>, vector<64x64xf32> -> vector<64x64xf32>
    %cst_103 = arith.constant dense<0xFF800000> : vector<64xf32>
    %250 = vector.multi_reduction <maximumf>, %249, %cst_103 [1] : vector<64x64xf32> to vector<64xf32>
    %251 = vector.shape_cast %250 : vector<64xf32> to vector<64x1xf32>
    %252 = vector.broadcast %251 : vector<64x1xf32> to vector<64x64xf32>
    %253 = arith.subf %249, %252 : vector<64x64xf32>
    %254 = math.exp %253 : vector<64x64xf32>
    %cst_104 = arith.constant dense<0.000000e+00> : vector<64xf32>
    %255 = vector.multi_reduction <add>, %254, %cst_104 [1] : vector<64x64xf32> to vector<64xf32>
    %256 = vector.shape_cast %255 : vector<64xf32> to vector<64x1xf32>
    %257 = tpu.reciprocal %256 {approx = true} : vector<64x1xf32> -> vector<64x1xf32>
    %258 = vector.broadcast %257 : vector<64x1xf32> to vector<64x64xf32>
    %259 = arith.mulf %254, %258 : vector<64x64xf32>
    %260 = arith.truncf %259 : vector<64x64xf32> to vector<64x64xbf16>
    %cst_105 = arith.constant dense<0.000000e+00> : vector<64x32xf32>
    %261 = tpu.matmul %260, %226, %cst_105 {dimension_numbers = #tpu.dot_dimension_numbers<[1], [0], [0], [1], [0, 0, 1, 1], [], []>} : vector<64x64xbf16>, vector<64x32xbf16>, vector<64x32xf32> -> vector<64x32xf32>
    %262 = arith.truncf %261 : vector<64x32xf32> to vector<64x32xbf16>
    %263 = vector.extract_strided_slice %214 {offsets = [0, 64], sizes = [64, 32], strides = [1, 1]} : vector<64x384xf32> to vector<64x32xf32>
    %264 = arith.truncf %263 : vector<64x32xf32> to vector<64x32xbf16>
    %cst_106 = arith.constant dense<0.000000e+00> : vector<64x64xf32>
    %265 = tpu.matmul %264, %220, %cst_106 {dimension_numbers = #tpu.dot_dimension_numbers<[1], [1], [0], [0], [0, 0, 1, 0], [], []>} : vector<64x32xbf16>, vector<64x32xbf16>, vector<64x64xf32> -> vector<64x64xf32>
    %cst_107 = arith.constant dense<0xFF800000> : vector<64xf32>
    %266 = vector.multi_reduction <maximumf>, %265, %cst_107 [1] : vector<64x64xf32> to vector<64xf32>
    %267 = vector.shape_cast %266 : vector<64xf32> to vector<64x1xf32>
    %268 = vector.broadcast %267 : vector<64x1xf32> to vector<64x64xf32>
    %269 = arith.subf %265, %268 : vector<64x64xf32>
    %270 = math.exp %269 : vector<64x64xf32>
    %cst_108 = arith.constant dense<0.000000e+00> : vector<64xf32>
    %271 = vector.multi_reduction <add>, %270, %cst_108 [1] : vector<64x64xf32> to vector<64xf32>
    %272 = vector.shape_cast %271 : vector<64xf32> to vector<64x1xf32>
    %273 = tpu.reciprocal %272 {approx = true} : vector<64x1xf32> -> vector<64x1xf32>
    %274 = vector.broadcast %273 : vector<64x1xf32> to vector<64x64xf32>
    %275 = arith.mulf %270, %274 : vector<64x64xf32>
    %276 = arith.truncf %275 : vector<64x64xf32> to vector<64x64xbf16>
    %cst_109 = arith.constant dense<0.000000e+00> : vector<64x32xf32>
    %277 = tpu.matmul %276, %228, %cst_109 {dimension_numbers = #tpu.dot_dimension_numbers<[1], [0], [0], [1], [0, 0, 1, 1], [], []>} : vector<64x64xbf16>, vector<64x32xbf16>, vector<64x32xf32> -> vector<64x32xf32>
    %278 = arith.truncf %277 : vector<64x32xf32> to vector<64x32xbf16>
    %279 = vector.extract_strided_slice %214 {offsets = [0, 96], sizes = [64, 32], strides = [1, 1]} : vector<64x384xf32> to vector<64x32xf32>
    %280 = arith.truncf %279 : vector<64x32xf32> to vector<64x32xbf16>
    %cst_110 = arith.constant dense<0.000000e+00> : vector<64x64xf32>
    %281 = tpu.matmul %280, %222, %cst_110 {dimension_numbers = #tpu.dot_dimension_numbers<[1], [1], [0], [0], [0, 0, 1, 0], [], []>} : vector<64x32xbf16>, vector<64x32xbf16>, vector<64x64xf32> -> vector<64x64xf32>
    %cst_111 = arith.constant dense<0xFF800000> : vector<64xf32>
    %282 = vector.multi_reduction <maximumf>, %281, %cst_111 [1] : vector<64x64xf32> to vector<64xf32>
    %283 = vector.shape_cast %282 : vector<64xf32> to vector<64x1xf32>
    %284 = vector.broadcast %283 : vector<64x1xf32> to vector<64x64xf32>
    %285 = arith.subf %281, %284 : vector<64x64xf32>
    %286 = math.exp %285 : vector<64x64xf32>
    %cst_112 = arith.constant dense<0.000000e+00> : vector<64xf32>
    %287 = vector.multi_reduction <add>, %286, %cst_112 [1] : vector<64x64xf32> to vector<64xf32>
    %288 = vector.shape_cast %287 : vector<64xf32> to vector<64x1xf32>
    %289 = tpu.reciprocal %288 {approx = true} : vector<64x1xf32> -> vector<64x1xf32>
    %290 = vector.broadcast %289 : vector<64x1xf32> to vector<64x64xf32>
    %291 = arith.mulf %286, %290 : vector<64x64xf32>
    %292 = arith.truncf %291 : vector<64x64xf32> to vector<64x64xbf16>
    %cst_113 = arith.constant dense<0.000000e+00> : vector<64x32xf32>
    %293 = tpu.matmul %292, %230, %cst_113 {dimension_numbers = #tpu.dot_dimension_numbers<[1], [0], [0], [1], [0, 0, 1, 1], [], []>} : vector<64x64xbf16>, vector<64x32xbf16>, vector<64x32xf32> -> vector<64x32xf32>
    %294 = arith.truncf %293 : vector<64x32xf32> to vector<64x32xbf16>
    %295 = tpu.concatenate %246, %262, %278, %294 in 1 : vector<64x32xbf16>, vector<64x32xbf16>, vector<64x32xbf16>, vector<64x32xbf16> -> vector<64x128xbf16>
    %cst_114 = arith.constant dense<0.000000e+00> : vector<64x128xf32>
    %296 = tpu.matmul %295, %6, %cst_114 {dimension_numbers = #tpu.dot_dimension_numbers<[1], [0], [0], [1], [0, 0, 1, 1], [], []>} : vector<64x128xbf16>, vector<128x128xbf16>, vector<64x128xf32> -> vector<64x128xf32>
    %297 = arith.addf %188, %296 : vector<64x128xf32>
    %298 = vector.broadcast %14 : vector<1x128xf32> to vector<64x128xf32>
    %299 = arith.addf %297, %298 : vector<64x128xf32>
    %c1_115 = arith.constant 1 : index
    %c0_116 = arith.constant 0 : index
    %c0_117 = arith.constant 0 : index
    %300 = vector.load %arg24[%c1_115, %c0_116, %c0_117] : memref<2x64x128xf32, #tpu.memory_space<vmem>>, vector<1x64x128xf32>
    %301 = vector.shape_cast %300 : vector<1x64x128xf32> to vector<64x128xf32>
    %302 = vector.shape_cast %299 : vector<64x128xf32> to vector<1x64x128xf32>
    tpu.vector_store %arg24[%c1_115, %c0_116, %c0_117], %302 {strides = array<i32>} : memref<2x64x128xf32, #tpu.memory_space<vmem>>, vector<1x64x128xf32>,
    %c1_118 = arith.constant 1 : index
    %c0_119 = arith.constant 0 : index
    %c0_120 = arith.constant 0 : index
    %303 = vector.load %arg24[%c1_118, %c0_119, %c0_120] : memref<2x64x128xf32, #tpu.memory_space<vmem>>, vector<1x64x128xf32>
    %304 = vector.shape_cast %303 : vector<1x64x128xf32> to vector<64x128xf32>
    %c0_121 = arith.constant 0 : index
    %c0_122 = arith.constant 0 : index
    %c0_123 = arith.constant 0 : index
    %305 = vector.load %arg13[%c0_121, %c0_122, %c0_123] : memref<1x1x128xf32, #tpu.memory_space<vmem>>, vector<1x1x128xf32>
    %306 = vector.shape_cast %305 : vector<1x1x128xf32> to vector<1x128xf32>
    %c0_124 = arith.constant 0 : index
    %c0_125 = arith.constant 0 : index
    %c0_126 = arith.constant 0 : index
    %307 = vector.load %arg14[%c0_124, %c0_125, %c0_126] : memref<1x1x128xf32, #tpu.memory_space<vmem>>, vector<1x1x128xf32>
    %308 = vector.shape_cast %307 : vector<1x1x128xf32> to vector<1x128xf32>
    %cst_127 = arith.constant dense<0.000000e+00> : vector<64xf32>
    %309 = vector.multi_reduction <add>, %304, %cst_127 [1] : vector<64x128xf32> to vector<64xf32>
    %310 = vector.shape_cast %309 : vector<64xf32> to vector<64x1xf32>
    %cst_128 = arith.constant 1.280000e+02 : f32
    %311 = vector.broadcast %cst_128 : f32 to vector<64x1xf32>
    %312 = arith.divf %310, %311 : vector<64x1xf32>
    %313 = vector.broadcast %312 : vector<64x1xf32> to vector<64x128xf32>
    %314 = arith.subf %304, %313 : vector<64x128xf32>
    %315 = arith.mulf %314, %314 : vector<64x128xf32>
    %cst_129 = arith.constant dense<0.000000e+00> : vector<64xf32>
    %316 = vector.multi_reduction <add>, %315, %cst_129 [1] : vector<64x128xf32> to vector<64xf32>
    %317 = vector.shape_cast %316 : vector<64xf32> to vector<64x1xf32>
    %cst_130 = arith.constant 1.280000e+02 : f32
    %318 = vector.broadcast %cst_130 : f32 to vector<64x1xf32>
    %319 = arith.divf %317, %318 : vector<64x1xf32>
    %cst_131 = arith.constant 9.99999974E-6 : f32
    %320 = vector.broadcast %cst_131 : f32 to vector<64x1xf32>
    %321 = arith.addf %319, %320 : vector<64x1xf32>
    %322 = math.rsqrt %321 : vector<64x1xf32>
    %323 = vector.broadcast %322 : vector<64x1xf32> to vector<64x128xf32>
    %324 = arith.mulf %314, %323 : vector<64x128xf32>
    %325 = vector.broadcast %306 : vector<1x128xf32> to vector<64x128xf32>
    %326 = arith.mulf %324, %325 : vector<64x128xf32>
    %327 = vector.broadcast %308 : vector<1x128xf32> to vector<64x128xf32>
    %328 = arith.addf %326, %327 : vector<64x128xf32>
    %329 = arith.truncf %328 : vector<64x128xf32> to vector<64x128xbf16>
    %cst_132 = arith.constant dense<0.000000e+00> : vector<64x512xf32>
    %330 = tpu.matmul %329, %8, %cst_132 {dimension_numbers = #tpu.dot_dimension_numbers<[1], [0], [0], [1], [0, 0, 1, 1], [], []>} : vector<64x128xbf16>, vector<128x512xbf16>, vector<64x512xf32> -> vector<64x512xf32>
    %c0_133 = arith.constant 0 : index
    %c0_134 = arith.constant 0 : index
    %c0_135 = arith.constant 0 : index
    %331 = vector.load %arg16[%c0_133, %c0_134, %c0_135] : memref<1x1x512xf32, #tpu.memory_space<vmem>>, vector<1x1x512xf32>
    %332 = vector.shape_cast %331 : vector<1x1x512xf32> to vector<1x512xf32>
    %333 = vector.broadcast %332 : vector<1x512xf32> to vector<64x512xf32>
    %334 = arith.addf %330, %333 : vector<64x512xf32>
    %cst_136 = arith.constant dense<0.000000e+00> : vector<64x512xf32>
    %335 = tpu.matmul %329, %10, %cst_136 {dimension_numbers = #tpu.dot_dimension_numbers<[1], [0], [0], [1], [0, 0, 1, 1], [], []>} : vector<64x128xbf16>, vector<128x512xbf16>, vector<64x512xf32> -> vector<64x512xf32>
    %c0_137 = arith.constant 0 : index
    %c0_138 = arith.constant 0 : index
    %c0_139 = arith.constant 0 : index
    %336 = vector.load %arg18[%c0_137, %c0_138, %c0_139] : memref<1x1x512xf32, #tpu.memory_space<vmem>>, vector<1x1x512xf32>
    %337 = vector.shape_cast %336 : vector<1x1x512xf32> to vector<1x512xf32>
    %338 = vector.broadcast %337 : vector<1x512xf32> to vector<64x512xf32>
    %339 = arith.addf %335, %338 : vector<64x512xf32>
    %cst_140 = arith.constant 5.000000e-01 : f32
    %340 = vector.broadcast %cst_140 : f32 to vector<64x512xf32>
    %341 = arith.mulf %339, %340 : vector<64x512xf32>
    %cst_141 = arith.constant 0.707106769 : f32
    %342 = vector.broadcast %cst_141 : f32 to vector<64x512xf32>
    %343 = arith.mulf %339, %342 : vector<64x512xf32>
    %344 = math.erf %343 : vector<64x512xf32>
    %cst_142 = arith.constant 1.000000e+00 : f32
    %345 = vector.broadcast %cst_142 : f32 to vector<64x512xf32>
    %346 = arith.addf %345, %344 : vector<64x512xf32>
    %347 = arith.mulf %341, %346 : vector<64x512xf32>
    %348 = arith.mulf %334, %347 : vector<64x512xf32>
    %349 = arith.truncf %348 : vector<64x512xf32> to vector<64x512xbf16>
    %cst_143 = arith.constant dense<0.000000e+00> : vector<64x128xf32>
    %350 = tpu.matmul %349, %12, %cst_143 {dimension_numbers = #tpu.dot_dimension_numbers<[1], [0], [0], [1], [0, 0, 1, 1], [], []>} : vector<64x512xbf16>, vector<512x128xbf16>, vector<64x128xf32> -> vector<64x128xf32>
    %c0_144 = arith.constant 0 : index
    %c0_145 = arith.constant 0 : index
    %c0_146 = arith.constant 0 : index
    %351 = vector.load %arg20[%c0_144, %c0_145, %c0_146] : memref<1x1x128xf32, #tpu.memory_space<vmem>>, vector<1x1x128xf32>
    %352 = vector.shape_cast %351 : vector<1x1x128xf32> to vector<1x128xf32>
    %353 = vector.broadcast %352 : vector<1x128xf32> to vector<64x128xf32>
    %354 = arith.addf %350, %353 : vector<64x128xf32>
    %355 = arith.addf %304, %354 : vector<64x128xf32>
    %c1_147 = arith.constant 1 : index
    %c0_148 = arith.constant 0 : index
    %c0_149 = arith.constant 0 : index
    %356 = vector.load %arg24[%c1_147, %c0_148, %c0_149] : memref<2x64x128xf32, #tpu.memory_space<vmem>>, vector<1x64x128xf32>
    %357 = vector.shape_cast %356 : vector<1x64x128xf32> to vector<64x128xf32>
    %358 = vector.shape_cast %355 : vector<64x128xf32> to vector<1x64x128xf32>
    tpu.vector_store %arg24[%c1_147, %c0_148, %c0_149], %358 {strides = array<i32>} : memref<2x64x128xf32, #tpu.memory_space<vmem>>, vector<1x64x128xf32>,
    %c1_i32 = arith.constant 1 : i32
    %359 = arith.cmpi eq, %arg1, %c1_i32 : i32
    %360 = arith.extui %359 : i1 to i32
    %c0_i32_150 = arith.constant 0 : i32
    %361 = arith.cmpi ne, %360, %c0_i32_150 : i32
    scf.if %361 {
      %c0_151 = arith.constant 0 : index
      %c0_152 = arith.constant 0 : index
      %362 = vector.load %arg21[%c0_151, %c0_152] : memref<128x128xbf16, #tpu.memory_space<vmem>>, vector<128x128xbf16>
      %c0_153 = arith.constant 0 : index
      %c0_154 = arith.constant 0 : index
      %c0_155 = arith.constant 0 : index
      %363 = vector.load %arg24[%c0_153, %c0_154, %c0_155] : memref<2x64x128xf32, #tpu.memory_space<vmem>>, vector<1x64x128xf32>
      %364 = vector.shape_cast %363 : vector<1x64x128xf32> to vector<64x128xf32>
      %365 = arith.truncf %364 : vector<64x128xf32> to vector<64x128xbf16>
      %cst_156 = arith.constant dense<0.000000e+00> : vector<64x128xf32>
      %366 = tpu.matmul %365, %362, %cst_156 {dimension_numbers = #tpu.dot_dimension_numbers<[1], [0], [0], [1], [0, 0, 1, 1], [], []>} : vector<64x128xbf16>, vector<128x128xbf16>, vector<64x128xf32> -> vector<64x128xf32>
      %c0_157 = arith.constant 0 : index
      %c0_158 = arith.constant 0 : index
      %367 = vector.load %arg22[%c0_157, %c0_158] : memref<1x128xf32, #tpu.memory_space<vmem>>, vector<1x128xf32>
      %368 = vector.broadcast %367 : vector<1x128xf32> to vector<64x128xf32>
      %369 = arith.addf %366, %368 : vector<64x128xf32>
      %c0_159 = arith.constant 0 : index
      %c0_160 = arith.constant 0 : index
      %c0_161 = arith.constant 0 : index
      %370 = vector.load %arg2[%c0_159, %c0_160, %c0_161] : memref<2x64x128xf32, #tpu.memory_space<vmem>>, vector<1x64x128xf32>
      %371 = vector.shape_cast %370 : vector<1x64x128xf32> to vector<64x128xf32>
      %372 = arith.addf %369, %371 : vector<64x128xf32>
      %c0_162 = arith.constant 0 : index
      %c0_163 = arith.constant 0 : index
      %c0_164 = arith.constant 0 : index
      %373 = vector.load %arg23[%c0_162, %c0_163, %c0_164] : memref<2x64x128xf32, #tpu.memory_space<vmem>>, vector<1x64x128xf32>
      %374 = vector.shape_cast %373 : vector<1x64x128xf32> to vector<64x128xf32>
      %375 = vector.shape_cast %372 : vector<64x128xf32> to vector<1x64x128xf32>
      tpu.vector_store %arg23[%c0_162, %c0_163, %c0_164], %375 {strides = array<i32>} : memref<2x64x128xf32, #tpu.memory_space<vmem>>, vector<1x64x128xf32>,
      %c1_165 = arith.constant 1 : index
      %c0_166 = arith.constant 0 : index
      %c0_167 = arith.constant 0 : index
      %376 = vector.load %arg24[%c1_165, %c0_166, %c0_167] : memref<2x64x128xf32, #tpu.memory_space<vmem>>, vector<1x64x128xf32>
      %377 = vector.shape_cast %376 : vector<1x64x128xf32> to vector<64x128xf32>
      %378 = arith.truncf %377 : vector<64x128xf32> to vector<64x128xbf16>
      %cst_168 = arith.constant dense<0.000000e+00> : vector<64x128xf32>
      %379 = tpu.matmul %378, %362, %cst_168 {dimension_numbers = #tpu.dot_dimension_numbers<[1], [0], [0], [1], [0, 0, 1, 1], [], []>} : vector<64x128xbf16>, vector<128x128xbf16>, vector<64x128xf32> -> vector<64x128xf32>
      %c0_169 = arith.constant 0 : index
      %c0_170 = arith.constant 0 : index
      %380 = vector.load %arg22[%c0_169, %c0_170] : memref<1x128xf32, #tpu.memory_space<vmem>>, vector<1x128xf32>
      %381 = vector.broadcast %380 : vector<1x128xf32> to vector<64x128xf32>
      %382 = arith.addf %379, %381 : vector<64x128xf32>
      %c1_171 = arith.constant 1 : index
      %c0_172 = arith.constant 0 : index
      %c0_173 = arith.constant 0 : index
      %383 = vector.load %arg2[%c1_171, %c0_172, %c0_173] : memref<2x64x128xf32, #tpu.memory_space<vmem>>, vector<1x64x128xf32>
      %384 = vector.shape_cast %383 : vector<1x64x128xf32> to vector<64x128xf32>
      %385 = arith.addf %382, %384 : vector<64x128xf32>
      %c1_174 = arith.constant 1 : index
      %c0_175 = arith.constant 0 : index
      %c0_176 = arith.constant 0 : index
      %386 = vector.load %arg23[%c1_174, %c0_175, %c0_176] : memref<2x64x128xf32, #tpu.memory_space<vmem>>, vector<1x64x128xf32>
      %387 = vector.shape_cast %386 : vector<1x64x128xf32> to vector<64x128xf32>
      %388 = vector.shape_cast %385 : vector<64x128xf32> to vector<1x64x128xf32>
      tpu.vector_store %arg23[%c1_174, %c0_175, %c0_176], %388 {strides = array<i32>} : memref<2x64x128xf32, #tpu.memory_space<vmem>>, vector<1x64x128xf32>,
    } else {
    }
    return
  }
  func.func @transform_0(%arg0: i32, %arg1: i32) -> (i32, i32, i32) {
    %c0_i32 = arith.constant 0 : i32
    %c0_i32_0 = arith.constant 0 : i32
    %c0_i32_1 = arith.constant 0 : i32
    return %arg0, %c0_i32, %c0_i32_0 : i32, i32, i32
  }
  func.func @transform_1(%arg0: i32, %arg1: i32) -> (i32, i32) {
    %c0_i32 = arith.constant 0 : i32
    %c0_i32_0 = arith.constant 0 : i32
    %c0_i32_1 = arith.constant 0 : i32
    return %c0_i32, %c0_i32_0 : i32, i32
  }
  func.func @transform_2(%arg0: i32, %arg1: i32) -> (i32, i32) {
    %c0_i32 = arith.constant 0 : i32
    %c0_i32_0 = arith.constant 0 : i32
    %c0_i32_1 = arith.constant 0 : i32
    return %c0_i32, %c0_i32_0 : i32, i32
  }
  func.func @transform_3(%arg0: i32, %arg1: i32) -> (i32, i32) {
    %c0_i32 = arith.constant 0 : i32
    %c0_i32_0 = arith.constant 0 : i32
    %c0_i32_1 = arith.constant 0 : i32
    return %c0_i32, %c0_i32_0 : i32, i32
  }
  func.func @transform_4(%arg0: i32, %arg1: i32) -> (i32, i32) {
    %c0_i32 = arith.constant 0 : i32
    %c0_i32_0 = arith.constant 0 : i32
    %c0_i32_1 = arith.constant 0 : i32
    return %c0_i32, %c0_i32_0 : i32, i32
  }
  func.func @transform_5(%arg0: i32, %arg1: i32) -> (i32, i32) {
    %c0_i32 = arith.constant 0 : i32
    %c0_i32_0 = arith.constant 0 : i32
    %c0_i32_1 = arith.constant 0 : i32
    return %c0_i32, %c0_i32_0 : i32, i32
  }
  func.func @transform_6(%arg0: i32, %arg1: i32) -> (i32, i32, i32) {
    %c0_i32 = arith.constant 0 : i32
    %c0_i32_0 = arith.constant 0 : i32
    %c0_i32_1 = arith.constant 0 : i32
    return %arg1, %c0_i32, %c0_i32_0 : i32, i32, i32
  }
  func.func @transform_7(%arg0: i32, %arg1: i32) -> (i32, i32, i32) {
    %c0_i32 = arith.constant 0 : i32
    %c0_i32_0 = arith.constant 0 : i32
    %c0_i32_1 = arith.constant 0 : i32
    return %arg1, %c0_i32, %c0_i32_0 : i32, i32, i32
  }
  func.func @transform_8(%arg0: i32, %arg1: i32) -> (i32, i32, i32) {
    %c0_i32 = arith.constant 0 : i32
    %c0_i32_0 = arith.constant 0 : i32
    %c0_i32_1 = arith.constant 0 : i32
    return %arg1, %c0_i32, %c0_i32_0 : i32, i32, i32
  }
  func.func @transform_9(%arg0: i32, %arg1: i32) -> (i32, i32, i32) {
    %c0_i32 = arith.constant 0 : i32
    %c0_i32_0 = arith.constant 0 : i32
    %c0_i32_1 = arith.constant 0 : i32
    return %arg1, %c0_i32, %c0_i32_0 : i32, i32, i32
  }
  func.func @transform_10(%arg0: i32, %arg1: i32) -> (i32, i32, i32) {
    %c0_i32 = arith.constant 0 : i32
    %c0_i32_0 = arith.constant 0 : i32
    %c0_i32_1 = arith.constant 0 : i32
    return %arg1, %c0_i32, %c0_i32_0 : i32, i32, i32
  }
  func.func @transform_11(%arg0: i32, %arg1: i32) -> (i32, i32, i32) {
    %c0_i32 = arith.constant 0 : i32
    %c0_i32_0 = arith.constant 0 : i32
    %c0_i32_1 = arith.constant 0 : i32
    return %arg1, %c0_i32, %c0_i32_0 : i32, i32, i32
  }
  func.func @transform_12(%arg0: i32, %arg1: i32) -> (i32, i32, i32) {
    %c0_i32 = arith.constant 0 : i32
    %c0_i32_0 = arith.constant 0 : i32
    %c0_i32_1 = arith.constant 0 : i32
    return %arg1, %c0_i32, %c0_i32_0 : i32, i32, i32
  }
  func.func @transform_13(%arg0: i32, %arg1: i32) -> (i32, i32, i32) {
    %c0_i32 = arith.constant 0 : i32
    %c0_i32_0 = arith.constant 0 : i32
    %c0_i32_1 = arith.constant 0 : i32
    return %arg1, %c0_i32, %c0_i32_0 : i32, i32, i32
  }
  func.func @transform_14(%arg0: i32, %arg1: i32) -> (i32, i32, i32) {
    %c0_i32 = arith.constant 0 : i32
    %c0_i32_0 = arith.constant 0 : i32
    %c0_i32_1 = arith.constant 0 : i32
    return %arg1, %c0_i32, %c0_i32_0 : i32, i32, i32
  }
  func.func @transform_15(%arg0: i32, %arg1: i32) -> (i32, i32, i32) {
    %c0_i32 = arith.constant 0 : i32
    %c0_i32_0 = arith.constant 0 : i32
    %c0_i32_1 = arith.constant 0 : i32
    return %arg1, %c0_i32, %c0_i32_0 : i32, i32, i32
  }
  func.func @transform_16(%arg0: i32, %arg1: i32) -> (i32, i32, i32) {
    %c0_i32 = arith.constant 0 : i32
    %c0_i32_0 = arith.constant 0 : i32
    %c0_i32_1 = arith.constant 0 : i32
    return %arg1, %c0_i32, %c0_i32_0 : i32, i32, i32
  }
  func.func @transform_17(%arg0: i32, %arg1: i32) -> (i32, i32, i32) {
    %c0_i32 = arith.constant 0 : i32
    %c0_i32_0 = arith.constant 0 : i32
    %c0_i32_1 = arith.constant 0 : i32
    return %arg1, %c0_i32, %c0_i32_0 : i32, i32, i32
  }
  func.func @transform_18(%arg0: i32, %arg1: i32) -> (i32, i32, i32) {
    %c0_i32 = arith.constant 0 : i32
    %c0_i32_0 = arith.constant 0 : i32
    %c0_i32_1 = arith.constant 0 : i32
    return %arg1, %c0_i32, %c0_i32_0 : i32, i32, i32
  }
  func.func @transform_19(%arg0: i32, %arg1: i32) -> (i32, i32) {
    %c0_i32 = arith.constant 0 : i32
    %c0_i32_0 = arith.constant 0 : i32
    %c0_i32_1 = arith.constant 0 : i32
    return %c0_i32, %c0_i32_0 : i32, i32
  }
  func.func @transform_20(%arg0: i32, %arg1: i32) -> (i32, i32) {
    %c0_i32 = arith.constant 0 : i32
    %c0_i32_0 = arith.constant 0 : i32
    %c0_i32_1 = arith.constant 0 : i32
    return %c0_i32, %c0_i32_0 : i32, i32
  }
  func.func @transform_21(%arg0: i32, %arg1: i32) -> (i32, i32, i32) {
    %c0_i32 = arith.constant 0 : i32
    %c0_i32_0 = arith.constant 0 : i32
    %c0_i32_1 = arith.constant 0 : i32
    return %arg0, %c0_i32, %c0_i32_0 : i32, i32, i32
  }
}

</mosaic_0001>

<llo_original>
// kernel: tpu_custom_call.1
$region0: #{tpu_custom_call.1}
  #allocation0 [shape = 'u32[]', space=smem, size = 0x4, offset = 0x4, fixed_abs, tag = 'smem constant byte address 0x4 - core index']
  #allocation1 [shape = 'u32[144,128]{1,0:T(1,128)}', space=vmem, size = 0x12000, scoped, tag = 'internal scratch']
  #allocation2 [shape = 'f32[2,64,128]{2,1,0:T(8,128)}', space=vmem, size = 0x10000, scoped, tag = 'scratch operand']
  %s0 = inlined_call_operand.vmem [shape: f32[2,64,128], index: 0, kind: input, shape index: {}]
  %s1 = inlined_call_operand.vmem [shape: f32[128,16], index: 1, kind: input, shape index: {}]
  %s2 = inlined_call_operand.hbm [shape: f32[1,128], index: 2, kind: input, shape index: {}]
  %s3 = inlined_call_operand.hbm [shape: f32[1,128], index: 3, kind: input, shape index: {}]
  %s4 = inlined_call_operand.hbm [shape: bf16[128,128], index: 4, kind: input, shape index: {}]
  %s5 = inlined_call_operand.hbm [shape: f32[1,128], index: 5, kind: input, shape index: {}]
  %s6 = inlined_call_operand.hbm [shape: f32[2,1,128], index: 6, kind: input, shape index: {}]
  %s7 = inlined_call_operand.hbm [shape: f32[2,1,128], index: 7, kind: input, shape index: {}]
  %s8 = inlined_call_operand.hbm [shape: bf16[2,128,384], index: 8, kind: input, shape index: {}]
  %s9 = inlined_call_operand.hbm [shape: bf16[2,128,128], index: 9, kind: input, shape index: {}]
  %s10 = inlined_call_operand.hbm [shape: f32[2,1,128], index: 10, kind: input, shape index: {}]
  %s11 = inlined_call_operand.hbm [shape: f32[2,1,128], index: 11, kind: input, shape index: {}]
  %s12 = inlined_call_operand.hbm [shape: f32[2,1,128], index: 12, kind: input, shape index: {}]
  %s13 = inlined_call_operand.hbm [shape: bf16[2,128,512], index: 13, kind: input, shape index: {}]
  %s14 = inlined_call_operand.hbm [shape: f32[2,1,512], index: 14, kind: input, shape index: {}]
  %s15 = inlined_call_operand.hbm [shape: bf16[2,128,512], index: 15, kind: input, shape index: {}]
  %s16 = inlined_call_operand.vmem [shape: f32[2,1,512], index: 16, kind: input, shape index: {}]
  %s17 = inlined_call_operand.hbm [shape: bf16[2,512,128], index: 17, kind: input, shape index: {}]
  %s18 = inlined_call_operand.vmem [shape: f32[2,1,128], index: 18, kind: input, shape index: {}]
  %s19 = inlined_call_operand.vmem [shape: bf16[128,128], index: 19, kind: input, shape index: {}]
  %s20 = inlined_call_operand.vmem [shape: f32[1,128], index: 20, kind: input, shape index: {}]
  %s21 = inlined_call_operand.hbm [shape: f32[2,64,128], index: 21, kind: output, shape index: {}]
  %s22 = sld [smem:[#allocation0]]
  $region185: #{tpu_custom_call.1} parent=0
    _
  %s24 = ssub.s32 1, %s22
  %s25 = scalar_select 0, %s24, %s22
  $region1: #{tpu_custom_call.1} parent=0
    #allocation3 [shape = 'u8[512]{0}', space=vmem, size = 0x400, scoped, tag = 'input window, operand 2, single buffered']
    #allocation4 [shape = 's32[2]{0}', space=sflag, size = 0x8, scoped, tag = 'scoped memory for tpu_custom_call.1']
    #allocation5 [shape = 's32[2]{0}', space=sflag, size = 0x8, scoped, tag = 'scoped memory for tpu_custom_call.1']
    #allocation6 [shape = 'u8[512]{0}', space=vmem, size = 0x400, scoped, tag = 'input window, operand 3, single buffered']
    #allocation7 [shape = 's32[1]{0}', space=sflag, size = 0x4, scoped, tag = 'scoped memory for tpu_custom_call.1']
    #allocation8 [shape = 'u8[32768]{0}', space=vmem, size = 0x8000, scoped, tag = 'input window, operand 4, single buffered']
    #allocation9 [shape = 'u8[512]{0}', space=vmem, size = 0x400, scoped, tag = 'input window, operand 5, single buffered']
    #allocation10 [shape = 's32[1]{0}', space=sflag, size = 0x4, scoped, tag = 'scoped memory for tpu_custom_call.1']
    #allocation11 [shape = 'u8[1024]{0}', space=vmem, size = 0x400, scoped, tag = 'input window, operand 6']
    #allocation12 [shape = 'u8[1024]{0}', space=vmem, size = 0x400, scoped, tag = 'input window, operand 7']
    #allocation13 [shape = 'u8[196608]{0}', space=vmem, size = 0x30000, scoped, tag = 'input window, operand 8']
    #allocation14 [shape = 'u8[65536]{0}', space=vmem, size = 0x10000, scoped, tag = 'input window, operand 9']
    #allocation15 [shape = 'u8[1024]{0}', space=vmem, size = 0x400, scoped, tag = 'input window, operand 10']
    #allocation16 [shape = 'u8[1024]{0}', space=vmem, size = 0x400, scoped, tag = 'input window, operand 11']
    #allocation17 [shape = 'u8[1024]{0}', space=vmem, size = 0x400, scoped, tag = 'input window, operand 12']
    #allocation18 [shape = 'u8[262144]{0}', space=vmem, size = 0x40000, scoped, tag = 'input window, operand 13']
    #allocation19 [shape = 'u8[4096]{0}', space=vmem, size = 0x1000, scoped, tag = 'input window, operand 14']
    #allocation20 [shape = 'u8[262144]{0}', space=vmem, size = 0x40000, scoped, tag = 'input window, operand 15']
    #allocation21 [shape = 'u8[262144]{0}', space=vmem, size = 0x40000, scoped, tag = 'input window, operand 17']
    #allocation22 [shape = 'u8[65536]{0}', space=vmem, size = 0x10000, scoped, tag = 'output window, operand 0, single buffered']
    %26 = vsyncpa [#allocation4], 0
    %27 = vsyncpa [#allocation7], 0
    %28 = vsyncpa [#allocation10], 0
    %29 = vsyncpa [#allocation5], 0
    loop: start=0, step=1, limit=4
    $region2: #{tpu_custom_call.1} parent=1 // loop_pre_header
      _
    $region3: #{tpu_custom_call.1} parent=1 // loop_header
      %s31 = sphi 0, %s35
      %p32 = scmp.ge.s32.totalorder %s31, 4
      %s38 = sphi 0, %s50
      %s39 = sphi 0, %s46
      %s40 = sphi 0, %s38
      %s41 = sphi 0, %s39
      %s42 = sphi 0, %s40
      %s43 = sphi 0, %s41
      %s53 = sphi 0, %s55
      %s56 = sphi 0, %s53
      %s57 = sphi 0, %s56
      %s73 = sphi 0, %s57
      %s77 = sphi 0, %s77
      %s79 = sphi 0, %s77
      %s80 = sphi 0, %s79
      %s94 = sphi 0, %s80
      %s98 = sphi 0, %s98
      %s100 = sphi 0, %s98
      %s101 = sphi 0, %s100
      %s115 = sphi 0, %s101
      %s119 = sphi 0, %s119
      %s121 = sphi 0, %s119
      %s122 = sphi 0, %s121
      %s136 = sphi 0, %s122
      %s140 = sphi 0, %s140
      %s142 = sphi 0, %s140
      %s143 = sphi 0, %s142
      %s157 = sphi 0, %s143
      %s161 = sphi 0, %s161
      %s163 = sphi 0, %s161
      %s164 = sphi 0, %s163
      %s178 = sphi 0, %s164
      %s184 = sphi 0, %s186
      %s187 = sphi 0, %s184
      %s188 = sphi 0, %s187
      %s204 = sphi 0, %s188
      %s210 = sphi 0, %s212
      %s213 = sphi 0, %s210
      %s214 = sphi 0, %s213
      %s230 = sphi 0, %s214
      %s236 = sphi 0, %s238
      %s239 = sphi 0, %s236
      %s240 = sphi 0, %s239
      %s256 = sphi 0, %s240
      %s262 = sphi 0, %s264
      %s265 = sphi 0, %s262
      %s266 = sphi 0, %s265
      %s282 = sphi 0, %s266
      %s288 = sphi 0, %s290
      %s291 = sphi 0, %s288
      %s292 = sphi 0, %s291
      %s308 = sphi 0, %s292
      %s314 = sphi 0, %s316
      %s317 = sphi 0, %s314
      %s318 = sphi 0, %s317
      %s334 = sphi 0, %s318
      %s340 = sphi 0, %s342
      %s343 = sphi 0, %s340
      %s344 = sphi 0, %s343
      %s360 = sphi 0, %s344
      %s366 = sphi 0, %s368
      %s369 = sphi 0, %s366
      %s370 = sphi 0, %s369
      %s386 = sphi 0, %s370
      %s392 = sphi 0, %s394
      %s395 = sphi 0, %s392
      %s396 = sphi 0, %s395
      %s412 = sphi 0, %s396
      %s418 = sphi 0, %s420
      %s421 = sphi 0, %s418
      %s422 = sphi 0, %s421
      %s438 = sphi 0, %s422
      %s444 = sphi 0, %s446
      %s447 = sphi 0, %s444
      %s448 = sphi 0, %s447
      %s464 = sphi 0, %s448
      %s470 = sphi 0, %s472
      %s473 = sphi 0, %s470
      %s474 = sphi 0, %s473
      %s490 = sphi 0, %s474
      %s496 = sphi 0, %s498
      %s499 = sphi 0, %s496
      %s500 = sphi 0, %s499
      %s516 = sphi 0, %s500
      %s520 = sphi 0, %s520
      %s522 = sphi 0, %s520
      %s523 = sphi 0, %s522
      %s537 = sphi 0, %s523
      %s541 = sphi 0, %s541
      %s543 = sphi 0, %s541
      %s544 = sphi 0, %s543
      %s558 = sphi 0, %s544
      %s564 = sphi 0, %s566
      %s567 = sphi 0, %s564
      %s568 = sphi 0, %s567
      %s584 = sphi 0, %s568
    $region4: #{tpu_custom_call.1} parent=1 // loop_header_branch
      %34 = sbr.rel (%p32) target = $region8
    $region5: #{tpu_custom_call.1} parent=1 // loop_body
      %s36 = ssub.s32 %s31, 1
      %s37 = ssub.s32 %s31, 2
      %s44 = sadd.s32 1, %s39
      %p45 = scmp.ge.s32.totalorder %s44, 2
      %s46 = scalar_select %p45, 0, %s44
      %s47 = sadd.s32 1, %s38
      %s48 = scalar_select %p45, %s47, %s38
      %p49 = scmp.ge.s32.totalorder %s48, 1
      %s50 = scalar_select %p49, 0, %s48
      %s51 = ssub.s32 %s38, %s50
      %p52 = scmp.eq.s32.totalorder %s51, 0
      %s54 = sadd.s32 %s53, 1
      %s55 = scalar_select %p52, %s53, %s54
      %p58 = pneg %p52
      %p59 = scmp.eq.s32.totalorder %s31, 1
      %p60 = por %p58, %p59
      %p61 = scmp.ne.s32.totalorder %s53, %s56
      %p62 = scmp.eq.s32.totalorder %s31, 0
      %p63 = por %p61, %p62
      %p64 = scmp.ne.s32.totalorder %s53, %s56
      %p65 = scmp.eq.s32.totalorder %s36, 1
      %p66 = por %p64, %p65
      %p67 = scmp.ne.s32.totalorder %s56, %s57
      %p68 = scmp.eq.s32.totalorder %s36, 0
      %p69 = por %p67, %p68
      %p70 = scmp.ne.s32.totalorder %s56, %s57
      %p71 = scmp.eq.s32.totalorder %s37, 1
      %p72 = por %p70, %p71
      %p74 = scmp.ne.s32.totalorder %s57, %s73
      %p75 = scmp.eq.s32.totalorder %s37, 0
      %p76 = por %p74, %p75
      %s78 = sadd.s32 %s77, 1
      %p81 = scmp.eq.s32.totalorder %s31, 1
      %p82 = scmp.ne.s32.totalorder %s77, %s79
      %p83 = scmp.eq.s32.totalorder %s31, 0
      %p84 = por %p82, %p83
      %p85 = scmp.ne.s32.totalorder %s77, %s79
      %p86 = scmp.eq.s32.totalorder %s36, 1
      %p87 = por %p85, %p86
      %p88 = scmp.ne.s32.totalorder %s79, %s80
      %p89 = scmp.eq.s32.totalorder %s36, 0
      %p90 = por %p88, %p89
      %p91 = scmp.ne.s32.totalorder %s79, %s80
      %p92 = scmp.eq.s32.totalorder %s37, 1
      %p93 = por %p91, %p92
      %p95 = scmp.ne.s32.totalorder %s80, %s94
      %p96 = scmp.eq.s32.totalorder %s37, 0
      %p97 = por %p95, %p96
      %s99 = sadd.s32 %s98, 1
      %p102 = scmp.eq.s32.totalorder %s31, 1
      %p103 = scmp.ne.s32.totalorder %s98, %s100
      %p104 = scmp.eq.s32.totalorder %s31, 0
      %p105 = por %p103, %p104
      %p106 = scmp.ne.s32.totalorder %s98, %s100
      %p107 = scmp.eq.s32.totalorder %s36, 1
      %p108 = por %p106, %p107
      %p109 = scmp.ne.s32.totalorder %s100, %s101
      %p110 = scmp.eq.s32.totalorder %s36, 0
      %p111 = por %p109, %p110
      %p112 = scmp.ne.s32.totalorder %s100, %s101
      %p113 = scmp.eq.s32.totalorder %s37, 1
      %p114 = por %p112, %p113
      %p116 = scmp.ne.s32.totalorder %s101, %s115
      %p117 = scmp.eq.s32.totalorder %s37, 0
      %p118 = por %p116, %p117
      %s120 = sadd.s32 %s119, 1
      %p123 = scmp.eq.s32.totalorder %s31, 1
      %p124 = scmp.ne.s32.totalorder %s119, %s121
      %p125 = scmp.eq.s32.totalorder %s31, 0
      %p126 = por %p124, %p125
      %p127 = scmp.ne.s32.totalorder %s119, %s121
      %p128 = scmp.eq.s32.totalorder %s36, 1
      %p129 = por %p127, %p128
      %p130 = scmp.ne.s32.totalorder %s121, %s122
      %p131 = scmp.eq.s32.totalorder %s36, 0
      %p132 = por %p130, %p131
      %p133 = scmp.ne.s32.totalorder %s121, %s122
      %p134 = scmp.eq.s32.totalorder %s37, 1
      %p135 = por %p133, %p134
      %p137 = scmp.ne.s32.totalorder %s122, %s136
      %p138 = scmp.eq.s32.totalorder %s37, 0
      %p139 = por %p137, %p138
      %s141 = sadd.s32 %s140, 1
      %p144 = scmp.eq.s32.totalorder %s31, 1
      %p145 = scmp.ne.s32.totalorder %s140, %s142
      %p146 = scmp.eq.s32.totalorder %s31, 0
      %p147 = por %p145, %p146
      %p148 = scmp.ne.s32.totalorder %s140, %s142
      %p149 = scmp.eq.s32.totalorder %s36, 1
      %p150 = por %p148, %p149
      %p151 = scmp.ne.s32.totalorder %s142, %s143
      %p152 = scmp.eq.s32.totalorder %s36, 0
      %p153 = por %p151, %p152
      %p154 = scmp.ne.s32.totalorder %s142, %s143
      %p155 = scmp.eq.s32.totalorder %s37, 1
      %p156 = por %p154, %p155
      %p158 = scmp.ne.s32.totalorder %s143, %s157
      %p159 = scmp.eq.s32.totalorder %s37, 0
      %p160 = por %p158, %p159
      %s162 = sadd.s32 %s161, 1
      %p165 = scmp.eq.s32.totalorder %s31, 1
      %p166 = scmp.ne.s32.totalorder %s161, %s163
      %p167 = scmp.eq.s32.totalorder %s31, 0
      %p168 = por %p166, %p167
      %p169 = scmp.ne.s32.totalorder %s161, %s163
      %p170 = scmp.eq.s32.totalorder %s36, 1
      %p171 = por %p169, %p170
      %p172 = scmp.ne.s32.totalorder %s163, %s164
      %p173 = scmp.eq.s32.totalorder %s36, 0
      %p174 = por %p172, %p173
      %p175 = scmp.ne.s32.totalorder %s163, %s164
      %p176 = scmp.eq.s32.totalorder %s37, 1
      %p177 = por %p175, %p176
      %p179 = scmp.ne.s32.totalorder %s164, %s178
      %p180 = scmp.eq.s32.totalorder %s37, 0
      %p181 = por %p179, %p180
      %s182 = ssub.s32 %s39, %s46
      %p183 = scmp.eq.s32.totalorder %s182, 0
      %s185 = sadd.s32 %s184, 1
      %s186 = scalar_select %p183, %s184, %s185
      %p189 = pneg %p183
      %p190 = scmp.eq.s32.totalorder %s31, 1
      %p191 = por %p189, %p190
      %p192 = scmp.ne.s32.totalorder %s184, %s187
      %p193 = scmp.eq.s32.totalorder %s31, 0
      %p194 = por %p192, %p193
      %p195 = scmp.ne.s32.totalorder %s184, %s187
      %p196 = scmp.eq.s32.totalorder %s36, 1
      %p197 = por %p195, %p196
      %p198 = scmp.ne.s32.totalorder %s187, %s188
      %p199 = scmp.eq.s32.totalorder %s36, 0
      %p200 = por %p198, %p199
      %p201 = scmp.ne.s32.totalorder %s187, %s188
      %p202 = scmp.eq.s32.totalorder %s37, 1
      %p203 = por %p201, %p202
      %p205 = scmp.ne.s32.totalorder %s188, %s204
      %p206 = scmp.eq.s32.totalorder %s37, 0
      %p207 = por %p205, %p206
      %s208 = ssub.s32 %s39, %s46
      %p209 = scmp.eq.s32.totalorder %s208, 0
      %s211 = sadd.s32 %s210, 1
      %s212 = scalar_select %p209, %s210, %s211
      %p215 = pneg %p209
      %p216 = scmp.eq.s32.totalorder %s31, 1
      %p217 = por %p215, %p216
      %p218 = scmp.ne.s32.totalorder %s210, %s213
      %p219 = scmp.eq.s32.totalorder %s31, 0
      %p220 = por %p218, %p219
      %p221 = scmp.ne.s32.totalorder %s210, %s213
      %p222 = scmp.eq.s32.totalorder %s36, 1
      %p223 = por %p221, %p222
      %p224 = scmp.ne.s32.totalorder %s213, %s214
      %p225 = scmp.eq.s32.totalorder %s36, 0
      %p226 = por %p224, %p225
      %p227 = scmp.ne.s32.totalorder %s213, %s214
      %p228 = scmp.eq.s32.totalorder %s37, 1
      %p229 = por %p227, %p228
      %p231 = scmp.ne.s32.totalorder %s214, %s230
      %p232 = scmp.eq.s32.totalorder %s37, 0
      %p233 = por %p231, %p232
      %s234 = ssub.s32 %s39, %s46
      %p235 = scmp.eq.s32.totalorder %s234, 0
      %s237 = sadd.s32 %s236, 1
      %s238 = scalar_select %p235, %s236, %s237
      %p241 = pneg %p235
      %p242 = scmp.eq.s32.totalorder %s31, 1
      %p243 = por %p241, %p242
      %p244 = scmp.ne.s32.totalorder %s236, %s239
      %p245 = scmp.eq.s32.totalorder %s31, 0
      %p246 = por %p244, %p245
      %p247 = scmp.ne.s32.totalorder %s236, %s239
      %p248 = scmp.eq.s32.totalorder %s36, 1
      %p249 = por %p247, %p248
      %p250 = scmp.ne.s32.totalorder %s239, %s240
      %p251 = scmp.eq.s32.totalorder %s36, 0
      %p252 = por %p250, %p251
      %p253 = scmp.ne.s32.totalorder %s239, %s240
      %p254 = scmp.eq.s32.totalorder %s37, 1
      %p255 = por %p253, %p254
      %p257 = scmp.ne.s32.totalorder %s240, %s256
      %p258 = scmp.eq.s32.totalorder %s37, 0
      %p259 = por %p257, %p258
      %s260 = ssub.s32 %s39, %s46
      %p261 = scmp.eq.s32.totalorder %s260, 0
      %s263 = sadd.s32 %s262, 1
      %s264 = scalar_select %p261, %s262, %s263
      %p267 = pneg %p261
      %p268 = scmp.eq.s32.totalorder %s31, 1
      %p269 = por %p267, %p268
      %p270 = scmp.ne.s32.totalorder %s262, %s265
      %p271 = scmp.eq.s32.totalorder %s31, 0
      %p272 = por %p270, %p271
      %p273 = scmp.ne.s32.totalorder %s262, %s265
      %p274 = scmp.eq.s32.totalorder %s36, 1
      %p275 = por %p273, %p274
      %p276 = scmp.ne.s32.totalorder %s265, %s266
      %p277 = scmp.eq.s32.totalorder %s36, 0
      %p278 = por %p276, %p277
      %p279 = scmp.ne.s32.totalorder %s265, %s266
      %p280 = scmp.eq.s32.totalorder %s37, 1
      %p281 = por %p279, %p280
      %p283 = scmp.ne.s32.totalorder %s266, %s282
      %p284 = scmp.eq.s32.totalorder %s37, 0
      %p285 = por %p283, %p284
      %s286 = ssub.s32 %s39, %s46
      %p287 = scmp.eq.s32.totalorder %s286, 0
      %s289 = sadd.s32 %s288, 1
      %s290 = scalar_select %p287, %s288, %s289
      %p293 = pneg %p287
      %p294 = scmp.eq.s32.totalorder %s31, 1
      %p295 = por %p293, %p294
      %p296 = scmp.ne.s32.totalorder %s288, %s291
      %p297 = scmp.eq.s32.totalorder %s31, 0
      %p298 = por %p296, %p297
      %p299 = scmp.ne.s32.totalorder %s288, %s291
      %p300 = scmp.eq.s32.totalorder %s36, 1
      %p301 = por %p299, %p300
      %p302 = scmp.ne.s32.totalorder %s291, %s292
      %p303 = scmp.eq.s32.totalorder %s36, 0
      %p304 = por %p302, %p303
      %p305 = scmp.ne.s32.totalorder %s291, %s292
      %p306 = scmp.eq.s32.totalorder %s37, 1
      %p307 = por %p305, %p306
      %p309 = scmp.ne.s32.totalorder %s292, %s308
      %p310 = scmp.eq.s32.totalorder %s37, 0
      %p311 = por %p309, %p310
      %s312 = ssub.s32 %s39, %s46
      %p313 = scmp.eq.s32.totalorder %s312, 0
      %s315 = sadd.s32 %s314, 1
      %s316 = scalar_select %p313, %s314, %s315
      %p319 = pneg %p313
      %p320 = scmp.eq.s32.totalorder %s31, 1
      %p321 = por %p319, %p320
      %p322 = scmp.ne.s32.totalorder %s314, %s317
      %p323 = scmp.eq.s32.totalorder %s31, 0
      %p324 = por %p322, %p323
      %p325 = scmp.ne.s32.totalorder %s314, %s317
      %p326 = scmp.eq.s32.totalorder %s36, 1
      %p327 = por %p325, %p326
      %p328 = scmp.ne.s32.totalorder %s317, %s318
      %p329 = scmp.eq.s32.totalorder %s36, 0
      %p330 = por %p328, %p329
      %p331 = scmp.ne.s32.totalorder %s317, %s318
      %p332 = scmp.eq.s32.totalorder %s37, 1
      %p333 = por %p331, %p332
      %p335 = scmp.ne.s32.totalorder %s318, %s334
      %p336 = scmp.eq.s32.totalorder %s37, 0
      %p337 = por %p335, %p336
      %s338 = ssub.s32 %s39, %s46
      %p339 = scmp.eq.s32.totalorder %s338, 0
      %s341 = sadd.s32 %s340, 1
      %s342 = scalar_select %p339, %s340, %s341
      %p345 = pneg %p339
      %p346 = scmp.eq.s32.totalorder %s31, 1
      %p347 = por %p345, %p346
      %p348 = scmp.ne.s32.totalorder %s340, %s343
      %p349 = scmp.eq.s32.totalorder %s31, 0
      %p350 = por %p348, %p349
      %p351 = scmp.ne.s32.totalorder %s340, %s343
      %p352 = scmp.eq.s32.totalorder %s36, 1
      %p353 = por %p351, %p352
      %p354 = scmp.ne.s32.totalorder %s343, %s344
      %p355 = scmp.eq.s32.totalorder %s36, 0
      %p356 = por %p354, %p355
      %p357 = scmp.ne.s32.totalorder %s343, %s344
      %p358 = scmp.eq.s32.totalorder %s37, 1
      %p359 = por %p357, %p358
      %p361 = scmp.ne.s32.totalorder %s344, %s360
      %p362 = scmp.eq.s32.totalorder %s37, 0
      %p363 = por %p361, %p362
      %s364 = ssub.s32 %s39, %s46
      %p365 = scmp.eq.s32.totalorder %s364, 0
      %s367 = sadd.s32 %s366, 1
      %s368 = scalar_select %p365, %s366, %s367
      %p371 = pneg %p365
      %p372 = scmp.eq.s32.totalorder %s31, 1
      %p373 = por %p371, %p372
      %p374 = scmp.ne.s32.totalorder %s366, %s369
      %p375 = scmp.eq.s32.totalorder %s31, 0
      %p376 = por %p374, %p375
      %p377 = scmp.ne.s32.totalorder %s366, %s369
      %p378 = scmp.eq.s32.totalorder %s36, 1
      %p379 = por %p377, %p378
      %p380 = scmp.ne.s32.totalorder %s369, %s370
      %p381 = scmp.eq.s32.totalorder %s36, 0
      %p382 = por %p380, %p381
      %p383 = scmp.ne.s32.totalorder %s369, %s370
      %p384 = scmp.eq.s32.totalorder %s37, 1
      %p385 = por %p383, %p384
      %p387 = scmp.ne.s32.totalorder %s370, %s386
      %p388 = scmp.eq.s32.totalorder %s37, 0
      %p389 = por %p387, %p388
      %s390 = ssub.s32 %s39, %s46
      %p391 = scmp.eq.s32.totalorder %s390, 0
      %s393 = sadd.s32 %s392, 1
      %s394 = scalar_select %p391, %s392, %s393
      %p397 = pneg %p391
      %p398 = scmp.eq.s32.totalorder %s31, 1
      %p399 = por %p397, %p398
      %p400 = scmp.ne.s32.totalorder %s392, %s395
      %p401 = scmp.eq.s32.totalorder %s31, 0
      %p402 = por %p400, %p401
      %p403 = scmp.ne.s32.totalorder %s392, %s395
      %p404 = scmp.eq.s32.totalorder %s36, 1
      %p405 = por %p403, %p404
      %p406 = scmp.ne.s32.totalorder %s395, %s396
      %p407 = scmp.eq.s32.totalorder %s36, 0
      %p408 = por %p406, %p407
      %p409 = scmp.ne.s32.totalorder %s395, %s396
      %p410 = scmp.eq.s32.totalorder %s37, 1
      %p411 = por %p409, %p410
      %p413 = scmp.ne.s32.totalorder %s396, %s412
      %p414 = scmp.eq.s32.totalorder %s37, 0
      %p415 = por %p413, %p414
      %s416 = ssub.s32 %s39, %s46
      %p417 = scmp.eq.s32.totalorder %s416, 0
      %s419 = sadd.s32 %s418, 1
      %s420 = scalar_select %p417, %s418, %s419
      %p423 = pneg %p417
      %p424 = scmp.eq.s32.totalorder %s31, 1
      %p425 = por %p423, %p424
      %p426 = scmp.ne.s32.totalorder %s418, %s421
      %p427 = scmp.eq.s32.totalorder %s31, 0
      %p428 = por %p426, %p427
      %p429 = scmp.ne.s32.totalorder %s418, %s421
      %p430 = scmp.eq.s32.totalorder %s36, 1
      %p431 = por %p429, %p430
      %p432 = scmp.ne.s32.totalorder %s421, %s422
      %p433 = scmp.eq.s32.totalorder %s36, 0
      %p434 = por %p432, %p433
      %p435 = scmp.ne.s32.totalorder %s421, %s422
      %p436 = scmp.eq.s32.totalorder %s37, 1
      %p437 = por %p435, %p436
      %p439 = scmp.ne.s32.totalorder %s422, %s438
      %p440 = scmp.eq.s32.totalorder %s37, 0
      %p441 = por %p439, %p440
      %s442 = ssub.s32 %s39, %s46
      %p443 = scmp.eq.s32.totalorder %s442, 0
      %s445 = sadd.s32 %s444, 1
      %s446 = scalar_select %p443, %s444, %s445
      %p449 = pneg %p443
      %p450 = scmp.eq.s32.totalorder %s31, 1
      %p451 = por %p449, %p450
      %p452 = scmp.ne.s32.totalorder %s444, %s447
      %p453 = scmp.eq.s32.totalorder %s31, 0
      %p454 = por %p452, %p453
      %p455 = scmp.ne.s32.totalorder %s444, %s447
      %p456 = scmp.eq.s32.totalorder %s36, 1
      %p457 = por %p455, %p456
      %p458 = scmp.ne.s32.totalorder %s447, %s448
      %p459 = scmp.eq.s32.totalorder %s36, 0
      %p460 = por %p458, %p459
      %p461 = scmp.ne.s32.totalorder %s447, %s448
      %p462 = scmp.eq.s32.totalorder %s37, 1
      %p463 = por %p461, %p462
      %p465 = scmp.ne.s32.totalorder %s448, %s464
      %p466 = scmp.eq.s32.totalorder %s37, 0
      %p467 = por %p465, %p466
      %s468 = ssub.s32 %s39, %s46
      %p469 = scmp.eq.s32.totalorder %s468, 0
      %s471 = sadd.s32 %s470, 1
      %s472 = scalar_select %p469, %s470, %s471
      %p475 = pneg %p469
      %p476 = scmp.eq.s32.totalorder %s31, 1
      %p477 = por %p475, %p476
      %p478 = scmp.ne.s32.totalorder %s470, %s473
      %p479 = scmp.eq.s32.totalorder %s31, 0
      %p480 = por %p478, %p479
      %p481 = scmp.ne.s32.totalorder %s470, %s473
      %p482 = scmp.eq.s32.totalorder %s36, 1
      %p483 = por %p481, %p482
      %p484 = scmp.ne.s32.totalorder %s473, %s474
      %p485 = scmp.eq.s32.totalorder %s36, 0
      %p486 = por %p484, %p485
      %p487 = scmp.ne.s32.totalorder %s473, %s474
      %p488 = scmp.eq.s32.totalorder %s37, 1
      %p489 = por %p487, %p488
      %p491 = scmp.ne.s32.totalorder %s474, %s490
      %p492 = scmp.eq.s32.totalorder %s37, 0
      %p493 = por %p491, %p492
      %s494 = ssub.s32 %s39, %s46
      %p495 = scmp.eq.s32.totalorder %s494, 0
      %s497 = sadd.s32 %s496, 1
      %s498 = scalar_select %p495, %s496, %s497
      %p501 = pneg %p495
      %p502 = scmp.eq.s32.totalorder %s31, 1
      %p503 = por %p501, %p502
      %p504 = scmp.ne.s32.totalorder %s496, %s499
      %p505 = scmp.eq.s32.totalorder %s31, 0
      %p506 = por %p504, %p505
      %p507 = scmp.ne.s32.totalorder %s496, %s499
      %p508 = scmp.eq.s32.totalorder %s36, 1
      %p509 = por %p507, %p508
      %p510 = scmp.ne.s32.totalorder %s499, %s500
      %p511 = scmp.eq.s32.totalorder %s36, 0
      %p512 = por %p510, %p511
      %p513 = scmp.ne.s32.totalorder %s499, %s500
      %p514 = scmp.eq.s32.totalorder %s37, 1
      %p515 = por %p513, %p514
      %p517 = scmp.ne.s32.totalorder %s500, %s516
      %p518 = scmp.eq.s32.totalorder %s37, 0
      %p519 = por %p517, %p518
      %s521 = sadd.s32 %s520, 1
      %p524 = scmp.eq.s32.totalorder %s31, 1
      %p525 = scmp.ne.s32.totalorder %s520, %s522
      %p526 = scmp.eq.s32.totalorder %s31, 0
      %p527 = por %p525, %p526
      %p528 = scmp.ne.s32.totalorder %s520, %s522
      %p529 = scmp.eq.s32.totalorder %s36, 1
      %p530 = por %p528, %p529
      %p531 = scmp.ne.s32.totalorder %s522, %s523
      %p532 = scmp.eq.s32.totalorder %s36, 0
      %p533 = por %p531, %p532
      %p534 = scmp.ne.s32.totalorder %s522, %s523
      %p535 = scmp.eq.s32.totalorder %s37, 1
      %p536 = por %p534, %p535
      %p538 = scmp.ne.s32.totalorder %s523, %s537
      %p539 = scmp.eq.s32.totalorder %s37, 0
      %p540 = por %p538, %p539
      %s542 = sadd.s32 %s541, 1
      %p545 = scmp.eq.s32.totalorder %s31, 1
      %p546 = scmp.ne.s32.totalorder %s541, %s543
      %p547 = scmp.eq.s32.totalorder %s31, 0
      %p548 = por %p546, %p547
      %p549 = scmp.ne.s32.totalorder %s541, %s543
      %p550 = scmp.eq.s32.totalorder %s36, 1
      %p551 = por %p549, %p550
      %p552 = scmp.ne.s32.totalorder %s543, %s544
      %p553 = scmp.eq.s32.totalorder %s36, 0
      %p554 = por %p552, %p553
      %p555 = scmp.ne.s32.totalorder %s543, %s544
      %p556 = scmp.eq.s32.totalorder %s37, 1
      %p557 = por %p555, %p556
      %p559 = scmp.ne.s32.totalorder %s544, %s558
      %p560 = scmp.eq.s32.totalorder %s37, 0
      %p561 = por %p559, %p560
      %s562 = ssub.s32 %s38, %s50
      %p563 = scmp.eq.s32.totalorder %s562, 0
      %s565 = sadd.s32 %s564, 1
      %s566 = scalar_select %p563, %s564, %s565
      %p569 = pneg %p563
      %p570 = scmp.eq.s32.totalorder %s31, 1
      %p571 = por %p569, %p570
      %p572 = scmp.ne.s32.totalorder %s564, %s567
      %p573 = scmp.eq.s32.totalorder %s31, 0
      %p574 = por %p572, %p573
      %p575 = scmp.ne.s32.totalorder %s564, %s567
      %p576 = scmp.eq.s32.totalorder %s36, 1
      %p577 = por %p575, %p576
      %p578 = scmp.ne.s32.totalorder %s567, %s568
      %p579 = scmp.eq.s32.totalorder %s36, 0
      %p580 = por %p578, %p579
      %p581 = scmp.ne.s32.totalorder %s567, %s568
      %p582 = scmp.eq.s32.totalorder %s37, 1
      %p583 = por %p581, %p582
      %p585 = scmp.ne.s32.totalorder %s568, %s584
      %p586 = scmp.eq.s32.totalorder %s37, 0
      %p587 = por %p585, %p586
      %p588 = scmp.le.s32.totalorder 1, %s31
      %p589 = scmp.lt.s32.totalorder %s31, 3
      %p590 = pnand %p588, %p589
      %p591 = pneg %p590
      // Predicated region
      $region9: #{tpu_custom_call.1} parent=5 // pred_check
        _
      $region10: #{tpu_custom_call.1} parent=5 // pred_check_branch
        %593 = sbr.rel (%p590) target = $region12
      $region11: #{tpu_custom_call.1} parent=5 // pred_region
        %s594 = ssub.s32 %s31, 1
        // Predicated region
        $region13: #{tpu_custom_call.1} parent=11 // pred_check
          %p595 = pneg %p69
        $region14: #{tpu_custom_call.1} parent=11 // pred_check_branch
          %597 = sbr.rel (%p595) target = $region16
        $region15: #{tpu_custom_call.1} parent=11 // pred_region
          %s598 = smul.u32 2, %s40
          %p599 = scmp.lt.s32.totalorder %s598, 1
          %s600 = scalar_select %p599, %s598, 1
          %s601 = smul.addr %s600, 8
          %s602 = smul.addr %s601, 8
          %s603 = scalar_lea.vmem %s0, %s602
          %s604 = smul.u32 2, %s40
        $region16: #{tpu_custom_call.1} parent=11 // pred_fallthru
          _
        // Predicated region
        $region17: #{tpu_custom_call.1} parent=11 // pred_check
          %p605 = pneg %p90
        $region18: #{tpu_custom_call.1} parent=11 // pred_check_branch
          %607 = sbr.rel (%p605) target = $region20
        $region19: #{tpu_custom_call.1} parent=11 // pred_region
          _
        $region20: #{tpu_custom_call.1} parent=11 // pred_fallthru
          _
        // Predicated region
        $region21: #{tpu_custom_call.1} parent=11 // pred_check
          %p608 = pneg %p111
        $region22: #{tpu_custom_call.1} parent=11 // pred_check_branch
          %610 = sbr.rel (%p608) target = $region24
        $region23: #{tpu_custom_call.1} parent=11 // pred_region
          %s612 = ssub.s32 16, 16
          %613 = vsyncadd [#allocation4], %s612
          %s615 = sshll.u32 [#allocation3], 4
          %s616 = int_to_ptr.vmem [resolvable:$true] %s615
          %618 = dma.hbm_to_vmem [thread:$0]  %s2, 16, %s616, [#allocation4]
        $region24: #{tpu_custom_call.1} parent=11 // pred_fallthru
          _
        // Predicated region
        $region25: #{tpu_custom_call.1} parent=11 // pred_check
          %p619 = pneg %p132
        $region26: #{tpu_custom_call.1} parent=11 // pred_check_branch
          %621 = sbr.rel (%p619) target = $region28
        $region27: #{tpu_custom_call.1} parent=11 // pred_region
          %s623 = ssub.s32 16, 16
          %624 = vsyncadd [#allocation7], %s623
          %s626 = sshll.u32 [#allocation6], 4
          %s627 = int_to_ptr.vmem [resolvable:$true] %s626
          %629 = dma.hbm_to_vmem [thread:$0]  %s3, 16, %s627, [#allocation7]
        $region28: #{tpu_custom_call.1} parent=11 // pred_fallthru
          _
        // Predicated region
        $region29: #{tpu_custom_call.1} parent=11 // pred_check
          %p630 = pneg %p153
        $region30: #{tpu_custom_call.1} parent=11 // pred_check_branch
          %632 = sbr.rel (%p630) target = $region32
        $region31: #{tpu_custom_call.1} parent=11 // pred_region
          %s634 = ssub.s32 1024, 1024
          %635 = vsyncadd [#allocation7], %s634
          %s636 = sshll.u32 [#allocation8], 4
          %s637 = int_to_ptr.vmem [resolvable:$true] %s636
          %642 = dma.hbm_to_vmem [thread:$0]  %s4, 1024, %s637, [#allocation7], 64, 64, 4
        $region32: #{tpu_custom_call.1} parent=11 // pred_fallthru
          _
        // Predicated region
        $region33: #{tpu_custom_call.1} parent=11 // pred_check
          %p643 = pneg %p174
        $region34: #{tpu_custom_call.1} parent=11 // pred_check_branch
          %645 = sbr.rel (%p643) target = $region36
        $region35: #{tpu_custom_call.1} parent=11 // pred_region
          %s647 = ssub.s32 16, 16
          %648 = vsyncadd [#allocation10], %s647
          %s650 = sshll.u32 [#allocation9], 4
          %s651 = int_to_ptr.vmem [resolvable:$true] %s650
          %653 = dma.hbm_to_vmem [thread:$0]  %s5, 16, %s651, [#allocation10]
        $region36: #{tpu_custom_call.1} parent=11 // pred_fallthru
          _
        // Predicated region
        $region37: #{tpu_custom_call.1} parent=11 // pred_check
          %p654 = pneg %p533
        $region38: #{tpu_custom_call.1} parent=11 // pred_check_branch
          %656 = sbr.rel (%p654) target = $region40
        $region39: #{tpu_custom_call.1} parent=11 // pred_region
          _
        $region40: #{tpu_custom_call.1} parent=11 // pred_fallthru
          _
        // Predicated region
        $region41: #{tpu_custom_call.1} parent=11 // pred_check
          %p657 = pneg %p554
        $region42: #{tpu_custom_call.1} parent=11 // pred_check_branch
          %659 = sbr.rel (%p657) target = $region44
        $region43: #{tpu_custom_call.1} parent=11 // pred_region
          _
        $region44: #{tpu_custom_call.1} parent=11 // pred_fallthru
          _
      $region12: #{tpu_custom_call.1} parent=5 // pred_fallthru
        _
      %p660 = scmp.lt.s32.totalorder %s31, 2
      // Predicated region
      $region45: #{tpu_custom_call.1} parent=5 // pred_check
        %p661 = pneg %p660
      $region46: #{tpu_custom_call.1} parent=5 // pred_check_branch
        %663 = sbr.rel (%p661) target = $region48
      $region47: #{tpu_custom_call.1} parent=5 // pred_region
        // Predicated region
        $region49: #{tpu_custom_call.1} parent=47 // pred_check
          %p664 = pneg %p194
        $region50: #{tpu_custom_call.1} parent=47 // pred_check_branch
          %666 = sbr.rel (%p664) target = $region52
        $region51: #{tpu_custom_call.1} parent=47 // pred_region
          %s667 = sand.u32 %s31, 1
          %s668 = scalar_lea.sflag [#allocation4], %s667
          %s669 = sand.u32 %s184, 1
          %s670 = scalar_lea.vmem [#allocation11], %s669
          %s672 = ssub.s32 16, 16
          %673 = vsyncadd %s668, %s672
          %s674 = smul.addr %s39, 16
          %s675 = scalar_lea.hbm %s6, %s674
          %s677 = sshll.u32 %s670, 4
          %s678 = int_to_ptr.vmem [resolvable:$true] %s677
          %680 = dma.hbm_to_vmem [thread:$0]  %s675, 16, %s678, %s668
        $region52: #{tpu_custom_call.1} parent=47 // pred_fallthru
          _
        // Predicated region
        $region53: #{tpu_custom_call.1} parent=47 // pred_check
          %p681 = pneg %p220
        $region54: #{tpu_custom_call.1} parent=47 // pred_check_branch
          %683 = sbr.rel (%p681) target = $region56
        $region55: #{tpu_custom_call.1} parent=47 // pred_region
          %s684 = sand.u32 %s31, 1
          %s685 = scalar_lea.sflag [#allocation4], %s684
          %s686 = sand.u32 %s210, 1
          %s687 = scalar_lea.vmem [#allocation12], %s686
          %s689 = ssub.s32 16, 16
          %690 = vsyncadd %s685, %s689
          %s691 = smul.addr %s39, 16
          %s692 = scalar_lea.hbm %s7, %s691
          %s694 = sshll.u32 %s687, 4
          %s695 = int_to_ptr.vmem [resolvable:$true] %s694
          %697 = dma.hbm_to_vmem [thread:$0]  %s692, 16, %s695, %s685
        $region56: #{tpu_custom_call.1} parent=47 // pred_fallthru
          _
        // Predicated region
        $region57: #{tpu_custom_call.1} parent=47 // pred_check
          %p698 = pneg %p246
        $region58: #{tpu_custom_call.1} parent=47 // pred_check_branch
          %700 = sbr.rel (%p698) target = $region60
        $region59: #{tpu_custom_call.1} parent=47 // pred_region
          %s701 = sand.u32 %s31, 1
          %s702 = scalar_lea.sflag [#allocation4], %s701
          %s703 = sand.u32 %s236, 1
          %s704 = smul.addr %s703, 192
          %s705 = scalar_lea.vmem [#allocation13], %s704
          %s707 = ssub.s32 3072, 3072
          %708 = vsyncadd %s702, %s707
          %s709 = smul.addr %s39, 48
          %s710 = smul.addr %s709, 64
          %s711 = scalar_lea.hbm %s8, %s710
          %s712 = sshll.u32 %s705, 4
          %s713 = int_to_ptr.vmem [resolvable:$true] %s712
          %718 = dma.hbm_to_vmem [thread:$0]  %s711, 3072, %s713, %s702, 192, 192, 12
        $region60: #{tpu_custom_call.1} parent=47 // pred_fallthru
          _
        // Predicated region
        $region61: #{tpu_custom_call.1} parent=47 // pred_check
          %p719 = pneg %p272
        $region62: #{tpu_custom_call.1} parent=47 // pred_check_branch
          %721 = sbr.rel (%p719) target = $region64
        $region63: #{tpu_custom_call.1} parent=47 // pred_region
          %s722 = sand.u32 %s31, 1
          %s723 = scalar_lea.sflag [#allocation4], %s722
          %s724 = sand.u32 %s262, 1
          %s725 = smul.addr %s724, 64
          %s726 = scalar_lea.vmem [#allocation14], %s725
          %s728 = ssub.s32 1024, 1024
          %729 = vsyncadd %s723, %s728
          %s730 = smul.addr %s39, 16
          %s731 = smul.addr %s730, 64
          %s732 = scalar_lea.hbm %s9, %s731
          %s733 = sshll.u32 %s726, 4
          %s734 = int_to_ptr.vmem [resolvable:$true] %s733
          %739 = dma.hbm_to_vmem [thread:$0]  %s732, 1024, %s734, %s723, 64, 64, 4
        $region64: #{tpu_custom_call.1} parent=47 // pred_fallthru
          _
        // Predicated region
        $region65: #{tpu_custom_call.1} parent=47 // pred_check
          %p740 = pneg %p298
        $region66: #{tpu_custom_call.1} parent=47 // pred_check_branch
          %742 = sbr.rel (%p740) target = $region68
        $region67: #{tpu_custom_call.1} parent=47 // pred_region
          %s743 = sand.u32 %s31, 1
          %s744 = scalar_lea.sflag [#allocation4], %s743
          %s745 = sand.u32 %s288, 1
          %s746 = scalar_lea.vmem [#allocation15], %s745
          %s748 = ssub.s32 16, 16
          %749 = vsyncadd %s744, %s748
          %s750 = smul.addr %s39, 16
          %s751 = scalar_lea.hbm %s10, %s750
          %s753 = sshll.u32 %s746, 4
          %s754 = int_to_ptr.vmem [resolvable:$true] %s753
          %756 = dma.hbm_to_vmem [thread:$0]  %s751, 16, %s754, %s744
        $region68: #{tpu_custom_call.1} parent=47 // pred_fallthru
          _
        // Predicated region
        $region69: #{tpu_custom_call.1} parent=47 // pred_check
          %p757 = pneg %p324
        $region70: #{tpu_custom_call.1} parent=47 // pred_check_branch
          %759 = sbr.rel (%p757) target = $region72
        $region71: #{tpu_custom_call.1} parent=47 // pred_region
          %s760 = sand.u32 %s31, 1
          %s761 = scalar_lea.sflag [#allocation4], %s760
          %s762 = sand.u32 %s314, 1
          %s763 = scalar_lea.vmem [#allocation16], %s762
          %s765 = ssub.s32 16, 16
          %766 = vsyncadd %s761, %s765
          %s767 = smul.addr %s39, 16
          %s768 = scalar_lea.hbm %s11, %s767
          %s770 = sshll.u32 %s763, 4
          %s771 = int_to_ptr.vmem [resolvable:$true] %s770
          %773 = dma.hbm_to_vmem [thread:$0]  %s768, 16, %s771, %s761
        $region72: #{tpu_custom_call.1} parent=47 // pred_fallthru
          _
        // Predicated region
        $region73: #{tpu_custom_call.1} parent=47 // pred_check
          %p774 = pneg %p350
        $region74: #{tpu_custom_call.1} parent=47 // pred_check_branch
          %776 = sbr.rel (%p774) target = $region76
        $region75: #{tpu_custom_call.1} parent=47 // pred_region
          %s777 = sand.u32 %s31, 1
          %s778 = scalar_lea.sflag [#allocation4], %s777
          %s779 = sand.u32 %s340, 1
          %s780 = scalar_lea.vmem [#allocation17], %s779
          %s782 = ssub.s32 16, 16
          %783 = vsyncadd %s778, %s782
          %s784 = smul.addr %s39, 16
          %s785 = scalar_lea.hbm %s12, %s784
          %s787 = sshll.u32 %s780, 4
          %s788 = int_to_ptr.vmem [resolvable:$true] %s787
          %790 = dma.hbm_to_vmem [thread:$0]  %s785, 16, %s788, %s778
        $region76: #{tpu_custom_call.1} parent=47 // pred_fallthru
          _
        // Predicated region
        $region77: #{tpu_custom_call.1} parent=47 // pred_check
          %p791 = pneg %p376
        $region78: #{tpu_custom_call.1} parent=47 // pred_check_branch
          %793 = sbr.rel (%p791) target = $region80
        $region79: #{tpu_custom_call.1} parent=47 // pred_region
          %s794 = sand.u32 %s31, 1
          %s795 = scalar_lea.sflag [#allocation4], %s794
          %s796 = sand.u32 %s366, 1
          %s797 = smul.addr %s796, 256
          %s798 = scalar_lea.vmem [#allocation18], %s797
          %s800 = ssub.s32 4096, 4096
          %801 = vsyncadd %s795, %s800
          %s802 = smul.addr %s39, 64
          %s803 = smul.addr %s802, 64
          %s804 = scalar_lea.hbm %s13, %s803
          %s805 = sshll.u32 %s798, 4
          %s806 = int_to_ptr.vmem [resolvable:$true] %s805
          %811 = dma.hbm_to_vmem [thread:$0]  %s804, 4096, %s806, %s795, 256, 256, 16
        $region80: #{tpu_custom_call.1} parent=47 // pred_fallthru
          _
        // Predicated region
        $region81: #{tpu_custom_call.1} parent=47 // pred_check
          %p812 = pneg %p402
        $region82: #{tpu_custom_call.1} parent=47 // pred_check_branch
          %814 = sbr.rel (%p812) target = $region84
        $region83: #{tpu_custom_call.1} parent=47 // pred_region
          %s815 = sand.u32 %s31, 1
          %s816 = scalar_lea.sflag [#allocation4], %s815
          %s817 = sand.u32 %s392, 1
          %s818 = smul.addr %s817, 4
          %s819 = scalar_lea.vmem [#allocation19], %s818
          %s821 = ssub.s32 64, 64
          %822 = vsyncadd %s816, %s821
          %s823 = smul.addr %s39, 4
          %s824 = smul.addr %s823, 16
          %s825 = scalar_lea.hbm %s14, %s824
          %s827 = sshll.u32 %s819, 4
          %s828 = int_to_ptr.vmem [resolvable:$true] %s827
          %830 = dma.hbm_to_vmem [thread:$0]  %s825, 64, %s828, %s816
        $region84: #{tpu_custom_call.1} parent=47 // pred_fallthru
          _
        // Predicated region
        $region85: #{tpu_custom_call.1} parent=47 // pred_check
          %p831 = pneg %p428
        $region86: #{tpu_custom_call.1} parent=47 // pred_check_branch
          %833 = sbr.rel (%p831) target = $region88
        $region87: #{tpu_custom_call.1} parent=47 // pred_region
          %s834 = sand.u32 %s31, 1
          %s835 = scalar_lea.sflag [#allocation4], %s834
          %s836 = sand.u32 %s418, 1
          %s837 = smul.addr %s836, 256
          %s838 = scalar_lea.vmem [#allocation20], %s837
          %s840 = ssub.s32 4096, 4096
          %841 = vsyncadd %s835, %s840
          %s842 = smul.addr %s39, 64
          %s843 = smul.addr %s842, 64
          %s844 = scalar_lea.hbm %s15, %s843
          %s845 = sshll.u32 %s838, 4
          %s846 = int_to_ptr.vmem [resolvable:$true] %s845
          %851 = dma.hbm_to_vmem [thread:$0]  %s844, 4096, %s846, %s835, 256, 256, 16
        $region88: #{tpu_custom_call.1} parent=47 // pred_fallthru
          _
        // Predicated region
        $region89: #{tpu_custom_call.1} parent=47 // pred_check
          %p852 = pneg %p454
        $region90: #{tpu_custom_call.1} parent=47 // pred_check_branch
          %854 = sbr.rel (%p852) target = $region92
        $region91: #{tpu_custom_call.1} parent=47 // pred_region
          %p855 = scmp.lt.s32.totalorder %s39, 1
          %s856 = scalar_select %p855, %s39, 1
          %s857 = smul.addr %s856, 4
          %s858 = scalar_lea.vmem %s16, %s857
        $region92: #{tpu_custom_call.1} parent=47 // pred_fallthru
          _
        // Predicated region
        $region93: #{tpu_custom_call.1} parent=47 // pred_check
          %p859 = pneg %p480
        $region94: #{tpu_custom_call.1} parent=47 // pred_check_branch
          %861 = sbr.rel (%p859) target = $region96
        $region95: #{tpu_custom_call.1} parent=47 // pred_region
          %s862 = sand.u32 %s31, 1
          %s863 = scalar_lea.sflag [#allocation4], %s862
          %s864 = sand.u32 %s470, 1
          %s865 = smul.addr %s864, 256
          %s866 = scalar_lea.vmem [#allocation21], %s865
          %s868 = ssub.s32 4096, 4096
          %869 = vsyncadd %s863, %s868
          %s870 = smul.addr %s39, 64
          %s871 = smul.addr %s870, 64
          %s872 = scalar_lea.hbm %s17, %s871
          %s873 = sshll.u32 %s866, 4
          %s874 = int_to_ptr.vmem [resolvable:$true] %s873
          %879 = dma.hbm_to_vmem [thread:$0]  %s872, 4096, %s874, %s863, 64, 64, 4
        $region96: #{tpu_custom_call.1} parent=47 // pred_fallthru
          _
        // Predicated region
        $region97: #{tpu_custom_call.1} parent=47 // pred_check
          %p880 = pneg %p506
        $region98: #{tpu_custom_call.1} parent=47 // pred_check_branch
          %882 = sbr.rel (%p880) target = $region100
        $region99: #{tpu_custom_call.1} parent=47 // pred_region
          %p883 = scmp.lt.s32.totalorder %s39, 1
          %s884 = scalar_select %p883, %s39, 1
          %s885 = scalar_lea.vmem %s18, %s884
        $region100: #{tpu_custom_call.1} parent=47 // pred_fallthru
          _
      $region48: #{tpu_custom_call.1} parent=5 // pred_fallthru
        _
      %p886 = scmp.le.s32.totalorder 1, %s31
      %p887 = scmp.lt.s32.totalorder %s31, 3
      %p888 = pnand %p886, %p887
      %p889 = pneg %p888
      // Predicated region
      $region101: #{tpu_custom_call.1} parent=5 // pred_check
        _
      $region102: #{tpu_custom_call.1} parent=5 // pred_check_branch
        %891 = sbr.rel (%p888) target = $region104
      $region103: #{tpu_custom_call.1} parent=5 // pred_region
        %s892 = ssub.s32 %s31, 1
        // Predicated region
        $region105: #{tpu_custom_call.1} parent=103 // pred_check
          %p893 = pneg %p111
        $region106: #{tpu_custom_call.1} parent=103 // pred_check_branch
          %895 = sbr.rel (%p893) target = $region108
        $region107: #{tpu_custom_call.1} parent=103 // pred_region
          %896 = dma.done [#allocation4], 16
        $region108: #{tpu_custom_call.1} parent=103 // pred_fallthru
          _
        // Predicated region
        $region109: #{tpu_custom_call.1} parent=103 // pred_check
          %p897 = pneg %p132
        $region110: #{tpu_custom_call.1} parent=103 // pred_check_branch
          %899 = sbr.rel (%p897) target = $region112
        $region111: #{tpu_custom_call.1} parent=103 // pred_region
          %900 = dma.done [#allocation7], 16
        $region112: #{tpu_custom_call.1} parent=103 // pred_fallthru
          _
        // Predicated region
        $region113: #{tpu_custom_call.1} parent=103 // pred_check
          %p901 = pneg %p153
        $region114: #{tpu_custom_call.1} parent=103 // pred_check_branch
          %903 = sbr.rel (%p901) target = $region116
        $region115: #{tpu_custom_call.1} parent=103 // pred_region
          %904 = dma.done [#allocation7], 1024
        $region116: #{tpu_custom_call.1} parent=103 // pred_fallthru
          _
        // Predicated region
        $region117: #{tpu_custom_call.1} parent=103 // pred_check
          %p905 = pneg %p174
        $region118: #{tpu_custom_call.1} parent=103 // pred_check_branch
          %907 = sbr.rel (%p905) target = $region120
        $region119: #{tpu_custom_call.1} parent=103 // pred_region
          %908 = dma.done [#allocation10], 16
        $region120: #{tpu_custom_call.1} parent=103 // pred_fallthru
          _
        %s909 = sand.u32 %s36, 1
        %s910 = scalar_lea.sflag [#allocation4], %s909
        %s911 = sand.u32 %s187, 1
        %s912 = scalar_lea.vmem [#allocation11], %s911
        // Predicated region
        $region121: #{tpu_custom_call.1} parent=103 // pred_check
          %p913 = pneg %p200
        $region122: #{tpu_custom_call.1} parent=103 // pred_check_branch
          %915 = sbr.rel (%p913) target = $region124
        $region123: #{tpu_custom_call.1} parent=103 // pred_region
          %916 = dma.done %s910, 16
        $region124: #{tpu_custom_call.1} parent=103 // pred_fallthru
          _
        %s917 = sand.u32 %s36, 1
        %s918 = scalar_lea.sflag [#allocation4], %s917
        %s919 = sand.u32 %s213, 1
        %s920 = scalar_lea.vmem [#allocation12], %s919
        // Predicated region
        $region125: #{tpu_custom_call.1} parent=103 // pred_check
          %p921 = pneg %p226
        $region126: #{tpu_custom_call.1} parent=103 // pred_check_branch
          %923 = sbr.rel (%p921) target = $region128
        $region127: #{tpu_custom_call.1} parent=103 // pred_region
          %924 = dma.done %s918, 16
        $region128: #{tpu_custom_call.1} parent=103 // pred_fallthru
          _
        %s925 = sand.u32 %s36, 1
        %s926 = scalar_lea.sflag [#allocation4], %s925
        %s927 = sand.u32 %s239, 1
        %s928 = smul.addr %s927, 192
        %s929 = scalar_lea.vmem [#allocation13], %s928
        // Predicated region
        $region129: #{tpu_custom_call.1} parent=103 // pred_check
          %p930 = pneg %p252
        $region130: #{tpu_custom_call.1} parent=103 // pred_check_branch
          %932 = sbr.rel (%p930) target = $region132
        $region131: #{tpu_custom_call.1} parent=103 // pred_region
          %933 = dma.done %s926, 3072
        $region132: #{tpu_custom_call.1} parent=103 // pred_fallthru
          _
        %s934 = sand.u32 %s36, 1
        %s935 = scalar_lea.sflag [#allocation4], %s934
        %s936 = sand.u32 %s265, 1
        %s937 = smul.addr %s936, 64
        %s938 = scalar_lea.vmem [#allocation14], %s937
        // Predicated region
        $region133: #{tpu_custom_call.1} parent=103 // pred_check
          %p939 = pneg %p278
        $region134: #{tpu_custom_call.1} parent=103 // pred_check_branch
          %941 = sbr.rel (%p939) target = $region136
        $region135: #{tpu_custom_call.1} parent=103 // pred_region
          %942 = dma.done %s935, 1024
        $region136: #{tpu_custom_call.1} parent=103 // pred_fallthru
          _
        %s943 = sand.u32 %s36, 1
        %s944 = scalar_lea.sflag [#allocation4], %s943
        %s945 = sand.u32 %s291, 1
        %s946 = scalar_lea.vmem [#allocation15], %s945
        // Predicated region
        $region137: #{tpu_custom_call.1} parent=103 // pred_check
          %p947 = pneg %p304
        $region138: #{tpu_custom_call.1} parent=103 // pred_check_branch
          %949 = sbr.rel (%p947) target = $region140
        $region139: #{tpu_custom_call.1} parent=103 // pred_region
          %950 = dma.done %s944, 16
        $region140: #{tpu_custom_call.1} parent=103 // pred_fallthru
          _
        %s951 = sand.u32 %s36, 1
        %s952 = scalar_lea.sflag [#allocation4], %s951
        %s953 = sand.u32 %s317, 1
        %s954 = scalar_lea.vmem [#allocation16], %s953
        // Predicated region
        $region141: #{tpu_custom_call.1} parent=103 // pred_check
          %p955 = pneg %p330
        $region142: #{tpu_custom_call.1} parent=103 // pred_check_branch
          %957 = sbr.rel (%p955) target = $region144
        $region143: #{tpu_custom_call.1} parent=103 // pred_region
          %958 = dma.done %s952, 16
        $region144: #{tpu_custom_call.1} parent=103 // pred_fallthru
          _
        %s959 = sand.u32 %s36, 1
        %s960 = scalar_lea.sflag [#allocation4], %s959
        %s961 = sand.u32 %s343, 1
        %s962 = scalar_lea.vmem [#allocation17], %s961
        // Predicated region
        $region145: #{tpu_custom_call.1} parent=103 // pred_check
          %p963 = pneg %p356
        $region146: #{tpu_custom_call.1} parent=103 // pred_check_branch
          %965 = sbr.rel (%p963) target = $region148
        $region147: #{tpu_custom_call.1} parent=103 // pred_region
          %966 = dma.done %s960, 16
        $region148: #{tpu_custom_call.1} parent=103 // pred_fallthru
          _
        %s967 = sand.u32 %s36, 1
        %s968 = scalar_lea.sflag [#allocation4], %s967
        %s969 = sand.u32 %s369, 1
        %s970 = smul.addr %s969, 256
        %s971 = scalar_lea.vmem [#allocation18], %s970
        // Predicated region
        $region149: #{tpu_custom_call.1} parent=103 // pred_check
          %p972 = pneg %p382
        $region150: #{tpu_custom_call.1} parent=103 // pred_check_branch
          %974 = sbr.rel (%p972) target = $region152
        $region151: #{tpu_custom_call.1} parent=103 // pred_region
          %975 = dma.done %s968, 4096
        $region152: #{tpu_custom_call.1} parent=103 // pred_fallthru
          _
        %s976 = sand.u32 %s36, 1
        %s977 = scalar_lea.sflag [#allocation4], %s976
        %s978 = sand.u32 %s395, 1
        %s979 = smul.addr %s978, 4
        %s980 = scalar_lea.vmem [#allocation19], %s979
        // Predicated region
        $region153: #{tpu_custom_call.1} parent=103 // pred_check
          %p981 = pneg %p408
        $region154: #{tpu_custom_call.1} parent=103 // pred_check_branch
          %983 = sbr.rel (%p981) target = $region156
        $region155: #{tpu_custom_call.1} parent=103 // pred_region
          %984 = dma.done %s977, 64
        $region156: #{tpu_custom_call.1} parent=103 // pred_fallthru
          _
        %s985 = sand.u32 %s36, 1
        %s986 = scalar_lea.sflag [#allocation4], %s985
        %s987 = sand.u32 %s421, 1
        %s988 = smul.addr %s987, 256
        %s989 = scalar_lea.vmem [#allocation20], %s988
        // Predicated region
        $region157: #{tpu_custom_call.1} parent=103 // pred_check
          %p990 = pneg %p434
        $region158: #{tpu_custom_call.1} parent=103 // pred_check_branch
          %992 = sbr.rel (%p990) target = $region160
        $region159: #{tpu_custom_call.1} parent=103 // pred_region
          %993 = dma.done %s986, 4096
        $region160: #{tpu_custom_call.1} parent=103 // pred_fallthru
          _
        %s994 = sand.u32 %s36, 1
        %s995 = scalar_lea.sflag [#allocation4], %s994
        %s996 = sand.u32 %s473, 1
        %s997 = smul.addr %s996, 256
        %s998 = scalar_lea.vmem [#allocation21], %s997
        // Predicated region
        $region161: #{tpu_custom_call.1} parent=103 // pred_check
          %p999 = pneg %p486
        $region162: #{tpu_custom_call.1} parent=103 // pred_check_branch
          %1001 = sbr.rel (%p999) target = $region164
        $region163: #{tpu_custom_call.1} parent=103 // pred_region
          %1002 = dma.done %s995, 4096
        $region164: #{tpu_custom_call.1} parent=103 // pred_fallthru
          _
        %s1003 = smul.u32 2, %s40
        %p1004 = scmp.lt.s32.totalorder %s1003, 1
        %s1005 = scalar_select %p1004, %s1003, 1
        %s1006 = smul.addr %s1005, 8
        %s1007 = smul.addr %s1006, 8
        %s1008 = scalar_lea.vmem %s0, %s1007
        %p1009 = pneg %p69
        %p1010 = pneg %p66
        %p1011 = pneg %p90
        %p1012 = pneg %p87
        %p1013 = pneg %p111
        %p1014 = pneg %p108
        %p1015 = pneg %p132
        %p1016 = pneg %p129
        %p1017 = pneg %p153
        %p1018 = pneg %p150
        %p1019 = pneg %p174
        %p1020 = pneg %p171
        %s1021 = sand.u32 %s36, 1
        %s1022 = scalar_lea.sflag [#allocation4], %s1021
        %s1023 = sand.u32 %s187, 1
        %s1024 = scalar_lea.vmem [#allocation11], %s1023
        %p1025 = pneg %p200
        %p1026 = pneg %p197
        %s1027 = sand.u32 %s36, 1
        %s1028 = scalar_lea.sflag [#allocation4], %s1027
        %s1029 = sand.u32 %s213, 1
        %s1030 = scalar_lea.vmem [#allocation12], %s1029
        %p1031 = pneg %p226
        %p1032 = pneg %p223
        %s1033 = sand.u32 %s36, 1
        %s1034 = scalar_lea.sflag [#allocation4], %s1033
        %s1035 = sand.u32 %s239, 1
        %s1036 = smul.addr %s1035, 192
        %s1037 = scalar_lea.vmem [#allocation13], %s1036
        %p1038 = pneg %p252
        %p1039 = pneg %p249
        %s1040 = sand.u32 %s36, 1
        %s1041 = scalar_lea.sflag [#allocation4], %s1040
        %s1042 = sand.u32 %s265, 1
        %s1043 = smul.addr %s1042, 64
        %s1044 = scalar_lea.vmem [#allocation14], %s1043
        %p1045 = pneg %p278
        %p1046 = pneg %p275
        %s1047 = sand.u32 %s36, 1
        %s1048 = scalar_lea.sflag [#allocation4], %s1047
        %s1049 = sand.u32 %s291, 1
        %s1050 = scalar_lea.vmem [#allocation15], %s1049
        %p1051 = pneg %p304
        %p1052 = pneg %p301
        %s1053 = sand.u32 %s36, 1
        %s1054 = scalar_lea.sflag [#allocation4], %s1053
        %s1055 = sand.u32 %s317, 1
        %s1056 = scalar_lea.vmem [#allocation16], %s1055
        %p1057 = pneg %p330
        %p1058 = pneg %p327
        %s1059 = sand.u32 %s36, 1
        %s1060 = scalar_lea.sflag [#allocation4], %s1059
        %s1061 = sand.u32 %s343, 1
        %s1062 = scalar_lea.vmem [#allocation17], %s1061
        %p1063 = pneg %p356
        %p1064 = pneg %p353
        %s1065 = sand.u32 %s36, 1
        %s1066 = scalar_lea.sflag [#allocation4], %s1065
        %s1067 = sand.u32 %s369, 1
        %s1068 = smul.addr %s1067, 256
        %s1069 = scalar_lea.vmem [#allocation18], %s1068
        %p1070 = pneg %p382
        %p1071 = pneg %p379
        %s1072 = sand.u32 %s36, 1
        %s1073 = scalar_lea.sflag [#allocation4], %s1072
        %s1074 = sand.u32 %s395, 1
        %s1075 = smul.addr %s1074, 4
        %s1076 = scalar_lea.vmem [#allocation19], %s1075
        %p1077 = pneg %p408
        %p1078 = pneg %p405
        %s1079 = sand.u32 %s36, 1
        %s1080 = scalar_lea.sflag [#allocation4], %s1079
        %s1081 = sand.u32 %s421, 1
        %s1082 = smul.addr %s1081, 256
        %s1083 = scalar_lea.vmem [#allocation20], %s1082
        %p1084 = pneg %p434
        %p1085 = pneg %p431
        %p1086 = scmp.lt.s32.totalorder %s41, 1
        %s1087 = scalar_select %p1086, %s41, 1
        %s1088 = smul.addr %s1087, 4
        %s1089 = scalar_lea.vmem %s16, %s1088
        %p1090 = pneg %p460
        %p1091 = pneg %p457
        %s1092 = sand.u32 %s36, 1
        %s1093 = scalar_lea.sflag [#allocation4], %s1092
        %s1094 = sand.u32 %s473, 1
        %s1095 = smul.addr %s1094, 256
        %s1096 = scalar_lea.vmem [#allocation21], %s1095
        %p1097 = pneg %p486
        %p1098 = pneg %p483
        %p1099 = scmp.lt.s32.totalorder %s41, 1
        %s1100 = scalar_select %p1099, %s41, 1
        %s1101 = scalar_lea.vmem %s18, %s1100
        %p1102 = pneg %p512
        %p1103 = pneg %p509
        %p1104 = pneg %p533
        %p1105 = pneg %p530
        %p1106 = pneg %p554
        %p1107 = pneg %p551
        %p1108 = pneg %p580
        %p1109 = pneg %p577
        %s1110 = smul.u32 2, %s40
        %p1111 = scmp.lt.s32.totalorder %s1110, 1
        %s1112 = scalar_select %p1111, %s1110, 1
        %s1113 = smul.addr %s1112, 8
        %s1114 = smul.addr %s1113, 8
        %s1115 = scalar_lea.vmem %s0, %s1114
        %s1116 = smul.u32 2, %s40
        %p1117 = scmp.lt.s32.totalorder %s41, 1
        %s1118 = scalar_select %p1117, %s41, 1
        %s1119 = smul.addr %s1118, 4
        %s1120 = scalar_lea.vmem %s16, %s1119
        %p1121 = scmp.lt.s32.totalorder %s41, 1
        %s1122 = scalar_select %p1121, %s41, 1
        %s1123 = scalar_lea.vmem %s18, %s1122
        %s1124 = smul.u32 2, %s40
        %p1126 = scmp.eq.s32.totalorder %s41, 0
        // Predicated region
        $region165: #{tpu_custom_call.1} parent=103 // pred_check
          %p1127 = pneg %p1126
        $region166: #{tpu_custom_call.1} parent=103 // pred_check_branch
          %1129 = sbr.rel (%p1127) target = $region168
        $region167: #{tpu_custom_call.1} parent=103 // pred_region
          %v1130 = vld [vmem:[%s1] sm:$0xff]
          %v1131 = vld [vmem:[%s1 + $0x8] sm:$0xff]
          %v1132 = vld [vmem:[%s1 + $0x10] sm:$0xff]
          %v1133 = vld [vmem:[%s1 + $0x18] sm:$0xff]
          %v1134 = vld [vmem:[%s1 + $0x20] sm:$0xff]
          %v1135 = vld [vmem:[%s1 + $0x28] sm:$0xff]
          %v1136 = vld [vmem:[%s1 + $0x30] sm:$0xff]
          %v1137 = vld [vmem:[%s1 + $0x38] sm:$0xff]
          %v1138 = vld [vmem:[%s1 + $0x40] sm:$0xff]
          %v1139 = vld [vmem:[%s1 + $0x48] sm:$0xff]
          %v1140 = vld [vmem:[%s1 + $0x50] sm:$0xff]
          %v1141 = vld [vmem:[%s1 + $0x58] sm:$0xff]
          %v1142 = vld [vmem:[%s1 + $0x60] sm:$0xff]
          %v1143 = vld [vmem:[%s1 + $0x68] sm:$0xff]
          %v1144 = vld [vmem:[%s1 + $0x70] sm:$0xff]
          %v1145 = vld [vmem:[%s1 + $0x78] sm:$0xff]
          %v1146 = vld [vmem:[#allocation8] sm:$0xf]
          %v1147 = vld [vmem:[#allocation8 + $0x4] sm:$0xf]
          %v1148 = vld [vmem:[#allocation8 + $0x8] sm:$0xf]
          %v1149 = vld [vmem:[#allocation8 + $0xc] sm:$0xf]
          %v1150 = vld [vmem:[#allocation8 + $0x10] sm:$0xf]
          %v1151 = vld [vmem:[#allocation8 + $0x14] sm:$0xf]
          %v1152 = vld [vmem:[#allocation8 + $0x18] sm:$0xf]
          %v1153 = vld [vmem:[#allocation8 + $0x1c] sm:$0xf]
          %v1154 = vld [vmem:[#allocation8 + $0x20] sm:$0xf]
          %v1155 = vld [vmem:[#allocation8 + $0x24] sm:$0xf]
          %v1156 = vld [vmem:[#allocation8 + $0x28] sm:$0xf]
          %v1157 = vld [vmem:[#allocation8 + $0x2c] sm:$0xf]
          %v1158 = vld [vmem:[#allocation8 + $0x30] sm:$0xf]
          %v1159 = vld [vmem:[#allocation8 + $0x34] sm:$0xf]
          %v1160 = vld [vmem:[#allocation8 + $0x38] sm:$0xf]
          %v1161 = vld [vmem:[#allocation8 + $0x3c] sm:$0xf]
          %v1162 = vld [vmem:[%s1115] sm:$0xff]
          %v1163 = vld [vmem:[%s1115 + $0x8] sm:$0xff]
          %v1164 = vld [vmem:[%s1115 + $0x10] sm:$0xff]
          %v1165 = vld [vmem:[%s1115 + $0x18] sm:$0xff]
          %v1166 = vld [vmem:[%s1115 + $0x20] sm:$0xff]
          %v1167 = vld [vmem:[%s1115 + $0x28] sm:$0xff]
          %v1168 = vld [vmem:[%s1115 + $0x30] sm:$0xff]
          %v1169 = vld [vmem:[%s1115 + $0x38] sm:$0xff]
          %v1170 = vadd.f32 %v1162, %v1163
          %v1171 = vadd.f32 %v1170, %v1164
          %v1172 = vadd.f32 %v1171, %v1165
          %v1173 = vadd.f32 %v1172, %v1166
          %v1174 = vadd.f32 %v1173, %v1167
          %v1175 = vadd.f32 %v1174, %v1168
          %v1176 = vadd.f32 %v1175, %v1169
          %v1177 = vrot.slane %v1176, 4
          %v1178 = vadd.f32 %v1176, %v1177
          %v1179 = vrot.slane %v1178, 2
          %v1180 = vadd.f32 %v1178, %v1179
          %v1181 = vrot.slane %v1180, 1
          %v1182 = vadd.f32 %v1180, %v1181
          %1183 = vmatprep.subr.mxu0 0.0
          %1184 = vmatpush1.msra.mxu0 %v1130
          %1185 = vmatprep.subr.mxu0 0.0
          %1186 = vmatpush1.msra.mxu0 %v1131
          %1187 = vmatprep.subr.mxu0 0.0
          %1188 = vmatpush1.msra.mxu0 %v1132
          %1189 = vmatprep.subr.mxu0 0.0
          %1190 = vmatpush1.msra.mxu0 %v1133
          %1191 = vmatprep.subr.mxu0 0.0
          %1192 = vmatpush1.msra.mxu0 %v1134
          %1193 = vmatprep.subr.mxu0 0.0
          %1194 = vmatpush1.msra.mxu0 %v1135
          %1195 = vmatprep.subr.mxu0 0.0
          %1196 = vmatpush1.msra.mxu0 %v1136
          %1197 = vmatprep.subr.mxu0 0.0
          %1198 = vmatpush1.msra.mxu0 %v1137
          %1199 = vmatprep.subr.mxu0 0.0
          %1200 = vmatpush1.msra.mxu0 %v1138
          %1201 = vmatprep.subr.mxu0 0.0
          %1202 = vmatpush1.msra.mxu0 %v1139
          %1203 = vmatprep.subr.mxu0 0.0
          %1204 = vmatpush1.msra.mxu0 %v1140
          %1205 = vmatprep.subr.mxu0 0.0
          %1206 = vmatpush1.msra.mxu0 %v1141
          %1207 = vmatprep.subr.mxu0 0.0
          %1208 = vmatpush1.msra.mxu0 %v1142
          %1209 = vmatprep.subr.mxu0 0.0
          %1210 = vmatpush1.msra.mxu0 %v1143
          %1211 = vmatprep.subr.mxu0 0.0
          %1212 = vmatpush1.msra.mxu0 %v1144
          %1213 = vmatprep.subr.mxu0 0.0
          %1214 = vmatpush1.msra.mxu0 %v1145
          %1215 = vmatprep.subr.mxu0 0.0
          %1216 = vmatpush1.msra.mxu0 0.0
          %1217 = vmatprep.subr.mxu0 0.0
          %1218 = vmatpush1.msra.mxu0 0.0
          %1219 = vmatprep.subr.mxu0 0.0
          %1220 = vmatpush1.msra.mxu0 0.0
          %1221 = vmatprep.subr.mxu0 0.0
          %1222 = vmatpush1.msra.mxu0 0.0
          %1223 = vmatprep.subr.mxu0 0.0
          %1224 = vmatpush1.msra.mxu0 0.0
          %1225 = vmatprep.subr.mxu0 0.0
          %1226 = vmatpush1.msra.mxu0 0.0
          %1227 = vmatprep.subr.mxu0 0.0
          %1228 = vmatpush1.msra.mxu0 0.0
          %1229 = vmatprep.subr.mxu0 0.0
          %1230 = vmatpush1.msra.mxu0 0.0
          %1231 = vmatprep.subr.mxu0 0.0
          %1232 = vmatpush1.msra.mxu0 0.0
          %1233 = vmatprep.subr.mxu0 0.0
          %1234 = vmatpush1.msra.mxu0 0.0
          %1235 = vmatprep.subr.mxu0 0.0
          %1236 = vmatpush1.msra.mxu0 0.0
          %1237 = vmatprep.subr.mxu0 0.0
          %1238 = vmatpush1.msra.mxu0 0.0
          %1239 = vmatprep.subr.mxu0 0.0
          %1240 = vmatpush1.msra.mxu0 0.0
          %1241 = vmatprep.subr.mxu0 0.0
          %1242 = vmatpush1.msra.mxu0 0.0
          %1243 = vmatprep.subr.mxu0 0.0
          %1244 = vmatpush1.msra.mxu0 0.0
          %1245 = vmatprep.subr.mxu0 0.0
          %1246 = vmatpush1.msra.mxu0 0.0
          %1247 = vmatprep.mubr.f32.mxu0 0.0
          %1248 = vmatmul.mubr.f32.gmra.mrb[0].mxu0 %v1182
          %v1249 = vpop.f32.mrb[0].mxu0
          %v1250 = vadd.f32 0.0, %v1249
          %v1251 = vpop.f32.mrb[0].mxu0
          %1252 = vdwg.mxu0
          %v1253 = vrcp.pop 512.0
          %v1254 = vmul.f32 %v1250, %v1253
          %vm1255 = vcmask 130048
          %v1257 = vsel %vm1255, %v1254, 0
          %v1260 = vsel %vm1255, %v1130, 0
          %v1263 = vsel %vm1255, %v1131, 0
          %v1266 = vsel %vm1255, %v1132, 0
          %v1269 = vsel %vm1255, %v1133, 0
          %v1272 = vsel %vm1255, %v1134, 0
          %v1275 = vsel %vm1255, %v1135, 0
          %v1278 = vsel %vm1255, %v1136, 0
          %v1281 = vsel %vm1255, %v1137, 0
          %v1284 = vsel %vm1255, %v1138, 0
          %v1287 = vsel %vm1255, %v1139, 0
          %v1290 = vsel %vm1255, %v1140, 0
          %v1293 = vsel %vm1255, %v1141, 0
          %v1296 = vsel %vm1255, %v1142, 0
          %v1299 = vsel %vm1255, %v1143, 0
          %v1302 = vsel %vm1255, %v1144, 0
          %v1305 = vsel %vm1255, %v1145, 0
          %1307 = vmatprep.subr.mxu0 0.0
          %1308 = vmatpush1.xpose.msra.mxu0 %v1260
          %1309 = vmatprep.subr.mxu0 0.0
          %1310 = vmatpush1.xpose.msra.mxu0 %v1263
          %1311 = vmatprep.subr.mxu0 0.0
          %1312 = vmatpush1.xpose.msra.mxu0 %v1266
          %1313 = vmatprep.subr.mxu0 0.0
          %1314 = vmatpush1.xpose.msra.mxu0 %v1269
          %1315 = vmatprep.subr.mxu0 0.0
          %1316 = vmatpush1.xpose.msra.mxu0 %v1272
          %1317 = vmatprep.subr.mxu0 0.0
          %1318 = vmatpush1.xpose.msra.mxu0 %v1275
          %1319 = vmatprep.subr.mxu0 0.0
          %1320 = vmatpush1.xpose.msra.mxu0 %v1278
          %1321 = vmatprep.subr.mxu0 0.0
          %1322 = vmatpush1.xpose.msra.mxu0 %v1281
          %1323 = vmatprep.subr.mxu0 0.0
          %1324 = vmatpush1.xpose.msra.mxu0 %v1284
          %1325 = vmatprep.subr.mxu0 0.0
          %1326 = vmatpush1.xpose.msra.mxu0 %v1287
          %1327 = vmatprep.subr.mxu0 0.0
          %1328 = vmatpush1.xpose.msra.mxu0 %v1290
          %1329 = vmatprep.subr.mxu0 0.0
          %1330 = vmatpush1.xpose.msra.mxu0 %v1293
          %1331 = vmatprep.subr.mxu0 0.0
          %1332 = vmatpush1.xpose.msra.mxu0 %v1296
          %1333 = vmatprep.subr.mxu0 0.0
          %1334 = vmatpush1.xpose.msra.mxu0 %v1299
          %1335 = vmatprep.subr.mxu0 0.0
          %1336 = vmatpush1.xpose.msra.mxu0 %v1302
          %1337 = vmatprep.subr.mxu0 0.0
          %1338 = vmatpush1.xpose.msra.mxu0 %v1305
          %1339 = vmatprep.subr.mxu0 0.0
          %1340 = vmatpush1.xpose.msra.mxu0 0.0
          %1341 = vmatprep.subr.mxu0 0.0
          %1342 = vmatpush1.xpose.msra.mxu0 0.0
          %1343 = vmatprep.subr.mxu0 0.0
          %1344 = vmatpush1.xpose.msra.mxu0 0.0
          %1345 = vmatprep.subr.mxu0 0.0
          %1346 = vmatpush1.xpose.msra.mxu0 0.0
          %1347 = vmatprep.subr.mxu0 0.0
          %1348 = vmatpush1.xpose.msra.mxu0 0.0
          %1349 = vmatprep.subr.mxu0 0.0
          %1350 = vmatpush1.xpose.msra.mxu0 0.0
          %1351 = vmatprep.subr.mxu0 0.0
          %1352 = vmatpush1.xpose.msra.mxu0 0.0
          %1353 = vmatprep.subr.mxu0 0.0
          %1354 = vmatpush1.xpose.msra.mxu0 0.0
          %1355 = vmatprep.subr.mxu0 0.0
          %1356 = vmatpush1.xpose.msra.mxu0 0.0
          %1357 = vmatprep.subr.mxu0 0.0
          %1358 = vmatpush1.xpose.msra.mxu0 0.0
          %1359 = vmatprep.subr.mxu0 0.0
          %1360 = vmatpush1.xpose.msra.mxu0 0.0
          %1361 = vmatprep.subr.mxu0 0.0
          %1362 = vmatpush1.xpose.msra.mxu0 0.0
          %1363 = vmatprep.subr.mxu0 0.0
          %1364 = vmatpush1.xpose.msra.mxu0 0.0
          %1365 = vmatprep.subr.mxu0 0.0
          %1366 = vmatpush1.xpose.msra.mxu0 0.0
          %1367 = vmatprep.subr.mxu0 0.0
          %1368 = vmatpush1.xpose.msra.mxu0 0.0
          %1369 = vmatprep.subr.mxu0 0.0
          %1370 = vmatpush1.xpose.msra.mxu0 0.0
          %1371 = vmatprep.mubr.f32.mxu0 0.0
          %1372 = vmatmul.mubr.f32.gmra.mrb[0].mxu0 %v1257
          %v1373 = vpop.f32.mrb[0].mxu0
          %v1374 = vadd.f32 0.0, %v1373
          %v1375 = vpop.f32.mrb[0].mxu0
          %1376 = vdwg.mxu0
          %v1377 = vlaneseq
          %v1378 = vshrl.u32 %v1377, 7
          %v1379 = vsub.s32 0, %v1378
          %v1380 = vrot.slane %v1374, %v1379
          %v1381 = vsub.f32 %v1162, %v1380
          %v1382 = vsub.f32 %v1163, %v1380
          %v1383 = vsub.f32 %v1164, %v1380
          %v1384 = vsub.f32 %v1165, %v1380
          %v1385 = vsub.f32 %v1166, %v1380
          %v1386 = vsub.f32 %v1167, %v1380
          %v1387 = vsub.f32 %v1168, %v1380
          %v1388 = vsub.f32 %v1169, %v1380
          %v1389 = vmul.f32 %v1381, %v1381
          %v1390 = vmul.f32 %v1382, %v1382
          %v1391 = vmul.f32 %v1383, %v1383
          %v1392 = vmul.f32 %v1384, %v1384
          %v1393 = vmul.f32 %v1385, %v1385
          %v1394 = vmul.f32 %v1386, %v1386
          %v1395 = vmul.f32 %v1387, %v1387
          %v1396 = vmul.f32 %v1388, %v1388
          %v1397 = vadd.f32 %v1389, %v1390
          %v1398 = vadd.f32 %v1397, %v1391
          %v1399 = vadd.f32 %v1398, %v1392
          %v1400 = vadd.f32 %v1399, %v1393
          %v1401 = vadd.f32 %v1400, %v1394
          %v1402 = vadd.f32 %v1401, %v1395
          %v1403 = vadd.f32 %v1402, %v1396
          %v1404 = vrot.slane %v1403, 4
          %v1405 = vadd.f32 %v1403, %v1404
          %v1406 = vrot.slane %v1405, 2
          %v1407 = vadd.f32 %v1405, %v1406
          %v1408 = vrot.slane %v1407, 1
          %v1409 = vadd.f32 %v1407, %v1408
          %1410 = vmatprep.subr.mxu0 0.0
          %1411 = vmatpush1.msra.mxu0 %v1130
          %1412 = vmatprep.subr.mxu0 0.0
          %1413 = vmatpush1.msra.mxu0 %v1131
          %1414 = vmatprep.subr.mxu0 0.0
          %1415 = vmatpush1.msra.mxu0 %v1132
          %1416 = vmatprep.subr.mxu0 0.0
          %1417 = vmatpush1.msra.mxu0 %v1133
          %1418 = vmatprep.subr.mxu0 0.0
          %1419 = vmatpush1.msra.mxu0 %v1134
          %1420 = vmatprep.subr.mxu0 0.0
          %1421 = vmatpush1.msra.mxu0 %v1135
          %1422 = vmatprep.subr.mxu0 0.0
          %1423 = vmatpush1.msra.mxu0 %v1136
          %1424 = vmatprep.subr.mxu0 0.0
          %1425 = vmatpush1.msra.mxu0 %v1137
          %1426 = vmatprep.subr.mxu0 0.0
          %1427 = vmatpush1.msra.mxu0 %v1138
          %1428 = vmatprep.subr.mxu0 0.0
          %1429 = vmatpush1.msra.mxu0 %v1139
          %1430 = vmatprep.subr.mxu0 0.0
          %1431 = vmatpush1.msra.mxu0 %v1140
          %1432 = vmatprep.subr.mxu0 0.0
          %1433 = vmatpush1.msra.mxu0 %v1141
          %1434 = vmatprep.subr.mxu0 0.0
          %1435 = vmatpush1.msra.mxu0 %v1142
          %1436 = vmatprep.subr.mxu0 0.0
          %1437 = vmatpush1.msra.mxu0 %v1143
          %1438 = vmatprep.subr.mxu0 0.0
          %1439 = vmatpush1.msra.mxu0 %v1144
          %1440 = vmatprep.subr.mxu0 0.0
          %1441 = vmatpush1.msra.mxu0 %v1145
          %1442 = vmatprep.subr.mxu0 0.0
          %1443 = vmatpush1.msra.mxu0 0.0
          %1444 = vmatprep.subr.mxu0 0.0
          %1445 = vmatpush1.msra.mxu0 0.0
          %1446 = vmatprep.subr.mxu0 0.0
          %1447 = vmatpush1.msra.mxu0 0.0
          %1448 = vmatprep.subr.mxu0 0.0
          %1449 = vmatpush1.msra.mxu0 0.0
          %1450 = vmatprep.subr.mxu0 0.0
          %1451 = vmatpush1.msra.mxu0 0.0
          %1452 = vmatprep.subr.mxu0 0.0
          %1453 = vmatpush1.msra.mxu0 0.0
          %1454 = vmatprep.subr.mxu0 0.0
          %1455 = vmatpush1.msra.mxu0 0.0
          %1456 = vmatprep.subr.mxu0 0.0
          %1457 = vmatpush1.msra.mxu0 0.0
          %1458 = vmatprep.subr.mxu0 0.0
          %1459 = vmatpush1.msra.mxu0 0.0
          %1460 = vmatprep.subr.mxu0 0.0
          %1461 = vmatpush1.msra.mxu0 0.0
          %1462 = vmatprep.subr.mxu0 0.0
          %1463 = vmatpush1.msra.mxu0 0.0
          %1464 = vmatprep.subr.mxu0 0.0
          %1465 = vmatpush1.msra.mxu0 0.0
          %1466 = vmatprep.subr.mxu0 0.0
          %1467 = vmatpush1.msra.mxu0 0.0
          %1468 = vmatprep.subr.mxu0 0.0
          %1469 = vmatpush1.msra.mxu0 0.0
          %1470 = vmatprep.subr.mxu0 0.0
          %1471 = vmatpush1.msra.mxu0 0.0
          %1472 = vmatprep.subr.mxu0 0.0
          %1473 = vmatpush1.msra.mxu0 0.0
          %1474 = vmatprep.mubr.f32.mxu0 0.0
          %1475 = vmatmul.mubr.f32.gmra.mrb[0].mxu0 %v1409
          %v1476 = vpop.f32.mrb[0].mxu0
          %v1477 = vadd.f32 0.0, %v1476
          %v1478 = vpop.f32.mrb[0].mxu0
          %1479 = vdwg.mxu0
          %v1480 = vmul.f32 %v1477, %v1253
          %v1482 = vsel %vm1255, %v1480, 0
          %1484 = vmatprep.subr.mxu0 0.0
          %1485 = vmatpush1.xpose.msra.mxu0 %v1260
          %1486 = vmatprep.subr.mxu0 0.0
          %1487 = vmatpush1.xpose.msra.mxu0 %v1263
          %1488 = vmatprep.subr.mxu0 0.0
          %1489 = vmatpush1.xpose.msra.mxu0 %v1266
          %1490 = vmatprep.subr.mxu0 0.0
          %1491 = vmatpush1.xpose.msra.mxu0 %v1269
          %1492 = vmatprep.subr.mxu0 0.0
          %1493 = vmatpush1.xpose.msra.mxu0 %v1272
          %1494 = vmatprep.subr.mxu0 0.0
          %1495 = vmatpush1.xpose.msra.mxu0 %v1275
          %1496 = vmatprep.subr.mxu0 0.0
          %1497 = vmatpush1.xpose.msra.mxu0 %v1278
          %1498 = vmatprep.subr.mxu0 0.0
          %1499 = vmatpush1.xpose.msra.mxu0 %v1281
          %1500 = vmatprep.subr.mxu0 0.0
          %1501 = vmatpush1.xpose.msra.mxu0 %v1284
          %1502 = vmatprep.subr.mxu0 0.0
          %1503 = vmatpush1.xpose.msra.mxu0 %v1287
          %1504 = vmatprep.subr.mxu0 0.0
          %1505 = vmatpush1.xpose.msra.mxu0 %v1290
          %1506 = vmatprep.subr.mxu0 0.0
          %1507 = vmatpush1.xpose.msra.mxu0 %v1293
          %1508 = vmatprep.subr.mxu0 0.0
          %1509 = vmatpush1.xpose.msra.mxu0 %v1296
          %1510 = vmatprep.subr.mxu0 0.0
          %1511 = vmatpush1.xpose.msra.mxu0 %v1299
          %1512 = vmatprep.subr.mxu0 0.0
          %1513 = vmatpush1.xpose.msra.mxu0 %v1302
          %1514 = vmatprep.subr.mxu0 0.0
          %1515 = vmatpush1.xpose.msra.mxu0 %v1305
          %1516 = vmatprep.subr.mxu0 0.0
          %1517 = vmatpush1.xpose.msra.mxu0 0.0
          %1518 = vmatprep.subr.mxu0 0.0
          %1519 = vmatpush1.xpose.msra.mxu0 0.0
          %1520 = vmatprep.subr.mxu0 0.0
          %1521 = vmatpush1.xpose.msra.mxu0 0.0
          %1522 = vmatprep.subr.mxu0 0.0
          %1523 = vmatpush1.xpose.msra.mxu0 0.0
          %1524 = vmatprep.subr.mxu0 0.0
          %1525 = vmatpush1.xpose.msra.mxu0 0.0
          %1526 = vmatprep.subr.mxu0 0.0
          %1527 = vmatpush1.xpose.msra.mxu0 0.0
          %1528 = vmatprep.subr.mxu0 0.0
          %1529 = vmatpush1.xpose.msra.mxu0 0.0
          %1530 = vmatprep.subr.mxu0 0.0
          %1531 = vmatpush1.xpose.msra.mxu0 0.0
          %1532 = vmatprep.subr.mxu0 0.0
          %1533 = vmatpush1.xpose.msra.mxu0 0.0
          %1534 = vmatprep.subr.mxu0 0.0
          %1535 = vmatpush1.xpose.msra.mxu0 0.0
          %1536 = vmatprep.subr.mxu0 0.0
          %1537 = vmatpush1.xpose.msra.mxu0 0.0
          %1538 = vmatprep.subr.mxu0 0.0
          %1539 = vmatpush1.xpose.msra.mxu0 0.0
          %1540 = vmatprep.subr.mxu0 0.0
          %1541 = vmatpush1.xpose.msra.mxu0 0.0
          %1542 = vmatprep.subr.mxu0 0.0
          %1543 = vmatpush1.xpose.msra.mxu0 0.0
          %1544 = vmatprep.subr.mxu0 0.0
          %1545 = vmatpush1.xpose.msra.mxu0 0.0
          %1546 = vmatprep.subr.mxu0 0.0
          %1547 = vmatpush1.xpose.msra.mxu0 0.0
          %1548 = vmatprep.mubr.f32.mxu0 0.0
          %1549 = vmatmul.mubr.f32.gmra.mrb[0].mxu0 %v1482
          %v1550 = vpop.f32.mrb[0].mxu0
          %v1551 = vadd.f32 1e-06, %v1550
          %v1552 = vpop.f32.mrb[0].mxu0
          %1553 = vdwg.mxu0
          %v1554 = vrsqrt.pop %v1551
          %v1555 = vlaneseq
          %v1556 = vshrl.u32 %v1555, 7
          %v1557 = vsub.s32 0, %v1556
          %v1558 = vrot.slane %v1554, %v1557
          %v1559 = vmul.f32 %v1381, %v1558
          %v1560 = vmul.f32 %v1382, %v1558
          %v1561 = vmul.f32 %v1383, %v1558
          %v1562 = vmul.f32 %v1384, %v1558
          %v1563 = vmul.f32 %v1385, %v1558
          %v1564 = vmul.f32 %v1386, %v1558
          %v1565 = vmul.f32 %v1387, %v1558
          %v1566 = vmul.f32 %v1388, %v1558
          %v1567 = vld [vmem:[#allocation3] sm:$0x1]
          %v1569 = vlaneseq
          %v1570 = vshrl.u32 %v1569, 7
          %v1571 = vsub.s32 0, %v1570
          %v1572 = vrot.slane %v1567, %v1571
          %v1574 = vmul.f32 %v1559, %v1572
          %v1575 = vmul.f32 %v1560, %v1572
          %v1576 = vmul.f32 %v1561, %v1572
          %v1577 = vmul.f32 %v1562, %v1572
          %v1578 = vmul.f32 %v1563, %v1572
          %v1579 = vmul.f32 %v1564, %v1572
          %v1580 = vmul.f32 %v1565, %v1572
          %v1581 = vmul.f32 %v1566, %v1572
          %v1582 = vld [vmem:[#allocation6] sm:$0x1]
          %v1584 = vlaneseq
          %v1585 = vshrl.u32 %v1584, 7
          %v1586 = vsub.s32 0, %v1585
          %v1587 = vrot.slane %v1582, %v1586
          %v1589 = vadd.f32 %v1574, %v1587
          %v1590 = vadd.f32 %v1575, %v1587
          %v1591 = vadd.f32 %v1576, %v1587
          %v1592 = vadd.f32 %v1577, %v1587
          %v1593 = vadd.f32 %v1578, %v1587
          %v1594 = vadd.f32 %v1579, %v1587
          %v1595 = vadd.f32 %v1580, %v1587
          %v1596 = vadd.f32 %v1581, %v1587
          %v1597 = vpack.c.bf16 %v1590, %v1589
          %v1598 = vpack.c.bf16 %v1592, %v1591
          %v1599 = vpack.c.bf16 %v1594, %v1593
          %v1600 = vpack.c.bf16 %v1596, %v1595
          %v1601 = vld [vmem:[#allocation9] sm:$0x1]
          %v1603 = vlaneseq
          %v1604 = vshrl.u32 %v1603, 7
          %v1605 = vsub.s32 0, %v1604
          %v1606 = vrot.slane %v1601, %v1605
          %v1624 = vunpack.c.l.b16 %v1146
          %v1625 = vunpack.c.l.b16 %v1147
          %v1626 = vunpack.c.l.b16 %v1148
          %v1627 = vunpack.c.l.b16 %v1149
          %v1628 = vunpack.c.l.b16 %v1150
          %v1629 = vunpack.c.l.b16 %v1151
          %v1630 = vunpack.c.l.b16 %v1152
          %v1631 = vunpack.c.l.b16 %v1153
          %v1632 = vunpack.c.l.b16 %v1154
          %v1633 = vunpack.c.l.b16 %v1155
          %v1634 = vunpack.c.l.b16 %v1156
          %v1635 = vunpack.c.l.b16 %v1157
          %v1636 = vunpack.c.l.b16 %v1158
          %v1637 = vunpack.c.l.b16 %v1159
          %v1638 = vunpack.c.l.b16 %v1160
          %v1639 = vunpack.c.l.b16 %v1161
          %v1640 = vpack.c.b16 %v1625, %v1624
          %v1641 = vpack.c.b16 %v1627, %v1626
          %v1642 = vpack.c.b16 %v1629, %v1628
          %v1643 = vpack.c.b16 %v1631, %v1630
          %v1644 = vpack.c.b16 %v1633, %v1632
          %v1645 = vpack.c.b16 %v1635, %v1634
          %v1646 = vpack.c.b16 %v1637, %v1636
          %v1647 = vpack.c.b16 %v1639, %v1638
          %1656 = vmatprep.subr.bf16.mxu0 0
          %1657 = vmatpush1.bf16.msra.mxu0 %v1640
          %1658 = vmatprep.subr.bf16.mxu0 0
          %1659 = vmatpush1.bf16.msra.mxu0 %v1641
          %1660 = vmatprep.subr.bf16.mxu0 0
          %1661 = vmatpush1.bf16.msra.mxu0 %v1642
          %1662 = vmatprep.subr.bf16.mxu0 0
          %1663 = vmatpush1.bf16.msra.mxu0 %v1643
          %1664 = vmatprep.subr.bf16.mxu0 0
          %1665 = vmatpush1.bf16.msra.mxu0 %v1644
          %1666 = vmatprep.subr.bf16.mxu0 0
          %1667 = vmatpush1.bf16.msra.mxu0 %v1645
          %1668 = vmatprep.subr.bf16.mxu0 0
          %1669 = vmatpush1.bf16.msra.mxu0 %v1646
          %1670 = vmatprep.subr.bf16.mxu0 0
          %1671 = vmatpush1.bf16.msra.mxu0 %v1647
          %1672 = vmatprep.subr.bf16.mxu0 0
          %1673 = vmatpush1.bf16.msra.mxu0 0
          %1674 = vmatprep.subr.bf16.mxu0 0
          %1675 = vmatpush1.bf16.msra.mxu0 0
          %1676 = vmatprep.subr.bf16.mxu0 0
          %1677 = vmatpush1.bf16.msra.mxu0 0
          %1678 = vmatprep.subr.bf16.mxu0 0
          %1679 = vmatpush1.bf16.msra.mxu0 0
          %1680 = vmatprep.subr.bf16.mxu0 0
          %1681 = vmatpush1.bf16.msra.mxu0 0
          %1682 = vmatprep.subr.bf16.mxu0 0
          %1683 = vmatpush1.bf16.msra.mxu0 0
          %1684 = vmatprep.subr.bf16.mxu0 0
          %1685 = vmatpush1.bf16.msra.mxu0 0
          %1686 = vmatprep.subr.bf16.mxu0 0
          %1687 = vmatpush1.bf16.msra.mxu0 0
          %1688 = vmatprep.mubr.bf16.mxu0 0
          %1689 = vmatmul.mubr.bf16.gmra.mrb[0].mxu0 %v1597
          %v1690 = vpop.f32.mrb[0].mxu0
          %v1691 = vadd.f32 %v1606, %v1690
          %v1692 = vpop.f32.mrb[0].mxu0
          %v1693 = vpop.f32.mrb[0].mxu0
          %v1694 = vadd.f32 %v1606, %v1693
          %v1695 = vpop.f32.mrb[0].mxu0
          %1696 = vmatprep.mubr.bf16.mxu0 0
          %1697 = vmatmul.mubr.bf16.gmra.mrb[0].mxu0 %v1598
          %v1698 = vpop.f32.mrb[0].mxu0
          %v1699 = vadd.f32 %v1606, %v1698
          %v1700 = vpop.f32.mrb[0].mxu0
          %v1701 = vpop.f32.mrb[0].mxu0
          %v1702 = vadd.f32 %v1606, %v1701
          %v1703 = vpop.f32.mrb[0].mxu0
          %1704 = vmatprep.mubr.bf16.mxu0 0
          %1705 = vmatmul.mubr.bf16.gmra.mrb[0].mxu0 %v1599
          %v1706 = vpop.f32.mrb[0].mxu0
          %v1707 = vadd.f32 %v1606, %v1706
          %v1708 = vpop.f32.mrb[0].mxu0
          %v1709 = vpop.f32.mrb[0].mxu0
          %v1710 = vadd.f32 %v1606, %v1709
          %v1711 = vpop.f32.mrb[0].mxu0
          %1712 = vmatprep.mubr.bf16.mxu0 0
          %1713 = vmatmul.mubr.bf16.gmra.mrb[0].mxu0 %v1600
          %v1714 = vpop.f32.mrb[0].mxu0
          %v1715 = vadd.f32 %v1606, %v1714
          %v1716 = vpop.f32.mrb[0].mxu0
          %v1717 = vpop.f32.mrb[0].mxu0
          %v1718 = vadd.f32 %v1606, %v1717
          %v1719 = vpop.f32.mrb[0].mxu0
          %1720 = vdwg.mxu0
          %1721 = vst [vmem:[#allocation2] sm:$0xff] %v1691
          %1722 = vst [vmem:[#allocation2 + $0x8] sm:$0xff] %v1694
          %1723 = vst [vmem:[#allocation2 + $0x10] sm:$0xff] %v1699
          %1724 = vst [vmem:[#allocation2 + $0x18] sm:$0xff] %v1702
          %1725 = vst [vmem:[#allocation2 + $0x20] sm:$0xff] %v1707
          %1726 = vst [vmem:[#allocation2 + $0x28] sm:$0xff] %v1710
          %1727 = vst [vmem:[#allocation2 + $0x30] sm:$0xff] %v1715
          %1728 = vst [vmem:[#allocation2 + $0x38] sm:$0xff] %v1718
          %s1729 = scalar_lea.vmem %s1115, 64
          %v1730 = vld [vmem:[%s1729] sm:$0xff]
          %v1731 = vld [vmem:[%s1729 + $0x8] sm:$0xff]
          %v1732 = vld [vmem:[%s1729 + $0x10] sm:$0xff]
          %v1733 = vld [vmem:[%s1729 + $0x18] sm:$0xff]
          %v1734 = vld [vmem:[%s1729 + $0x20] sm:$0xff]
          %v1735 = vld [vmem:[%s1729 + $0x28] sm:$0xff]
          %v1736 = vld [vmem:[%s1729 + $0x30] sm:$0xff]
          %v1737 = vld [vmem:[%s1729 + $0x38] sm:$0xff]
          %v1738 = vadd.f32 %v1730, %v1731
          %v1739 = vadd.f32 %v1738, %v1732
          %v1740 = vadd.f32 %v1739, %v1733
          %v1741 = vadd.f32 %v1740, %v1734
          %v1742 = vadd.f32 %v1741, %v1735
          %v1743 = vadd.f32 %v1742, %v1736
          %v1744 = vadd.f32 %v1743, %v1737
          %v1745 = vrot.slane %v1744, 4
          %v1746 = vadd.f32 %v1744, %v1745
          %v1747 = vrot.slane %v1746, 2
          %v1748 = vadd.f32 %v1746, %v1747
          %v1749 = vrot.slane %v1748, 1
          %v1750 = vadd.f32 %v1748, %v1749
          %1751 = vmatprep.subr.mxu0 0.0
          %1752 = vmatpush1.msra.mxu0 %v1130
          %1753 = vmatprep.subr.mxu0 0.0
          %1754 = vmatpush1.msra.mxu0 %v1131
          %1755 = vmatprep.subr.mxu0 0.0
          %1756 = vmatpush1.msra.mxu0 %v1132
          %1757 = vmatprep.subr.mxu0 0.0
          %1758 = vmatpush1.msra.mxu0 %v1133
          %1759 = vmatprep.subr.mxu0 0.0
          %1760 = vmatpush1.msra.mxu0 %v1134
          %1761 = vmatprep.subr.mxu0 0.0
          %1762 = vmatpush1.msra.mxu0 %v1135
          %1763 = vmatprep.subr.mxu0 0.0
          %1764 = vmatpush1.msra.mxu0 %v1136
          %1765 = vmatprep.subr.mxu0 0.0
          %1766 = vmatpush1.msra.mxu0 %v1137
          %1767 = vmatprep.subr.mxu0 0.0
          %1768 = vmatpush1.msra.mxu0 %v1138
          %1769 = vmatprep.subr.mxu0 0.0
          %1770 = vmatpush1.msra.mxu0 %v1139
          %1771 = vmatprep.subr.mxu0 0.0
          %1772 = vmatpush1.msra.mxu0 %v1140
          %1773 = vmatprep.subr.mxu0 0.0
          %1774 = vmatpush1.msra.mxu0 %v1141
          %1775 = vmatprep.subr.mxu0 0.0
          %1776 = vmatpush1.msra.mxu0 %v1142
          %1777 = vmatprep.subr.mxu0 0.0
          %1778 = vmatpush1.msra.mxu0 %v1143
          %1779 = vmatprep.subr.mxu0 0.0
          %1780 = vmatpush1.msra.mxu0 %v1144
          %1781 = vmatprep.subr.mxu0 0.0
          %1782 = vmatpush1.msra.mxu0 %v1145
          %1783 = vmatprep.subr.mxu0 0.0
          %1784 = vmatpush1.msra.mxu0 0.0
          %1785 = vmatprep.subr.mxu0 0.0
          %1786 = vmatpush1.msra.mxu0 0.0
          %1787 = vmatprep.subr.mxu0 0.0
          %1788 = vmatpush1.msra.mxu0 0.0
          %1789 = vmatprep.subr.mxu0 0.0
          %1790 = vmatpush1.msra.mxu0 0.0
          %1791 = vmatprep.subr.mxu0 0.0
          %1792 = vmatpush1.msra.mxu0 0.0
          %1793 = vmatprep.subr.mxu0 0.0
          %1794 = vmatpush1.msra.mxu0 0.0
          %1795 = vmatprep.subr.mxu0 0.0
          %1796 = vmatpush1.msra.mxu0 0.0
          %1797 = vmatprep.subr.mxu0 0.0
          %1798 = vmatpush1.msra.mxu0 0.0
          %1799 = vmatprep.subr.mxu0 0.0
          %1800 = vmatpush1.msra.mxu0 0.0
          %1801 = vmatprep.subr.mxu0 0.0
          %1802 = vmatpush1.msra.mxu0 0.0
          %1803 = vmatprep.subr.mxu0 0.0
          %1804 = vmatpush1.msra.mxu0 0.0
          %1805 = vmatprep.subr.mxu0 0.0
          %1806 = vmatpush1.msra.mxu0 0.0
          %1807 = vmatprep.subr.mxu0 0.0
          %1808 = vmatpush1.msra.mxu0 0.0
          %1809 = vmatprep.subr.mxu0 0.0
          %1810 = vmatpush1.msra.mxu0 0.0
          %1811 = vmatprep.subr.mxu0 0.0
          %1812 = vmatpush1.msra.mxu0 0.0
          %1813 = vmatprep.subr.mxu0 0.0
          %1814 = vmatpush1.msra.mxu0 0.0
          %1815 = vmatprep.mubr.f32.mxu0 0.0
          %1816 = vmatmul.mubr.f32.gmra.mrb[0].mxu0 %v1750
          %v1817 = vpop.f32.mrb[0].mxu0
          %v1818 = vadd.f32 0.0, %v1817
          %v1819 = vpop.f32.mrb[0].mxu0
          %1820 = vdwg.mxu0
          %v1821 = vmul.f32 %v1818, %v1253
          %v1823 = vsel %vm1255, %v1821, 0
          %1825 = vmatprep.subr.mxu0 0.0
          %1826 = vmatpush1.xpose.msra.mxu0 %v1260
          %1827 = vmatprep.subr.mxu0 0.0
          %1828 = vmatpush1.xpose.msra.mxu0 %v1263
          %1829 = vmatprep.subr.mxu0 0.0
          %1830 = vmatpush1.xpose.msra.mxu0 %v1266
          %1831 = vmatprep.subr.mxu0 0.0
          %1832 = vmatpush1.xpose.msra.mxu0 %v1269
          %1833 = vmatprep.subr.mxu0 0.0
          %1834 = vmatpush1.xpose.msra.mxu0 %v1272
          %1835 = vmatprep.subr.mxu0 0.0
          %1836 = vmatpush1.xpose.msra.mxu0 %v1275
          %1837 = vmatprep.subr.mxu0 0.0
          %1838 = vmatpush1.xpose.msra.mxu0 %v1278
          %1839 = vmatprep.subr.mxu0 0.0
          %1840 = vmatpush1.xpose.msra.mxu0 %v1281
          %1841 = vmatprep.subr.mxu0 0.0
          %1842 = vmatpush1.xpose.msra.mxu0 %v1284
          %1843 = vmatprep.subr.mxu0 0.0
          %1844 = vmatpush1.xpose.msra.mxu0 %v1287
          %1845 = vmatprep.subr.mxu0 0.0
          %1846 = vmatpush1.xpose.msra.mxu0 %v1290
          %1847 = vmatprep.subr.mxu0 0.0
          %1848 = vmatpush1.xpose.msra.mxu0 %v1293
          %1849 = vmatprep.subr.mxu0 0.0
          %1850 = vmatpush1.xpose.msra.mxu0 %v1296
          %1851 = vmatprep.subr.mxu0 0.0
          %1852 = vmatpush1.xpose.msra.mxu0 %v1299
          %1853 = vmatprep.subr.mxu0 0.0
          %1854 = vmatpush1.xpose.msra.mxu0 %v1302
          %1855 = vmatprep.subr.mxu0 0.0
          %1856 = vmatpush1.xpose.msra.mxu0 %v1305
          %1857 = vmatprep.subr.mxu0 0.0
          %1858 = vmatpush1.xpose.msra.mxu0 0.0
          %1859 = vmatprep.subr.mxu0 0.0
          %1860 = vmatpush1.xpose.msra.mxu0 0.0
          %1861 = vmatprep.subr.mxu0 0.0
          %1862 = vmatpush1.xpose.msra.mxu0 0.0
          %1863 = vmatprep.subr.mxu0 0.0
          %1864 = vmatpush1.xpose.msra.mxu0 0.0
          %1865 = vmatprep.subr.mxu0 0.0
          %1866 = vmatpush1.xpose.msra.mxu0 0.0
          %1867 = vmatprep.subr.mxu0 0.0
          %1868 = vmatpush1.xpose.msra.mxu0 0.0
          %1869 = vmatprep.subr.mxu0 0.0
          %1870 = vmatpush1.xpose.msra.mxu0 0.0
          %1871 = vmatprep.subr.mxu0 0.0
          %1872 = vmatpush1.xpose.msra.mxu0 0.0
          %1873 = vmatprep.subr.mxu0 0.0
          %1874 = vmatpush1.xpose.msra.mxu0 0.0
          %1875 = vmatprep.subr.mxu0 0.0
          %1876 = vmatpush1.xpose.msra.mxu0 0.0
          %1877 = vmatprep.subr.mxu0 0.0
          %1878 = vmatpush1.xpose.msra.mxu0 0.0
          %1879 = vmatprep.subr.mxu0 0.0
          %1880 = vmatpush1.xpose.msra.mxu0 0.0
          %1881 = vmatprep.subr.mxu0 0.0
          %1882 = vmatpush1.xpose.msra.mxu0 0.0
          %1883 = vmatprep.subr.mxu0 0.0
          %1884 = vmatpush1.xpose.msra.mxu0 0.0
          %1885 = vmatprep.subr.mxu0 0.0
          %1886 = vmatpush1.xpose.msra.mxu0 0.0
          %1887 = vmatprep.subr.mxu0 0.0
          %1888 = vmatpush1.xpose.msra.mxu0 0.0
          %1889 = vmatprep.mubr.f32.mxu0 0.0
          %1890 = vmatmul.mubr.f32.gmra.mrb[0].mxu0 %v1823
          %v1891 = vpop.f32.mrb[0].mxu0
          %v1892 = vadd.f32 0.0, %v1891
          %v1893 = vpop.f32.mrb[0].mxu0
          %1894 = vdwg.mxu0
          %v1895 = vlaneseq
          %v1896 = vshrl.u32 %v1895, 7
          %v1897 = vsub.s32 0, %v1896
          %v1898 = vrot.slane %v1892, %v1897
          %v1899 = vsub.f32 %v1730, %v1898
          %v1900 = vsub.f32 %v1731, %v1898
          %v1901 = vsub.f32 %v1732, %v1898
          %v1902 = vsub.f32 %v1733, %v1898
          %v1903 = vsub.f32 %v1734, %v1898
          %v1904 = vsub.f32 %v1735, %v1898
          %v1905 = vsub.f32 %v1736, %v1898
          %v1906 = vsub.f32 %v1737, %v1898
          %v1907 = vmul.f32 %v1899, %v1899
          %v1908 = vmul.f32 %v1900, %v1900
          %v1909 = vmul.f32 %v1901, %v1901
          %v1910 = vmul.f32 %v1902, %v1902
          %v1911 = vmul.f32 %v1903, %v1903
          %v1912 = vmul.f32 %v1904, %v1904
          %v1913 = vmul.f32 %v1905, %v1905
          %v1914 = vmul.f32 %v1906, %v1906
          %v1915 = vadd.f32 %v1907, %v1908
          %v1916 = vadd.f32 %v1915, %v1909
          %v1917 = vadd.f32 %v1916, %v1910
          %v1918 = vadd.f32 %v1917, %v1911
          %v1919 = vadd.f32 %v1918, %v1912
          %v1920 = vadd.f32 %v1919, %v1913
          %v1921 = vadd.f32 %v1920, %v1914
          %v1922 = vrot.slane %v1921, 4
          %v1923 = vadd.f32 %v1921, %v1922
          %v1924 = vrot.slane %v1923, 2
          %v1925 = vadd.f32 %v1923, %v1924
          %v1926 = vrot.slane %v1925, 1
          %v1927 = vadd.f32 %v1925, %v1926
          %1928 = vmatprep.subr.mxu0 0.0
          %1929 = vmatpush1.msra.mxu0 %v1130
          %1930 = vmatprep.subr.mxu0 0.0
          %1931 = vmatpush1.msra.mxu0 %v1131
          %1932 = vmatprep.subr.mxu0 0.0
          %1933 = vmatpush1.msra.mxu0 %v1132
          %1934 = vmatprep.subr.mxu0 0.0
          %1935 = vmatpush1.msra.mxu0 %v1133
          %1936 = vmatprep.subr.mxu0 0.0
          %1937 = vmatpush1.msra.mxu0 %v1134
          %1938 = vmatprep.subr.mxu0 0.0
          %1939 = vmatpush1.msra.mxu0 %v1135
          %1940 = vmatprep.subr.mxu0 0.0
          %1941 = vmatpush1.msra.mxu0 %v1136
          %1942 = vmatprep.subr.mxu0 0.0
          %1943 = vmatpush1.msra.mxu0 %v1137
          %1944 = vmatprep.subr.mxu0 0.0
          %1945 = vmatpush1.msra.mxu0 %v1138
          %1946 = vmatprep.subr.mxu0 0.0
          %1947 = vmatpush1.msra.mxu0 %v1139
          %1948 = vmatprep.subr.mxu0 0.0
          %1949 = vmatpush1.msra.mxu0 %v1140
          %1950 = vmatprep.subr.mxu0 0.0
          %1951 = vmatpush1.msra.mxu0 %v1141
          %1952 = vmatprep.subr.mxu0 0.0
          %1953 = vmatpush1.msra.mxu0 %v1142
          %1954 = vmatprep.subr.mxu0 0.0
          %1955 = vmatpush1.msra.mxu0 %v1143
          %1956 = vmatprep.subr.mxu0 0.0
          %1957 = vmatpush1.msra.mxu0 %v1144
          %1958 = vmatprep.subr.mxu0 0.0
          %1959 = vmatpush1.msra.mxu0 %v1145
          %1960 = vmatprep.subr.mxu0 0.0
          %1961 = vmatpush1.msra.mxu0 0.0
          %1962 = vmatprep.subr.mxu0 0.0
          %1963 = vmatpush1.msra.mxu0 0.0
          %1964 = vmatprep.subr.mxu0 0.0
          %1965 = vmatpush1.msra.mxu0 0.0
          %1966 = vmatprep.subr.mxu0 0.0
          %1967 = vmatpush1.msra.mxu0 0.0
          %1968 = vmatprep.subr.mxu0 0.0
          %1969 = vmatpush1.msra.mxu0 0.0
          %1970 = vmatprep.subr.mxu0 0.0
          %1971 = vmatpush1.msra.mxu0 0.0
          %1972 = vmatprep.subr.mxu0 0.0
          %1973 = vmatpush1.msra.mxu0 0.0
          %1974 = vmatprep.subr.mxu0 0.0
          %1975 = vmatpush1.msra.mxu0 0.0
          %1976 = vmatprep.subr.mxu0 0.0
          %1977 = vmatpush1.msra.mxu0 0.0
          %1978 = vmatprep.subr.mxu0 0.0
          %1979 = vmatpush1.msra.mxu0 0.0
          %1980 = vmatprep.subr.mxu0 0.0
          %1981 = vmatpush1.msra.mxu0 0.0
          %1982 = vmatprep.subr.mxu0 0.0
          %1983 = vmatpush1.msra.mxu0 0.0
          %1984 = vmatprep.subr.mxu0 0.0
          %1985 = vmatpush1.msra.mxu0 0.0
          %1986 = vmatprep.subr.mxu0 0.0
          %1987 = vmatpush1.msra.mxu0 0.0
          %1988 = vmatprep.subr.mxu0 0.0
          %1989 = vmatpush1.msra.mxu0 0.0
          %1990 = vmatprep.subr.mxu0 0.0
          %1991 = vmatpush1.msra.mxu0 0.0
          %1992 = vmatprep.mubr.f32.mxu0 0.0
          %1993 = vmatmul.mubr.f32.gmra.mrb[0].mxu0 %v1927
          %v1994 = vpop.f32.mrb[0].mxu0
          %v1995 = vadd.f32 0.0, %v1994
          %v1996 = vpop.f32.mrb[0].mxu0
          %1997 = vdwg.mxu0
          %v1998 = vmul.f32 %v1995, %v1253
          %v2000 = vsel %vm1255, %v1998, 0
          %2002 = vmatprep.subr.mxu0 0.0
          %2003 = vmatpush1.xpose.msra.mxu0 %v1260
          %2004 = vmatprep.subr.mxu0 0.0
          %2005 = vmatpush1.xpose.msra.mxu0 %v1263
          %2006 = vmatprep.subr.mxu0 0.0
          %2007 = vmatpush1.xpose.msra.mxu0 %v1266
          %2008 = vmatprep.subr.mxu0 0.0
          %2009 = vmatpush1.xpose.msra.mxu0 %v1269
          %2010 = vmatprep.subr.mxu0 0.0
          %2011 = vmatpush1.xpose.msra.mxu0 %v1272
          %2012 = vmatprep.subr.mxu0 0.0
          %2013 = vmatpush1.xpose.msra.mxu0 %v1275
          %2014 = vmatprep.subr.mxu0 0.0
          %2015 = vmatpush1.xpose.msra.mxu0 %v1278
          %2016 = vmatprep.subr.mxu0 0.0
          %2017 = vmatpush1.xpose.msra.mxu0 %v1281
          %2018 = vmatprep.subr.mxu0 0.0
          %2019 = vmatpush1.xpose.msra.mxu0 %v1284
          %2020 = vmatprep.subr.mxu0 0.0
          %2021 = vmatpush1.xpose.msra.mxu0 %v1287
          %2022 = vmatprep.subr.mxu0 0.0
          %2023 = vmatpush1.xpose.msra.mxu0 %v1290
          %2024 = vmatprep.subr.mxu0 0.0
          %2025 = vmatpush1.xpose.msra.mxu0 %v1293
          %2026 = vmatprep.subr.mxu0 0.0
          %2027 = vmatpush1.xpose.msra.mxu0 %v1296
          %2028 = vmatprep.subr.mxu0 0.0
          %2029 = vmatpush1.xpose.msra.mxu0 %v1299
          %2030 = vmatprep.subr.mxu0 0.0
          %2031 = vmatpush1.xpose.msra.mxu0 %v1302
          %2032 = vmatprep.subr.mxu0 0.0
          %2033 = vmatpush1.xpose.msra.mxu0 %v1305
          %2034 = vmatprep.subr.mxu0 0.0
          %2035 = vmatpush1.xpose.msra.mxu0 0.0
          %2036 = vmatprep.subr.mxu0 0.0
          %2037 = vmatpush1.xpose.msra.mxu0 0.0
          %2038 = vmatprep.subr.mxu0 0.0
          %2039 = vmatpush1.xpose.msra.mxu0 0.0
          %2040 = vmatprep.subr.mxu0 0.0
          %2041 = vmatpush1.xpose.msra.mxu0 0.0
          %2042 = vmatprep.subr.mxu0 0.0
          %2043 = vmatpush1.xpose.msra.mxu0 0.0
          %2044 = vmatprep.subr.mxu0 0.0
          %2045 = vmatpush1.xpose.msra.mxu0 0.0
          %2046 = vmatprep.subr.mxu0 0.0
          %2047 = vmatpush1.xpose.msra.mxu0 0.0
          %2048 = vmatprep.subr.mxu0 0.0
          %2049 = vmatpush1.xpose.msra.mxu0 0.0
          %2050 = vmatprep.subr.mxu0 0.0
          %2051 = vmatpush1.xpose.msra.mxu0 0.0
          %2052 = vmatprep.subr.mxu0 0.0
          %2053 = vmatpush1.xpose.msra.mxu0 0.0
          %2054 = vmatprep.subr.mxu0 0.0
          %2055 = vmatpush1.xpose.msra.mxu0 0.0
          %2056 = vmatprep.subr.mxu0 0.0
          %2057 = vmatpush1.xpose.msra.mxu0 0.0
          %2058 = vmatprep.subr.mxu0 0.0
          %2059 = vmatpush1.xpose.msra.mxu0 0.0
          %2060 = vmatprep.subr.mxu0 0.0
          %2061 = vmatpush1.xpose.msra.mxu0 0.0
          %2062 = vmatprep.subr.mxu0 0.0
          %2063 = vmatpush1.xpose.msra.mxu0 0.0
          %2064 = vmatprep.subr.mxu0 0.0
          %2065 = vmatpush1.xpose.msra.mxu0 0.0
          %2066 = vmatprep.mubr.f32.mxu0 0.0
          %2067 = vmatmul.mubr.f32.gmra.mrb[0].mxu0 %v2000
          %v2068 = vpop.f32.mrb[0].mxu0
          %v2069 = vadd.f32 1e-06, %v2068
          %v2070 = vpop.f32.mrb[0].mxu0
          %2071 = vdwg.mxu0
          %v2072 = vrsqrt.pop %v2069
          %v2073 = vlaneseq
          %v2074 = vshrl.u32 %v2073, 7
          %v2075 = vsub.s32 0, %v2074
          %v2076 = vrot.slane %v2072, %v2075
          %v2077 = vmul.f32 %v1899, %v2076
          %v2078 = vmul.f32 %v1900, %v2076
          %v2079 = vmul.f32 %v1901, %v2076
          %v2080 = vmul.f32 %v1902, %v2076
          %v2081 = vmul.f32 %v1903, %v2076
          %v2082 = vmul.f32 %v1904, %v2076
          %v2083 = vmul.f32 %v1905, %v2076
          %v2084 = vmul.f32 %v1906, %v2076
          %v2085 = vld [vmem:[#allocation3] sm:$0x1]
          %v2087 = vlaneseq
          %v2088 = vshrl.u32 %v2087, 7
          %v2089 = vsub.s32 0, %v2088
          %v2090 = vrot.slane %v2085, %v2089
          %v2092 = vmul.f32 %v2077, %v2090
          %v2093 = vmul.f32 %v2078, %v2090
          %v2094 = vmul.f32 %v2079, %v2090
          %v2095 = vmul.f32 %v2080, %v2090
          %v2096 = vmul.f32 %v2081, %v2090
          %v2097 = vmul.f32 %v2082, %v2090
          %v2098 = vmul.f32 %v2083, %v2090
          %v2099 = vmul.f32 %v2084, %v2090
          %v2100 = vld [vmem:[#allocation6] sm:$0x1]
          %v2102 = vlaneseq
          %v2103 = vshrl.u32 %v2102, 7
          %v2104 = vsub.s32 0, %v2103
          %v2105 = vrot.slane %v2100, %v2104
          %v2107 = vadd.f32 %v2092, %v2105
          %v2108 = vadd.f32 %v2093, %v2105
          %v2109 = vadd.f32 %v2094, %v2105
          %v2110 = vadd.f32 %v2095, %v2105
          %v2111 = vadd.f32 %v2096, %v2105
          %v2112 = vadd.f32 %v2097, %v2105
          %v2113 = vadd.f32 %v2098, %v2105
          %v2114 = vadd.f32 %v2099, %v2105
          %v2115 = vpack.c.bf16 %v2108, %v2107
          %v2116 = vpack.c.bf16 %v2110, %v2109
          %v2117 = vpack.c.bf16 %v2112, %v2111
          %v2118 = vpack.c.bf16 %v2114, %v2113
          %v2119 = vld [vmem:[#allocation9] sm:$0x1]
          %v2121 = vlaneseq
          %v2122 = vshrl.u32 %v2121, 7
          %v2123 = vsub.s32 0, %v2122
          %v2124 = vrot.slane %v2119, %v2123
          %2126 = vmatprep.subr.bf16.mxu0 0
          %2127 = vmatpush1.bf16.msra.mxu0 %v1640
          %2128 = vmatprep.subr.bf16.mxu0 0
          %2129 = vmatpush1.bf16.msra.mxu0 %v1641
          %2130 = vmatprep.subr.bf16.mxu0 0
          %2131 = vmatpush1.bf16.msra.mxu0 %v1642
          %2132 = vmatprep.subr.bf16.mxu0 0
          %2133 = vmatpush1.bf16.msra.mxu0 %v1643
          %2134 = vmatprep.subr.bf16.mxu0 0
          %2135 = vmatpush1.bf16.msra.mxu0 %v1644
          %2136 = vmatprep.subr.bf16.mxu0 0
          %2137 = vmatpush1.bf16.msra.mxu0 %v1645
          %2138 = vmatprep.subr.bf16.mxu0 0
          %2139 = vmatpush1.bf16.msra.mxu0 %v1646
          %2140 = vmatprep.subr.bf16.mxu0 0
          %2141 = vmatpush1.bf16.msra.mxu0 %v1647
          %2142 = vmatprep.subr.bf16.mxu0 0
          %2143 = vmatpush1.bf16.msra.mxu0 0
          %2144 = vmatprep.subr.bf16.mxu0 0
          %2145 = vmatpush1.bf16.msra.mxu0 0
          %2146 = vmatprep.subr.bf16.mxu0 0
          %2147 = vmatpush1.bf16.msra.mxu0 0
          %2148 = vmatprep.subr.bf16.mxu0 0
          %2149 = vmatpush1.bf16.msra.mxu0 0
          %2150 = vmatprep.subr.bf16.mxu0 0
          %2151 = vmatpush1.bf16.msra.mxu0 0
          %2152 = vmatprep.subr.bf16.mxu0 0
          %2153 = vmatpush1.bf16.msra.mxu0 0
          %2154 = vmatprep.subr.bf16.mxu0 0
          %2155 = vmatpush1.bf16.msra.mxu0 0
          %2156 = vmatprep.subr.bf16.mxu0 0
          %2157 = vmatpush1.bf16.msra.mxu0 0
          %2158 = vmatprep.mubr.bf16.mxu0 0
          %2159 = vmatmul.mubr.bf16.gmra.mrb[0].mxu0 %v2115
          %v2160 = vpop.f32.mrb[0].mxu0
          %v2161 = vadd.f32 %v2124, %v2160
          %v2162 = vpop.f32.mrb[0].mxu0
          %v2163 = vpop.f32.mrb[0].mxu0
          %v2164 = vadd.f32 %v2124, %v2163
          %v2165 = vpop.f32.mrb[0].mxu0
          %2166 = vmatprep.mubr.bf16.mxu0 0
          %2167 = vmatmul.mubr.bf16.gmra.mrb[0].mxu0 %v2116
          %v2168 = vpop.f32.mrb[0].mxu0
          %v2169 = vadd.f32 %v2124, %v2168
          %v2170 = vpop.f32.mrb[0].mxu0
          %v2171 = vpop.f32.mrb[0].mxu0
          %v2172 = vadd.f32 %v2124, %v2171
          %v2173 = vpop.f32.mrb[0].mxu0
          %2174 = vmatprep.mubr.bf16.mxu0 0
          %2175 = vmatmul.mubr.bf16.gmra.mrb[0].mxu0 %v2117
          %v2176 = vpop.f32.mrb[0].mxu0
          %v2177 = vadd.f32 %v2124, %v2176
          %v2178 = vpop.f32.mrb[0].mxu0
          %v2179 = vpop.f32.mrb[0].mxu0
          %v2180 = vadd.f32 %v2124, %v2179
          %v2181 = vpop.f32.mrb[0].mxu0
          %2182 = vmatprep.mubr.bf16.mxu0 0
          %2183 = vmatmul.mubr.bf16.gmra.mrb[0].mxu0 %v2118
          %v2184 = vpop.f32.mrb[0].mxu0
          %v2185 = vadd.f32 %v2124, %v2184
          %v2186 = vpop.f32.mrb[0].mxu0
          %v2187 = vpop.f32.mrb[0].mxu0
          %v2188 = vadd.f32 %v2124, %v2187
          %v2189 = vpop.f32.mrb[0].mxu0
          %2190 = vdwg.mxu0
          %s2191 = scalar_lea.vmem [#allocation2], 64
          %2192 = vst [vmem:[%s2191] sm:$0xff] %v2161
          %2193 = vst [vmem:[%s2191 + $0x8] sm:$0xff] %v2164
          %2194 = vst [vmem:[%s2191 + $0x10] sm:$0xff] %v2169
          %2195 = vst [vmem:[%s2191 + $0x18] sm:$0xff] %v2172
          %2196 = vst [vmem:[%s2191 + $0x20] sm:$0xff] %v2177
          %2197 = vst [vmem:[%s2191 + $0x28] sm:$0xff] %v2180
          %2198 = vst [vmem:[%s2191 + $0x30] sm:$0xff] %v2185
          %2199 = vst [vmem:[%s2191 + $0x38] sm:$0xff] %v2188
        $region168: #{tpu_custom_call.1} parent=103 // pred_fallthru
          _
        %v2200 = vld [vmem:[%s929] sm:$0xff]
        %v2201 = vld [vmem:[%s929 + $0x8] sm:$0xf]
        %v2202 = vld [vmem:[%s929 + $0xc] sm:$0xff]
        %v2203 = vld [vmem:[%s929 + $0x14] sm:$0xf]
        %v2204 = vld [vmem:[%s929 + $0x18] sm:$0xff]
        %v2205 = vld [vmem:[%s929 + $0x20] sm:$0xf]
        %v2206 = vld [vmem:[%s929 + $0x24] sm:$0xff]
        %v2207 = vld [vmem:[%s929 + $0x2c] sm:$0xf]
        %v2208 = vld [vmem:[%s929 + $0x30] sm:$0xff]
        %v2209 = vld [vmem:[%s929 + $0x38] sm:$0xf]
        %v2210 = vld [vmem:[%s929 + $0x3c] sm:$0xff]
        %v2211 = vld [vmem:[%s929 + $0x44] sm:$0xf]
        %v2212 = vld [vmem:[%s929 + $0x48] sm:$0xff]
        %v2213 = vld [vmem:[%s929 + $0x50] sm:$0xf]
        %v2214 = vld [vmem:[%s929 + $0x54] sm:$0xff]
        %v2215 = vld [vmem:[%s929 + $0x5c] sm:$0xf]
        %v2216 = vld [vmem:[%s929 + $0x60] sm:$0xff]
        %v2217 = vld [vmem:[%s929 + $0x68] sm:$0xf]
        %v2218 = vld [vmem:[%s929 + $0x6c] sm:$0xff]
        %v2219 = vld [vmem:[%s929 + $0x74] sm:$0xf]
        %v2220 = vld [vmem:[%s929 + $0x78] sm:$0xff]
        %v2221 = vld [vmem:[%s929 + $0x80] sm:$0xf]
        %v2222 = vld [vmem:[%s929 + $0x84] sm:$0xff]
        %v2223 = vld [vmem:[%s929 + $0x8c] sm:$0xf]
        %v2224 = vld [vmem:[%s929 + $0x90] sm:$0xff]
        %v2225 = vld [vmem:[%s929 + $0x98] sm:$0xf]
        %v2226 = vld [vmem:[%s929 + $0x9c] sm:$0xff]
        %v2227 = vld [vmem:[%s929 + $0xa4] sm:$0xf]
        %v2228 = vld [vmem:[%s929 + $0xa8] sm:$0xff]
        %v2229 = vld [vmem:[%s929 + $0xb0] sm:$0xf]
        %v2230 = vld [vmem:[%s929 + $0xb4] sm:$0xff]
        %v2231 = vld [vmem:[%s929 + $0xbc] sm:$0xf]
        %v2232 = vld [vmem:[%s938] sm:$0xf]
        %v2233 = vld [vmem:[%s938 + $0x4] sm:$0xf]
        %v2234 = vld [vmem:[%s938 + $0x8] sm:$0xf]
        %v2235 = vld [vmem:[%s938 + $0xc] sm:$0xf]
        %v2236 = vld [vmem:[%s938 + $0x10] sm:$0xf]
        %v2237 = vld [vmem:[%s938 + $0x14] sm:$0xf]
        %v2238 = vld [vmem:[%s938 + $0x18] sm:$0xf]
        %v2239 = vld [vmem:[%s938 + $0x1c] sm:$0xf]
        %v2240 = vld [vmem:[%s938 + $0x20] sm:$0xf]
        %v2241 = vld [vmem:[%s938 + $0x24] sm:$0xf]
        %v2242 = vld [vmem:[%s938 + $0x28] sm:$0xf]
        %v2243 = vld [vmem:[%s938 + $0x2c] sm:$0xf]
        %v2244 = vld [vmem:[%s938 + $0x30] sm:$0xf]
        %v2245 = vld [vmem:[%s938 + $0x34] sm:$0xf]
        %v2246 = vld [vmem:[%s938 + $0x38] sm:$0xf]
        %v2247 = vld [vmem:[%s938 + $0x3c] sm:$0xf]
        %v2248 = vld [vmem:[%s971] sm:$0xff]
        %v2249 = vld [vmem:[%s971 + $0x8] sm:$0xff]
        %v2250 = vld [vmem:[%s971 + $0x10] sm:$0xff]
        %v2251 = vld [vmem:[%s971 + $0x18] sm:$0xff]
        %v2252 = vld [vmem:[%s971 + $0x20] sm:$0xff]
        %v2253 = vld [vmem:[%s971 + $0x28] sm:$0xff]
        %v2254 = vld [vmem:[%s971 + $0x30] sm:$0xff]
        %v2255 = vld [vmem:[%s971 + $0x38] sm:$0xff]
        %v2256 = vld [vmem:[%s971 + $0x40] sm:$0xff]
        %v2257 = vld [vmem:[%s971 + $0x48] sm:$0xff]
        %v2258 = vld [vmem:[%s971 + $0x50] sm:$0xff]
        %v2259 = vld [vmem:[%s971 + $0x58] sm:$0xff]
        %v2260 = vld [vmem:[%s971 + $0x60] sm:$0xff]
        %v2261 = vld [vmem:[%s971 + $0x68] sm:$0xff]
        %v2262 = vld [vmem:[%s971 + $0x70] sm:$0xff]
        %v2263 = vld [vmem:[%s971 + $0x78] sm:$0xff]
        %v2264 = vld [vmem:[%s971 + $0x80] sm:$0xff]
        %v2265 = vld [vmem:[%s971 + $0x88] sm:$0xff]
        %v2266 = vld [vmem:[%s971 + $0x90] sm:$0xff]
        %v2267 = vld [vmem:[%s971 + $0x98] sm:$0xff]
        %v2268 = vld [vmem:[%s971 + $0xa0] sm:$0xff]
        %v2269 = vld [vmem:[%s971 + $0xa8] sm:$0xff]
        %v2270 = vld [vmem:[%s971 + $0xb0] sm:$0xff]
        %v2271 = vld [vmem:[%s971 + $0xb8] sm:$0xff]
        %v2272 = vld [vmem:[%s971 + $0xc0] sm:$0xff]
        %v2273 = vld [vmem:[%s971 + $0xc8] sm:$0xff]
        %v2274 = vld [vmem:[%s971 + $0xd0] sm:$0xff]
        %v2275 = vld [vmem:[%s971 + $0xd8] sm:$0xff]
        %v2276 = vld [vmem:[%s971 + $0xe0] sm:$0xff]
        %v2277 = vld [vmem:[%s971 + $0xe8] sm:$0xff]
        %v2278 = vld [vmem:[%s971 + $0xf0] sm:$0xff]
        %v2279 = vld [vmem:[%s971 + $0xf8] sm:$0xff]
        %v2280 = vld [vmem:[%s989] sm:$0xff]
        %v2281 = vld [vmem:[%s989 + $0x8] sm:$0xff]
        %v2282 = vld [vmem:[%s989 + $0x10] sm:$0xff]
        %v2283 = vld [vmem:[%s989 + $0x18] sm:$0xff]
        %v2284 = vld [vmem:[%s989 + $0x20] sm:$0xff]
        %v2285 = vld [vmem:[%s989 + $0x28] sm:$0xff]
        %v2286 = vld [vmem:[%s989 + $0x30] sm:$0xff]
        %v2287 = vld [vmem:[%s989 + $0x38] sm:$0xff]
        %v2288 = vld [vmem:[%s989 + $0x40] sm:$0xff]
        %v2289 = vld [vmem:[%s989 + $0x48] sm:$0xff]
        %v2290 = vld [vmem:[%s989 + $0x50] sm:$0xff]
        %v2291 = vld [vmem:[%s989 + $0x58] sm:$0xff]
        %v2292 = vld [vmem:[%s989 + $0x60] sm:$0xff]
        %v2293 = vld [vmem:[%s989 + $0x68] sm:$0xff]
        %v2294 = vld [vmem:[%s989 + $0x70] sm:$0xff]
        %v2295 = vld [vmem:[%s989 + $0x78] sm:$0xff]
        %v2296 = vld [vmem:[%s989 + $0x80] sm:$0xff]
        %v2297 = vld [vmem:[%s989 + $0x88] sm:$0xff]
        %v2298 = vld [vmem:[%s989 + $0x90] sm:$0xff]
        %v2299 = vld [vmem:[%s989 + $0x98] sm:$0xff]
        %v2300 = vld [vmem:[%s989 + $0xa0] sm:$0xff]
        %v2301 = vld [vmem:[%s989 + $0xa8] sm:$0xff]
        %v2302 = vld [vmem:[%s989 + $0xb0] sm:$0xff]
        %v2303 = vld [vmem:[%s989 + $0xb8] sm:$0xff]
        %v2304 = vld [vmem:[%s989 + $0xc0] sm:$0xff]
        %v2305 = vld [vmem:[%s989 + $0xc8] sm:$0xff]
        %v2306 = vld [vmem:[%s989 + $0xd0] sm:$0xff]
        %v2307 = vld [vmem:[%s989 + $0xd8] sm:$0xff]
        %v2308 = vld [vmem:[%s989 + $0xe0] sm:$0xff]
        %v2309 = vld [vmem:[%s989 + $0xe8] sm:$0xff]
        %v2310 = vld [vmem:[%s989 + $0xf0] sm:$0xff]
        %v2311 = vld [vmem:[%s989 + $0xf8] sm:$0xff]
        %v2312 = vld [vmem:[%s998] sm:$0xf]
        %v2313 = vld [vmem:[%s998 + $0x4] sm:$0xf]
        %v2314 = vld [vmem:[%s998 + $0x8] sm:$0xf]
        %v2315 = vld [vmem:[%s998 + $0xc] sm:$0xf]
        %v2316 = vld [vmem:[%s998 + $0x10] sm:$0xf]
        %v2317 = vld [vmem:[%s998 + $0x14] sm:$0xf]
        %v2318 = vld [vmem:[%s998 + $0x18] sm:$0xf]
        %v2319 = vld [vmem:[%s998 + $0x1c] sm:$0xf]
        %v2320 = vld [vmem:[%s998 + $0x20] sm:$0xf]
        %v2321 = vld [vmem:[%s998 + $0x24] sm:$0xf]
        %v2322 = vld [vmem:[%s998 + $0x28] sm:$0xf]
        %v2323 = vld [vmem:[%s998 + $0x2c] sm:$0xf]
        %v2324 = vld [vmem:[%s998 + $0x30] sm:$0xf]
        %v2325 = vld [vmem:[%s998 + $0x34] sm:$0xf]
        %v2326 = vld [vmem:[%s998 + $0x38] sm:$0xf]
        %v2327 = vld [vmem:[%s998 + $0x3c] sm:$0xf]
        %v2328 = vld [vmem:[%s998 + $0x40] sm:$0xf]
        %v2329 = vld [vmem:[%s998 + $0x44] sm:$0xf]
        %v2330 = vld [vmem:[%s998 + $0x48] sm:$0xf]
        %v2331 = vld [vmem:[%s998 + $0x4c] sm:$0xf]
        %v2332 = vld [vmem:[%s998 + $0x50] sm:$0xf]
        %v2333 = vld [vmem:[%s998 + $0x54] sm:$0xf]
        %v2334 = vld [vmem:[%s998 + $0x58] sm:$0xf]
        %v2335 = vld [vmem:[%s998 + $0x5c] sm:$0xf]
        %v2336 = vld [vmem:[%s998 + $0x60] sm:$0xf]
        %v2337 = vld [vmem:[%s998 + $0x64] sm:$0xf]
        %v2338 = vld [vmem:[%s998 + $0x68] sm:$0xf]
        %v2339 = vld [vmem:[%s998 + $0x6c] sm:$0xf]
        %v2340 = vld [vmem:[%s998 + $0x70] sm:$0xf]
        %v2341 = vld [vmem:[%s998 + $0x74] sm:$0xf]
        %v2342 = vld [vmem:[%s998 + $0x78] sm:$0xf]
        %v2343 = vld [vmem:[%s998 + $0x7c] sm:$0xf]
        %v2344 = vld [vmem:[%s998 + $0x80] sm:$0xf]
        %v2345 = vld [vmem:[%s998 + $0x84] sm:$0xf]
        %v2346 = vld [vmem:[%s998 + $0x88] sm:$0xf]
        %v2347 = vld [vmem:[%s998 + $0x8c] sm:$0xf]
        %v2348 = vld [vmem:[%s998 + $0x90] sm:$0xf]
        %v2349 = vld [vmem:[%s998 + $0x94] sm:$0xf]
        %v2350 = vld [vmem:[%s998 + $0x98] sm:$0xf]
        %v2351 = vld [vmem:[%s998 + $0x9c] sm:$0xf]
        %v2352 = vld [vmem:[%s998 + $0xa0] sm:$0xf]
        %v2353 = vld [vmem:[%s998 + $0xa4] sm:$0xf]
        %v2354 = vld [vmem:[%s998 + $0xa8] sm:$0xf]
        %v2355 = vld [vmem:[%s998 + $0xac] sm:$0xf]
        %v2356 = vld [vmem:[%s998 + $0xb0] sm:$0xf]
        %v2357 = vld [vmem:[%s998 + $0xb4] sm:$0xf]
        %v2358 = vld [vmem:[%s998 + $0xb8] sm:$0xf]
        %v2359 = vld [vmem:[%s998 + $0xbc] sm:$0xf]
        %v2360 = vld [vmem:[%s998 + $0xc0] sm:$0xf]
        %v2361 = vld [vmem:[%s998 + $0xc4] sm:$0xf]
        %v2362 = vld [vmem:[%s998 + $0xc8] sm:$0xf]
        %v2363 = vld [vmem:[%s998 + $0xcc] sm:$0xf]
        %v2364 = vld [vmem:[%s998 + $0xd0] sm:$0xf]
        %v2365 = vld [vmem:[%s998 + $0xd4] sm:$0xf]
        %v2366 = vld [vmem:[%s998 + $0xd8] sm:$0xf]
        %v2367 = vld [vmem:[%s998 + $0xdc] sm:$0xf]
        %v2368 = vld [vmem:[%s998 + $0xe0] sm:$0xf]
        %v2369 = vld [vmem:[%s998 + $0xe4] sm:$0xf]
        %v2370 = vld [vmem:[%s998 + $0xe8] sm:$0xf]
        %v2371 = vld [vmem:[%s998 + $0xec] sm:$0xf]
        %v2372 = vld [vmem:[%s998 + $0xf0] sm:$0xf]
        %v2373 = vld [vmem:[%s998 + $0xf4] sm:$0xf]
        %v2374 = vld [vmem:[%s998 + $0xf8] sm:$0xf]
        %v2375 = vld [vmem:[%s998 + $0xfc] sm:$0xf]
        %v2376 = vld [vmem:[%s946] sm:$0x1]
        %v2377 = vld [vmem:[#allocation2] sm:$0xff]
        %v2378 = vld [vmem:[#allocation2 + $0x8] sm:$0xff]
        %v2379 = vld [vmem:[#allocation2 + $0x10] sm:$0xff]
        %v2380 = vld [vmem:[#allocation2 + $0x18] sm:$0xff]
        %v2381 = vld [vmem:[#allocation2 + $0x20] sm:$0xff]
        %v2382 = vld [vmem:[#allocation2 + $0x28] sm:$0xff]
        %v2383 = vld [vmem:[#allocation2 + $0x30] sm:$0xff]
        %v2384 = vld [vmem:[#allocation2 + $0x38] sm:$0xff]
        %v2385 = vld [vmem:[%s912] sm:$0x1]
        %v2386 = vld [vmem:[%s920] sm:$0x1]
        %2387 = vadd.xlane.f32.xlu0 %v2377
        %v2388 = vpop.xlane.xlu0 %2387
        %2389 = vadd.xlane.f32.xlu0 %v2378
        %v2390 = vpop.xlane.xlu0 %2389
        %2391 = vadd.xlane.f32.xlu0 %v2379
        %v2392 = vpop.xlane.xlu0 %2391
        %2393 = vadd.xlane.f32.xlu0 %v2380
        %v2394 = vpop.xlane.xlu0 %2393
        %2395 = vadd.xlane.f32.xlu0 %v2381
        %v2396 = vpop.xlane.xlu0 %2395
        %2397 = vadd.xlane.f32.xlu0 %v2382
        %v2398 = vpop.xlane.xlu0 %2397
        %2399 = vadd.xlane.f32.xlu0 %v2383
        %v2400 = vpop.xlane.xlu0 %2399
        %2401 = vadd.xlane.f32.xlu0 %v2384
        %v2402 = vpop.xlane.xlu0 %2401
        %v2403 = vrcp.pop 128.0
        %v2404 = vmul.f32 %v2388, %v2403
        %v2405 = vmul.f32 %v2390, %v2403
        %v2406 = vmul.f32 %v2392, %v2403
        %v2407 = vmul.f32 %v2394, %v2403
        %v2408 = vmul.f32 %v2396, %v2403
        %v2409 = vmul.f32 %v2398, %v2403
        %v2410 = vmul.f32 %v2400, %v2403
        %v2411 = vmul.f32 %v2402, %v2403
        %v2412 = vsub.f32 %v2377, %v2404
        %v2413 = vsub.f32 %v2378, %v2405
        %v2414 = vsub.f32 %v2379, %v2406
        %v2415 = vsub.f32 %v2380, %v2407
        %v2416 = vsub.f32 %v2381, %v2408
        %v2417 = vsub.f32 %v2382, %v2409
        %v2418 = vsub.f32 %v2383, %v2410
        %v2419 = vsub.f32 %v2384, %v2411
        %v2420 = vmul.f32 %v2412, %v2412
        %v2421 = vmul.f32 %v2413, %v2413
        %v2422 = vmul.f32 %v2414, %v2414
        %v2423 = vmul.f32 %v2415, %v2415
        %v2424 = vmul.f32 %v2416, %v2416
        %v2425 = vmul.f32 %v2417, %v2417
        %v2426 = vmul.f32 %v2418, %v2418
        %v2427 = vmul.f32 %v2419, %v2419
        %2428 = vadd.xlane.f32.xlu0 %v2420
        %v2429 = vpop.xlane.xlu0 %2428
        %2430 = vadd.xlane.f32.xlu0 %v2421
        %v2431 = vpop.xlane.xlu0 %2430
        %2432 = vadd.xlane.f32.xlu0 %v2422
        %v2433 = vpop.xlane.xlu0 %2432
        %2434 = vadd.xlane.f32.xlu0 %v2423
        %v2435 = vpop.xlane.xlu0 %2434
        %2436 = vadd.xlane.f32.xlu0 %v2424
        %v2437 = vpop.xlane.xlu0 %2436
        %2438 = vadd.xlane.f32.xlu0 %v2425
        %v2439 = vpop.xlane.xlu0 %2438
        %2440 = vadd.xlane.f32.xlu0 %v2426
        %v2441 = vpop.xlane.xlu0 %2440
        %2442 = vadd.xlane.f32.xlu0 %v2427
        %v2443 = vpop.xlane.xlu0 %2442
        %v2444 = vmul.f32 %v2429, %v2403
        %v2445 = vmul.f32 %v2431, %v2403
        %v2446 = vmul.f32 %v2433, %v2403
        %v2447 = vmul.f32 %v2435, %v2403
        %v2448 = vmul.f32 %v2437, %v2403
        %v2449 = vmul.f32 %v2439, %v2403
        %v2450 = vmul.f32 %v2441, %v2403
        %v2451 = vmul.f32 %v2443, %v2403
        %v2452 = vadd.f32 %v2444, 1e-05
        %v2453 = vadd.f32 %v2445, 1e-05
        %v2454 = vadd.f32 %v2446, 1e-05
        %v2455 = vadd.f32 %v2447, 1e-05
        %v2456 = vadd.f32 %v2448, 1e-05
        %v2457 = vadd.f32 %v2449, 1e-05
        %v2458 = vadd.f32 %v2450, 1e-05
        %v2459 = vadd.f32 %v2451, 1e-05
        %v2460 = vrsqrt.pop %v2452
        %v2461 = vrsqrt.pop %v2453
        %v2462 = vrsqrt.pop %v2454
        %v2463 = vrsqrt.pop %v2455
        %v2464 = vrsqrt.pop %v2456
        %v2465 = vrsqrt.pop %v2457
        %v2466 = vrsqrt.pop %v2458
        %v2467 = vrsqrt.pop %v2459
        %v2468 = vmul.f32 %v2412, %v2460
        %v2469 = vmul.f32 %v2413, %v2461
        %v2470 = vmul.f32 %v2414, %v2462
        %v2471 = vmul.f32 %v2415, %v2463
        %v2472 = vmul.f32 %v2416, %v2464
        %v2473 = vmul.f32 %v2417, %v2465
        %v2474 = vmul.f32 %v2418, %v2466
        %v2475 = vmul.f32 %v2419, %v2467
        %v2477 = vlaneseq
        %v2478 = vshrl.u32 %v2477, 7
        %v2479 = vsub.s32 0, %v2478
        %v2480 = vrot.slane %v2385, %v2479
        %v2482 = vmul.f32 %v2468, %v2480
        %v2483 = vmul.f32 %v2469, %v2480
        %v2484 = vmul.f32 %v2470, %v2480
        %v2485 = vmul.f32 %v2471, %v2480
        %v2486 = vmul.f32 %v2472, %v2480
        %v2487 = vmul.f32 %v2473, %v2480
        %v2488 = vmul.f32 %v2474, %v2480
        %v2489 = vmul.f32 %v2475, %v2480
        %v2491 = vlaneseq
        %v2492 = vshrl.u32 %v2491, 7
        %v2493 = vsub.s32 0, %v2492
        %v2494 = vrot.slane %v2386, %v2493
        %v2496 = vadd.f32 %v2482, %v2494
        %v2497 = vadd.f32 %v2483, %v2494
        %v2498 = vadd.f32 %v2484, %v2494
        %v2499 = vadd.f32 %v2485, %v2494
        %v2500 = vadd.f32 %v2486, %v2494
        %v2501 = vadd.f32 %v2487, %v2494
        %v2502 = vadd.f32 %v2488, %v2494
        %v2503 = vadd.f32 %v2489, %v2494
        %v2504 = vpack.c.bf16 %v2497, %v2496
        %v2505 = vpack.c.bf16 %v2499, %v2498
        %v2506 = vpack.c.bf16 %v2501, %v2500
        %v2507 = vpack.c.bf16 %v2503, %v2502
        %v2540 = vunpack.c.l.b16 %v2200
        %v2541 = vunpack.c.h.b16 %v2200
        %v2542 = vunpack.c.l.b16 %v2201
        %v2543 = vunpack.c.l.b16 %v2202
        %v2544 = vunpack.c.h.b16 %v2202
        %v2545 = vunpack.c.l.b16 %v2203
        %v2546 = vunpack.c.l.b16 %v2204
        %v2547 = vunpack.c.h.b16 %v2204
        %v2548 = vunpack.c.l.b16 %v2205
        %v2549 = vunpack.c.l.b16 %v2206
        %v2550 = vunpack.c.h.b16 %v2206
        %v2551 = vunpack.c.l.b16 %v2207
        %v2552 = vunpack.c.l.b16 %v2208
        %v2553 = vunpack.c.h.b16 %v2208
        %v2554 = vunpack.c.l.b16 %v2209
        %v2555 = vunpack.c.l.b16 %v2210
        %v2556 = vunpack.c.h.b16 %v2210
        %v2557 = vunpack.c.l.b16 %v2211
        %v2558 = vunpack.c.l.b16 %v2212
        %v2559 = vunpack.c.h.b16 %v2212
        %v2560 = vunpack.c.l.b16 %v2213
        %v2561 = vunpack.c.l.b16 %v2214
        %v2562 = vunpack.c.h.b16 %v2214
        %v2563 = vunpack.c.l.b16 %v2215
        %v2564 = vunpack.c.l.b16 %v2216
        %v2565 = vunpack.c.h.b16 %v2216
        %v2566 = vunpack.c.l.b16 %v2217
        %v2567 = vunpack.c.l.b16 %v2218
        %v2568 = vunpack.c.h.b16 %v2218
        %v2569 = vunpack.c.l.b16 %v2219
        %v2570 = vunpack.c.l.b16 %v2220
        %v2571 = vunpack.c.h.b16 %v2220
        %v2572 = vunpack.c.l.b16 %v2221
        %v2573 = vunpack.c.l.b16 %v2222
        %v2574 = vunpack.c.h.b16 %v2222
        %v2575 = vunpack.c.l.b16 %v2223
        %v2576 = vunpack.c.l.b16 %v2224
        %v2577 = vunpack.c.h.b16 %v2224
        %v2578 = vunpack.c.l.b16 %v2225
        %v2579 = vunpack.c.l.b16 %v2226
        %v2580 = vunpack.c.h.b16 %v2226
        %v2581 = vunpack.c.l.b16 %v2227
        %v2582 = vunpack.c.l.b16 %v2228
        %v2583 = vunpack.c.h.b16 %v2228
        %v2584 = vunpack.c.l.b16 %v2229
        %v2585 = vunpack.c.l.b16 %v2230
        %v2586 = vunpack.c.h.b16 %v2230
        %v2587 = vunpack.c.l.b16 %v2231
        %v2588 = vpack.c.b16 %v2543, %v2540
        %v2589 = vpack.c.b16 %v2544, %v2541
        %v2590 = vpack.c.b16 %v2545, %v2542
        %v2591 = vpack.c.b16 %v2549, %v2546
        %v2592 = vpack.c.b16 %v2550, %v2547
        %v2593 = vpack.c.b16 %v2551, %v2548
        %v2594 = vpack.c.b16 %v2555, %v2552
        %v2595 = vpack.c.b16 %v2556, %v2553
        %v2596 = vpack.c.b16 %v2557, %v2554
        %v2597 = vpack.c.b16 %v2561, %v2558
        %v2598 = vpack.c.b16 %v2562, %v2559
        %v2599 = vpack.c.b16 %v2563, %v2560
        %v2600 = vpack.c.b16 %v2567, %v2564
        %v2601 = vpack.c.b16 %v2568, %v2565
        %v2602 = vpack.c.b16 %v2569, %v2566
        %v2603 = vpack.c.b16 %v2573, %v2570
        %v2604 = vpack.c.b16 %v2574, %v2571
        %v2605 = vpack.c.b16 %v2575, %v2572
        %v2606 = vpack.c.b16 %v2579, %v2576
        %v2607 = vpack.c.b16 %v2580, %v2577
        %v2608 = vpack.c.b16 %v2581, %v2578
        %v2609 = vpack.c.b16 %v2585, %v2582
        %v2610 = vpack.c.b16 %v2586, %v2583
        %v2611 = vpack.c.b16 %v2587, %v2584
        %2636 = vmatprep.subr.bf16.mxu0 %v2589
        %2637 = vmatpush1.bf16.msra.mxu0 %v2588
        %2638 = vmatprep.subr.bf16.mxu0 %v2592
        %2639 = vmatpush1.bf16.msra.mxu0 %v2591
        %2640 = vmatprep.subr.bf16.mxu0 %v2595
        %2641 = vmatpush1.bf16.msra.mxu0 %v2594
        %2642 = vmatprep.subr.bf16.mxu0 %v2598
        %2643 = vmatpush1.bf16.msra.mxu0 %v2597
        %2644 = vmatprep.subr.bf16.mxu0 %v2601
        %2645 = vmatpush1.bf16.msra.mxu0 %v2600
        %2646 = vmatprep.subr.bf16.mxu0 %v2604
        %2647 = vmatpush1.bf16.msra.mxu0 %v2603
        %2648 = vmatprep.subr.bf16.mxu0 %v2607
        %2649 = vmatpush1.bf16.msra.mxu0 %v2606
        %2650 = vmatprep.subr.bf16.mxu0 %v2610
        %2651 = vmatpush1.bf16.msra.mxu0 %v2609
        %2652 = vmatprep.subr.bf16.mxu0 0
        %2653 = vmatpush1.bf16.msra.mxu0 0
        %2654 = vmatprep.subr.bf16.mxu0 0
        %2655 = vmatpush1.bf16.msra.mxu0 0
        %2656 = vmatprep.subr.bf16.mxu0 0
        %2657 = vmatpush1.bf16.msra.mxu0 0
        %2658 = vmatprep.subr.bf16.mxu0 0
        %2659 = vmatpush1.bf16.msra.mxu0 0
        %2660 = vmatprep.subr.bf16.mxu0 0
        %2661 = vmatpush1.bf16.msra.mxu0 0
        %2662 = vmatprep.subr.bf16.mxu0 0
        %2663 = vmatpush1.bf16.msra.mxu0 0
        %2664 = vmatprep.subr.bf16.mxu0 0
        %2665 = vmatpush1.bf16.msra.mxu0 0
        %2666 = vmatprep.subr.bf16.mxu0 0
        %2667 = vmatpush1.bf16.msra.mxu0 0
        %2668 = vmatprep.mubr.bf16.mxu0 0
        %2669 = vmatmul.mubr.bf16.gmra.mrb[0].mxu0 %v2504
        %v2670 = vpop.f32.mrb[0].mxu0
        %v2671 = vadd.f32 0.0, %v2670
        %v2672 = vpop.f32.mrb[0].mxu0
        %v2673 = vadd.f32 0.0, %v2672
        %v2674 = vpop.f32.mrb[0].mxu0
        %v2675 = vadd.f32 0.0, %v2674
        %v2676 = vpop.f32.mrb[0].mxu0
        %v2677 = vadd.f32 0.0, %v2676
        %2678 = vmatprep.mubr.bf16.mxu0 0
        %2679 = vmatmul.mubr.bf16.gmra.mrb[0].mxu0 %v2505
        %v2680 = vpop.f32.mrb[0].mxu0
        %v2681 = vadd.f32 0.0, %v2680
        %v2682 = vpop.f32.mrb[0].mxu0
        %v2683 = vadd.f32 0.0, %v2682
        %v2684 = vpop.f32.mrb[0].mxu0
        %v2685 = vadd.f32 0.0, %v2684
        %v2686 = vpop.f32.mrb[0].mxu0
        %v2687 = vadd.f32 0.0, %v2686
        %2688 = vmatprep.mubr.bf16.mxu0 0
        %2689 = vmatmul.mubr.bf16.gmra.mrb[0].mxu0 %v2506
        %v2690 = vpop.f32.mrb[0].mxu0
        %v2691 = vadd.f32 0.0, %v2690
        %v2692 = vpop.f32.mrb[0].mxu0
        %v2693 = vadd.f32 0.0, %v2692
        %v2694 = vpop.f32.mrb[0].mxu0
        %v2695 = vadd.f32 0.0, %v2694
        %v2696 = vpop.f32.mrb[0].mxu0
        %v2697 = vadd.f32 0.0, %v2696
        %2698 = vmatprep.mubr.bf16.mxu0 0
        %2699 = vmatmul.mubr.bf16.gmra.mrb[0].mxu0 %v2507
        %v2700 = vpop.f32.mrb[0].mxu0
        %v2701 = vadd.f32 0.0, %v2700
        %v2702 = vpop.f32.mrb[0].mxu0
        %v2703 = vadd.f32 0.0, %v2702
        %v2704 = vpop.f32.mrb[0].mxu0
        %v2705 = vadd.f32 0.0, %v2704
        %v2706 = vpop.f32.mrb[0].mxu0
        %v2707 = vadd.f32 0.0, %v2706
        %2708 = vdwg.mxu0
        %2709 = vmatprep.subr.bf16.mxu0 0
        %2710 = vmatpush1.bf16.msra.mxu0 %v2590
        %2711 = vmatprep.subr.bf16.mxu0 0
        %2712 = vmatpush1.bf16.msra.mxu0 %v2593
        %2713 = vmatprep.subr.bf16.mxu0 0
        %2714 = vmatpush1.bf16.msra.mxu0 %v2596
        %2715 = vmatprep.subr.bf16.mxu0 0
        %2716 = vmatpush1.bf16.msra.mxu0 %v2599
        %2717 = vmatprep.subr.bf16.mxu0 0
        %2718 = vmatpush1.bf16.msra.mxu0 %v2602
        %2719 = vmatprep.subr.bf16.mxu0 0
        %2720 = vmatpush1.bf16.msra.mxu0 %v2605
        %2721 = vmatprep.subr.bf16.mxu0 0
        %2722 = vmatpush1.bf16.msra.mxu0 %v2608
        %2723 = vmatprep.subr.bf16.mxu0 0
        %2724 = vmatpush1.bf16.msra.mxu0 %v2611
        %2725 = vmatprep.subr.bf16.mxu0 0
        %2726 = vmatpush1.bf16.msra.mxu0 0
        %2727 = vmatprep.subr.bf16.mxu0 0
        %2728 = vmatpush1.bf16.msra.mxu0 0
        %2729 = vmatprep.subr.bf16.mxu0 0
        %2730 = vmatpush1.bf16.msra.mxu0 0
        %2731 = vmatprep.subr.bf16.mxu0 0
        %2732 = vmatpush1.bf16.msra.mxu0 0
        %2733 = vmatprep.subr.bf16.mxu0 0
        %2734 = vmatpush1.bf16.msra.mxu0 0
        %2735 = vmatprep.subr.bf16.mxu0 0
        %2736 = vmatpush1.bf16.msra.mxu0 0
        %2737 = vmatprep.subr.bf16.mxu0 0
        %2738 = vmatpush1.bf16.msra.mxu0 0
        %2739 = vmatprep.subr.bf16.mxu0 0
        %2740 = vmatpush1.bf16.msra.mxu0 0
        %2741 = vmatprep.mubr.bf16.mxu0 0
        %2742 = vmatmul.mubr.bf16.gmra.mrb[0].mxu0 %v2504
        %v2743 = vpop.f32.mrb[0].mxu0
        %v2744 = vadd.f32 0.0, %v2743
        %v2745 = vpop.f32.mrb[0].mxu0
        %v2746 = vpop.f32.mrb[0].mxu0
        %v2747 = vadd.f32 0.0, %v2746
        %v2748 = vpop.f32.mrb[0].mxu0
        %2749 = vmatprep.mubr.bf16.mxu0 0
        %2750 = vmatmul.mubr.bf16.gmra.mrb[0].mxu0 %v2505
        %v2751 = vpop.f32.mrb[0].mxu0
        %v2752 = vadd.f32 0.0, %v2751
        %v2753 = vpop.f32.mrb[0].mxu0
        %v2754 = vpop.f32.mrb[0].mxu0
        %v2755 = vadd.f32 0.0, %v2754
        %v2756 = vpop.f32.mrb[0].mxu0
        %2757 = vmatprep.mubr.bf16.mxu0 0
        %2758 = vmatmul.mubr.bf16.gmra.mrb[0].mxu0 %v2506
        %v2759 = vpop.f32.mrb[0].mxu0
        %v2760 = vadd.f32 0.0, %v2759
        %v2761 = vpop.f32.mrb[0].mxu0
        %v2762 = vpop.f32.mrb[0].mxu0
        %v2763 = vadd.f32 0.0, %v2762
        %v2764 = vpop.f32.mrb[0].mxu0
        %2765 = vmatprep.mubr.bf16.mxu0 0
        %2766 = vmatmul.mubr.bf16.gmra.mrb[0].mxu0 %v2507
        %v2767 = vpop.f32.mrb[0].mxu0
        %v2768 = vadd.f32 0.0, %v2767
        %v2769 = vpop.f32.mrb[0].mxu0
        %v2770 = vpop.f32.mrb[0].mxu0
        %v2771 = vadd.f32 0.0, %v2770
        %v2772 = vpop.f32.mrb[0].mxu0
        %2773 = vdwg.mxu0
        %v2774 = vpack.c.bf16 %v2677, %v2673
        %v2775 = vpack.c.bf16 %v2687, %v2683
        %v2776 = vpack.c.bf16 %v2697, %v2693
        %v2777 = vpack.c.bf16 %v2707, %v2703
        %v2778 = vpack.c.bf16 %v2747, %v2744
        %v2779 = vpack.c.bf16 %v2755, %v2752
        %v2780 = vpack.c.bf16 %v2763, %v2760
        %v2781 = vpack.c.bf16 %v2771, %v2768
        %v2782 = vpack.c.bf16 %v2675, %v2671
        %v2783 = vpack.c.bf16 %v2685, %v2681
        %v2784 = vpack.c.bf16 %v2695, %v2691
        %v2785 = vpack.c.bf16 %v2705, %v2701
        %vm2786 = vcmask 261120
        %v2788 = vsel %vm2786, %v2782, 0
        %v2791 = vsel %vm2786, %v2783, 0
        %v2794 = vsel %vm2786, %v2784, 0
        %v2797 = vsel %vm2786, %v2785, 0
        %v2800 = vsel %vm2786, %v2774, 0
        %v2803 = vsel %vm2786, %v2775, 0
        %v2806 = vsel %vm2786, %v2776, 0
        %v2809 = vsel %vm2786, %v2777, 0
        %2811 = vmatprep.subr.bf16.mxu0 0
        %2812 = vmatpush1.bf16.xpose.msra.mxu0 %v2800
        %2813 = vmatprep.subr.bf16.mxu0 0
        %2814 = vmatpush1.bf16.xpose.msra.mxu0 %v2803
        %2815 = vmatprep.subr.bf16.mxu0 0
        %2816 = vmatpush1.bf16.xpose.msra.mxu0 %v2806
        %2817 = vmatprep.subr.bf16.mxu0 0
        %2818 = vmatpush1.bf16.xpose.msra.mxu0 %v2809
        %2819 = vmatprep.subr.bf16.mxu0 0
        %2820 = vmatpush1.bf16.xpose.msra.mxu0 0
        %2821 = vmatprep.subr.bf16.mxu0 0
        %2822 = vmatpush1.bf16.xpose.msra.mxu0 0
        %2823 = vmatprep.subr.bf16.mxu0 0
        %2824 = vmatpush1.bf16.xpose.msra.mxu0 0
        %2825 = vmatprep.subr.bf16.mxu0 0
        %2826 = vmatpush1.bf16.xpose.msra.mxu0 0
        %2827 = vmatprep.subr.bf16.mxu0 0
        %2828 = vmatpush1.bf16.xpose.msra.mxu0 0
        %2829 = vmatprep.subr.bf16.mxu0 0
        %2830 = vmatpush1.bf16.xpose.msra.mxu0 0
        %2831 = vmatprep.subr.bf16.mxu0 0
        %2832 = vmatpush1.bf16.xpose.msra.mxu0 0
        %2833 = vmatprep.subr.bf16.mxu0 0
        %2834 = vmatpush1.bf16.xpose.msra.mxu0 0
        %2835 = vmatprep.subr.bf16.mxu0 0
        %2836 = vmatpush1.bf16.xpose.msra.mxu0 0
        %2837 = vmatprep.subr.bf16.mxu0 0
        %2838 = vmatpush1.bf16.xpose.msra.mxu0 0
        %2839 = vmatprep.subr.bf16.mxu0 0
        %2840 = vmatpush1.bf16.xpose.msra.mxu0 0
        %2841 = vmatprep.subr.bf16.mxu0 0
        %2842 = vmatpush1.bf16.xpose.msra.mxu0 0
        %2843 = vmatprep.mubr.bf16.mxu0 0
        %2844 = vmatmul.mubr.bf16.gmra.mrb[0].mxu0 %v2788
        %v2845 = vpop.f32.mrb[0].mxu0
        %v2846 = vadd.f32 0.0, %v2845
        %v2847 = vpop.f32.mrb[0].mxu0
        %v2848 = vpop.f32.mrb[0].mxu0
        %v2849 = vadd.f32 0.0, %v2848
        %v2850 = vpop.f32.mrb[0].mxu0
        %2851 = vmatprep.mubr.bf16.mxu0 0
        %2852 = vmatmul.mubr.bf16.gmra.mrb[0].mxu0 %v2791
        %v2853 = vpop.f32.mrb[0].mxu0
        %v2854 = vadd.f32 0.0, %v2853
        %v2855 = vpop.f32.mrb[0].mxu0
        %v2856 = vpop.f32.mrb[0].mxu0
        %v2857 = vadd.f32 0.0, %v2856
        %v2858 = vpop.f32.mrb[0].mxu0
        %2859 = vmatprep.mubr.bf16.mxu0 0
        %2860 = vmatmul.mubr.bf16.gmra.mrb[0].mxu0 %v2794
        %v2861 = vpop.f32.mrb[0].mxu0
        %v2862 = vadd.f32 0.0, %v2861
        %v2863 = vpop.f32.mrb[0].mxu0
        %v2864 = vpop.f32.mrb[0].mxu0
        %v2865 = vadd.f32 0.0, %v2864
        %v2866 = vpop.f32.mrb[0].mxu0
        %2867 = vmatprep.mubr.bf16.mxu0 0
        %2868 = vmatmul.mubr.bf16.gmra.mrb[0].mxu0 %v2797
        %v2869 = vpop.f32.mrb[0].mxu0
        %v2870 = vadd.f32 0.0, %v2869
        %v2871 = vpop.f32.mrb[0].mxu0
        %v2872 = vpop.f32.mrb[0].mxu0
        %v2873 = vadd.f32 0.0, %v2872
        %v2874 = vpop.f32.mrb[0].mxu0
        %2875 = vdwg.mxu0
        %vm2876 = vcmask 523264
        %v2877 = vsel %vm2876, %v2846, -inf
        %2878 = vmax.xlane.f32.xlu0 %v2877
        %v2879 = vpop.xlane.xlu0 %2878
        %v2880 = vsel %vm2876, %v2849, -inf
        %2881 = vmax.xlane.f32.xlu0 %v2880
        %v2882 = vpop.xlane.xlu0 %2881
        %v2883 = vsel %vm2876, %v2854, -inf
        %2884 = vmax.xlane.f32.xlu0 %v2883
        %v2885 = vpop.xlane.xlu0 %2884
        %v2886 = vsel %vm2876, %v2857, -inf
        %2887 = vmax.xlane.f32.xlu0 %v2886
        %v2888 = vpop.xlane.xlu0 %2887
        %v2889 = vsel %vm2876, %v2862, -inf
        %2890 = vmax.xlane.f32.xlu0 %v2889
        %v2891 = vpop.xlane.xlu0 %2890
        %v2892 = vsel %vm2876, %v2865, -inf
        %2893 = vmax.xlane.f32.xlu0 %v2892
        %v2894 = vpop.xlane.xlu0 %2893
        %v2895 = vsel %vm2876, %v2870, -inf
        %2896 = vmax.xlane.f32.xlu0 %v2895
        %v2897 = vpop.xlane.xlu0 %2896
        %v2898 = vsel %vm2876, %v2873, -inf
        %2899 = vmax.xlane.f32.xlu0 %v2898
        %v2900 = vpop.xlane.xlu0 %2899
        %v2901 = vsub.f32 %v2846, %v2879
        %v2902 = vsub.f32 %v2849, %v2882
        %v2903 = vsub.f32 %v2854, %v2885
        %v2904 = vsub.f32 %v2857, %v2888
        %v2905 = vsub.f32 %v2862, %v2891
        %v2906 = vsub.f32 %v2865, %v2894
        %v2907 = vsub.f32 %v2870, %v2897
        %v2908 = vsub.f32 %v2873, %v2900
        %v2909 = vmul.f32 %v2901, 1.442695
        %v2910 = vpow.pop %v2909
        %v2911 = vmul.f32 %v2902, 1.442695
        %v2912 = vpow.pop %v2911
        %v2913 = vmul.f32 %v2903, 1.442695
        %v2914 = vpow.pop %v2913
        %v2915 = vmul.f32 %v2904, 1.442695
        %v2916 = vpow.pop %v2915
        %v2917 = vmul.f32 %v2905, 1.442695
        %v2918 = vpow.pop %v2917
        %v2919 = vmul.f32 %v2906, 1.442695
        %v2920 = vpow.pop %v2919
        %v2921 = vmul.f32 %v2907, 1.442695
        %v2922 = vpow.pop %v2921
        %v2923 = vmul.f32 %v2908, 1.442695
        %v2924 = vpow.pop %v2923
        %v2925 = vsel %vm2876, %v2910, 0.0
        %2926 = vadd.xlane.f32.xlu0 %v2925
        %v2927 = vpop.xlane.xlu0 %2926
        %v2928 = vsel %vm2876, %v2912, 0.0
        %2929 = vadd.xlane.f32.xlu0 %v2928
        %v2930 = vpop.xlane.xlu0 %2929
        %v2931 = vsel %vm2876, %v2914, 0.0
        %2932 = vadd.xlane.f32.xlu0 %v2931
        %v2933 = vpop.xlane.xlu0 %2932
        %v2934 = vsel %vm2876, %v2916, 0.0
        %2935 = vadd.xlane.f32.xlu0 %v2934
        %v2936 = vpop.xlane.xlu0 %2935
        %v2937 = vsel %vm2876, %v2918, 0.0
        %2938 = vadd.xlane.f32.xlu0 %v2937
        %v2939 = vpop.xlane.xlu0 %2938
        %v2940 = vsel %vm2876, %v2920, 0.0
        %2941 = vadd.xlane.f32.xlu0 %v2940
        %v2942 = vpop.xlane.xlu0 %2941
        %v2943 = vsel %vm2876, %v2922, 0.0
        %2944 = vadd.xlane.f32.xlu0 %v2943
        %v2945 = vpop.xlane.xlu0 %2944
        %v2946 = vsel %vm2876, %v2924, 0.0
        %2947 = vadd.xlane.f32.xlu0 %v2946
        %v2948 = vpop.xlane.xlu0 %2947
        %v2949 = vrcp.pop %v2927
        %v2950 = vrcp.pop %v2930
        %v2951 = vrcp.pop %v2933
        %v2952 = vrcp.pop %v2936
        %v2953 = vrcp.pop %v2939
        %v2954 = vrcp.pop %v2942
        %v2955 = vrcp.pop %v2945
        %v2956 = vrcp.pop %v2948
        %v2957 = vmul.f32 %v2910, %v2949
        %v2958 = vmul.f32 %v2912, %v2950
        %v2959 = vmul.f32 %v2914, %v2951
        %v2960 = vmul.f32 %v2916, %v2952
        %v2961 = vmul.f32 %v2918, %v2953
        %v2962 = vmul.f32 %v2920, %v2954
        %v2963 = vmul.f32 %v2922, %v2955
        %v2964 = vmul.f32 %v2924, %v2956
        %v2965 = vpack.c.bf16 %v2958, %v2957
        %v2966 = vpack.c.bf16 %v2960, %v2959
        %v2967 = vpack.c.bf16 %v2962, %v2961
        %v2968 = vpack.c.bf16 %v2964, %v2963
        %v2970 = vsel %vm2876, %v2965, 0
        %v2973 = vsel %vm2876, %v2966, 0
        %v2976 = vsel %vm2876, %v2967, 0
        %v2979 = vsel %vm2876, %v2968, 0
        %2981 = vmatprep.subr.bf16.mxu0 0
        %2982 = vmatpush1.bf16.msra.mxu0 %v2778
        %2983 = vmatprep.subr.bf16.mxu0 0
        %2984 = vmatpush1.bf16.msra.mxu0 %v2779
        %2985 = vmatprep.subr.bf16.mxu0 0
        %2986 = vmatpush1.bf16.msra.mxu0 %v2780
        %2987 = vmatprep.subr.bf16.mxu0 0
        %2988 = vmatpush1.bf16.msra.mxu0 %v2781
        %2989 = vmatprep.subr.bf16.mxu0 0
        %2990 = vmatpush1.bf16.msra.mxu0 0
        %2991 = vmatprep.subr.bf16.mxu0 0
        %2992 = vmatpush1.bf16.msra.mxu0 0
        %2993 = vmatprep.subr.bf16.mxu0 0
        %2994 = vmatpush1.bf16.msra.mxu0 0
        %2995 = vmatprep.subr.bf16.mxu0 0
        %2996 = vmatpush1.bf16.msra.mxu0 0
        %2997 = vmatprep.subr.bf16.mxu0 0
        %2998 = vmatpush1.bf16.msra.mxu0 0
        %2999 = vmatprep.subr.bf16.mxu0 0
        %3000 = vmatpush1.bf16.msra.mxu0 0
        %3001 = vmatprep.subr.bf16.mxu0 0
        %3002 = vmatpush1.bf16.msra.mxu0 0
        %3003 = vmatprep.subr.bf16.mxu0 0
        %3004 = vmatpush1.bf16.msra.mxu0 0
        %3005 = vmatprep.subr.bf16.mxu0 0
        %3006 = vmatpush1.bf16.msra.mxu0 0
        %3007 = vmatprep.subr.bf16.mxu0 0
        %3008 = vmatpush1.bf16.msra.mxu0 0
        %3009 = vmatprep.subr.bf16.mxu0 0
        %3010 = vmatpush1.bf16.msra.mxu0 0
        %3011 = vmatprep.subr.bf16.mxu0 0
        %3012 = vmatpush1.bf16.msra.mxu0 0
        %3013 = vmatprep.mubr.bf16.mxu0 0
        %3014 = vmatmul.mubr.bf16.gmra.mrb[0].mxu0 %v2970
        %v3015 = vpop.f32.mrb[0].mxu0
        %v3016 = vadd.f32 0.0, %v3015
        %v3017 = vpop.f32.mrb[0].mxu0
        %v3018 = vpop.f32.mrb[0].mxu0
        %v3019 = vadd.f32 0.0, %v3018
        %v3020 = vpop.f32.mrb[0].mxu0
        %3021 = vmatprep.mubr.bf16.mxu0 0
        %3022 = vmatmul.mubr.bf16.gmra.mrb[0].mxu0 %v2973
        %v3023 = vpop.f32.mrb[0].mxu0
        %v3024 = vadd.f32 0.0, %v3023
        %v3025 = vpop.f32.mrb[0].mxu0
        %v3026 = vpop.f32.mrb[0].mxu0
        %v3027 = vadd.f32 0.0, %v3026
        %v3028 = vpop.f32.mrb[0].mxu0
        %3029 = vmatprep.mubr.bf16.mxu0 0
        %3030 = vmatmul.mubr.bf16.gmra.mrb[0].mxu0 %v2976
        %v3031 = vpop.f32.mrb[0].mxu0
        %v3032 = vadd.f32 0.0, %v3031
        %v3033 = vpop.f32.mrb[0].mxu0
        %v3034 = vpop.f32.mrb[0].mxu0
        %v3035 = vadd.f32 0.0, %v3034
        %v3036 = vpop.f32.mrb[0].mxu0
        %3037 = vmatprep.mubr.bf16.mxu0 0
        %3038 = vmatmul.mubr.bf16.gmra.mrb[0].mxu0 %v2979
        %v3039 = vpop.f32.mrb[0].mxu0
        %v3040 = vadd.f32 0.0, %v3039
        %v3041 = vpop.f32.mrb[0].mxu0
        %v3042 = vpop.f32.mrb[0].mxu0
        %v3043 = vadd.f32 0.0, %v3042
        %v3044 = vpop.f32.mrb[0].mxu0
        %3045 = vdwg.mxu0
        %v3046 = vpack.c.bf16 %v3019, %v3016
        %v3047 = vpack.c.bf16 %v3027, %v3024
        %v3048 = vpack.c.bf16 %v3035, %v3032
        %v3049 = vpack.c.bf16 %v3043, %v3040
        %3054 = vrot.lane.b32.xlu0 %v2782, 96
        %v3055 = vpop.permute.xlu0 %3054
        %3056 = vrot.lane.b32.xlu0 %v2783, 96
        %v3057 = vpop.permute.xlu0 %3056
        %3058 = vrot.lane.b32.xlu0 %v2784, 96
        %v3059 = vpop.permute.xlu0 %3058
        %3060 = vrot.lane.b32.xlu0 %v2785, 96
        %v3061 = vpop.permute.xlu0 %3060
        %3066 = vrot.lane.b32.xlu0 %v2774, 96
        %v3067 = vpop.permute.xlu0 %3066
        %3068 = vrot.lane.b32.xlu0 %v2775, 96
        %v3069 = vpop.permute.xlu0 %3068
        %3070 = vrot.lane.b32.xlu0 %v2776, 96
        %v3071 = vpop.permute.xlu0 %3070
        %3072 = vrot.lane.b32.xlu0 %v2777, 96
        %v3073 = vpop.permute.xlu0 %3072
        %v3075 = vsel %vm2786, %v3055, 0
        %v3078 = vsel %vm2786, %v3057, 0
        %v3081 = vsel %vm2786, %v3059, 0
        %v3084 = vsel %vm2786, %v3061, 0
        %v3087 = vsel %vm2786, %v3067, 0
        %v3090 = vsel %vm2786, %v3069, 0
        %v3093 = vsel %vm2786, %v3071, 0
        %v3096 = vsel %vm2786, %v3073, 0
        %3098 = vmatprep.subr.bf16.mxu0 0
        %3099 = vmatpush1.bf16.xpose.msra.mxu0 %v3087
        %3100 = vmatprep.subr.bf16.mxu0 0
        %3101 = vmatpush1.bf16.xpose.msra.mxu0 %v3090
        %3102 = vmatprep.subr.bf16.mxu0 0
        %3103 = vmatpush1.bf16.xpose.msra.mxu0 %v3093
        %3104 = vmatprep.subr.bf16.mxu0 0
        %3105 = vmatpush1.bf16.xpose.msra.mxu0 %v3096
        %3106 = vmatprep.subr.bf16.mxu0 0
        %3107 = vmatpush1.bf16.xpose.msra.mxu0 0
        %3108 = vmatprep.subr.bf16.mxu0 0
        %3109 = vmatpush1.bf16.xpose.msra.mxu0 0
        %3110 = vmatprep.subr.bf16.mxu0 0
        %3111 = vmatpush1.bf16.xpose.msra.mxu0 0
        %3112 = vmatprep.subr.bf16.mxu0 0
        %3113 = vmatpush1.bf16.xpose.msra.mxu0 0
        %3114 = vmatprep.subr.bf16.mxu0 0
        %3115 = vmatpush1.bf16.xpose.msra.mxu0 0
        %3116 = vmatprep.subr.bf16.mxu0 0
        %3117 = vmatpush1.bf16.xpose.msra.mxu0 0
        %3118 = vmatprep.subr.bf16.mxu0 0
        %3119 = vmatpush1.bf16.xpose.msra.mxu0 0
        %3120 = vmatprep.subr.bf16.mxu0 0
        %3121 = vmatpush1.bf16.xpose.msra.mxu0 0
        %3122 = vmatprep.subr.bf16.mxu0 0
        %3123 = vmatpush1.bf16.xpose.msra.mxu0 0
        %3124 = vmatprep.subr.bf16.mxu0 0
        %3125 = vmatpush1.bf16.xpose.msra.mxu0 0
        %3126 = vmatprep.subr.bf16.mxu0 0
        %3127 = vmatpush1.bf16.xpose.msra.mxu0 0
        %3128 = vmatprep.subr.bf16.mxu0 0
        %3129 = vmatpush1.bf16.xpose.msra.mxu0 0
        %3130 = vmatprep.mubr.bf16.mxu0 0
        %3131 = vmatmul.mubr.bf16.gmra.mrb[0].mxu0 %v3075
        %v3132 = vpop.f32.mrb[0].mxu0
        %v3133 = vadd.f32 0.0, %v3132
        %v3134 = vpop.f32.mrb[0].mxu0
        %v3135 = vpop.f32.mrb[0].mxu0
        %v3136 = vadd.f32 0.0, %v3135
        %v3137 = vpop.f32.mrb[0].mxu0
        %3138 = vmatprep.mubr.bf16.mxu0 0
        %3139 = vmatmul.mubr.bf16.gmra.mrb[0].mxu0 %v3078
        %v3140 = vpop.f32.mrb[0].mxu0
        %v3141 = vadd.f32 0.0, %v3140
        %v3142 = vpop.f32.mrb[0].mxu0
        %v3143 = vpop.f32.mrb[0].mxu0
        %v3144 = vadd.f32 0.0, %v3143
        %v3145 = vpop.f32.mrb[0].mxu0
        %3146 = vmatprep.mubr.bf16.mxu0 0
        %3147 = vmatmul.mubr.bf16.gmra.mrb[0].mxu0 %v3081
        %v3148 = vpop.f32.mrb[0].mxu0
        %v3149 = vadd.f32 0.0, %v3148
        %v3150 = vpop.f32.mrb[0].mxu0
        %v3151 = vpop.f32.mrb[0].mxu0
        %v3152 = vadd.f32 0.0, %v3151
        %v3153 = vpop.f32.mrb[0].mxu0
        %3154 = vmatprep.mubr.bf16.mxu0 0
        %3155 = vmatmul.mubr.bf16.gmra.mrb[0].mxu0 %v3084
        %v3156 = vpop.f32.mrb[0].mxu0
        %v3157 = vadd.f32 0.0, %v3156
        %v3158 = vpop.f32.mrb[0].mxu0
        %v3159 = vpop.f32.mrb[0].mxu0
        %v3160 = vadd.f32 0.0, %v3159
        %v3161 = vpop.f32.mrb[0].mxu0
        %3162 = vdwg.mxu0
        %v3163 = vsel %vm2876, %v3133, -inf
        %3164 = vmax.xlane.f32.xlu0 %v3163
        %v3165 = vpop.xlane.xlu0 %3164
        %v3166 = vsel %vm2876, %v3136, -inf
        %3167 = vmax.xlane.f32.xlu0 %v3166
        %v3168 = vpop.xlane.xlu0 %3167
        %v3169 = vsel %vm2876, %v3141, -inf
        %3170 = vmax.xlane.f32.xlu0 %v3169
        %v3171 = vpop.xlane.xlu0 %3170
        %v3172 = vsel %vm2876, %v3144, -inf
        %3173 = vmax.xlane.f32.xlu0 %v3172
        %v3174 = vpop.xlane.xlu0 %3173
        %v3175 = vsel %vm2876, %v3149, -inf
        %3176 = vmax.xlane.f32.xlu0 %v3175
        %v3177 = vpop.xlane.xlu0 %3176
        %v3178 = vsel %vm2876, %v3152, -inf
        %3179 = vmax.xlane.f32.xlu0 %v3178
        %v3180 = vpop.xlane.xlu0 %3179
        %v3181 = vsel %vm2876, %v3157, -inf
        %3182 = vmax.xlane.f32.xlu0 %v3181
        %v3183 = vpop.xlane.xlu0 %3182
        %v3184 = vsel %vm2876, %v3160, -inf
        %3185 = vmax.xlane.f32.xlu0 %v3184
        %v3186 = vpop.xlane.xlu0 %3185
        %v3187 = vsub.f32 %v3133, %v3165
        %v3188 = vsub.f32 %v3136, %v3168
        %v3189 = vsub.f32 %v3141, %v3171
        %v3190 = vsub.f32 %v3144, %v3174
        %v3191 = vsub.f32 %v3149, %v3177
        %v3192 = vsub.f32 %v3152, %v3180
        %v3193 = vsub.f32 %v3157, %v3183
        %v3194 = vsub.f32 %v3160, %v3186
        %v3195 = vmul.f32 %v3187, 1.442695
        %v3196 = vpow.pop %v3195
        %v3197 = vmul.f32 %v3188, 1.442695
        %v3198 = vpow.pop %v3197
        %v3199 = vmul.f32 %v3189, 1.442695
        %v3200 = vpow.pop %v3199
        %v3201 = vmul.f32 %v3190, 1.442695
        %v3202 = vpow.pop %v3201
        %v3203 = vmul.f32 %v3191, 1.442695
        %v3204 = vpow.pop %v3203
        %v3205 = vmul.f32 %v3192, 1.442695
        %v3206 = vpow.pop %v3205
        %v3207 = vmul.f32 %v3193, 1.442695
        %v3208 = vpow.pop %v3207
        %v3209 = vmul.f32 %v3194, 1.442695
        %v3210 = vpow.pop %v3209
        %v3211 = vsel %vm2876, %v3196, 0.0
        %3212 = vadd.xlane.f32.xlu0 %v3211
        %v3213 = vpop.xlane.xlu0 %3212
        %v3214 = vsel %vm2876, %v3198, 0.0
        %3215 = vadd.xlane.f32.xlu0 %v3214
        %v3216 = vpop.xlane.xlu0 %3215
        %v3217 = vsel %vm2876, %v3200, 0.0
        %3218 = vadd.xlane.f32.xlu0 %v3217
        %v3219 = vpop.xlane.xlu0 %3218
        %v3220 = vsel %vm2876, %v3202, 0.0
        %3221 = vadd.xlane.f32.xlu0 %v3220
        %v3222 = vpop.xlane.xlu0 %3221
        %v3223 = vsel %vm2876, %v3204, 0.0
        %3224 = vadd.xlane.f32.xlu0 %v3223
        %v3225 = vpop.xlane.xlu0 %3224
        %v3226 = vsel %vm2876, %v3206, 0.0
        %3227 = vadd.xlane.f32.xlu0 %v3226
        %v3228 = vpop.xlane.xlu0 %3227
        %v3229 = vsel %vm2876, %v3208, 0.0
        %3230 = vadd.xlane.f32.xlu0 %v3229
        %v3231 = vpop.xlane.xlu0 %3230
        %v3232 = vsel %vm2876, %v3210, 0.0
        %3233 = vadd.xlane.f32.xlu0 %v3232
        %v3234 = vpop.xlane.xlu0 %3233
        %v3235 = vrcp.pop %v3213
        %v3236 = vrcp.pop %v3216
        %v3237 = vrcp.pop %v3219
        %v3238 = vrcp.pop %v3222
        %v3239 = vrcp.pop %v3225
        %v3240 = vrcp.pop %v3228
        %v3241 = vrcp.pop %v3231
        %v3242 = vrcp.pop %v3234
        %v3243 = vmul.f32 %v3196, %v3235
        %v3244 = vmul.f32 %v3198, %v3236
        %v3245 = vmul.f32 %v3200, %v3237
        %v3246 = vmul.f32 %v3202, %v3238
        %v3247 = vmul.f32 %v3204, %v3239
        %v3248 = vmul.f32 %v3206, %v3240
        %v3249 = vmul.f32 %v3208, %v3241
        %v3250 = vmul.f32 %v3210, %v3242
        %v3251 = vpack.c.bf16 %v3244, %v3243
        %v3252 = vpack.c.bf16 %v3246, %v3245
        %v3253 = vpack.c.bf16 %v3248, %v3247
        %v3254 = vpack.c.bf16 %v3250, %v3249
        %3259 = vrot.lane.b32.xlu0 %v2778, 96
        %v3260 = vpop.permute.xlu0 %3259
        %3261 = vrot.lane.b32.xlu0 %v2779, 96
        %v3262 = vpop.permute.xlu0 %3261
        %3263 = vrot.lane.b32.xlu0 %v2780, 96
        %v3264 = vpop.permute.xlu0 %3263
        %3265 = vrot.lane.b32.xlu0 %v2781, 96
        %v3266 = vpop.permute.xlu0 %3265
        %v3272 = vsel %vm2876, %v3251, 0
        %v3275 = vsel %vm2876, %v3252, 0
        %v3278 = vsel %vm2876, %v3253, 0
        %v3281 = vsel %vm2876, %v3254, 0
        %3283 = vmatprep.subr.bf16.mxu0 0
        %3284 = vmatpush1.bf16.msra.mxu0 %v3260
        %3285 = vmatprep.subr.bf16.mxu0 0
        %3286 = vmatpush1.bf16.msra.mxu0 %v3262
        %3287 = vmatprep.subr.bf16.mxu0 0
        %3288 = vmatpush1.bf16.msra.mxu0 %v3264
        %3289 = vmatprep.subr.bf16.mxu0 0
        %3290 = vmatpush1.bf16.msra.mxu0 %v3266
        %3291 = vmatprep.subr.bf16.mxu0 0
        %3292 = vmatpush1.bf16.msra.mxu0 0
        %3293 = vmatprep.subr.bf16.mxu0 0
        %3294 = vmatpush1.bf16.msra.mxu0 0
        %3295 = vmatprep.subr.bf16.mxu0 0
        %3296 = vmatpush1.bf16.msra.mxu0 0
        %3297 = vmatprep.subr.bf16.mxu0 0
        %3298 = vmatpush1.bf16.msra.mxu0 0
        %3299 = vmatprep.subr.bf16.mxu0 0
        %3300 = vmatpush1.bf16.msra.mxu0 0
        %3301 = vmatprep.subr.bf16.mxu0 0
        %3302 = vmatpush1.bf16.msra.mxu0 0
        %3303 = vmatprep.subr.bf16.mxu0 0
        %3304 = vmatpush1.bf16.msra.mxu0 0
        %3305 = vmatprep.subr.bf16.mxu0 0
        %3306 = vmatpush1.bf16.msra.mxu0 0
        %3307 = vmatprep.subr.bf16.mxu0 0
        %3308 = vmatpush1.bf16.msra.mxu0 0
        %3309 = vmatprep.subr.bf16.mxu0 0
        %3310 = vmatpush1.bf16.msra.mxu0 0
        %3311 = vmatprep.subr.bf16.mxu0 0
        %3312 = vmatpush1.bf16.msra.mxu0 0
        %3313 = vmatprep.subr.bf16.mxu0 0
        %3314 = vmatpush1.bf16.msra.mxu0 0
        %3315 = vmatprep.mubr.bf16.mxu0 0
        %3316 = vmatmul.mubr.bf16.gmra.mrb[0].mxu0 %v3272
        %v3317 = vpop.f32.mrb[0].mxu0
        %v3318 = vadd.f32 0.0, %v3317
        %v3319 = vpop.f32.mrb[0].mxu0
        %v3320 = vpop.f32.mrb[0].mxu0
        %v3321 = vadd.f32 0.0, %v3320
        %v3322 = vpop.f32.mrb[0].mxu0
        %3323 = vmatprep.mubr.bf16.mxu0 0
        %3324 = vmatmul.mubr.bf16.gmra.mrb[0].mxu0 %v3275
        %v3325 = vpop.f32.mrb[0].mxu0
        %v3326 = vadd.f32 0.0, %v3325
        %v3327 = vpop.f32.mrb[0].mxu0
        %v3328 = vpop.f32.mrb[0].mxu0
        %v3329 = vadd.f32 0.0, %v3328
        %v3330 = vpop.f32.mrb[0].mxu0
        %3331 = vmatprep.mubr.bf16.mxu0 0
        %3332 = vmatmul.mubr.bf16.gmra.mrb[0].mxu0 %v3278
        %v3333 = vpop.f32.mrb[0].mxu0
        %v3334 = vadd.f32 0.0, %v3333
        %v3335 = vpop.f32.mrb[0].mxu0
        %v3336 = vpop.f32.mrb[0].mxu0
        %v3337 = vadd.f32 0.0, %v3336
        %v3338 = vpop.f32.mrb[0].mxu0
        %3339 = vmatprep.mubr.bf16.mxu0 0
        %3340 = vmatmul.mubr.bf16.gmra.mrb[0].mxu0 %v3281
        %v3341 = vpop.f32.mrb[0].mxu0
        %v3342 = vadd.f32 0.0, %v3341
        %v3343 = vpop.f32.mrb[0].mxu0
        %v3344 = vpop.f32.mrb[0].mxu0
        %v3345 = vadd.f32 0.0, %v3344
        %v3346 = vpop.f32.mrb[0].mxu0
        %3347 = vdwg.mxu0
        %v3348 = vpack.c.bf16 %v3321, %v3318
        %v3349 = vpack.c.bf16 %v3329, %v3326
        %v3350 = vpack.c.bf16 %v3337, %v3334
        %v3351 = vpack.c.bf16 %v3345, %v3342
        %3352 = vrot.lane.b32.xlu0 %v2782, 64
        %v3353 = vpop.permute.xlu0 %3352
        %3354 = vrot.lane.b32.xlu0 %v2783, 64
        %v3355 = vpop.permute.xlu0 %3354
        %3356 = vrot.lane.b32.xlu0 %v2784, 64
        %v3357 = vpop.permute.xlu0 %3356
        %3358 = vrot.lane.b32.xlu0 %v2785, 64
        %v3359 = vpop.permute.xlu0 %3358
        %3360 = vrot.lane.b32.xlu0 %v2774, 64
        %v3361 = vpop.permute.xlu0 %3360
        %3362 = vrot.lane.b32.xlu0 %v2775, 64
        %v3363 = vpop.permute.xlu0 %3362
        %3364 = vrot.lane.b32.xlu0 %v2776, 64
        %v3365 = vpop.permute.xlu0 %3364
        %3366 = vrot.lane.b32.xlu0 %v2777, 64
        %v3367 = vpop.permute.xlu0 %3366
        %v3369 = vsel %vm2786, %v3353, 0
        %v3372 = vsel %vm2786, %v3355, 0
        %v3375 = vsel %vm2786, %v3357, 0
        %v3378 = vsel %vm2786, %v3359, 0
        %v3381 = vsel %vm2786, %v3361, 0
        %v3384 = vsel %vm2786, %v3363, 0
        %v3387 = vsel %vm2786, %v3365, 0
        %v3390 = vsel %vm2786, %v3367, 0
        %3392 = vmatprep.subr.bf16.mxu0 0
        %3393 = vmatpush1.bf16.xpose.msra.mxu0 %v3381
        %3394 = vmatprep.subr.bf16.mxu0 0
        %3395 = vmatpush1.bf16.xpose.msra.mxu0 %v3384
        %3396 = vmatprep.subr.bf16.mxu0 0
        %3397 = vmatpush1.bf16.xpose.msra.mxu0 %v3387
        %3398 = vmatprep.subr.bf16.mxu0 0
        %3399 = vmatpush1.bf16.xpose.msra.mxu0 %v3390
        %3400 = vmatprep.subr.bf16.mxu0 0
        %3401 = vmatpush1.bf16.xpose.msra.mxu0 0
        %3402 = vmatprep.subr.bf16.mxu0 0
        %3403 = vmatpush1.bf16.xpose.msra.mxu0 0
        %3404 = vmatprep.subr.bf16.mxu0 0
        %3405 = vmatpush1.bf16.xpose.msra.mxu0 0
        %3406 = vmatprep.subr.bf16.mxu0 0
        %3407 = vmatpush1.bf16.xpose.msra.mxu0 0
        %3408 = vmatprep.subr.bf16.mxu0 0
        %3409 = vmatpush1.bf16.xpose.msra.mxu0 0
        %3410 = vmatprep.subr.bf16.mxu0 0
        %3411 = vmatpush1.bf16.xpose.msra.mxu0 0
        %3412 = vmatprep.subr.bf16.mxu0 0
        %3413 = vmatpush1.bf16.xpose.msra.mxu0 0
        %3414 = vmatprep.subr.bf16.mxu0 0
        %3415 = vmatpush1.bf16.xpose.msra.mxu0 0
        %3416 = vmatprep.subr.bf16.mxu0 0
        %3417 = vmatpush1.bf16.xpose.msra.mxu0 0
        %3418 = vmatprep.subr.bf16.mxu0 0
        %3419 = vmatpush1.bf16.xpose.msra.mxu0 0
        %3420 = vmatprep.subr.bf16.mxu0 0
        %3421 = vmatpush1.bf16.xpose.msra.mxu0 0
        %3422 = vmatprep.subr.bf16.mxu0 0
        %3423 = vmatpush1.bf16.xpose.msra.mxu0 0
        %3424 = vmatprep.mubr.bf16.mxu0 0
        %3425 = vmatmul.mubr.bf16.gmra.mrb[0].mxu0 %v3369
        %v3426 = vpop.f32.mrb[0].mxu0
        %v3427 = vadd.f32 0.0, %v3426
        %v3428 = vpop.f32.mrb[0].mxu0
        %v3429 = vpop.f32.mrb[0].mxu0
        %v3430 = vadd.f32 0.0, %v3429
        %v3431 = vpop.f32.mrb[0].mxu0
        %3432 = vmatprep.mubr.bf16.mxu0 0
        %3433 = vmatmul.mubr.bf16.gmra.mrb[0].mxu0 %v3372
        %v3434 = vpop.f32.mrb[0].mxu0
        %v3435 = vadd.f32 0.0, %v3434
        %v3436 = vpop.f32.mrb[0].mxu0
        %v3437 = vpop.f32.mrb[0].mxu0
        %v3438 = vadd.f32 0.0, %v3437
        %v3439 = vpop.f32.mrb[0].mxu0
        %3440 = vmatprep.mubr.bf16.mxu0 0
        %3441 = vmatmul.mubr.bf16.gmra.mrb[0].mxu0 %v3375
        %v3442 = vpop.f32.mrb[0].mxu0
        %v3443 = vadd.f32 0.0, %v3442
        %v3444 = vpop.f32.mrb[0].mxu0
        %v3445 = vpop.f32.mrb[0].mxu0
        %v3446 = vadd.f32 0.0, %v3445
        %v3447 = vpop.f32.mrb[0].mxu0
        %3448 = vmatprep.mubr.bf16.mxu0 0
        %3449 = vmatmul.mubr.bf16.gmra.mrb[0].mxu0 %v3378
        %v3450 = vpop.f32.mrb[0].mxu0
        %v3451 = vadd.f32 0.0, %v3450
        %v3452 = vpop.f32.mrb[0].mxu0
        %v3453 = vpop.f32.mrb[0].mxu0
        %v3454 = vadd.f32 0.0, %v3453
        %v3455 = vpop.f32.mrb[0].mxu0
        %3456 = vdwg.mxu0
        %v3457 = vsel %vm2876, %v3427, -inf
        %3458 = vmax.xlane.f32.xlu0 %v3457
        %v3459 = vpop.xlane.xlu0 %3458
        %v3460 = vsel %vm2876, %v3430, -inf
        %3461 = vmax.xlane.f32.xlu0 %v3460
        %v3462 = vpop.xlane.xlu0 %3461
        %v3463 = vsel %vm2876, %v3435, -inf
        %3464 = vmax.xlane.f32.xlu0 %v3463
        %v3465 = vpop.xlane.xlu0 %3464
        %v3466 = vsel %vm2876, %v3438, -inf
        %3467 = vmax.xlane.f32.xlu0 %v3466
        %v3468 = vpop.xlane.xlu0 %3467
        %v3469 = vsel %vm2876, %v3443, -inf
        %3470 = vmax.xlane.f32.xlu0 %v3469
        %v3471 = vpop.xlane.xlu0 %3470
        %v3472 = vsel %vm2876, %v3446, -inf
        %3473 = vmax.xlane.f32.xlu0 %v3472
        %v3474 = vpop.xlane.xlu0 %3473
        %v3475 = vsel %vm2876, %v3451, -inf
        %3476 = vmax.xlane.f32.xlu0 %v3475
        %v3477 = vpop.xlane.xlu0 %3476
        %v3478 = vsel %vm2876, %v3454, -inf
        %3479 = vmax.xlane.f32.xlu0 %v3478
        %v3480 = vpop.xlane.xlu0 %3479
        %v3481 = vsub.f32 %v3427, %v3459
        %v3482 = vsub.f32 %v3430, %v3462
        %v3483 = vsub.f32 %v3435, %v3465
        %v3484 = vsub.f32 %v3438, %v3468
        %v3485 = vsub.f32 %v3443, %v3471
        %v3486 = vsub.f32 %v3446, %v3474
        %v3487 = vsub.f32 %v3451, %v3477
        %v3488 = vsub.f32 %v3454, %v3480
        %v3489 = vmul.f32 %v3481, 1.442695
        %v3490 = vpow.pop %v3489
        %v3491 = vmul.f32 %v3482, 1.442695
        %v3492 = vpow.pop %v3491
        %v3493 = vmul.f32 %v3483, 1.442695
        %v3494 = vpow.pop %v3493
        %v3495 = vmul.f32 %v3484, 1.442695
        %v3496 = vpow.pop %v3495
        %v3497 = vmul.f32 %v3485, 1.442695
        %v3498 = vpow.pop %v3497
        %v3499 = vmul.f32 %v3486, 1.442695
        %v3500 = vpow.pop %v3499
        %v3501 = vmul.f32 %v3487, 1.442695
        %v3502 = vpow.pop %v3501
        %v3503 = vmul.f32 %v3488, 1.442695
        %v3504 = vpow.pop %v3503
        %v3505 = vsel %vm2876, %v3490, 0.0
        %3506 = vadd.xlane.f32.xlu0 %v3505
        %v3507 = vpop.xlane.xlu0 %3506
        %v3508 = vsel %vm2876, %v3492, 0.0
        %3509 = vadd.xlane.f32.xlu0 %v3508
        %v3510 = vpop.xlane.xlu0 %3509
        %v3511 = vsel %vm2876, %v3494, 0.0
        %3512 = vadd.xlane.f32.xlu0 %v3511
        %v3513 = vpop.xlane.xlu0 %3512
        %v3514 = vsel %vm2876, %v3496, 0.0
        %3515 = vadd.xlane.f32.xlu0 %v3514
        %v3516 = vpop.xlane.xlu0 %3515
        %v3517 = vsel %vm2876, %v3498, 0.0
        %3518 = vadd.xlane.f32.xlu0 %v3517
        %v3519 = vpop.xlane.xlu0 %3518
        %v3520 = vsel %vm2876, %v3500, 0.0
        %3521 = vadd.xlane.f32.xlu0 %v3520
        %v3522 = vpop.xlane.xlu0 %3521
        %v3523 = vsel %vm2876, %v3502, 0.0
        %3524 = vadd.xlane.f32.xlu0 %v3523
        %v3525 = vpop.xlane.xlu0 %3524
        %v3526 = vsel %vm2876, %v3504, 0.0
        %3527 = vadd.xlane.f32.xlu0 %v3526
        %v3528 = vpop.xlane.xlu0 %3527
        %v3529 = vrcp.pop %v3507
        %v3530 = vrcp.pop %v3510
        %v3531 = vrcp.pop %v3513
        %v3532 = vrcp.pop %v3516
        %v3533 = vrcp.pop %v3519
        %v3534 = vrcp.pop %v3522
        %v3535 = vrcp.pop %v3525
        %v3536 = vrcp.pop %v3528
        %v3537 = vmul.f32 %v3490, %v3529
        %v3538 = vmul.f32 %v3492, %v3530
        %v3539 = vmul.f32 %v3494, %v3531
        %v3540 = vmul.f32 %v3496, %v3532
        %v3541 = vmul.f32 %v3498, %v3533
        %v3542 = vmul.f32 %v3500, %v3534
        %v3543 = vmul.f32 %v3502, %v3535
        %v3544 = vmul.f32 %v3504, %v3536
        %v3545 = vpack.c.bf16 %v3538, %v3537
        %v3546 = vpack.c.bf16 %v3540, %v3539
        %v3547 = vpack.c.bf16 %v3542, %v3541
        %v3548 = vpack.c.bf16 %v3544, %v3543
        %3549 = vrot.lane.b32.xlu0 %v2778, 64
        %v3550 = vpop.permute.xlu0 %3549
        %3551 = vrot.lane.b32.xlu0 %v2779, 64
        %v3552 = vpop.permute.xlu0 %3551
        %3553 = vrot.lane.b32.xlu0 %v2780, 64
        %v3554 = vpop.permute.xlu0 %3553
        %3555 = vrot.lane.b32.xlu0 %v2781, 64
        %v3556 = vpop.permute.xlu0 %3555
        %v3562 = vsel %vm2876, %v3545, 0
        %v3565 = vsel %vm2876, %v3546, 0
        %v3568 = vsel %vm2876, %v3547, 0
        %v3571 = vsel %vm2876, %v3548, 0
        %3573 = vmatprep.subr.bf16.mxu0 0
        %3574 = vmatpush1.bf16.msra.mxu0 %v3550
        %3575 = vmatprep.subr.bf16.mxu0 0
        %3576 = vmatpush1.bf16.msra.mxu0 %v3552
        %3577 = vmatprep.subr.bf16.mxu0 0
        %3578 = vmatpush1.bf16.msra.mxu0 %v3554
        %3579 = vmatprep.subr.bf16.mxu0 0
        %3580 = vmatpush1.bf16.msra.mxu0 %v3556
        %3581 = vmatprep.subr.bf16.mxu0 0
        %3582 = vmatpush1.bf16.msra.mxu0 0
        %3583 = vmatprep.subr.bf16.mxu0 0
        %3584 = vmatpush1.bf16.msra.mxu0 0
        %3585 = vmatprep.subr.bf16.mxu0 0
        %3586 = vmatpush1.bf16.msra.mxu0 0
        %3587 = vmatprep.subr.bf16.mxu0 0
        %3588 = vmatpush1.bf16.msra.mxu0 0
        %3589 = vmatprep.subr.bf16.mxu0 0
        %3590 = vmatpush1.bf16.msra.mxu0 0
        %3591 = vmatprep.subr.bf16.mxu0 0
        %3592 = vmatpush1.bf16.msra.mxu0 0
        %3593 = vmatprep.subr.bf16.mxu0 0
        %3594 = vmatpush1.bf16.msra.mxu0 0
        %3595 = vmatprep.subr.bf16.mxu0 0
        %3596 = vmatpush1.bf16.msra.mxu0 0
        %3597 = vmatprep.subr.bf16.mxu0 0
        %3598 = vmatpush1.bf16.msra.mxu0 0
        %3599 = vmatprep.subr.bf16.mxu0 0
        %3600 = vmatpush1.bf16.msra.mxu0 0
        %3601 = vmatprep.subr.bf16.mxu0 0
        %3602 = vmatpush1.bf16.msra.mxu0 0
        %3603 = vmatprep.subr.bf16.mxu0 0
        %3604 = vmatpush1.bf16.msra.mxu0 0
        %3605 = vmatprep.mubr.bf16.mxu0 0
        %3606 = vmatmul.mubr.bf16.gmra.mrb[0].mxu0 %v3562
        %v3607 = vpop.f32.mrb[0].mxu0
        %v3608 = vadd.f32 0.0, %v3607
        %v3609 = vpop.f32.mrb[0].mxu0
        %v3610 = vpop.f32.mrb[0].mxu0
        %v3611 = vadd.f32 0.0, %v3610
        %v3612 = vpop.f32.mrb[0].mxu0
        %3613 = vmatprep.mubr.bf16.mxu0 0
        %3614 = vmatmul.mubr.bf16.gmra.mrb[0].mxu0 %v3565
        %v3615 = vpop.f32.mrb[0].mxu0
        %v3616 = vadd.f32 0.0, %v3615
        %v3617 = vpop.f32.mrb[0].mxu0
        %v3618 = vpop.f32.mrb[0].mxu0
        %v3619 = vadd.f32 0.0, %v3618
        %v3620 = vpop.f32.mrb[0].mxu0
        %3621 = vmatprep.mubr.bf16.mxu0 0
        %3622 = vmatmul.mubr.bf16.gmra.mrb[0].mxu0 %v3568
        %v3623 = vpop.f32.mrb[0].mxu0
        %v3624 = vadd.f32 0.0, %v3623
        %v3625 = vpop.f32.mrb[0].mxu0
        %v3626 = vpop.f32.mrb[0].mxu0
        %v3627 = vadd.f32 0.0, %v3626
        %v3628 = vpop.f32.mrb[0].mxu0
        %3629 = vmatprep.mubr.bf16.mxu0 0
        %3630 = vmatmul.mubr.bf16.gmra.mrb[0].mxu0 %v3571
        %v3631 = vpop.f32.mrb[0].mxu0
        %v3632 = vadd.f32 0.0, %v3631
        %v3633 = vpop.f32.mrb[0].mxu0
        %v3634 = vpop.f32.mrb[0].mxu0
        %v3635 = vadd.f32 0.0, %v3634
        %v3636 = vpop.f32.mrb[0].mxu0
        %3637 = vdwg.mxu0
        %v3638 = vpack.c.bf16 %v3611, %v3608
        %v3639 = vpack.c.bf16 %v3619, %v3616
        %v3640 = vpack.c.bf16 %v3627, %v3624
        %v3641 = vpack.c.bf16 %v3635, %v3632
        %3642 = vrot.lane.b32.xlu0 %v2782, 32
        %v3643 = vpop.permute.xlu0 %3642
        %3644 = vrot.lane.b32.xlu0 %v2783, 32
        %v3645 = vpop.permute.xlu0 %3644
        %3646 = vrot.lane.b32.xlu0 %v2784, 32
        %v3647 = vpop.permute.xlu0 %3646
        %3648 = vrot.lane.b32.xlu0 %v2785, 32
        %v3649 = vpop.permute.xlu0 %3648
        %3650 = vrot.lane.b32.xlu0 %v2774, 32
        %v3651 = vpop.permute.xlu0 %3650
        %3652 = vrot.lane.b32.xlu0 %v2775, 32
        %v3653 = vpop.permute.xlu0 %3652
        %3654 = vrot.lane.b32.xlu0 %v2776, 32
        %v3655 = vpop.permute.xlu0 %3654
        %3656 = vrot.lane.b32.xlu0 %v2777, 32
        %v3657 = vpop.permute.xlu0 %3656
        %v3659 = vsel %vm2786, %v3643, 0
        %v3662 = vsel %vm2786, %v3645, 0
        %v3665 = vsel %vm2786, %v3647, 0
        %v3668 = vsel %vm2786, %v3649, 0
        %v3671 = vsel %vm2786, %v3651, 0
        %v3674 = vsel %vm2786, %v3653, 0
        %v3677 = vsel %vm2786, %v3655, 0
        %v3680 = vsel %vm2786, %v3657, 0
        %3682 = vmatprep.subr.bf16.mxu0 0
        %3683 = vmatpush1.bf16.xpose.msra.mxu0 %v3671
        %3684 = vmatprep.subr.bf16.mxu0 0
        %3685 = vmatpush1.bf16.xpose.msra.mxu0 %v3674
        %3686 = vmatprep.subr.bf16.mxu0 0
        %3687 = vmatpush1.bf16.xpose.msra.mxu0 %v3677
        %3688 = vmatprep.subr.bf16.mxu0 0
        %3689 = vmatpush1.bf16.xpose.msra.mxu0 %v3680
        %3690 = vmatprep.subr.bf16.mxu0 0
        %3691 = vmatpush1.bf16.xpose.msra.mxu0 0
        %3692 = vmatprep.subr.bf16.mxu0 0
        %3693 = vmatpush1.bf16.xpose.msra.mxu0 0
        %3694 = vmatprep.subr.bf16.mxu0 0
        %3695 = vmatpush1.bf16.xpose.msra.mxu0 0
        %3696 = vmatprep.subr.bf16.mxu0 0
        %3697 = vmatpush1.bf16.xpose.msra.mxu0 0
        %3698 = vmatprep.subr.bf16.mxu0 0
        %3699 = vmatpush1.bf16.xpose.msra.mxu0 0
        %3700 = vmatprep.subr.bf16.mxu0 0
        %3701 = vmatpush1.bf16.xpose.msra.mxu0 0
        %3702 = vmatprep.subr.bf16.mxu0 0
        %3703 = vmatpush1.bf16.xpose.msra.mxu0 0
        %3704 = vmatprep.subr.bf16.mxu0 0
        %3705 = vmatpush1.bf16.xpose.msra.mxu0 0
        %3706 = vmatprep.subr.bf16.mxu0 0
        %3707 = vmatpush1.bf16.xpose.msra.mxu0 0
        %3708 = vmatprep.subr.bf16.mxu0 0
        %3709 = vmatpush1.bf16.xpose.msra.mxu0 0
        %3710 = vmatprep.subr.bf16.mxu0 0
        %3711 = vmatpush1.bf16.xpose.msra.mxu0 0
        %3712 = vmatprep.subr.bf16.mxu0 0
        %3713 = vmatpush1.bf16.xpose.msra.mxu0 0
        %3714 = vmatprep.mubr.bf16.mxu0 0
        %3715 = vmatmul.mubr.bf16.gmra.mrb[0].mxu0 %v3659
        %v3716 = vpop.f32.mrb[0].mxu0
        %v3717 = vadd.f32 0.0, %v3716
        %v3718 = vpop.f32.mrb[0].mxu0
        %v3719 = vpop.f32.mrb[0].mxu0
        %v3720 = vadd.f32 0.0, %v3719
        %v3721 = vpop.f32.mrb[0].mxu0
        %3722 = vmatprep.mubr.bf16.mxu0 0
        %3723 = vmatmul.mubr.bf16.gmra.mrb[0].mxu0 %v3662
        %v3724 = vpop.f32.mrb[0].mxu0
        %v3725 = vadd.f32 0.0, %v3724
        %v3726 = vpop.f32.mrb[0].mxu0
        %v3727 = vpop.f32.mrb[0].mxu0
        %v3728 = vadd.f32 0.0, %v3727
        %v3729 = vpop.f32.mrb[0].mxu0
        %3730 = vmatprep.mubr.bf16.mxu0 0
        %3731 = vmatmul.mubr.bf16.gmra.mrb[0].mxu0 %v3665
        %v3732 = vpop.f32.mrb[0].mxu0
        %v3733 = vadd.f32 0.0, %v3732
        %v3734 = vpop.f32.mrb[0].mxu0
        %v3735 = vpop.f32.mrb[0].mxu0
        %v3736 = vadd.f32 0.0, %v3735
        %v3737 = vpop.f32.mrb[0].mxu0
        %3738 = vmatprep.mubr.bf16.mxu0 0
        %3739 = vmatmul.mubr.bf16.gmra.mrb[0].mxu0 %v3668
        %v3740 = vpop.f32.mrb[0].mxu0
        %v3741 = vadd.f32 0.0, %v3740
        %v3742 = vpop.f32.mrb[0].mxu0
        %v3743 = vpop.f32.mrb[0].mxu0
        %v3744 = vadd.f32 0.0, %v3743
        %v3745 = vpop.f32.mrb[0].mxu0
        %3746 = vdwg.mxu0
        %v3747 = vsel %vm2876, %v3717, -inf
        %3748 = vmax.xlane.f32.xlu0 %v3747
        %v3749 = vpop.xlane.xlu0 %3748
        %v3750 = vsel %vm2876, %v3720, -inf
        %3751 = vmax.xlane.f32.xlu0 %v3750
        %v3752 = vpop.xlane.xlu0 %3751
        %v3753 = vsel %vm2876, %v3725, -inf
        %3754 = vmax.xlane.f32.xlu0 %v3753
        %v3755 = vpop.xlane.xlu0 %3754
        %v3756 = vsel %vm2876, %v3728, -inf
        %3757 = vmax.xlane.f32.xlu0 %v3756
        %v3758 = vpop.xlane.xlu0 %3757
        %v3759 = vsel %vm2876, %v3733, -inf
        %3760 = vmax.xlane.f32.xlu0 %v3759
        %v3761 = vpop.xlane.xlu0 %3760
        %v3762 = vsel %vm2876, %v3736, -inf
        %3763 = vmax.xlane.f32.xlu0 %v3762
        %v3764 = vpop.xlane.xlu0 %3763
        %v3765 = vsel %vm2876, %v3741, -inf
        %3766 = vmax.xlane.f32.xlu0 %v3765
        %v3767 = vpop.xlane.xlu0 %3766
        %v3768 = vsel %vm2876, %v3744, -inf
        %3769 = vmax.xlane.f32.xlu0 %v3768
        %v3770 = vpop.xlane.xlu0 %3769
        %v3771 = vsub.f32 %v3717, %v3749
        %v3772 = vsub.f32 %v3720, %v3752
        %v3773 = vsub.f32 %v3725, %v3755
        %v3774 = vsub.f32 %v3728, %v3758
        %v3775 = vsub.f32 %v3733, %v3761
        %v3776 = vsub.f32 %v3736, %v3764
        %v3777 = vsub.f32 %v3741, %v3767
        %v3778 = vsub.f32 %v3744, %v3770
        %v3779 = vmul.f32 %v3771, 1.442695
        %v3780 = vpow.pop %v3779
        %v3781 = vmul.f32 %v3772, 1.442695
        %v3782 = vpow.pop %v3781
        %v3783 = vmul.f32 %v3773, 1.442695
        %v3784 = vpow.pop %v3783
        %v3785 = vmul.f32 %v3774, 1.442695
        %v3786 = vpow.pop %v3785
        %v3787 = vmul.f32 %v3775, 1.442695
        %v3788 = vpow.pop %v3787
        %v3789 = vmul.f32 %v3776, 1.442695
        %v3790 = vpow.pop %v3789
        %v3791 = vmul.f32 %v3777, 1.442695
        %v3792 = vpow.pop %v3791
        %v3793 = vmul.f32 %v3778, 1.442695
        %v3794 = vpow.pop %v3793
        %v3795 = vsel %vm2876, %v3780, 0.0
        %3796 = vadd.xlane.f32.xlu0 %v3795
        %v3797 = vpop.xlane.xlu0 %3796
        %v3798 = vsel %vm2876, %v3782, 0.0
        %3799 = vadd.xlane.f32.xlu0 %v3798
        %v3800 = vpop.xlane.xlu0 %3799
        %v3801 = vsel %vm2876, %v3784, 0.0
        %3802 = vadd.xlane.f32.xlu0 %v3801
        %v3803 = vpop.xlane.xlu0 %3802
        %v3804 = vsel %vm2876, %v3786, 0.0
        %3805 = vadd.xlane.f32.xlu0 %v3804
        %v3806 = vpop.xlane.xlu0 %3805
        %v3807 = vsel %vm2876, %v3788, 0.0
        %3808 = vadd.xlane.f32.xlu0 %v3807
        %v3809 = vpop.xlane.xlu0 %3808
        %v3810 = vsel %vm2876, %v3790, 0.0
        %3811 = vadd.xlane.f32.xlu0 %v3810
        %v3812 = vpop.xlane.xlu0 %3811
        %v3813 = vsel %vm2876, %v3792, 0.0
        %3814 = vadd.xlane.f32.xlu0 %v3813
        %v3815 = vpop.xlane.xlu0 %3814
        %v3816 = vsel %vm2876, %v3794, 0.0
        %3817 = vadd.xlane.f32.xlu0 %v3816
        %v3818 = vpop.xlane.xlu0 %3817
        %v3819 = vrcp.pop %v3797
        %v3820 = vrcp.pop %v3800
        %v3821 = vrcp.pop %v3803
        %v3822 = vrcp.pop %v3806
        %v3823 = vrcp.pop %v3809
        %v3824 = vrcp.pop %v3812
        %v3825 = vrcp.pop %v3815
        %v3826 = vrcp.pop %v3818
        %v3827 = vmul.f32 %v3780, %v3819
        %v3828 = vmul.f32 %v3782, %v3820
        %v3829 = vmul.f32 %v3784, %v3821
        %v3830 = vmul.f32 %v3786, %v3822
        %v3831 = vmul.f32 %v3788, %v3823
        %v3832 = vmul.f32 %v3790, %v3824
        %v3833 = vmul.f32 %v3792, %v3825
        %v3834 = vmul.f32 %v3794, %v3826
        %v3835 = vpack.c.bf16 %v3828, %v3827
        %v3836 = vpack.c.bf16 %v3830, %v3829
        %v3837 = vpack.c.bf16 %v3832, %v3831
        %v3838 = vpack.c.bf16 %v3834, %v3833
        %3839 = vrot.lane.b32.xlu0 %v2778, 32
        %v3840 = vpop.permute.xlu0 %3839
        %3841 = vrot.lane.b32.xlu0 %v2779, 32
        %v3842 = vpop.permute.xlu0 %3841
        %3843 = vrot.lane.b32.xlu0 %v2780, 32
        %v3844 = vpop.permute.xlu0 %3843
        %3845 = vrot.lane.b32.xlu0 %v2781, 32
        %v3846 = vpop.permute.xlu0 %3845
        %v3852 = vsel %vm2876, %v3835, 0
        %v3855 = vsel %vm2876, %v3836, 0
        %v3858 = vsel %vm2876, %v3837, 0
        %v3861 = vsel %vm2876, %v3838, 0
        %3863 = vmatprep.subr.bf16.mxu0 0
        %3864 = vmatpush1.bf16.msra.mxu0 %v3840
        %3865 = vmatprep.subr.bf16.mxu0 0
        %3866 = vmatpush1.bf16.msra.mxu0 %v3842
        %3867 = vmatprep.subr.bf16.mxu0 0
        %3868 = vmatpush1.bf16.msra.mxu0 %v3844
        %3869 = vmatprep.subr.bf16.mxu0 0
        %3870 = vmatpush1.bf16.msra.mxu0 %v3846
        %3871 = vmatprep.subr.bf16.mxu0 0
        %3872 = vmatpush1.bf16.msra.mxu0 0
        %3873 = vmatprep.subr.bf16.mxu0 0
        %3874 = vmatpush1.bf16.msra.mxu0 0
        %3875 = vmatprep.subr.bf16.mxu0 0
        %3876 = vmatpush1.bf16.msra.mxu0 0
        %3877 = vmatprep.subr.bf16.mxu0 0
        %3878 = vmatpush1.bf16.msra.mxu0 0
        %3879 = vmatprep.subr.bf16.mxu0 0
        %3880 = vmatpush1.bf16.msra.mxu0 0
        %3881 = vmatprep.subr.bf16.mxu0 0
        %3882 = vmatpush1.bf16.msra.mxu0 0
        %3883 = vmatprep.subr.bf16.mxu0 0
        %3884 = vmatpush1.bf16.msra.mxu0 0
        %3885 = vmatprep.subr.bf16.mxu0 0
        %3886 = vmatpush1.bf16.msra.mxu0 0
        %3887 = vmatprep.subr.bf16.mxu0 0
        %3888 = vmatpush1.bf16.msra.mxu0 0
        %3889 = vmatprep.subr.bf16.mxu0 0
        %3890 = vmatpush1.bf16.msra.mxu0 0
        %3891 = vmatprep.subr.bf16.mxu0 0
        %3892 = vmatpush1.bf16.msra.mxu0 0
        %3893 = vmatprep.subr.bf16.mxu0 0
        %3894 = vmatpush1.bf16.msra.mxu0 0
        %3895 = vmatprep.mubr.bf16.mxu0 0
        %3896 = vmatmul.mubr.bf16.gmra.mrb[0].mxu0 %v3852
        %v3897 = vpop.f32.mrb[0].mxu0
        %v3898 = vadd.f32 0.0, %v3897
        %v3899 = vpop.f32.mrb[0].mxu0
        %v3900 = vpop.f32.mrb[0].mxu0
        %v3901 = vadd.f32 0.0, %v3900
        %v3902 = vpop.f32.mrb[0].mxu0
        %3903 = vmatprep.mubr.bf16.mxu0 0
        %3904 = vmatmul.mubr.bf16.gmra.mrb[0].mxu0 %v3855
        %v3905 = vpop.f32.mrb[0].mxu0
        %v3906 = vadd.f32 0.0, %v3905
        %v3907 = vpop.f32.mrb[0].mxu0
        %v3908 = vpop.f32.mrb[0].mxu0
        %v3909 = vadd.f32 0.0, %v3908
        %v3910 = vpop.f32.mrb[0].mxu0
        %3911 = vmatprep.mubr.bf16.mxu0 0
        %3912 = vmatmul.mubr.bf16.gmra.mrb[0].mxu0 %v3858
        %v3913 = vpop.f32.mrb[0].mxu0
        %v3914 = vadd.f32 0.0, %v3913
        %v3915 = vpop.f32.mrb[0].mxu0
        %v3916 = vpop.f32.mrb[0].mxu0
        %v3917 = vadd.f32 0.0, %v3916
        %v3918 = vpop.f32.mrb[0].mxu0
        %3919 = vmatprep.mubr.bf16.mxu0 0
        %3920 = vmatmul.mubr.bf16.gmra.mrb[0].mxu0 %v3861
        %v3921 = vpop.f32.mrb[0].mxu0
        %v3922 = vadd.f32 0.0, %v3921
        %v3923 = vpop.f32.mrb[0].mxu0
        %v3924 = vpop.f32.mrb[0].mxu0
        %v3925 = vadd.f32 0.0, %v3924
        %v3926 = vpop.f32.mrb[0].mxu0
        %3927 = vdwg.mxu0
        %v3928 = vpack.c.bf16 %v3901, %v3898
        %v3929 = vpack.c.bf16 %v3909, %v3906
        %v3930 = vpack.c.bf16 %v3917, %v3914
        %v3931 = vpack.c.bf16 %v3925, %v3922
        %3936 = vrot.lane.b32.xlu0 %v3348, 32
        %v3937 = vpop.permute.xlu0 %3936
        %3938 = vrot.lane.b32.xlu0 %v3349, 32
        %v3939 = vpop.permute.xlu0 %3938
        %3940 = vrot.lane.b32.xlu0 %v3350, 32
        %v3941 = vpop.permute.xlu0 %3940
        %3942 = vrot.lane.b32.xlu0 %v3351, 32
        %v3943 = vpop.permute.xlu0 %3942
        %3948 = vrot.lane.b32.xlu0 %v3638, 64
        %v3949 = vpop.permute.xlu0 %3948
        %3950 = vrot.lane.b32.xlu0 %v3639, 64
        %v3951 = vpop.permute.xlu0 %3950
        %3952 = vrot.lane.b32.xlu0 %v3640, 64
        %v3953 = vpop.permute.xlu0 %3952
        %3954 = vrot.lane.b32.xlu0 %v3641, 64
        %v3955 = vpop.permute.xlu0 %3954
        %3960 = vrot.lane.b32.xlu0 %v3928, 96
        %v3961 = vpop.permute.xlu0 %3960
        %3962 = vrot.lane.b32.xlu0 %v3929, 96
        %v3963 = vpop.permute.xlu0 %3962
        %3964 = vrot.lane.b32.xlu0 %v3930, 96
        %v3965 = vpop.permute.xlu0 %3964
        %3966 = vrot.lane.b32.xlu0 %v3931, 96
        %v3967 = vpop.permute.xlu0 %3966
        %v3970 = vsel %vm2786, %v3046, %v3937
        %v3973 = vsel %vm2786, %v3047, %v3939
        %v3976 = vsel %vm2786, %v3048, %v3941
        %v3979 = vsel %vm2786, %v3049, %v3943
        %v3981 = vsel %vm2876, %v3970, %v3949
        %v3983 = vsel %vm2876, %v3973, %v3951
        %v3985 = vsel %vm2876, %v3976, %v3953
        %v3987 = vsel %vm2876, %v3979, %v3955
        %vm3988 = vcmask 785408
        %v3990 = vsel %vm3988, %v3981, %v3961
        %v3993 = vsel %vm3988, %v3983, %v3963
        %v3996 = vsel %vm3988, %v3985, %v3965
        %v3999 = vsel %vm3988, %v3987, %v3967
        %v4017 = vunpack.c.l.b16 %v2232
        %v4018 = vunpack.c.l.b16 %v2233
        %v4019 = vunpack.c.l.b16 %v2234
        %v4020 = vunpack.c.l.b16 %v2235
        %v4021 = vunpack.c.l.b16 %v2236
        %v4022 = vunpack.c.l.b16 %v2237
        %v4023 = vunpack.c.l.b16 %v2238
        %v4024 = vunpack.c.l.b16 %v2239
        %v4025 = vunpack.c.l.b16 %v2240
        %v4026 = vunpack.c.l.b16 %v2241
        %v4027 = vunpack.c.l.b16 %v2242
        %v4028 = vunpack.c.l.b16 %v2243
        %v4029 = vunpack.c.l.b16 %v2244
        %v4030 = vunpack.c.l.b16 %v2245
        %v4031 = vunpack.c.l.b16 %v2246
        %v4032 = vunpack.c.l.b16 %v2247
        %v4033 = vpack.c.b16 %v4018, %v4017
        %v4034 = vpack.c.b16 %v4020, %v4019
        %v4035 = vpack.c.b16 %v4022, %v4021
        %v4036 = vpack.c.b16 %v4024, %v4023
        %v4037 = vpack.c.b16 %v4026, %v4025
        %v4038 = vpack.c.b16 %v4028, %v4027
        %v4039 = vpack.c.b16 %v4030, %v4029
        %v4040 = vpack.c.b16 %v4032, %v4031
        %4049 = vmatprep.subr.bf16.mxu0 0
        %4050 = vmatpush1.bf16.msra.mxu0 %v4033
        %4051 = vmatprep.subr.bf16.mxu0 0
        %4052 = vmatpush1.bf16.msra.mxu0 %v4034
        %4053 = vmatprep.subr.bf16.mxu0 0
        %4054 = vmatpush1.bf16.msra.mxu0 %v4035
        %4055 = vmatprep.subr.bf16.mxu0 0
        %4056 = vmatpush1.bf16.msra.mxu0 %v4036
        %4057 = vmatprep.subr.bf16.mxu0 0
        %4058 = vmatpush1.bf16.msra.mxu0 %v4037
        %4059 = vmatprep.subr.bf16.mxu0 0
        %4060 = vmatpush1.bf16.msra.mxu0 %v4038
        %4061 = vmatprep.subr.bf16.mxu0 0
        %4062 = vmatpush1.bf16.msra.mxu0 %v4039
        %4063 = vmatprep.subr.bf16.mxu0 0
        %4064 = vmatpush1.bf16.msra.mxu0 %v4040
        %4065 = vmatprep.subr.bf16.mxu0 0
        %4066 = vmatpush1.bf16.msra.mxu0 0
        %4067 = vmatprep.subr.bf16.mxu0 0
        %4068 = vmatpush1.bf16.msra.mxu0 0
        %4069 = vmatprep.subr.bf16.mxu0 0
        %4070 = vmatpush1.bf16.msra.mxu0 0
        %4071 = vmatprep.subr.bf16.mxu0 0
        %4072 = vmatpush1.bf16.msra.mxu0 0
        %4073 = vmatprep.subr.bf16.mxu0 0
        %4074 = vmatpush1.bf16.msra.mxu0 0
        %4075 = vmatprep.subr.bf16.mxu0 0
        %4076 = vmatpush1.bf16.msra.mxu0 0
        %4077 = vmatprep.subr.bf16.mxu0 0
        %4078 = vmatpush1.bf16.msra.mxu0 0
        %4079 = vmatprep.subr.bf16.mxu0 0
        %4080 = vmatpush1.bf16.msra.mxu0 0
        %4081 = vmatprep.mubr.bf16.mxu0 0
        %4082 = vmatmul.mubr.bf16.gmra.mrb[0].mxu0 %v3990
        %v4083 = vpop.f32.mrb[0].mxu0
        %v4084 = vadd.f32 0.0, %v4083
        %v4085 = vpop.f32.mrb[0].mxu0
        %v4086 = vpop.f32.mrb[0].mxu0
        %v4087 = vadd.f32 0.0, %v4086
        %v4088 = vpop.f32.mrb[0].mxu0
        %4089 = vmatprep.mubr.bf16.mxu0 0
        %4090 = vmatmul.mubr.bf16.gmra.mrb[0].mxu0 %v3993
        %v4091 = vpop.f32.mrb[0].mxu0
        %v4092 = vadd.f32 0.0, %v4091
        %v4093 = vpop.f32.mrb[0].mxu0
        %v4094 = vpop.f32.mrb[0].mxu0
        %v4095 = vadd.f32 0.0, %v4094
        %v4096 = vpop.f32.mrb[0].mxu0
        %4097 = vmatprep.mubr.bf16.mxu0 0
        %4098 = vmatmul.mubr.bf16.gmra.mrb[0].mxu0 %v3996
        %v4099 = vpop.f32.mrb[0].mxu0
        %v4100 = vadd.f32 0.0, %v4099
        %v4101 = vpop.f32.mrb[0].mxu0
        %v4102 = vpop.f32.mrb[0].mxu0
        %v4103 = vadd.f32 0.0, %v4102
        %v4104 = vpop.f32.mrb[0].mxu0
        %4105 = vmatprep.mubr.bf16.mxu0 0
        %4106 = vmatmul.mubr.bf16.gmra.mrb[0].mxu0 %v3999
        %v4107 = vpop.f32.mrb[0].mxu0
        %v4108 = vadd.f32 0.0, %v4107
        %v4109 = vpop.f32.mrb[0].mxu0
        %v4110 = vpop.f32.mrb[0].mxu0
        %v4111 = vadd.f32 0.0, %v4110
        %v4112 = vpop.f32.mrb[0].mxu0
        %4113 = vdwg.mxu0
        %v4114 = vadd.f32 %v2377, %v4084
        %v4115 = vadd.f32 %v2378, %v4087
        %v4116 = vadd.f32 %v2379, %v4092
        %v4117 = vadd.f32 %v2380, %v4095
        %v4118 = vadd.f32 %v2381, %v4100
        %v4119 = vadd.f32 %v2382, %v4103
        %v4120 = vadd.f32 %v2383, %v4108
        %v4121 = vadd.f32 %v2384, %v4111
        %v4123 = vlaneseq
        %v4124 = vshrl.u32 %v4123, 7
        %v4125 = vsub.s32 0, %v4124
        %v4126 = vrot.slane %v2376, %v4125
        %v4128 = vadd.f32 %v4114, %v4126
        %v4129 = vadd.f32 %v4115, %v4126
        %v4130 = vadd.f32 %v4116, %v4126
        %v4131 = vadd.f32 %v4117, %v4126
        %v4132 = vadd.f32 %v4118, %v4126
        %v4133 = vadd.f32 %v4119, %v4126
        %v4134 = vadd.f32 %v4120, %v4126
        %v4135 = vadd.f32 %v4121, %v4126
        %4136 = vst [vmem:[#allocation2] sm:$0xff] %v4128
        %4137 = vst [vmem:[#allocation2 + $0x8] sm:$0xff] %v4129
        %4138 = vst [vmem:[#allocation2 + $0x10] sm:$0xff] %v4130
        %4139 = vst [vmem:[#allocation2 + $0x18] sm:$0xff] %v4131
        %4140 = vst [vmem:[#allocation2 + $0x20] sm:$0xff] %v4132
        %4141 = vst [vmem:[#allocation2 + $0x28] sm:$0xff] %v4133
        %4142 = vst [vmem:[#allocation2 + $0x30] sm:$0xff] %v4134
        %4143 = vst [vmem:[#allocation2 + $0x38] sm:$0xff] %v4135
        %v4144 = vld [vmem:[#allocation2] sm:$0xff]
        %v4145 = vld [vmem:[#allocation2 + $0x8] sm:$0xff]
        %v4146 = vld [vmem:[#allocation2 + $0x10] sm:$0xff]
        %v4147 = vld [vmem:[#allocation2 + $0x18] sm:$0xff]
        %v4148 = vld [vmem:[#allocation2 + $0x20] sm:$0xff]
        %v4149 = vld [vmem:[#allocation2 + $0x28] sm:$0xff]
        %v4150 = vld [vmem:[#allocation2 + $0x30] sm:$0xff]
        %v4151 = vld [vmem:[#allocation2 + $0x38] sm:$0xff]
        %v4152 = vld [vmem:[%s954] sm:$0x1]
        %v4153 = vld [vmem:[%s962] sm:$0x1]
        %4154 = vadd.xlane.f32.xlu0 %v4144
        %v4155 = vpop.xlane.xlu0 %4154
        %4156 = vadd.xlane.f32.xlu0 %v4145
        %v4157 = vpop.xlane.xlu0 %4156
        %4158 = vadd.xlane.f32.xlu0 %v4146
        %v4159 = vpop.xlane.xlu0 %4158
        %4160 = vadd.xlane.f32.xlu0 %v4147
        %v4161 = vpop.xlane.xlu0 %4160
        %4162 = vadd.xlane.f32.xlu0 %v4148
        %v4163 = vpop.xlane.xlu0 %4162
        %4164 = vadd.xlane.f32.xlu0 %v4149
        %v4165 = vpop.xlane.xlu0 %4164
        %4166 = vadd.xlane.f32.xlu0 %v4150
        %v4167 = vpop.xlane.xlu0 %4166
        %4168 = vadd.xlane.f32.xlu0 %v4151
        %v4169 = vpop.xlane.xlu0 %4168
        %v4170 = vmul.f32 %v4155, %v2403
        %v4171 = vmul.f32 %v4157, %v2403
        %v4172 = vmul.f32 %v4159, %v2403
        %v4173 = vmul.f32 %v4161, %v2403
        %v4174 = vmul.f32 %v4163, %v2403
        %v4175 = vmul.f32 %v4165, %v2403
        %v4176 = vmul.f32 %v4167, %v2403
        %v4177 = vmul.f32 %v4169, %v2403
        %v4178 = vsub.f32 %v4144, %v4170
        %v4179 = vsub.f32 %v4145, %v4171
        %v4180 = vsub.f32 %v4146, %v4172
        %v4181 = vsub.f32 %v4147, %v4173
        %v4182 = vsub.f32 %v4148, %v4174
        %v4183 = vsub.f32 %v4149, %v4175
        %v4184 = vsub.f32 %v4150, %v4176
        %v4185 = vsub.f32 %v4151, %v4177
        %v4186 = vmul.f32 %v4178, %v4178
        %v4187 = vmul.f32 %v4179, %v4179
        %v4188 = vmul.f32 %v4180, %v4180
        %v4189 = vmul.f32 %v4181, %v4181
        %v4190 = vmul.f32 %v4182, %v4182
        %v4191 = vmul.f32 %v4183, %v4183
        %v4192 = vmul.f32 %v4184, %v4184
        %v4193 = vmul.f32 %v4185, %v4185
        %4194 = vadd.xlane.f32.xlu0 %v4186
        %v4195 = vpop.xlane.xlu0 %4194
        %4196 = vadd.xlane.f32.xlu0 %v4187
        %v4197 = vpop.xlane.xlu0 %4196
        %4198 = vadd.xlane.f32.xlu0 %v4188
        %v4199 = vpop.xlane.xlu0 %4198
        %4200 = vadd.xlane.f32.xlu0 %v4189
        %v4201 = vpop.xlane.xlu0 %4200
        %4202 = vadd.xlane.f32.xlu0 %v4190
        %v4203 = vpop.xlane.xlu0 %4202
        %4204 = vadd.xlane.f32.xlu0 %v4191
        %v4205 = vpop.xlane.xlu0 %4204
        %4206 = vadd.xlane.f32.xlu0 %v4192
        %v4207 = vpop.xlane.xlu0 %4206
        %4208 = vadd.xlane.f32.xlu0 %v4193
        %v4209 = vpop.xlane.xlu0 %4208
        %v4210 = vmul.f32 %v4195, %v2403
        %v4211 = vmul.f32 %v4197, %v2403
        %v4212 = vmul.f32 %v4199, %v2403
        %v4213 = vmul.f32 %v4201, %v2403
        %v4214 = vmul.f32 %v4203, %v2403
        %v4215 = vmul.f32 %v4205, %v2403
        %v4216 = vmul.f32 %v4207, %v2403
        %v4217 = vmul.f32 %v4209, %v2403
        %v4218 = vadd.f32 %v4210, 1e-05
        %v4219 = vadd.f32 %v4211, 1e-05
        %v4220 = vadd.f32 %v4212, 1e-05
        %v4221 = vadd.f32 %v4213, 1e-05
        %v4222 = vadd.f32 %v4214, 1e-05
        %v4223 = vadd.f32 %v4215, 1e-05
        %v4224 = vadd.f32 %v4216, 1e-05
        %v4225 = vadd.f32 %v4217, 1e-05
        %v4226 = vrsqrt.pop %v4218
        %v4227 = vrsqrt.pop %v4219
        %v4228 = vrsqrt.pop %v4220
        %v4229 = vrsqrt.pop %v4221
        %v4230 = vrsqrt.pop %v4222
        %v4231 = vrsqrt.pop %v4223
        %v4232 = vrsqrt.pop %v4224
        %v4233 = vrsqrt.pop %v4225
        %v4234 = vmul.f32 %v4178, %v4226
        %v4235 = vmul.f32 %v4179, %v4227
        %v4236 = vmul.f32 %v4180, %v4228
        %v4237 = vmul.f32 %v4181, %v4229
        %v4238 = vmul.f32 %v4182, %v4230
        %v4239 = vmul.f32 %v4183, %v4231
        %v4240 = vmul.f32 %v4184, %v4232
        %v4241 = vmul.f32 %v4185, %v4233
        %v4243 = vlaneseq
        %v4244 = vshrl.u32 %v4243, 7
        %v4245 = vsub.s32 0, %v4244
        %v4246 = vrot.slane %v4152, %v4245
        %v4248 = vmul.f32 %v4234, %v4246
        %v4249 = vmul.f32 %v4235, %v4246
        %v4250 = vmul.f32 %v4236, %v4246
        %v4251 = vmul.f32 %v4237, %v4246
        %v4252 = vmul.f32 %v4238, %v4246
        %v4253 = vmul.f32 %v4239, %v4246
        %v4254 = vmul.f32 %v4240, %v4246
        %v4255 = vmul.f32 %v4241, %v4246
        %v4257 = vlaneseq
        %v4258 = vshrl.u32 %v4257, 7
        %v4259 = vsub.s32 0, %v4258
        %v4260 = vrot.slane %v4153, %v4259
        %v4262 = vadd.f32 %v4248, %v4260
        %v4263 = vadd.f32 %v4249, %v4260
        %v4264 = vadd.f32 %v4250, %v4260
        %v4265 = vadd.f32 %v4251, %v4260
        %v4266 = vadd.f32 %v4252, %v4260
        %v4267 = vadd.f32 %v4253, %v4260
        %v4268 = vadd.f32 %v4254, %v4260
        %v4269 = vadd.f32 %v4255, %v4260
        %v4270 = vpack.c.bf16 %v4263, %v4262
        %v4271 = vpack.c.bf16 %v4265, %v4264
        %v4272 = vpack.c.bf16 %v4267, %v4266
        %v4273 = vpack.c.bf16 %v4269, %v4268
        %v4274 = vld [vmem:[%s980] sm:$0xf]
        %v4276 = vlaneseq
        %v4277 = vshrl.u32 %v4276, 7
        %v4278 = vsub.s32 0, %v4277
        %v4279 = vrot.slane %v4274, %v4278
        %v4280 = vlaneseq
        %v4281 = vshrl.u32 %v4280, 7
        %v4282 = vsub.s32 1, %v4281
        %v4283 = vrot.slane %v4274, %v4282
        %v4284 = vlaneseq
        %v4285 = vshrl.u32 %v4284, 7
        %v4286 = vsub.s32 2, %v4285
        %v4287 = vrot.slane %v4274, %v4286
        %v4288 = vlaneseq
        %v4289 = vshrl.u32 %v4288, 7
        %v4290 = vsub.s32 3, %v4289
        %v4291 = vrot.slane %v4274, %v4290
        %v4328 = vunpack.c.l.b16 %v2248
        %v4329 = vunpack.c.h.b16 %v2248
        %v4330 = vunpack.c.l.b16 %v2249
        %v4331 = vunpack.c.h.b16 %v2249
        %v4332 = vunpack.c.l.b16 %v2250
        %v4333 = vunpack.c.h.b16 %v2250
        %v4334 = vunpack.c.l.b16 %v2251
        %v4335 = vunpack.c.h.b16 %v2251
        %v4336 = vunpack.c.l.b16 %v2252
        %v4337 = vunpack.c.h.b16 %v2252
        %v4338 = vunpack.c.l.b16 %v2253
        %v4339 = vunpack.c.h.b16 %v2253
        %v4340 = vunpack.c.l.b16 %v2254
        %v4341 = vunpack.c.h.b16 %v2254
        %v4342 = vunpack.c.l.b16 %v2255
        %v4343 = vunpack.c.h.b16 %v2255
        %v4344 = vunpack.c.l.b16 %v2256
        %v4345 = vunpack.c.h.b16 %v2256
        %v4346 = vunpack.c.l.b16 %v2257
        %v4347 = vunpack.c.h.b16 %v2257
        %v4348 = vunpack.c.l.b16 %v2258
        %v4349 = vunpack.c.h.b16 %v2258
        %v4350 = vunpack.c.l.b16 %v2259
        %v4351 = vunpack.c.h.b16 %v2259
        %v4352 = vunpack.c.l.b16 %v2260
        %v4353 = vunpack.c.h.b16 %v2260
        %v4354 = vunpack.c.l.b16 %v2261
        %v4355 = vunpack.c.h.b16 %v2261
        %v4356 = vunpack.c.l.b16 %v2262
        %v4357 = vunpack.c.h.b16 %v2262
        %v4358 = vunpack.c.l.b16 %v2263
        %v4359 = vunpack.c.h.b16 %v2263
        %v4360 = vunpack.c.l.b16 %v2264
        %v4361 = vunpack.c.h.b16 %v2264
        %v4362 = vunpack.c.l.b16 %v2265
        %v4363 = vunpack.c.h.b16 %v2265
        %v4364 = vunpack.c.l.b16 %v2266
        %v4365 = vunpack.c.h.b16 %v2266
        %v4366 = vunpack.c.l.b16 %v2267
        %v4367 = vunpack.c.h.b16 %v2267
        %v4368 = vunpack.c.l.b16 %v2268
        %v4369 = vunpack.c.h.b16 %v2268
        %v4370 = vunpack.c.l.b16 %v2269
        %v4371 = vunpack.c.h.b16 %v2269
        %v4372 = vunpack.c.l.b16 %v2270
        %v4373 = vunpack.c.h.b16 %v2270
        %v4374 = vunpack.c.l.b16 %v2271
        %v4375 = vunpack.c.h.b16 %v2271
        %v4376 = vunpack.c.l.b16 %v2272
        %v4377 = vunpack.c.h.b16 %v2272
        %v4378 = vunpack.c.l.b16 %v2273
        %v4379 = vunpack.c.h.b16 %v2273
        %v4380 = vunpack.c.l.b16 %v2274
        %v4381 = vunpack.c.h.b16 %v2274
        %v4382 = vunpack.c.l.b16 %v2275
        %v4383 = vunpack.c.h.b16 %v2275
        %v4384 = vunpack.c.l.b16 %v2276
        %v4385 = vunpack.c.h.b16 %v2276
        %v4386 = vunpack.c.l.b16 %v2277
        %v4387 = vunpack.c.h.b16 %v2277
        %v4388 = vunpack.c.l.b16 %v2278
        %v4389 = vunpack.c.h.b16 %v2278
        %v4390 = vunpack.c.l.b16 %v2279
        %v4391 = vunpack.c.h.b16 %v2279
        %v4392 = vpack.c.b16 %v4332, %v4328
        %v4393 = vpack.c.b16 %v4333, %v4329
        %v4394 = vpack.c.b16 %v4334, %v4330
        %v4395 = vpack.c.b16 %v4335, %v4331
        %v4396 = vpack.c.b16 %v4340, %v4336
        %v4397 = vpack.c.b16 %v4341, %v4337
        %v4398 = vpack.c.b16 %v4342, %v4338
        %v4399 = vpack.c.b16 %v4343, %v4339
        %v4400 = vpack.c.b16 %v4348, %v4344
        %v4401 = vpack.c.b16 %v4349, %v4345
        %v4402 = vpack.c.b16 %v4350, %v4346
        %v4403 = vpack.c.b16 %v4351, %v4347
        %v4404 = vpack.c.b16 %v4356, %v4352
        %v4405 = vpack.c.b16 %v4357, %v4353
        %v4406 = vpack.c.b16 %v4358, %v4354
        %v4407 = vpack.c.b16 %v4359, %v4355
        %v4408 = vpack.c.b16 %v4364, %v4360
        %v4409 = vpack.c.b16 %v4365, %v4361
        %v4410 = vpack.c.b16 %v4366, %v4362
        %v4411 = vpack.c.b16 %v4367, %v4363
        %v4412 = vpack.c.b16 %v4372, %v4368
        %v4413 = vpack.c.b16 %v4373, %v4369
        %v4414 = vpack.c.b16 %v4374, %v4370
        %v4415 = vpack.c.b16 %v4375, %v4371
        %v4416 = vpack.c.b16 %v4380, %v4376
        %v4417 = vpack.c.b16 %v4381, %v4377
        %v4418 = vpack.c.b16 %v4382, %v4378
        %v4419 = vpack.c.b16 %v4383, %v4379
        %v4420 = vpack.c.b16 %v4388, %v4384
        %v4421 = vpack.c.b16 %v4389, %v4385
        %v4422 = vpack.c.b16 %v4390, %v4386
        %v4423 = vpack.c.b16 %v4391, %v4387
        %4456 = vmatprep.subr.bf16.mxu0 %v4393
        %4457 = vmatpush1.bf16.msra.mxu0 %v4392
        %4458 = vmatprep.subr.bf16.mxu0 %v4397
        %4459 = vmatpush1.bf16.msra.mxu0 %v4396
        %4460 = vmatprep.subr.bf16.mxu0 %v4401
        %4461 = vmatpush1.bf16.msra.mxu0 %v4400
        %4462 = vmatprep.subr.bf16.mxu0 %v4405
        %4463 = vmatpush1.bf16.msra.mxu0 %v4404
        %4464 = vmatprep.subr.bf16.mxu0 %v4409
        %4465 = vmatpush1.bf16.msra.mxu0 %v4408
        %4466 = vmatprep.subr.bf16.mxu0 %v4413
        %4467 = vmatpush1.bf16.msra.mxu0 %v4412
        %4468 = vmatprep.subr.bf16.mxu0 %v4417
        %4469 = vmatpush1.bf16.msra.mxu0 %v4416
        %4470 = vmatprep.subr.bf16.mxu0 %v4421
        %4471 = vmatpush1.bf16.msra.mxu0 %v4420
        %4472 = vmatprep.subr.bf16.mxu0 0
        %4473 = vmatpush1.bf16.msra.mxu0 0
        %4474 = vmatprep.subr.bf16.mxu0 0
        %4475 = vmatpush1.bf16.msra.mxu0 0
        %4476 = vmatprep.subr.bf16.mxu0 0
        %4477 = vmatpush1.bf16.msra.mxu0 0
        %4478 = vmatprep.subr.bf16.mxu0 0
        %4479 = vmatpush1.bf16.msra.mxu0 0
        %4480 = vmatprep.subr.bf16.mxu0 0
        %4481 = vmatpush1.bf16.msra.mxu0 0
        %4482 = vmatprep.subr.bf16.mxu0 0
        %4483 = vmatpush1.bf16.msra.mxu0 0
        %4484 = vmatprep.subr.bf16.mxu0 0
        %4485 = vmatpush1.bf16.msra.mxu0 0
        %4486 = vmatprep.subr.bf16.mxu0 0
        %4487 = vmatpush1.bf16.msra.mxu0 0
        %4488 = vmatprep.mubr.bf16.mxu0 0
        %4489 = vmatmul.mubr.bf16.gmra.mrb[0].mxu0 %v4270
        %v4490 = vpop.f32.mrb[0].mxu0
        %v4491 = vadd.f32 %v4279, %v4490
        %v4492 = vpop.f32.mrb[0].mxu0
        %v4493 = vadd.f32 %v4283, %v4492
        %v4494 = vpop.f32.mrb[0].mxu0
        %v4495 = vadd.f32 %v4279, %v4494
        %v4496 = vpop.f32.mrb[0].mxu0
        %v4497 = vadd.f32 %v4283, %v4496
        %4498 = vmatprep.mubr.bf16.mxu0 0
        %4499 = vmatmul.mubr.bf16.gmra.mrb[0].mxu0 %v4271
        %v4500 = vpop.f32.mrb[0].mxu0
        %v4501 = vadd.f32 %v4279, %v4500
        %v4502 = vpop.f32.mrb[0].mxu0
        %v4503 = vadd.f32 %v4283, %v4502
        %v4504 = vpop.f32.mrb[0].mxu0
        %v4505 = vadd.f32 %v4279, %v4504
        %v4506 = vpop.f32.mrb[0].mxu0
        %v4507 = vadd.f32 %v4283, %v4506
        %4508 = vmatprep.mubr.bf16.mxu0 0
        %4509 = vmatmul.mubr.bf16.gmra.mrb[0].mxu0 %v4272
        %v4510 = vpop.f32.mrb[0].mxu0
        %v4511 = vadd.f32 %v4279, %v4510
        %v4512 = vpop.f32.mrb[0].mxu0
        %v4513 = vadd.f32 %v4283, %v4512
        %v4514 = vpop.f32.mrb[0].mxu0
        %v4515 = vadd.f32 %v4279, %v4514
        %v4516 = vpop.f32.mrb[0].mxu0
        %v4517 = vadd.f32 %v4283, %v4516
        %4518 = vmatprep.mubr.bf16.mxu0 0
        %4519 = vmatmul.mubr.bf16.gmra.mrb[0].mxu0 %v4273
        %v4520 = vpop.f32.mrb[0].mxu0
        %v4521 = vadd.f32 %v4279, %v4520
        %v4522 = vpop.f32.mrb[0].mxu0
        %v4523 = vadd.f32 %v4283, %v4522
        %v4524 = vpop.f32.mrb[0].mxu0
        %v4525 = vadd.f32 %v4279, %v4524
        %v4526 = vpop.f32.mrb[0].mxu0
        %v4527 = vadd.f32 %v4283, %v4526
        %4528 = vdwg.mxu0
        %4529 = vmatprep.subr.bf16.mxu0 %v4395
        %4530 = vmatpush1.bf16.msra.mxu0 %v4394
        %4531 = vmatprep.subr.bf16.mxu0 %v4399
        %4532 = vmatpush1.bf16.msra.mxu0 %v4398
        %4533 = vmatprep.subr.bf16.mxu0 %v4403
        %4534 = vmatpush1.bf16.msra.mxu0 %v4402
        %4535 = vmatprep.subr.bf16.mxu0 %v4407
        %4536 = vmatpush1.bf16.msra.mxu0 %v4406
        %4537 = vmatprep.subr.bf16.mxu0 %v4411
        %4538 = vmatpush1.bf16.msra.mxu0 %v4410
        %4539 = vmatprep.subr.bf16.mxu0 %v4415
        %4540 = vmatpush1.bf16.msra.mxu0 %v4414
        %4541 = vmatprep.subr.bf16.mxu0 %v4419
        %4542 = vmatpush1.bf16.msra.mxu0 %v4418
        %4543 = vmatprep.subr.bf16.mxu0 %v4423
        %4544 = vmatpush1.bf16.msra.mxu0 %v4422
        %4545 = vmatprep.subr.bf16.mxu0 0
        %4546 = vmatpush1.bf16.msra.mxu0 0
        %4547 = vmatprep.subr.bf16.mxu0 0
        %4548 = vmatpush1.bf16.msra.mxu0 0
        %4549 = vmatprep.subr.bf16.mxu0 0
        %4550 = vmatpush1.bf16.msra.mxu0 0
        %4551 = vmatprep.subr.bf16.mxu0 0
        %4552 = vmatpush1.bf16.msra.mxu0 0
        %4553 = vmatprep.subr.bf16.mxu0 0
        %4554 = vmatpush1.bf16.msra.mxu0 0
        %4555 = vmatprep.subr.bf16.mxu0 0
        %4556 = vmatpush1.bf16.msra.mxu0 0
        %4557 = vmatprep.subr.bf16.mxu0 0
        %4558 = vmatpush1.bf16.msra.mxu0 0
        %4559 = vmatprep.subr.bf16.mxu0 0
        %4560 = vmatpush1.bf16.msra.mxu0 0
        %4561 = vmatprep.mubr.bf16.mxu0 0
        %4562 = vmatmul.mubr.bf16.gmra.mrb[0].mxu0 %v4270
        %v4563 = vpop.f32.mrb[0].mxu0
        %v4564 = vadd.f32 %v4287, %v4563
        %v4565 = vpop.f32.mrb[0].mxu0
        %v4566 = vadd.f32 %v4291, %v4565
        %v4567 = vpop.f32.mrb[0].mxu0
        %v4568 = vadd.f32 %v4287, %v4567
        %v4569 = vpop.f32.mrb[0].mxu0
        %v4570 = vadd.f32 %v4291, %v4569
        %4571 = vmatprep.mubr.bf16.mxu0 0
        %4572 = vmatmul.mubr.bf16.gmra.mrb[0].mxu0 %v4271
        %v4573 = vpop.f32.mrb[0].mxu0
        %v4574 = vadd.f32 %v4287, %v4573
        %v4575 = vpop.f32.mrb[0].mxu0
        %v4576 = vadd.f32 %v4291, %v4575
        %v4577 = vpop.f32.mrb[0].mxu0
        %v4578 = vadd.f32 %v4287, %v4577
        %v4579 = vpop.f32.mrb[0].mxu0
        %v4580 = vadd.f32 %v4291, %v4579
        %4581 = vmatprep.mubr.bf16.mxu0 0
        %4582 = vmatmul.mubr.bf16.gmra.mrb[0].mxu0 %v4272
        %v4583 = vpop.f32.mrb[0].mxu0
        %v4584 = vadd.f32 %v4287, %v4583
        %v4585 = vpop.f32.mrb[0].mxu0
        %v4586 = vadd.f32 %v4291, %v4585
        %v4587 = vpop.f32.mrb[0].mxu0
        %v4588 = vadd.f32 %v4287, %v4587
        %v4589 = vpop.f32.mrb[0].mxu0
        %v4590 = vadd.f32 %v4291, %v4589
        %4591 = vmatprep.mubr.bf16.mxu0 0
        %4592 = vmatmul.mubr.bf16.gmra.mrb[0].mxu0 %v4273
        %v4593 = vpop.f32.mrb[0].mxu0
        %v4594 = vadd.f32 %v4287, %v4593
        %v4595 = vpop.f32.mrb[0].mxu0
        %v4596 = vadd.f32 %v4291, %v4595
        %v4597 = vpop.f32.mrb[0].mxu0
        %v4598 = vadd.f32 %v4287, %v4597
        %v4599 = vpop.f32.mrb[0].mxu0
        %v4600 = vadd.f32 %v4291, %v4599
        %4601 = vdwg.mxu0
        %v4602 = vld [vmem:[%s1120] sm:$0xf]
        %v4604 = vlaneseq
        %v4605 = vshrl.u32 %v4604, 7
        %v4606 = vsub.s32 0, %v4605
        %v4607 = vrot.slane %v4602, %v4606
        %v4608 = vlaneseq
        %v4609 = vshrl.u32 %v4608, 7
        %v4610 = vsub.s32 1, %v4609
        %v4611 = vrot.slane %v4602, %v4610
        %v4612 = vlaneseq
        %v4613 = vshrl.u32 %v4612, 7
        %v4614 = vsub.s32 2, %v4613
        %v4615 = vrot.slane %v4602, %v4614
        %v4616 = vlaneseq
        %v4617 = vshrl.u32 %v4616, 7
        %v4618 = vsub.s32 3, %v4617
        %v4619 = vrot.slane %v4602, %v4618
        %v4656 = vunpack.c.l.b16 %v2280
        %v4657 = vunpack.c.h.b16 %v2280
        %v4658 = vunpack.c.l.b16 %v2281
        %v4659 = vunpack.c.h.b16 %v2281
        %v4660 = vunpack.c.l.b16 %v2282
        %v4661 = vunpack.c.h.b16 %v2282
        %v4662 = vunpack.c.l.b16 %v2283
        %v4663 = vunpack.c.h.b16 %v2283
        %v4664 = vunpack.c.l.b16 %v2284
        %v4665 = vunpack.c.h.b16 %v2284
        %v4666 = vunpack.c.l.b16 %v2285
        %v4667 = vunpack.c.h.b16 %v2285
        %v4668 = vunpack.c.l.b16 %v2286
        %v4669 = vunpack.c.h.b16 %v2286
        %v4670 = vunpack.c.l.b16 %v2287
        %v4671 = vunpack.c.h.b16 %v2287
        %v4672 = vunpack.c.l.b16 %v2288
        %v4673 = vunpack.c.h.b16 %v2288
        %v4674 = vunpack.c.l.b16 %v2289
        %v4675 = vunpack.c.h.b16 %v2289
        %v4676 = vunpack.c.l.b16 %v2290
        %v4677 = vunpack.c.h.b16 %v2290
        %v4678 = vunpack.c.l.b16 %v2291
        %v4679 = vunpack.c.h.b16 %v2291
        %v4680 = vunpack.c.l.b16 %v2292
        %v4681 = vunpack.c.h.b16 %v2292
        %v4682 = vunpack.c.l.b16 %v2293
        %v4683 = vunpack.c.h.b16 %v2293
        %v4684 = vunpack.c.l.b16 %v2294
        %v4685 = vunpack.c.h.b16 %v2294
        %v4686 = vunpack.c.l.b16 %v2295
        %v4687 = vunpack.c.h.b16 %v2295
        %v4688 = vunpack.c.l.b16 %v2296
        %v4689 = vunpack.c.h.b16 %v2296
        %v4690 = vunpack.c.l.b16 %v2297
        %v4691 = vunpack.c.h.b16 %v2297
        %v4692 = vunpack.c.l.b16 %v2298
        %v4693 = vunpack.c.h.b16 %v2298
        %v4694 = vunpack.c.l.b16 %v2299
        %v4695 = vunpack.c.h.b16 %v2299
        %v4696 = vunpack.c.l.b16 %v2300
        %v4697 = vunpack.c.h.b16 %v2300
        %v4698 = vunpack.c.l.b16 %v2301
        %v4699 = vunpack.c.h.b16 %v2301
        %v4700 = vunpack.c.l.b16 %v2302
        %v4701 = vunpack.c.h.b16 %v2302
        %v4702 = vunpack.c.l.b16 %v2303
        %v4703 = vunpack.c.h.b16 %v2303
        %v4704 = vunpack.c.l.b16 %v2304
        %v4705 = vunpack.c.h.b16 %v2304
        %v4706 = vunpack.c.l.b16 %v2305
        %v4707 = vunpack.c.h.b16 %v2305
        %v4708 = vunpack.c.l.b16 %v2306
        %v4709 = vunpack.c.h.b16 %v2306
        %v4710 = vunpack.c.l.b16 %v2307
        %v4711 = vunpack.c.h.b16 %v2307
        %v4712 = vunpack.c.l.b16 %v2308
        %v4713 = vunpack.c.h.b16 %v2308
        %v4714 = vunpack.c.l.b16 %v2309
        %v4715 = vunpack.c.h.b16 %v2309
        %v4716 = vunpack.c.l.b16 %v2310
        %v4717 = vunpack.c.h.b16 %v2310
        %v4718 = vunpack.c.l.b16 %v2311
        %v4719 = vunpack.c.h.b16 %v2311
        %v4720 = vpack.c.b16 %v4660, %v4656
        %v4721 = vpack.c.b16 %v4661, %v4657
        %v4722 = vpack.c.b16 %v4662, %v4658
        %v4723 = vpack.c.b16 %v4663, %v4659
        %v4724 = vpack.c.b16 %v4668, %v4664
        %v4725 = vpack.c.b16 %v4669, %v4665
        %v4726 = vpack.c.b16 %v4670, %v4666
        %v4727 = vpack.c.b16 %v4671, %v4667
        %v4728 = vpack.c.b16 %v4676, %v4672
        %v4729 = vpack.c.b16 %v4677, %v4673
        %v4730 = vpack.c.b16 %v4678, %v4674
        %v4731 = vpack.c.b16 %v4679, %v4675
        %v4732 = vpack.c.b16 %v4684, %v4680
        %v4733 = vpack.c.b16 %v4685, %v4681
        %v4734 = vpack.c.b16 %v4686, %v4682
        %v4735 = vpack.c.b16 %v4687, %v4683
        %v4736 = vpack.c.b16 %v4692, %v4688
        %v4737 = vpack.c.b16 %v4693, %v4689
        %v4738 = vpack.c.b16 %v4694, %v4690
        %v4739 = vpack.c.b16 %v4695, %v4691
        %v4740 = vpack.c.b16 %v4700, %v4696
        %v4741 = vpack.c.b16 %v4701, %v4697
        %v4742 = vpack.c.b16 %v4702, %v4698
        %v4743 = vpack.c.b16 %v4703, %v4699
        %v4744 = vpack.c.b16 %v4708, %v4704
        %v4745 = vpack.c.b16 %v4709, %v4705
        %v4746 = vpack.c.b16 %v4710, %v4706
        %v4747 = vpack.c.b16 %v4711, %v4707
        %v4748 = vpack.c.b16 %v4716, %v4712
        %v4749 = vpack.c.b16 %v4717, %v4713
        %v4750 = vpack.c.b16 %v4718, %v4714
        %v4751 = vpack.c.b16 %v4719, %v4715
        %4784 = vmatprep.subr.bf16.mxu0 %v4721
        %4785 = vmatpush1.bf16.msra.mxu0 %v4720
        %4786 = vmatprep.subr.bf16.mxu0 %v4725
        %4787 = vmatpush1.bf16.msra.mxu0 %v4724
        %4788 = vmatprep.subr.bf16.mxu0 %v4729
        %4789 = vmatpush1.bf16.msra.mxu0 %v4728
        %4790 = vmatprep.subr.bf16.mxu0 %v4733
        %4791 = vmatpush1.bf16.msra.mxu0 %v4732
        %4792 = vmatprep.subr.bf16.mxu0 %v4737
        %4793 = vmatpush1.bf16.msra.mxu0 %v4736
        %4794 = vmatprep.subr.bf16.mxu0 %v4741
        %4795 = vmatpush1.bf16.msra.mxu0 %v4740
        %4796 = vmatprep.subr.bf16.mxu0 %v4745
        %4797 = vmatpush1.bf16.msra.mxu0 %v4744
        %4798 = vmatprep.subr.bf16.mxu0 %v4749
        %4799 = vmatpush1.bf16.msra.mxu0 %v4748
        %4800 = vmatprep.subr.bf16.mxu0 0
        %4801 = vmatpush1.bf16.msra.mxu0 0
        %4802 = vmatprep.subr.bf16.mxu0 0
        %4803 = vmatpush1.bf16.msra.mxu0 0
        %4804 = vmatprep.subr.bf16.mxu0 0
        %4805 = vmatpush1.bf16.msra.mxu0 0
        %4806 = vmatprep.subr.bf16.mxu0 0
        %4807 = vmatpush1.bf16.msra.mxu0 0
        %4808 = vmatprep.subr.bf16.mxu0 0
        %4809 = vmatpush1.bf16.msra.mxu0 0
        %4810 = vmatprep.subr.bf16.mxu0 0
        %4811 = vmatpush1.bf16.msra.mxu0 0
        %4812 = vmatprep.subr.bf16.mxu0 0
        %4813 = vmatpush1.bf16.msra.mxu0 0
        %4814 = vmatprep.subr.bf16.mxu0 0
        %4815 = vmatpush1.bf16.msra.mxu0 0
        %4816 = vmatprep.mubr.bf16.mxu0 0
        %4817 = vmatmul.mubr.bf16.gmra.mrb[0].mxu0 %v4270
        %v4818 = vpop.f32.mrb[0].mxu0
        %v4819 = vadd.f32 %v4607, %v4818
        %v4820 = vpop.f32.mrb[0].mxu0
        %v4821 = vadd.f32 %v4611, %v4820
        %v4822 = vpop.f32.mrb[0].mxu0
        %v4823 = vadd.f32 %v4607, %v4822
        %v4824 = vpop.f32.mrb[0].mxu0
        %v4825 = vadd.f32 %v4611, %v4824
        %4826 = vmatprep.mubr.bf16.mxu0 0
        %4827 = vmatmul.mubr.bf16.gmra.mrb[0].mxu0 %v4271
        %v4828 = vpop.f32.mrb[0].mxu0
        %v4829 = vadd.f32 %v4607, %v4828
        %v4830 = vpop.f32.mrb[0].mxu0
        %v4831 = vadd.f32 %v4611, %v4830
        %v4832 = vpop.f32.mrb[0].mxu0
        %v4833 = vadd.f32 %v4607, %v4832
        %v4834 = vpop.f32.mrb[0].mxu0
        %v4835 = vadd.f32 %v4611, %v4834
        %4836 = vmatprep.mubr.bf16.mxu0 0
        %4837 = vmatmul.mubr.bf16.gmra.mrb[0].mxu0 %v4272
        %v4838 = vpop.f32.mrb[0].mxu0
        %v4839 = vadd.f32 %v4607, %v4838
        %v4840 = vpop.f32.mrb[0].mxu0
        %v4841 = vadd.f32 %v4611, %v4840
        %v4842 = vpop.f32.mrb[0].mxu0
        %v4843 = vadd.f32 %v4607, %v4842
        %v4844 = vpop.f32.mrb[0].mxu0
        %v4845 = vadd.f32 %v4611, %v4844
        %4846 = vmatprep.mubr.bf16.mxu0 0
        %4847 = vmatmul.mubr.bf16.gmra.mrb[0].mxu0 %v4273
        %v4848 = vpop.f32.mrb[0].mxu0
        %v4849 = vadd.f32 %v4607, %v4848
        %v4850 = vpop.f32.mrb[0].mxu0
        %v4851 = vadd.f32 %v4611, %v4850
        %v4852 = vpop.f32.mrb[0].mxu0
        %v4853 = vadd.f32 %v4607, %v4852
        %v4854 = vpop.f32.mrb[0].mxu0
        %v4855 = vadd.f32 %v4611, %v4854
        %4856 = vdwg.mxu0
        %4857 = vmatprep.subr.bf16.mxu0 %v4723
        %4858 = vmatpush1.bf16.msra.mxu0 %v4722
        %4859 = vmatprep.subr.bf16.mxu0 %v4727
        %4860 = vmatpush1.bf16.msra.mxu0 %v4726
        %4861 = vmatprep.subr.bf16.mxu0 %v4731
        %4862 = vmatpush1.bf16.msra.mxu0 %v4730
        %4863 = vmatprep.subr.bf16.mxu0 %v4735
        %4864 = vmatpush1.bf16.msra.mxu0 %v4734
        %4865 = vmatprep.subr.bf16.mxu0 %v4739
        %4866 = vmatpush1.bf16.msra.mxu0 %v4738
        %4867 = vmatprep.subr.bf16.mxu0 %v4743
        %4868 = vmatpush1.bf16.msra.mxu0 %v4742
        %4869 = vmatprep.subr.bf16.mxu0 %v4747
        %4870 = vmatpush1.bf16.msra.mxu0 %v4746
        %4871 = vmatprep.subr.bf16.mxu0 %v4751
        %4872 = vmatpush1.bf16.msra.mxu0 %v4750
        %4873 = vmatprep.subr.bf16.mxu0 0
        %4874 = vmatpush1.bf16.msra.mxu0 0
        %4875 = vmatprep.subr.bf16.mxu0 0
        %4876 = vmatpush1.bf16.msra.mxu0 0
        %4877 = vmatprep.subr.bf16.mxu0 0
        %4878 = vmatpush1.bf16.msra.mxu0 0
        %4879 = vmatprep.subr.bf16.mxu0 0
        %4880 = vmatpush1.bf16.msra.mxu0 0
        %4881 = vmatprep.subr.bf16.mxu0 0
        %4882 = vmatpush1.bf16.msra.mxu0 0
        %4883 = vmatprep.subr.bf16.mxu0 0
        %4884 = vmatpush1.bf16.msra.mxu0 0
        %4885 = vmatprep.subr.bf16.mxu0 0
        %4886 = vmatpush1.bf16.msra.mxu0 0
        %4887 = vmatprep.subr.bf16.mxu0 0
        %4888 = vmatpush1.bf16.msra.mxu0 0
        %4889 = vmatprep.mubr.bf16.mxu0 0
        %4890 = vmatmul.mubr.bf16.gmra.mrb[0].mxu0 %v4270
        %v4891 = vpop.f32.mrb[0].mxu0
        %v4892 = vadd.f32 %v4615, %v4891
        %v4893 = vpop.f32.mrb[0].mxu0
        %v4894 = vadd.f32 %v4619, %v4893
        %v4895 = vpop.f32.mrb[0].mxu0
        %v4896 = vadd.f32 %v4615, %v4895
        %v4897 = vpop.f32.mrb[0].mxu0
        %v4898 = vadd.f32 %v4619, %v4897
        %4899 = vmatprep.mubr.bf16.mxu0 0
        %4900 = vmatmul.mubr.bf16.gmra.mrb[0].mxu0 %v4271
        %v4901 = vpop.f32.mrb[0].mxu0
        %v4902 = vadd.f32 %v4615, %v4901
        %v4903 = vpop.f32.mrb[0].mxu0
        %v4904 = vadd.f32 %v4619, %v4903
        %v4905 = vpop.f32.mrb[0].mxu0
        %v4906 = vadd.f32 %v4615, %v4905
        %v4907 = vpop.f32.mrb[0].mxu0
        %v4908 = vadd.f32 %v4619, %v4907
        %4909 = vmatprep.mubr.bf16.mxu0 0
        %4910 = vmatmul.mubr.bf16.gmra.mrb[0].mxu0 %v4272
        %v4911 = vpop.f32.mrb[0].mxu0
        %v4912 = vadd.f32 %v4615, %v4911
        %v4913 = vpop.f32.mrb[0].mxu0
        %v4914 = vadd.f32 %v4619, %v4913
        %v4915 = vpop.f32.mrb[0].mxu0
        %v4916 = vadd.f32 %v4615, %v4915
        %v4917 = vpop.f32.mrb[0].mxu0
        %v4918 = vadd.f32 %v4619, %v4917
        %4919 = vmatprep.mubr.bf16.mxu0 0
        %4920 = vmatmul.mubr.bf16.gmra.mrb[0].mxu0 %v4273
        %v4921 = vpop.f32.mrb[0].mxu0
        %v4922 = vadd.f32 %v4615, %v4921
        %v4923 = vpop.f32.mrb[0].mxu0
        %v4924 = vadd.f32 %v4619, %v4923
        %v4925 = vpop.f32.mrb[0].mxu0
        %v4926 = vadd.f32 %v4615, %v4925
        %v4927 = vpop.f32.mrb[0].mxu0
        %v4928 = vadd.f32 %v4619, %v4927
        %4929 = vdwg.mxu0
        %v4930 = vmul.f32 %v4819, 0.5
        %v4931 = vmul.f32 %v4821, 0.5
        %v4932 = vmul.f32 %v4892, 0.5
        %v4933 = vmul.f32 %v4894, 0.5
        %v4934 = vmul.f32 %v4823, 0.5
        %v4935 = vmul.f32 %v4825, 0.5
        %v4936 = vmul.f32 %v4896, 0.5
        %v4937 = vmul.f32 %v4898, 0.5
        %v4938 = vmul.f32 %v4829, 0.5
        %v4939 = vmul.f32 %v4831, 0.5
        %v4940 = vmul.f32 %v4902, 0.5
        %v4941 = vmul.f32 %v4904, 0.5
        %v4942 = vmul.f32 %v4833, 0.5
        %v4943 = vmul.f32 %v4835, 0.5
        %v4944 = vmul.f32 %v4906, 0.5
        %v4945 = vmul.f32 %v4908, 0.5
        %v4946 = vmul.f32 %v4839, 0.5
        %v4947 = vmul.f32 %v4841, 0.5
        %v4948 = vmul.f32 %v4912, 0.5
        %v4949 = vmul.f32 %v4914, 0.5
        %v4950 = vmul.f32 %v4843, 0.5
        %v4951 = vmul.f32 %v4845, 0.5
        %v4952 = vmul.f32 %v4916, 0.5
        %v4953 = vmul.f32 %v4918, 0.5
        %v4954 = vmul.f32 %v4849, 0.5
        %v4955 = vmul.f32 %v4851, 0.5
        %v4956 = vmul.f32 %v4922, 0.5
        %v4957 = vmul.f32 %v4924, 0.5
        %v4958 = vmul.f32 %v4853, 0.5
        %v4959 = vmul.f32 %v4855, 0.5
        %v4960 = vmul.f32 %v4926, 0.5
        %v4961 = vmul.f32 %v4928, 0.5
        %v4962 = vmul.f32 %v4819, 0.70710677
        %v4963 = vmul.f32 %v4821, 0.70710677
        %v4964 = vmul.f32 %v4892, 0.70710677
        %v4965 = vmul.f32 %v4894, 0.70710677
        %v4966 = vmul.f32 %v4823, 0.70710677
        %v4967 = vmul.f32 %v4825, 0.70710677
        %v4968 = vmul.f32 %v4896, 0.70710677
        %v4969 = vmul.f32 %v4898, 0.70710677
        %v4970 = vmul.f32 %v4829, 0.70710677
        %v4971 = vmul.f32 %v4831, 0.70710677
        %v4972 = vmul.f32 %v4902, 0.70710677
        %v4973 = vmul.f32 %v4904, 0.70710677
        %v4974 = vmul.f32 %v4833, 0.70710677
        %v4975 = vmul.f32 %v4835, 0.70710677
        %v4976 = vmul.f32 %v4906, 0.70710677
        %v4977 = vmul.f32 %v4908, 0.70710677
        %v4978 = vmul.f32 %v4839, 0.70710677
        %v4979 = vmul.f32 %v4841, 0.70710677
        %v4980 = vmul.f32 %v4912, 0.70710677
        %v4981 = vmul.f32 %v4914, 0.70710677
        %v4982 = vmul.f32 %v4843, 0.70710677
        %v4983 = vmul.f32 %v4845, 0.70710677
        %v4984 = vmul.f32 %v4916, 0.70710677
        %v4985 = vmul.f32 %v4918, 0.70710677
        %v4986 = vmul.f32 %v4849, 0.70710677
        %v4987 = vmul.f32 %v4851, 0.70710677
        %v4988 = vmul.f32 %v4922, 0.70710677
        %v4989 = vmul.f32 %v4924, 0.70710677
        %v4990 = vmul.f32 %v4853, 0.70710677
        %v4991 = vmul.f32 %v4855, 0.70710677
        %v4992 = vmul.f32 %v4926, 0.70710677
        %v4993 = vmul.f32 %v4928, 0.70710677
        %v4994 = verf.f32.pop %v4962
        %v4995 = verf.f32.pop %v4963
        %v4996 = verf.f32.pop %v4964
        %v4997 = verf.f32.pop %v4965
        %v4998 = verf.f32.pop %v4966
        %v4999 = verf.f32.pop %v4967
        %v5000 = verf.f32.pop %v4968
        %v5001 = verf.f32.pop %v4969
        %v5002 = verf.f32.pop %v4970
        %v5003 = verf.f32.pop %v4971
        %v5004 = verf.f32.pop %v4972
        %v5005 = verf.f32.pop %v4973
        %v5006 = verf.f32.pop %v4974
        %v5007 = verf.f32.pop %v4975
        %v5008 = verf.f32.pop %v4976
        %v5009 = verf.f32.pop %v4977
        %v5010 = verf.f32.pop %v4978
        %v5011 = verf.f32.pop %v4979
        %v5012 = verf.f32.pop %v4980
        %v5013 = verf.f32.pop %v4981
        %v5014 = verf.f32.pop %v4982
        %v5015 = verf.f32.pop %v4983
        %v5016 = verf.f32.pop %v4984
        %v5017 = verf.f32.pop %v4985
        %v5018 = verf.f32.pop %v4986
        %v5019 = verf.f32.pop %v4987
        %v5020 = verf.f32.pop %v4988
        %v5021 = verf.f32.pop %v4989
        %v5022 = verf.f32.pop %v4990
        %v5023 = verf.f32.pop %v4991
        %v5024 = verf.f32.pop %v4992
        %v5025 = verf.f32.pop %v4993
        %v5026 = vadd.f32 %v4994, 1.0
        %v5027 = vadd.f32 %v4995, 1.0
        %v5028 = vadd.f32 %v4996, 1.0
        %v5029 = vadd.f32 %v4997, 1.0
        %v5030 = vadd.f32 %v4998, 1.0
        %v5031 = vadd.f32 %v4999, 1.0
        %v5032 = vadd.f32 %v5000, 1.0
        %v5033 = vadd.f32 %v5001, 1.0
        %v5034 = vadd.f32 %v5002, 1.0
        %v5035 = vadd.f32 %v5003, 1.0
        %v5036 = vadd.f32 %v5004, 1.0
        %v5037 = vadd.f32 %v5005, 1.0
        %v5038 = vadd.f32 %v5006, 1.0
        %v5039 = vadd.f32 %v5007, 1.0
        %v5040 = vadd.f32 %v5008, 1.0
        %v5041 = vadd.f32 %v5009, 1.0
        %v5042 = vadd.f32 %v5010, 1.0
        %v5043 = vadd.f32 %v5011, 1.0
        %v5044 = vadd.f32 %v5012, 1.0
        %v5045 = vadd.f32 %v5013, 1.0
        %v5046 = vadd.f32 %v5014, 1.0
        %v5047 = vadd.f32 %v5015, 1.0
        %v5048 = vadd.f32 %v5016, 1.0
        %v5049 = vadd.f32 %v5017, 1.0
        %v5050 = vadd.f32 %v5018, 1.0
        %v5051 = vadd.f32 %v5019, 1.0
        %v5052 = vadd.f32 %v5020, 1.0
        %v5053 = vadd.f32 %v5021, 1.0
        %v5054 = vadd.f32 %v5022, 1.0
        %v5055 = vadd.f32 %v5023, 1.0
        %v5056 = vadd.f32 %v5024, 1.0
        %v5057 = vadd.f32 %v5025, 1.0
        %v5058 = vmul.f32 %v4930, %v5026
        %v5059 = vmul.f32 %v4931, %v5027
        %v5060 = vmul.f32 %v4932, %v5028
        %v5061 = vmul.f32 %v4933, %v5029
        %v5062 = vmul.f32 %v4934, %v5030
        %v5063 = vmul.f32 %v4935, %v5031
        %v5064 = vmul.f32 %v4936, %v5032
        %v5065 = vmul.f32 %v4937, %v5033
        %v5066 = vmul.f32 %v4938, %v5034
        %v5067 = vmul.f32 %v4939, %v5035
        %v5068 = vmul.f32 %v4940, %v5036
        %v5069 = vmul.f32 %v4941, %v5037
        %v5070 = vmul.f32 %v4942, %v5038
        %v5071 = vmul.f32 %v4943, %v5039
        %v5072 = vmul.f32 %v4944, %v5040
        %v5073 = vmul.f32 %v4945, %v5041
        %v5074 = vmul.f32 %v4946, %v5042
        %v5075 = vmul.f32 %v4947, %v5043
        %v5076 = vmul.f32 %v4948, %v5044
        %v5077 = vmul.f32 %v4949, %v5045
        %v5078 = vmul.f32 %v4950, %v5046
        %v5079 = vmul.f32 %v4951, %v5047
        %v5080 = vmul.f32 %v4952, %v5048
        %v5081 = vmul.f32 %v4953, %v5049
        %v5082 = vmul.f32 %v4954, %v5050
        %v5083 = vmul.f32 %v4955, %v5051
        %v5084 = vmul.f32 %v4956, %v5052
        %v5085 = vmul.f32 %v4957, %v5053
        %v5086 = vmul.f32 %v4958, %v5054
        %v5087 = vmul.f32 %v4959, %v5055
        %v5088 = vmul.f32 %v4960, %v5056
        %v5089 = vmul.f32 %v4961, %v5057
        %v5090 = vmul.f32 %v4491, %v5058
        %v5091 = vmul.f32 %v4493, %v5059
        %v5092 = vmul.f32 %v4564, %v5060
        %v5093 = vmul.f32 %v4566, %v5061
        %v5094 = vmul.f32 %v4495, %v5062
        %v5095 = vmul.f32 %v4497, %v5063
        %v5096 = vmul.f32 %v4568, %v5064
        %v5097 = vmul.f32 %v4570, %v5065
        %v5098 = vmul.f32 %v4501, %v5066
        %v5099 = vmul.f32 %v4503, %v5067
        %v5100 = vmul.f32 %v4574, %v5068
        %v5101 = vmul.f32 %v4576, %v5069
        %v5102 = vmul.f32 %v4505, %v5070
        %v5103 = vmul.f32 %v4507, %v5071
        %v5104 = vmul.f32 %v4578, %v5072
        %v5105 = vmul.f32 %v4580, %v5073
        %v5106 = vmul.f32 %v4511, %v5074
        %v5107 = vmul.f32 %v4513, %v5075
        %v5108 = vmul.f32 %v4584, %v5076
        %v5109 = vmul.f32 %v4586, %v5077
        %v5110 = vmul.f32 %v4515, %v5078
        %v5111 = vmul.f32 %v4517, %v5079
        %v5112 = vmul.f32 %v4588, %v5080
        %v5113 = vmul.f32 %v4590, %v5081
        %v5114 = vmul.f32 %v4521, %v5082
        %v5115 = vmul.f32 %v4523, %v5083
        %v5116 = vmul.f32 %v4594, %v5084
        %v5117 = vmul.f32 %v4596, %v5085
        %v5118 = vmul.f32 %v4525, %v5086
        %v5119 = vmul.f32 %v4527, %v5087
        %v5120 = vmul.f32 %v4598, %v5088
        %v5121 = vmul.f32 %v4600, %v5089
        %v5122 = vpack.c.bf16 %v5094, %v5090
        %v5123 = vpack.c.bf16 %v5095, %v5091
        %v5124 = vpack.c.bf16 %v5096, %v5092
        %v5125 = vpack.c.bf16 %v5097, %v5093
        %v5126 = vpack.c.bf16 %v5102, %v5098
        %v5127 = vpack.c.bf16 %v5103, %v5099
        %v5128 = vpack.c.bf16 %v5104, %v5100
        %v5129 = vpack.c.bf16 %v5105, %v5101
        %v5130 = vpack.c.bf16 %v5110, %v5106
        %v5131 = vpack.c.bf16 %v5111, %v5107
        %v5132 = vpack.c.bf16 %v5112, %v5108
        %v5133 = vpack.c.bf16 %v5113, %v5109
        %v5134 = vpack.c.bf16 %v5118, %v5114
        %v5135 = vpack.c.bf16 %v5119, %v5115
        %v5136 = vpack.c.bf16 %v5120, %v5116
        %v5137 = vpack.c.bf16 %v5121, %v5117
        %v5138 = vld [vmem:[%s1123] sm:$0x1]
        %v5140 = vlaneseq
        %v5141 = vshrl.u32 %v5140, 7
        %v5142 = vsub.s32 0, %v5141
        %v5143 = vrot.slane %v5138, %v5142
        %v5209 = vunpack.c.l.b16 %v2312
        %v5210 = vunpack.c.l.b16 %v2313
        %v5211 = vunpack.c.l.b16 %v2314
        %v5212 = vunpack.c.l.b16 %v2315
        %v5213 = vunpack.c.l.b16 %v2316
        %v5214 = vunpack.c.l.b16 %v2317
        %v5215 = vunpack.c.l.b16 %v2318
        %v5216 = vunpack.c.l.b16 %v2319
        %v5217 = vunpack.c.l.b16 %v2320
        %v5218 = vunpack.c.l.b16 %v2321
        %v5219 = vunpack.c.l.b16 %v2322
        %v5220 = vunpack.c.l.b16 %v2323
        %v5221 = vunpack.c.l.b16 %v2324
        %v5222 = vunpack.c.l.b16 %v2325
        %v5223 = vunpack.c.l.b16 %v2326
        %v5224 = vunpack.c.l.b16 %v2327
        %v5225 = vunpack.c.l.b16 %v2328
        %v5226 = vunpack.c.l.b16 %v2329
        %v5227 = vunpack.c.l.b16 %v2330
        %v5228 = vunpack.c.l.b16 %v2331
        %v5229 = vunpack.c.l.b16 %v2332
        %v5230 = vunpack.c.l.b16 %v2333
        %v5231 = vunpack.c.l.b16 %v2334
        %v5232 = vunpack.c.l.b16 %v2335
        %v5233 = vunpack.c.l.b16 %v2336
        %v5234 = vunpack.c.l.b16 %v2337
        %v5235 = vunpack.c.l.b16 %v2338
        %v5236 = vunpack.c.l.b16 %v2339
        %v5237 = vunpack.c.l.b16 %v2340
        %v5238 = vunpack.c.l.b16 %v2341
        %v5239 = vunpack.c.l.b16 %v2342
        %v5240 = vunpack.c.l.b16 %v2343
        %v5241 = vunpack.c.l.b16 %v2344
        %v5242 = vunpack.c.l.b16 %v2345
        %v5243 = vunpack.c.l.b16 %v2346
        %v5244 = vunpack.c.l.b16 %v2347
        %v5245 = vunpack.c.l.b16 %v2348
        %v5246 = vunpack.c.l.b16 %v2349
        %v5247 = vunpack.c.l.b16 %v2350
        %v5248 = vunpack.c.l.b16 %v2351
        %v5249 = vunpack.c.l.b16 %v2352
        %v5250 = vunpack.c.l.b16 %v2353
        %v5251 = vunpack.c.l.b16 %v2354
        %v5252 = vunpack.c.l.b16 %v2355
        %v5253 = vunpack.c.l.b16 %v2356
        %v5254 = vunpack.c.l.b16 %v2357
        %v5255 = vunpack.c.l.b16 %v2358
        %v5256 = vunpack.c.l.b16 %v2359
        %v5257 = vunpack.c.l.b16 %v2360
        %v5258 = vunpack.c.l.b16 %v2361
        %v5259 = vunpack.c.l.b16 %v2362
        %v5260 = vunpack.c.l.b16 %v2363
        %v5261 = vunpack.c.l.b16 %v2364
        %v5262 = vunpack.c.l.b16 %v2365
        %v5263 = vunpack.c.l.b16 %v2366
        %v5264 = vunpack.c.l.b16 %v2367
        %v5265 = vunpack.c.l.b16 %v2368
        %v5266 = vunpack.c.l.b16 %v2369
        %v5267 = vunpack.c.l.b16 %v2370
        %v5268 = vunpack.c.l.b16 %v2371
        %v5269 = vunpack.c.l.b16 %v2372
        %v5270 = vunpack.c.l.b16 %v2373
        %v5271 = vunpack.c.l.b16 %v2374
        %v5272 = vunpack.c.l.b16 %v2375
        %v5273 = vpack.c.b16 %v5210, %v5209
        %v5274 = vpack.c.b16 %v5212, %v5211
        %v5275 = vpack.c.b16 %v5214, %v5213
        %v5276 = vpack.c.b16 %v5216, %v5215
        %v5277 = vpack.c.b16 %v5218, %v5217
        %v5278 = vpack.c.b16 %v5220, %v5219
        %v5279 = vpack.c.b16 %v5222, %v5221
        %v5280 = vpack.c.b16 %v5224, %v5223
        %v5281 = vpack.c.b16 %v5226, %v5225
        %v5282 = vpack.c.b16 %v5228, %v5227
        %v5283 = vpack.c.b16 %v5230, %v5229
        %v5284 = vpack.c.b16 %v5232, %v5231
        %v5285 = vpack.c.b16 %v5234, %v5233
        %v5286 = vpack.c.b16 %v5236, %v5235
        %v5287 = vpack.c.b16 %v5238, %v5237
        %v5288 = vpack.c.b16 %v5240, %v5239
        %v5289 = vpack.c.b16 %v5242, %v5241
        %v5290 = vpack.c.b16 %v5244, %v5243
        %v5291 = vpack.c.b16 %v5246, %v5245
        %v5292 = vpack.c.b16 %v5248, %v5247
        %v5293 = vpack.c.b16 %v5250, %v5249
        %v5294 = vpack.c.b16 %v5252, %v5251
        %v5295 = vpack.c.b16 %v5254, %v5253
        %v5296 = vpack.c.b16 %v5256, %v5255
        %v5297 = vpack.c.b16 %v5258, %v5257
        %v5298 = vpack.c.b16 %v5260, %v5259
        %v5299 = vpack.c.b16 %v5262, %v5261
        %v5300 = vpack.c.b16 %v5264, %v5263
        %v5301 = vpack.c.b16 %v5266, %v5265
        %v5302 = vpack.c.b16 %v5268, %v5267
        %v5303 = vpack.c.b16 %v5270, %v5269
        %v5304 = vpack.c.b16 %v5272, %v5271
        %5337 = vmatprep.subr.bf16.mxu0 0
        %5338 = vmatpush1.bf16.msra.mxu0 %v5273
        %5339 = vmatprep.subr.bf16.mxu0 0
        %5340 = vmatpush1.bf16.msra.mxu0 %v5274
        %5341 = vmatprep.subr.bf16.mxu0 0
        %5342 = vmatpush1.bf16.msra.mxu0 %v5275
        %5343 = vmatprep.subr.bf16.mxu0 0
        %5344 = vmatpush1.bf16.msra.mxu0 %v5276
        %5345 = vmatprep.subr.bf16.mxu0 0
        %5346 = vmatpush1.bf16.msra.mxu0 %v5277
        %5347 = vmatprep.subr.bf16.mxu0 0
        %5348 = vmatpush1.bf16.msra.mxu0 %v5278
        %5349 = vmatprep.subr.bf16.mxu0 0
        %5350 = vmatpush1.bf16.msra.mxu0 %v5279
        %5351 = vmatprep.subr.bf16.mxu0 0
        %5352 = vmatpush1.bf16.msra.mxu0 %v5280
        %5353 = vmatprep.subr.bf16.mxu0 0
        %5354 = vmatpush1.bf16.msra.mxu0 %v5281
        %5355 = vmatprep.subr.bf16.mxu0 0
        %5356 = vmatpush1.bf16.msra.mxu0 %v5282
        %5357 = vmatprep.subr.bf16.mxu0 0
        %5358 = vmatpush1.bf16.msra.mxu0 %v5283
        %5359 = vmatprep.subr.bf16.mxu0 0
        %5360 = vmatpush1.bf16.msra.mxu0 %v5284
        %5361 = vmatprep.subr.bf16.mxu0 0
        %5362 = vmatpush1.bf16.msra.mxu0 %v5285
        %5363 = vmatprep.subr.bf16.mxu0 0
        %5364 = vmatpush1.bf16.msra.mxu0 %v5286
        %5365 = vmatprep.subr.bf16.mxu0 0
        %5366 = vmatpush1.bf16.msra.mxu0 %v5287
        %5367 = vmatprep.subr.bf16.mxu0 0
        %5368 = vmatpush1.bf16.msra.mxu0 %v5288
        %5369 = vmatprep.mubr.bf16.mxu0 %v5123
        %5370 = vmatmul.mubr.bf16.gmra.mrb[0].mxu0 %v5122
        %v5371 = vpop.f32.mrb[0].mxu0
        %v5372 = vadd.f32 %v5143, %v5371
        %v5373 = vpop.f32.mrb[0].mxu0
        %v5374 = vpop.f32.mrb[0].mxu0
        %v5375 = vadd.f32 %v5143, %v5374
        %v5376 = vpop.f32.mrb[0].mxu0
        %5377 = vmatprep.mubr.bf16.mxu0 %v5127
        %5378 = vmatmul.mubr.bf16.gmra.mrb[0].mxu0 %v5126
        %v5379 = vpop.f32.mrb[0].mxu0
        %v5380 = vadd.f32 %v5143, %v5379
        %v5381 = vpop.f32.mrb[0].mxu0
        %v5382 = vpop.f32.mrb[0].mxu0
        %v5383 = vadd.f32 %v5143, %v5382
        %v5384 = vpop.f32.mrb[0].mxu0
        %5385 = vmatprep.mubr.bf16.mxu0 %v5131
        %5386 = vmatmul.mubr.bf16.gmra.mrb[0].mxu0 %v5130
        %v5387 = vpop.f32.mrb[0].mxu0
        %v5388 = vadd.f32 %v5143, %v5387
        %v5389 = vpop.f32.mrb[0].mxu0
        %v5390 = vpop.f32.mrb[0].mxu0
        %v5391 = vadd.f32 %v5143, %v5390
        %v5392 = vpop.f32.mrb[0].mxu0
        %5393 = vmatprep.mubr.bf16.mxu0 %v5135
        %5394 = vmatmul.mubr.bf16.gmra.mrb[0].mxu0 %v5134
        %v5395 = vpop.f32.mrb[0].mxu0
        %v5396 = vadd.f32 %v5143, %v5395
        %v5397 = vpop.f32.mrb[0].mxu0
        %v5398 = vpop.f32.mrb[0].mxu0
        %v5399 = vadd.f32 %v5143, %v5398
        %v5400 = vpop.f32.mrb[0].mxu0
        %5401 = vdwg.mxu0
        %5402 = vmatprep.subr.bf16.mxu0 0
        %5403 = vmatpush1.bf16.msra.mxu0 %v5289
        %5404 = vmatprep.subr.bf16.mxu0 0
        %5405 = vmatpush1.bf16.msra.mxu0 %v5290
        %5406 = vmatprep.subr.bf16.mxu0 0
        %5407 = vmatpush1.bf16.msra.mxu0 %v5291
        %5408 = vmatprep.subr.bf16.mxu0 0
        %5409 = vmatpush1.bf16.msra.mxu0 %v5292
        %5410 = vmatprep.subr.bf16.mxu0 0
        %5411 = vmatpush1.bf16.msra.mxu0 %v5293
        %5412 = vmatprep.subr.bf16.mxu0 0
        %5413 = vmatpush1.bf16.msra.mxu0 %v5294
        %5414 = vmatprep.subr.bf16.mxu0 0
        %5415 = vmatpush1.bf16.msra.mxu0 %v5295
        %5416 = vmatprep.subr.bf16.mxu0 0
        %5417 = vmatpush1.bf16.msra.mxu0 %v5296
        %5418 = vmatprep.subr.bf16.mxu0 0
        %5419 = vmatpush1.bf16.msra.mxu0 %v5297
        %5420 = vmatprep.subr.bf16.mxu0 0
        %5421 = vmatpush1.bf16.msra.mxu0 %v5298
        %5422 = vmatprep.subr.bf16.mxu0 0
        %5423 = vmatpush1.bf16.msra.mxu0 %v5299
        %5424 = vmatprep.subr.bf16.mxu0 0
        %5425 = vmatpush1.bf16.msra.mxu0 %v5300
        %5426 = vmatprep.subr.bf16.mxu0 0
        %5427 = vmatpush1.bf16.msra.mxu0 %v5301
        %5428 = vmatprep.subr.bf16.mxu0 0
        %5429 = vmatpush1.bf16.msra.mxu0 %v5302
        %5430 = vmatprep.subr.bf16.mxu0 0
        %5431 = vmatpush1.bf16.msra.mxu0 %v5303
        %5432 = vmatprep.subr.bf16.mxu0 0
        %5433 = vmatpush1.bf16.msra.mxu0 %v5304
        %5434 = vmatprep.mubr.bf16.mxu0 %v5125
        %5435 = vmatmul.mubr.bf16.gmra.mrb[0].mxu0 %v5124
        %v5436 = vpop.f32.mrb[0].mxu0
        %v5437 = vadd.f32 %v5372, %v5436
        %v5438 = vpop.f32.mrb[0].mxu0
        %v5439 = vpop.f32.mrb[0].mxu0
        %v5440 = vadd.f32 %v5375, %v5439
        %v5441 = vpop.f32.mrb[0].mxu0
        %5442 = vmatprep.mubr.bf16.mxu0 %v5129
        %5443 = vmatmul.mubr.bf16.gmra.mrb[0].mxu0 %v5128
        %v5444 = vpop.f32.mrb[0].mxu0
        %v5445 = vadd.f32 %v5380, %v5444
        %v5446 = vpop.f32.mrb[0].mxu0
        %v5447 = vpop.f32.mrb[0].mxu0
        %v5448 = vadd.f32 %v5383, %v5447
        %v5449 = vpop.f32.mrb[0].mxu0
        %5450 = vmatprep.mubr.bf16.mxu0 %v5133
        %5451 = vmatmul.mubr.bf16.gmra.mrb[0].mxu0 %v5132
        %v5452 = vpop.f32.mrb[0].mxu0
        %v5453 = vadd.f32 %v5388, %v5452
        %v5454 = vpop.f32.mrb[0].mxu0
        %v5455 = vpop.f32.mrb[0].mxu0
        %v5456 = vadd.f32 %v5391, %v5455
        %v5457 = vpop.f32.mrb[0].mxu0
        %5458 = vmatprep.mubr.bf16.mxu0 %v5137
        %5459 = vmatmul.mubr.bf16.gmra.mrb[0].mxu0 %v5136
        %v5460 = vpop.f32.mrb[0].mxu0
        %v5461 = vadd.f32 %v5396, %v5460
        %v5462 = vpop.f32.mrb[0].mxu0
        %v5463 = vpop.f32.mrb[0].mxu0
        %v5464 = vadd.f32 %v5399, %v5463
        %v5465 = vpop.f32.mrb[0].mxu0
        %5466 = vdwg.mxu0
        %v5467 = vadd.f32 %v4144, %v5437
        %v5468 = vadd.f32 %v4145, %v5440
        %v5469 = vadd.f32 %v4146, %v5445
        %v5470 = vadd.f32 %v4147, %v5448
        %v5471 = vadd.f32 %v4148, %v5453
        %v5472 = vadd.f32 %v4149, %v5456
        %v5473 = vadd.f32 %v4150, %v5461
        %v5474 = vadd.f32 %v4151, %v5464
        %5475 = vst [vmem:[#allocation2] sm:$0xff] %v5467
        %5476 = vst [vmem:[#allocation2 + $0x8] sm:$0xff] %v5468
        %5477 = vst [vmem:[#allocation2 + $0x10] sm:$0xff] %v5469
        %5478 = vst [vmem:[#allocation2 + $0x18] sm:$0xff] %v5470
        %5479 = vst [vmem:[#allocation2 + $0x20] sm:$0xff] %v5471
        %5480 = vst [vmem:[#allocation2 + $0x28] sm:$0xff] %v5472
        %5481 = vst [vmem:[#allocation2 + $0x30] sm:$0xff] %v5473
        %5482 = vst [vmem:[#allocation2 + $0x38] sm:$0xff] %v5474
        %s5483 = scalar_lea.vmem [#allocation2], 64
        %v5484 = vld [vmem:[%s5483] sm:$0xff]
        %v5485 = vld [vmem:[%s5483 + $0x8] sm:$0xff]
        %v5486 = vld [vmem:[%s5483 + $0x10] sm:$0xff]
        %v5487 = vld [vmem:[%s5483 + $0x18] sm:$0xff]
        %v5488 = vld [vmem:[%s5483 + $0x20] sm:$0xff]
        %v5489 = vld [vmem:[%s5483 + $0x28] sm:$0xff]
        %v5490 = vld [vmem:[%s5483 + $0x30] sm:$0xff]
        %v5491 = vld [vmem:[%s5483 + $0x38] sm:$0xff]
        %v5492 = vld [vmem:[%s912] sm:$0x1]
        %v5493 = vld [vmem:[%s920] sm:$0x1]
        %5494 = vadd.xlane.f32.xlu0 %v5484
        %v5495 = vpop.xlane.xlu0 %5494
        %5496 = vadd.xlane.f32.xlu0 %v5485
        %v5497 = vpop.xlane.xlu0 %5496
        %5498 = vadd.xlane.f32.xlu0 %v5486
        %v5499 = vpop.xlane.xlu0 %5498
        %5500 = vadd.xlane.f32.xlu0 %v5487
        %v5501 = vpop.xlane.xlu0 %5500
        %5502 = vadd.xlane.f32.xlu0 %v5488
        %v5503 = vpop.xlane.xlu0 %5502
        %5504 = vadd.xlane.f32.xlu0 %v5489
        %v5505 = vpop.xlane.xlu0 %5504
        %5506 = vadd.xlane.f32.xlu0 %v5490
        %v5507 = vpop.xlane.xlu0 %5506
        %5508 = vadd.xlane.f32.xlu0 %v5491
        %v5509 = vpop.xlane.xlu0 %5508
        %v5510 = vmul.f32 %v5495, %v2403
        %v5511 = vmul.f32 %v5497, %v2403
        %v5512 = vmul.f32 %v5499, %v2403
        %v5513 = vmul.f32 %v5501, %v2403
        %v5514 = vmul.f32 %v5503, %v2403
        %v5515 = vmul.f32 %v5505, %v2403
        %v5516 = vmul.f32 %v5507, %v2403
        %v5517 = vmul.f32 %v5509, %v2403
        %v5518 = vsub.f32 %v5484, %v5510
        %v5519 = vsub.f32 %v5485, %v5511
        %v5520 = vsub.f32 %v5486, %v5512
        %v5521 = vsub.f32 %v5487, %v5513
        %v5522 = vsub.f32 %v5488, %v5514
        %v5523 = vsub.f32 %v5489, %v5515
        %v5524 = vsub.f32 %v5490, %v5516
        %v5525 = vsub.f32 %v5491, %v5517
        %v5526 = vmul.f32 %v5518, %v5518
        %v5527 = vmul.f32 %v5519, %v5519
        %v5528 = vmul.f32 %v5520, %v5520
        %v5529 = vmul.f32 %v5521, %v5521
        %v5530 = vmul.f32 %v5522, %v5522
        %v5531 = vmul.f32 %v5523, %v5523
        %v5532 = vmul.f32 %v5524, %v5524
        %v5533 = vmul.f32 %v5525, %v5525
        %5534 = vadd.xlane.f32.xlu0 %v5526
        %v5535 = vpop.xlane.xlu0 %5534
        %5536 = vadd.xlane.f32.xlu0 %v5527
        %v5537 = vpop.xlane.xlu0 %5536
        %5538 = vadd.xlane.f32.xlu0 %v5528
        %v5539 = vpop.xlane.xlu0 %5538
        %5540 = vadd.xlane.f32.xlu0 %v5529
        %v5541 = vpop.xlane.xlu0 %5540
        %5542 = vadd.xlane.f32.xlu0 %v5530
        %v5543 = vpop.xlane.xlu0 %5542
        %5544 = vadd.xlane.f32.xlu0 %v5531
        %v5545 = vpop.xlane.xlu0 %5544
        %5546 = vadd.xlane.f32.xlu0 %v5532
        %v5547 = vpop.xlane.xlu0 %5546
        %5548 = vadd.xlane.f32.xlu0 %v5533
        %v5549 = vpop.xlane.xlu0 %5548
        %v5550 = vmul.f32 %v5535, %v2403
        %v5551 = vmul.f32 %v5537, %v2403
        %v5552 = vmul.f32 %v5539, %v2403
        %v5553 = vmul.f32 %v5541, %v2403
        %v5554 = vmul.f32 %v5543, %v2403
        %v5555 = vmul.f32 %v5545, %v2403
        %v5556 = vmul.f32 %v5547, %v2403
        %v5557 = vmul.f32 %v5549, %v2403
        %v5558 = vadd.f32 %v5550, 1e-05
        %v5559 = vadd.f32 %v5551, 1e-05
        %v5560 = vadd.f32 %v5552, 1e-05
        %v5561 = vadd.f32 %v5553, 1e-05
        %v5562 = vadd.f32 %v5554, 1e-05
        %v5563 = vadd.f32 %v5555, 1e-05
        %v5564 = vadd.f32 %v5556, 1e-05
        %v5565 = vadd.f32 %v5557, 1e-05
        %v5566 = vrsqrt.pop %v5558
        %v5567 = vrsqrt.pop %v5559
        %v5568 = vrsqrt.pop %v5560
        %v5569 = vrsqrt.pop %v5561
        %v5570 = vrsqrt.pop %v5562
        %v5571 = vrsqrt.pop %v5563
        %v5572 = vrsqrt.pop %v5564
        %v5573 = vrsqrt.pop %v5565
        %v5574 = vmul.f32 %v5518, %v5566
        %v5575 = vmul.f32 %v5519, %v5567
        %v5576 = vmul.f32 %v5520, %v5568
        %v5577 = vmul.f32 %v5521, %v5569
        %v5578 = vmul.f32 %v5522, %v5570
        %v5579 = vmul.f32 %v5523, %v5571
        %v5580 = vmul.f32 %v5524, %v5572
        %v5581 = vmul.f32 %v5525, %v5573
        %v5583 = vlaneseq
        %v5584 = vshrl.u32 %v5583, 7
        %v5585 = vsub.s32 0, %v5584
        %v5586 = vrot.slane %v5492, %v5585
        %v5588 = vmul.f32 %v5574, %v5586
        %v5589 = vmul.f32 %v5575, %v5586
        %v5590 = vmul.f32 %v5576, %v5586
        %v5591 = vmul.f32 %v5577, %v5586
        %v5592 = vmul.f32 %v5578, %v5586
        %v5593 = vmul.f32 %v5579, %v5586
        %v5594 = vmul.f32 %v5580, %v5586
        %v5595 = vmul.f32 %v5581, %v5586
        %v5597 = vlaneseq
        %v5598 = vshrl.u32 %v5597, 7
        %v5599 = vsub.s32 0, %v5598
        %v5600 = vrot.slane %v5493, %v5599
        %v5602 = vadd.f32 %v5588, %v5600
        %v5603 = vadd.f32 %v5589, %v5600
        %v5604 = vadd.f32 %v5590, %v5600
        %v5605 = vadd.f32 %v5591, %v5600
        %v5606 = vadd.f32 %v5592, %v5600
        %v5607 = vadd.f32 %v5593, %v5600
        %v5608 = vadd.f32 %v5594, %v5600
        %v5609 = vadd.f32 %v5595, %v5600
        %v5610 = vpack.c.bf16 %v5603, %v5602
        %v5611 = vpack.c.bf16 %v5605, %v5604
        %v5612 = vpack.c.bf16 %v5607, %v5606
        %v5613 = vpack.c.bf16 %v5609, %v5608
        %5614 = vmatprep.subr.bf16.mxu0 %v2589
        %5615 = vmatpush1.bf16.msra.mxu0 %v2588
        %5616 = vmatprep.subr.bf16.mxu0 %v2592
        %5617 = vmatpush1.bf16.msra.mxu0 %v2591
        %5618 = vmatprep.subr.bf16.mxu0 %v2595
        %5619 = vmatpush1.bf16.msra.mxu0 %v2594
        %5620 = vmatprep.subr.bf16.mxu0 %v2598
        %5621 = vmatpush1.bf16.msra.mxu0 %v2597
        %5622 = vmatprep.subr.bf16.mxu0 %v2601
        %5623 = vmatpush1.bf16.msra.mxu0 %v2600
        %5624 = vmatprep.subr.bf16.mxu0 %v2604
        %5625 = vmatpush1.bf16.msra.mxu0 %v2603
        %5626 = vmatprep.subr.bf16.mxu0 %v2607
        %5627 = vmatpush1.bf16.msra.mxu0 %v2606
        %5628 = vmatprep.subr.bf16.mxu0 %v2610
        %5629 = vmatpush1.bf16.msra.mxu0 %v2609
        %5630 = vmatprep.subr.bf16.mxu0 0
        %5631 = vmatpush1.bf16.msra.mxu0 0
        %5632 = vmatprep.subr.bf16.mxu0 0
        %5633 = vmatpush1.bf16.msra.mxu0 0
        %5634 = vmatprep.subr.bf16.mxu0 0
        %5635 = vmatpush1.bf16.msra.mxu0 0
        %5636 = vmatprep.subr.bf16.mxu0 0
        %5637 = vmatpush1.bf16.msra.mxu0 0
        %5638 = vmatprep.subr.bf16.mxu0 0
        %5639 = vmatpush1.bf16.msra.mxu0 0
        %5640 = vmatprep.subr.bf16.mxu0 0
        %5641 = vmatpush1.bf16.msra.mxu0 0
        %5642 = vmatprep.subr.bf16.mxu0 0
        %5643 = vmatpush1.bf16.msra.mxu0 0
        %5644 = vmatprep.subr.bf16.mxu0 0
        %5645 = vmatpush1.bf16.msra.mxu0 0
        %5646 = vmatprep.mubr.bf16.mxu0 0
        %5647 = vmatmul.mubr.bf16.gmra.mrb[0].mxu0 %v5610
        %v5648 = vpop.f32.mrb[0].mxu0
        %v5649 = vadd.f32 0.0, %v5648
        %v5650 = vpop.f32.mrb[0].mxu0
        %v5651 = vadd.f32 0.0, %v5650
        %v5652 = vpop.f32.mrb[0].mxu0
        %v5653 = vadd.f32 0.0, %v5652
        %v5654 = vpop.f32.mrb[0].mxu0
        %v5655 = vadd.f32 0.0, %v5654
        %5656 = vmatprep.mubr.bf16.mxu0 0
        %5657 = vmatmul.mubr.bf16.gmra.mrb[0].mxu0 %v5611
        %v5658 = vpop.f32.mrb[0].mxu0
        %v5659 = vadd.f32 0.0, %v5658
        %v5660 = vpop.f32.mrb[0].mxu0
        %v5661 = vadd.f32 0.0, %v5660
        %v5662 = vpop.f32.mrb[0].mxu0
        %v5663 = vadd.f32 0.0, %v5662
        %v5664 = vpop.f32.mrb[0].mxu0
        %v5665 = vadd.f32 0.0, %v5664
        %5666 = vmatprep.mubr.bf16.mxu0 0
        %5667 = vmatmul.mubr.bf16.gmra.mrb[0].mxu0 %v5612
        %v5668 = vpop.f32.mrb[0].mxu0
        %v5669 = vadd.f32 0.0, %v5668
        %v5670 = vpop.f32.mrb[0].mxu0
        %v5671 = vadd.f32 0.0, %v5670
        %v5672 = vpop.f32.mrb[0].mxu0
        %v5673 = vadd.f32 0.0, %v5672
        %v5674 = vpop.f32.mrb[0].mxu0
        %v5675 = vadd.f32 0.0, %v5674
        %5676 = vmatprep.mubr.bf16.mxu0 0
        %5677 = vmatmul.mubr.bf16.gmra.mrb[0].mxu0 %v5613
        %v5678 = vpop.f32.mrb[0].mxu0
        %v5679 = vadd.f32 0.0, %v5678
        %v5680 = vpop.f32.mrb[0].mxu0
        %v5681 = vadd.f32 0.0, %v5680
        %v5682 = vpop.f32.mrb[0].mxu0
        %v5683 = vadd.f32 0.0, %v5682
        %v5684 = vpop.f32.mrb[0].mxu0
        %v5685 = vadd.f32 0.0, %v5684
        %5686 = vdwg.mxu0
        %5687 = vmatprep.subr.bf16.mxu0 0
        %5688 = vmatpush1.bf16.msra.mxu0 %v2590
        %5689 = vmatprep.subr.bf16.mxu0 0
        %5690 = vmatpush1.bf16.msra.mxu0 %v2593
        %5691 = vmatprep.subr.bf16.mxu0 0
        %5692 = vmatpush1.bf16.msra.mxu0 %v2596
        %5693 = vmatprep.subr.bf16.mxu0 0
        %5694 = vmatpush1.bf16.msra.mxu0 %v2599
        %5695 = vmatprep.subr.bf16.mxu0 0
        %5696 = vmatpush1.bf16.msra.mxu0 %v2602
        %5697 = vmatprep.subr.bf16.mxu0 0
        %5698 = vmatpush1.bf16.msra.mxu0 %v2605
        %5699 = vmatprep.subr.bf16.mxu0 0
        %5700 = vmatpush1.bf16.msra.mxu0 %v2608
        %5701 = vmatprep.subr.bf16.mxu0 0
        %5702 = vmatpush1.bf16.msra.mxu0 %v2611
        %5703 = vmatprep.subr.bf16.mxu0 0
        %5704 = vmatpush1.bf16.msra.mxu0 0
        %5705 = vmatprep.subr.bf16.mxu0 0
        %5706 = vmatpush1.bf16.msra.mxu0 0
        %5707 = vmatprep.subr.bf16.mxu0 0
        %5708 = vmatpush1.bf16.msra.mxu0 0
        %5709 = vmatprep.subr.bf16.mxu0 0
        %5710 = vmatpush1.bf16.msra.mxu0 0
        %5711 = vmatprep.subr.bf16.mxu0 0
        %5712 = vmatpush1.bf16.msra.mxu0 0
        %5713 = vmatprep.subr.bf16.mxu0 0
        %5714 = vmatpush1.bf16.msra.mxu0 0
        %5715 = vmatprep.subr.bf16.mxu0 0
        %5716 = vmatpush1.bf16.msra.mxu0 0
        %5717 = vmatprep.subr.bf16.mxu0 0
        %5718 = vmatpush1.bf16.msra.mxu0 0
        %5719 = vmatprep.mubr.bf16.mxu0 0
        %5720 = vmatmul.mubr.bf16.gmra.mrb[0].mxu0 %v5610
        %v5721 = vpop.f32.mrb[0].mxu0
        %v5722 = vadd.f32 0.0, %v5721
        %v5723 = vpop.f32.mrb[0].mxu0
        %v5724 = vpop.f32.mrb[0].mxu0
        %v5725 = vadd.f32 0.0, %v5724
        %v5726 = vpop.f32.mrb[0].mxu0
        %5727 = vmatprep.mubr.bf16.mxu0 0
        %5728 = vmatmul.mubr.bf16.gmra.mrb[0].mxu0 %v5611
        %v5729 = vpop.f32.mrb[0].mxu0
        %v5730 = vadd.f32 0.0, %v5729
        %v5731 = vpop.f32.mrb[0].mxu0
        %v5732 = vpop.f32.mrb[0].mxu0
        %v5733 = vadd.f32 0.0, %v5732
        %v5734 = vpop.f32.mrb[0].mxu0
        %5735 = vmatprep.mubr.bf16.mxu0 0
        %5736 = vmatmul.mubr.bf16.gmra.mrb[0].mxu0 %v5612
        %v5737 = vpop.f32.mrb[0].mxu0
        %v5738 = vadd.f32 0.0, %v5737
        %v5739 = vpop.f32.mrb[0].mxu0
        %v5740 = vpop.f32.mrb[0].mxu0
        %v5741 = vadd.f32 0.0, %v5740
        %v5742 = vpop.f32.mrb[0].mxu0
        %5743 = vmatprep.mubr.bf16.mxu0 0
        %5744 = vmatmul.mubr.bf16.gmra.mrb[0].mxu0 %v5613
        %v5745 = vpop.f32.mrb[0].mxu0
        %v5746 = vadd.f32 0.0, %v5745
        %v5747 = vpop.f32.mrb[0].mxu0
        %v5748 = vpop.f32.mrb[0].mxu0
        %v5749 = vadd.f32 0.0, %v5748
        %v5750 = vpop.f32.mrb[0].mxu0
        %5751 = vdwg.mxu0
        %v5752 = vpack.c.bf16 %v5655, %v5651
        %v5753 = vpack.c.bf16 %v5665, %v5661
        %v5754 = vpack.c.bf16 %v5675, %v5671
        %v5755 = vpack.c.bf16 %v5685, %v5681
        %v5756 = vpack.c.bf16 %v5725, %v5722
        %v5757 = vpack.c.bf16 %v5733, %v5730
        %v5758 = vpack.c.bf16 %v5741, %v5738
        %v5759 = vpack.c.bf16 %v5749, %v5746
        %v5760 = vpack.c.bf16 %v5653, %v5649
        %v5761 = vpack.c.bf16 %v5663, %v5659
        %v5762 = vpack.c.bf16 %v5673, %v5669
        %v5763 = vpack.c.bf16 %v5683, %v5679
        %v5765 = vsel %vm2786, %v5760, 0
        %v5768 = vsel %vm2786, %v5761, 0
        %v5771 = vsel %vm2786, %v5762, 0
        %v5774 = vsel %vm2786, %v5763, 0
        %v5777 = vsel %vm2786, %v5752, 0
        %v5780 = vsel %vm2786, %v5753, 0
        %v5783 = vsel %vm2786, %v5754, 0
        %v5786 = vsel %vm2786, %v5755, 0
        %5788 = vmatprep.subr.bf16.mxu0 0
        %5789 = vmatpush1.bf16.xpose.msra.mxu0 %v5777
        %5790 = vmatprep.subr.bf16.mxu0 0
        %5791 = vmatpush1.bf16.xpose.msra.mxu0 %v5780
        %5792 = vmatprep.subr.bf16.mxu0 0
        %5793 = vmatpush1.bf16.xpose.msra.mxu0 %v5783
        %5794 = vmatprep.subr.bf16.mxu0 0
        %5795 = vmatpush1.bf16.xpose.msra.mxu0 %v5786
        %5796 = vmatprep.subr.bf16.mxu0 0
        %5797 = vmatpush1.bf16.xpose.msra.mxu0 0
        %5798 = vmatprep.subr.bf16.mxu0 0
        %5799 = vmatpush1.bf16.xpose.msra.mxu0 0
        %5800 = vmatprep.subr.bf16.mxu0 0
        %5801 = vmatpush1.bf16.xpose.msra.mxu0 0
        %5802 = vmatprep.subr.bf16.mxu0 0
        %5803 = vmatpush1.bf16.xpose.msra.mxu0 0
        %5804 = vmatprep.subr.bf16.mxu0 0
        %5805 = vmatpush1.bf16.xpose.msra.mxu0 0
        %5806 = vmatprep.subr.bf16.mxu0 0
        %5807 = vmatpush1.bf16.xpose.msra.mxu0 0
        %5808 = vmatprep.subr.bf16.mxu0 0
        %5809 = vmatpush1.bf16.xpose.msra.mxu0 0
        %5810 = vmatprep.subr.bf16.mxu0 0
        %5811 = vmatpush1.bf16.xpose.msra.mxu0 0
        %5812 = vmatprep.subr.bf16.mxu0 0
        %5813 = vmatpush1.bf16.xpose.msra.mxu0 0
        %5814 = vmatprep.subr.bf16.mxu0 0
        %5815 = vmatpush1.bf16.xpose.msra.mxu0 0
        %5816 = vmatprep.subr.bf16.mxu0 0
        %5817 = vmatpush1.bf16.xpose.msra.mxu0 0
        %5818 = vmatprep.subr.bf16.mxu0 0
        %5819 = vmatpush1.bf16.xpose.msra.mxu0 0
        %5820 = vmatprep.mubr.bf16.mxu0 0
        %5821 = vmatmul.mubr.bf16.gmra.mrb[0].mxu0 %v5765
        %v5822 = vpop.f32.mrb[0].mxu0
        %v5823 = vadd.f32 0.0, %v5822
        %v5824 = vpop.f32.mrb[0].mxu0
        %v5825 = vpop.f32.mrb[0].mxu0
        %v5826 = vadd.f32 0.0, %v5825
        %v5827 = vpop.f32.mrb[0].mxu0
        %5828 = vmatprep.mubr.bf16.mxu0 0
        %5829 = vmatmul.mubr.bf16.gmra.mrb[0].mxu0 %v5768
        %v5830 = vpop.f32.mrb[0].mxu0
        %v5831 = vadd.f32 0.0, %v5830
        %v5832 = vpop.f32.mrb[0].mxu0
        %v5833 = vpop.f32.mrb[0].mxu0
        %v5834 = vadd.f32 0.0, %v5833
        %v5835 = vpop.f32.mrb[0].mxu0
        %5836 = vmatprep.mubr.bf16.mxu0 0
        %5837 = vmatmul.mubr.bf16.gmra.mrb[0].mxu0 %v5771
        %v5838 = vpop.f32.mrb[0].mxu0
        %v5839 = vadd.f32 0.0, %v5838
        %v5840 = vpop.f32.mrb[0].mxu0
        %v5841 = vpop.f32.mrb[0].mxu0
        %v5842 = vadd.f32 0.0, %v5841
        %v5843 = vpop.f32.mrb[0].mxu0
        %5844 = vmatprep.mubr.bf16.mxu0 0
        %5845 = vmatmul.mubr.bf16.gmra.mrb[0].mxu0 %v5774
        %v5846 = vpop.f32.mrb[0].mxu0
        %v5847 = vadd.f32 0.0, %v5846
        %v5848 = vpop.f32.mrb[0].mxu0
        %v5849 = vpop.f32.mrb[0].mxu0
        %v5850 = vadd.f32 0.0, %v5849
        %v5851 = vpop.f32.mrb[0].mxu0
        %5852 = vdwg.mxu0
        %v5853 = vsel %vm2876, %v5823, -inf
        %5854 = vmax.xlane.f32.xlu0 %v5853
        %v5855 = vpop.xlane.xlu0 %5854
        %v5856 = vsel %vm2876, %v5826, -inf
        %5857 = vmax.xlane.f32.xlu0 %v5856
        %v5858 = vpop.xlane.xlu0 %5857
        %v5859 = vsel %vm2876, %v5831, -inf
        %5860 = vmax.xlane.f32.xlu0 %v5859
        %v5861 = vpop.xlane.xlu0 %5860
        %v5862 = vsel %vm2876, %v5834, -inf
        %5863 = vmax.xlane.f32.xlu0 %v5862
        %v5864 = vpop.xlane.xlu0 %5863
        %v5865 = vsel %vm2876, %v5839, -inf
        %5866 = vmax.xlane.f32.xlu0 %v5865
        %v5867 = vpop.xlane.xlu0 %5866
        %v5868 = vsel %vm2876, %v5842, -inf
        %5869 = vmax.xlane.f32.xlu0 %v5868
        %v5870 = vpop.xlane.xlu0 %5869
        %v5871 = vsel %vm2876, %v5847, -inf
        %5872 = vmax.xlane.f32.xlu0 %v5871
        %v5873 = vpop.xlane.xlu0 %5872
        %v5874 = vsel %vm2876, %v5850, -inf
        %5875 = vmax.xlane.f32.xlu0 %v5874
        %v5876 = vpop.xlane.xlu0 %5875
        %v5877 = vsub.f32 %v5823, %v5855
        %v5878 = vsub.f32 %v5826, %v5858
        %v5879 = vsub.f32 %v5831, %v5861
        %v5880 = vsub.f32 %v5834, %v5864
        %v5881 = vsub.f32 %v5839, %v5867
        %v5882 = vsub.f32 %v5842, %v5870
        %v5883 = vsub.f32 %v5847, %v5873
        %v5884 = vsub.f32 %v5850, %v5876
        %v5885 = vmul.f32 %v5877, 1.442695
        %v5886 = vpow.pop %v5885
        %v5887 = vmul.f32 %v5878, 1.442695
        %v5888 = vpow.pop %v5887
        %v5889 = vmul.f32 %v5879, 1.442695
        %v5890 = vpow.pop %v5889
        %v5891 = vmul.f32 %v5880, 1.442695
        %v5892 = vpow.pop %v5891
        %v5893 = vmul.f32 %v5881, 1.442695
        %v5894 = vpow.pop %v5893
        %v5895 = vmul.f32 %v5882, 1.442695
        %v5896 = vpow.pop %v5895
        %v5897 = vmul.f32 %v5883, 1.442695
        %v5898 = vpow.pop %v5897
        %v5899 = vmul.f32 %v5884, 1.442695
        %v5900 = vpow.pop %v5899
        %v5901 = vsel %vm2876, %v5886, 0.0
        %5902 = vadd.xlane.f32.xlu0 %v5901
        %v5903 = vpop.xlane.xlu0 %5902
        %v5904 = vsel %vm2876, %v5888, 0.0
        %5905 = vadd.xlane.f32.xlu0 %v5904
        %v5906 = vpop.xlane.xlu0 %5905
        %v5907 = vsel %vm2876, %v5890, 0.0
        %5908 = vadd.xlane.f32.xlu0 %v5907
        %v5909 = vpop.xlane.xlu0 %5908
        %v5910 = vsel %vm2876, %v5892, 0.0
        %5911 = vadd.xlane.f32.xlu0 %v5910
        %v5912 = vpop.xlane.xlu0 %5911
        %v5913 = vsel %vm2876, %v5894, 0.0
        %5914 = vadd.xlane.f32.xlu0 %v5913
        %v5915 = vpop.xlane.xlu0 %5914
        %v5916 = vsel %vm2876, %v5896, 0.0
        %5917 = vadd.xlane.f32.xlu0 %v5916
        %v5918 = vpop.xlane.xlu0 %5917
        %v5919 = vsel %vm2876, %v5898, 0.0
        %5920 = vadd.xlane.f32.xlu0 %v5919
        %v5921 = vpop.xlane.xlu0 %5920
        %v5922 = vsel %vm2876, %v5900, 0.0
        %5923 = vadd.xlane.f32.xlu0 %v5922
        %v5924 = vpop.xlane.xlu0 %5923
        %v5925 = vrcp.pop %v5903
        %v5926 = vrcp.pop %v5906
        %v5927 = vrcp.pop %v5909
        %v5928 = vrcp.pop %v5912
        %v5929 = vrcp.pop %v5915
        %v5930 = vrcp.pop %v5918
        %v5931 = vrcp.pop %v5921
        %v5932 = vrcp.pop %v5924
        %v5933 = vmul.f32 %v5886, %v5925
        %v5934 = vmul.f32 %v5888, %v5926
        %v5935 = vmul.f32 %v5890, %v5927
        %v5936 = vmul.f32 %v5892, %v5928
        %v5937 = vmul.f32 %v5894, %v5929
        %v5938 = vmul.f32 %v5896, %v5930
        %v5939 = vmul.f32 %v5898, %v5931
        %v5940 = vmul.f32 %v5900, %v5932
        %v5941 = vpack.c.bf16 %v5934, %v5933
        %v5942 = vpack.c.bf16 %v5936, %v5935
        %v5943 = vpack.c.bf16 %v5938, %v5937
        %v5944 = vpack.c.bf16 %v5940, %v5939
        %v5946 = vsel %vm2876, %v5941, 0
        %v5949 = vsel %vm2876, %v5942, 0
        %v5952 = vsel %vm2876, %v5943, 0
        %v5955 = vsel %vm2876, %v5944, 0
        %5957 = vmatprep.subr.bf16.mxu0 0
        %5958 = vmatpush1.bf16.msra.mxu0 %v5756
        %5959 = vmatprep.subr.bf16.mxu0 0
        %5960 = vmatpush1.bf16.msra.mxu0 %v5757
        %5961 = vmatprep.subr.bf16.mxu0 0
        %5962 = vmatpush1.bf16.msra.mxu0 %v5758
        %5963 = vmatprep.subr.bf16.mxu0 0
        %5964 = vmatpush1.bf16.msra.mxu0 %v5759
        %5965 = vmatprep.subr.bf16.mxu0 0
        %5966 = vmatpush1.bf16.msra.mxu0 0
        %5967 = vmatprep.subr.bf16.mxu0 0
        %5968 = vmatpush1.bf16.msra.mxu0 0
        %5969 = vmatprep.subr.bf16.mxu0 0
        %5970 = vmatpush1.bf16.msra.mxu0 0
        %5971 = vmatprep.subr.bf16.mxu0 0
        %5972 = vmatpush1.bf16.msra.mxu0 0
        %5973 = vmatprep.subr.bf16.mxu0 0
        %5974 = vmatpush1.bf16.msra.mxu0 0
        %5975 = vmatprep.subr.bf16.mxu0 0
        %5976 = vmatpush1.bf16.msra.mxu0 0
        %5977 = vmatprep.subr.bf16.mxu0 0
        %5978 = vmatpush1.bf16.msra.mxu0 0
        %5979 = vmatprep.subr.bf16.mxu0 0
        %5980 = vmatpush1.bf16.msra.mxu0 0
        %5981 = vmatprep.subr.bf16.mxu0 0
        %5982 = vmatpush1.bf16.msra.mxu0 0
        %5983 = vmatprep.subr.bf16.mxu0 0
        %5984 = vmatpush1.bf16.msra.mxu0 0
        %5985 = vmatprep.subr.bf16.mxu0 0
        %5986 = vmatpush1.bf16.msra.mxu0 0
        %5987 = vmatprep.subr.bf16.mxu0 0
        %5988 = vmatpush1.bf16.msra.mxu0 0
        %5989 = vmatprep.mubr.bf16.mxu0 0
        %5990 = vmatmul.mubr.bf16.gmra.mrb[0].mxu0 %v5946
        %v5991 = vpop.f32.mrb[0].mxu0
        %v5992 = vadd.f32 0.0, %v5991
        %v5993 = vpop.f32.mrb[0].mxu0
        %v5994 = vpop.f32.mrb[0].mxu0
        %v5995 = vadd.f32 0.0, %v5994
        %v5996 = vpop.f32.mrb[0].mxu0
        %5997 = vmatprep.mubr.bf16.mxu0 0
        %5998 = vmatmul.mubr.bf16.gmra.mrb[0].mxu0 %v5949
        %v5999 = vpop.f32.mrb[0].mxu0
        %v6000 = vadd.f32 0.0, %v5999
        %v6001 = vpop.f32.mrb[0].mxu0
        %v6002 = vpop.f32.mrb[0].mxu0
        %v6003 = vadd.f32 0.0, %v6002
        %v6004 = vpop.f32.mrb[0].mxu0
        %6005 = vmatprep.mubr.bf16.mxu0 0
        %6006 = vmatmul.mubr.bf16.gmra.mrb[0].mxu0 %v5952
        %v6007 = vpop.f32.mrb[0].mxu0
        %v6008 = vadd.f32 0.0, %v6007
        %v6009 = vpop.f32.mrb[0].mxu0
        %v6010 = vpop.f32.mrb[0].mxu0
        %v6011 = vadd.f32 0.0, %v6010
        %v6012 = vpop.f32.mrb[0].mxu0
        %6013 = vmatprep.mubr.bf16.mxu0 0
        %6014 = vmatmul.mubr.bf16.gmra.mrb[0].mxu0 %v5955
        %v6015 = vpop.f32.mrb[0].mxu0
        %v6016 = vadd.f32 0.0, %v6015
        %v6017 = vpop.f32.mrb[0].mxu0
        %v6018 = vpop.f32.mrb[0].mxu0
        %v6019 = vadd.f32 0.0, %v6018
        %v6020 = vpop.f32.mrb[0].mxu0
        %6021 = vdwg.mxu0
        %v6022 = vpack.c.bf16 %v5995, %v5992
        %v6023 = vpack.c.bf16 %v6003, %v6000
        %v6024 = vpack.c.bf16 %v6011, %v6008
        %v6025 = vpack.c.bf16 %v6019, %v6016
        %6030 = vrot.lane.b32.xlu0 %v5760, 96
        %v6031 = vpop.permute.xlu0 %6030
        %6032 = vrot.lane.b32.xlu0 %v5761, 96
        %v6033 = vpop.permute.xlu0 %6032
        %6034 = vrot.lane.b32.xlu0 %v5762, 96
        %v6035 = vpop.permute.xlu0 %6034
        %6036 = vrot.lane.b32.xlu0 %v5763, 96
        %v6037 = vpop.permute.xlu0 %6036
        %6042 = vrot.lane.b32.xlu0 %v5752, 96
        %v6043 = vpop.permute.xlu0 %6042
        %6044 = vrot.lane.b32.xlu0 %v5753, 96
        %v6045 = vpop.permute.xlu0 %6044
        %6046 = vrot.lane.b32.xlu0 %v5754, 96
        %v6047 = vpop.permute.xlu0 %6046
        %6048 = vrot.lane.b32.xlu0 %v5755, 96
        %v6049 = vpop.permute.xlu0 %6048
        %v6051 = vsel %vm2786, %v6031, 0
        %v6054 = vsel %vm2786, %v6033, 0
        %v6057 = vsel %vm2786, %v6035, 0
        %v6060 = vsel %vm2786, %v6037, 0
        %v6063 = vsel %vm2786, %v6043, 0
        %v6066 = vsel %vm2786, %v6045, 0
        %v6069 = vsel %vm2786, %v6047, 0
        %v6072 = vsel %vm2786, %v6049, 0
        %6074 = vmatprep.subr.bf16.mxu0 0
        %6075 = vmatpush1.bf16.xpose.msra.mxu0 %v6063
        %6076 = vmatprep.subr.bf16.mxu0 0
        %6077 = vmatpush1.bf16.xpose.msra.mxu0 %v6066
        %6078 = vmatprep.subr.bf16.mxu0 0
        %6079 = vmatpush1.bf16.xpose.msra.mxu0 %v6069
        %6080 = vmatprep.subr.bf16.mxu0 0
        %6081 = vmatpush1.bf16.xpose.msra.mxu0 %v6072
        %6082 = vmatprep.subr.bf16.mxu0 0
        %6083 = vmatpush1.bf16.xpose.msra.mxu0 0
        %6084 = vmatprep.subr.bf16.mxu0 0
        %6085 = vmatpush1.bf16.xpose.msra.mxu0 0
        %6086 = vmatprep.subr.bf16.mxu0 0
        %6087 = vmatpush1.bf16.xpose.msra.mxu0 0
        %6088 = vmatprep.subr.bf16.mxu0 0
        %6089 = vmatpush1.bf16.xpose.msra.mxu0 0
        %6090 = vmatprep.subr.bf16.mxu0 0
        %6091 = vmatpush1.bf16.xpose.msra.mxu0 0
        %6092 = vmatprep.subr.bf16.mxu0 0
        %6093 = vmatpush1.bf16.xpose.msra.mxu0 0
        %6094 = vmatprep.subr.bf16.mxu0 0
        %6095 = vmatpush1.bf16.xpose.msra.mxu0 0
        %6096 = vmatprep.subr.bf16.mxu0 0
        %6097 = vmatpush1.bf16.xpose.msra.mxu0 0
        %6098 = vmatprep.subr.bf16.mxu0 0
        %6099 = vmatpush1.bf16.xpose.msra.mxu0 0
        %6100 = vmatprep.subr.bf16.mxu0 0
        %6101 = vmatpush1.bf16.xpose.msra.mxu0 0
        %6102 = vmatprep.subr.bf16.mxu0 0
        %6103 = vmatpush1.bf16.xpose.msra.mxu0 0
        %6104 = vmatprep.subr.bf16.mxu0 0
        %6105 = vmatpush1.bf16.xpose.msra.mxu0 0
        %6106 = vmatprep.mubr.bf16.mxu0 0
        %6107 = vmatmul.mubr.bf16.gmra.mrb[0].mxu0 %v6051
        %v6108 = vpop.f32.mrb[0].mxu0
        %v6109 = vadd.f32 0.0, %v6108
        %v6110 = vpop.f32.mrb[0].mxu0
        %v6111 = vpop.f32.mrb[0].mxu0
        %v6112 = vadd.f32 0.0, %v6111
        %v6113 = vpop.f32.mrb[0].mxu0
        %6114 = vmatprep.mubr.bf16.mxu0 0
        %6115 = vmatmul.mubr.bf16.gmra.mrb[0].mxu0 %v6054
        %v6116 = vpop.f32.mrb[0].mxu0
        %v6117 = vadd.f32 0.0, %v6116
        %v6118 = vpop.f32.mrb[0].mxu0
        %v6119 = vpop.f32.mrb[0].mxu0
        %v6120 = vadd.f32 0.0, %v6119
        %v6121 = vpop.f32.mrb[0].mxu0
        %6122 = vmatprep.mubr.bf16.mxu0 0
        %6123 = vmatmul.mubr.bf16.gmra.mrb[0].mxu0 %v6057
        %v6124 = vpop.f32.mrb[0].mxu0
        %v6125 = vadd.f32 0.0, %v6124
        %v6126 = vpop.f32.mrb[0].mxu0
        %v6127 = vpop.f32.mrb[0].mxu0
        %v6128 = vadd.f32 0.0, %v6127
        %v6129 = vpop.f32.mrb[0].mxu0
        %6130 = vmatprep.mubr.bf16.mxu0 0
        %6131 = vmatmul.mubr.bf16.gmra.mrb[0].mxu0 %v6060
        %v6132 = vpop.f32.mrb[0].mxu0
        %v6133 = vadd.f32 0.0, %v6132
        %v6134 = vpop.f32.mrb[0].mxu0
        %v6135 = vpop.f32.mrb[0].mxu0
        %v6136 = vadd.f32 0.0, %v6135
        %v6137 = vpop.f32.mrb[0].mxu0
        %6138 = vdwg.mxu0
        %v6139 = vsel %vm2876, %v6109, -inf
        %6140 = vmax.xlane.f32.xlu0 %v6139
        %v6141 = vpop.xlane.xlu0 %6140
        %v6142 = vsel %vm2876, %v6112, -inf
        %6143 = vmax.xlane.f32.xlu0 %v6142
        %v6144 = vpop.xlane.xlu0 %6143
        %v6145 = vsel %vm2876, %v6117, -inf
        %6146 = vmax.xlane.f32.xlu0 %v6145
        %v6147 = vpop.xlane.xlu0 %6146
        %v6148 = vsel %vm2876, %v6120, -inf
        %6149 = vmax.xlane.f32.xlu0 %v6148
        %v6150 = vpop.xlane.xlu0 %6149
        %v6151 = vsel %vm2876, %v6125, -inf
        %6152 = vmax.xlane.f32.xlu0 %v6151
        %v6153 = vpop.xlane.xlu0 %6152
        %v6154 = vsel %vm2876, %v6128, -inf
        %6155 = vmax.xlane.f32.xlu0 %v6154
        %v6156 = vpop.xlane.xlu0 %6155
        %v6157 = vsel %vm2876, %v6133, -inf
        %6158 = vmax.xlane.f32.xlu0 %v6157
        %v6159 = vpop.xlane.xlu0 %6158
        %v6160 = vsel %vm2876, %v6136, -inf
        %6161 = vmax.xlane.f32.xlu0 %v6160
        %v6162 = vpop.xlane.xlu0 %6161
        %v6163 = vsub.f32 %v6109, %v6141
        %v6164 = vsub.f32 %v6112, %v6144
        %v6165 = vsub.f32 %v6117, %v6147
        %v6166 = vsub.f32 %v6120, %v6150
        %v6167 = vsub.f32 %v6125, %v6153
        %v6168 = vsub.f32 %v6128, %v6156
        %v6169 = vsub.f32 %v6133, %v6159
        %v6170 = vsub.f32 %v6136, %v6162
        %v6171 = vmul.f32 %v6163, 1.442695
        %v6172 = vpow.pop %v6171
        %v6173 = vmul.f32 %v6164, 1.442695
        %v6174 = vpow.pop %v6173
        %v6175 = vmul.f32 %v6165, 1.442695
        %v6176 = vpow.pop %v6175
        %v6177 = vmul.f32 %v6166, 1.442695
        %v6178 = vpow.pop %v6177
        %v6179 = vmul.f32 %v6167, 1.442695
        %v6180 = vpow.pop %v6179
        %v6181 = vmul.f32 %v6168, 1.442695
        %v6182 = vpow.pop %v6181
        %v6183 = vmul.f32 %v6169, 1.442695
        %v6184 = vpow.pop %v6183
        %v6185 = vmul.f32 %v6170, 1.442695
        %v6186 = vpow.pop %v6185
        %v6187 = vsel %vm2876, %v6172, 0.0
        %6188 = vadd.xlane.f32.xlu0 %v6187
        %v6189 = vpop.xlane.xlu0 %6188
        %v6190 = vsel %vm2876, %v6174, 0.0
        %6191 = vadd.xlane.f32.xlu0 %v6190
        %v6192 = vpop.xlane.xlu0 %6191
        %v6193 = vsel %vm2876, %v6176, 0.0
        %6194 = vadd.xlane.f32.xlu0 %v6193
        %v6195 = vpop.xlane.xlu0 %6194
        %v6196 = vsel %vm2876, %v6178, 0.0
        %6197 = vadd.xlane.f32.xlu0 %v6196
        %v6198 = vpop.xlane.xlu0 %6197
        %v6199 = vsel %vm2876, %v6180, 0.0
        %6200 = vadd.xlane.f32.xlu0 %v6199
        %v6201 = vpop.xlane.xlu0 %6200
        %v6202 = vsel %vm2876, %v6182, 0.0
        %6203 = vadd.xlane.f32.xlu0 %v6202
        %v6204 = vpop.xlane.xlu0 %6203
        %v6205 = vsel %vm2876, %v6184, 0.0
        %6206 = vadd.xlane.f32.xlu0 %v6205
        %v6207 = vpop.xlane.xlu0 %6206
        %v6208 = vsel %vm2876, %v6186, 0.0
        %6209 = vadd.xlane.f32.xlu0 %v6208
        %v6210 = vpop.xlane.xlu0 %6209
        %v6211 = vrcp.pop %v6189
        %v6212 = vrcp.pop %v6192
        %v6213 = vrcp.pop %v6195
        %v6214 = vrcp.pop %v6198
        %v6215 = vrcp.pop %v6201
        %v6216 = vrcp.pop %v6204
        %v6217 = vrcp.pop %v6207
        %v6218 = vrcp.pop %v6210
        %v6219 = vmul.f32 %v6172, %v6211
        %v6220 = vmul.f32 %v6174, %v6212
        %v6221 = vmul.f32 %v6176, %v6213
        %v6222 = vmul.f32 %v6178, %v6214
        %v6223 = vmul.f32 %v6180, %v6215
        %v6224 = vmul.f32 %v6182, %v6216
        %v6225 = vmul.f32 %v6184, %v6217
        %v6226 = vmul.f32 %v6186, %v6218
        %v6227 = vpack.c.bf16 %v6220, %v6219
        %v6228 = vpack.c.bf16 %v6222, %v6221
        %v6229 = vpack.c.bf16 %v6224, %v6223
        %v6230 = vpack.c.bf16 %v6226, %v6225
        %6235 = vrot.lane.b32.xlu0 %v5756, 96
        %v6236 = vpop.permute.xlu0 %6235
        %6237 = vrot.lane.b32.xlu0 %v5757, 96
        %v6238 = vpop.permute.xlu0 %6237
        %6239 = vrot.lane.b32.xlu0 %v5758, 96
        %v6240 = vpop.permute.xlu0 %6239
        %6241 = vrot.lane.b32.xlu0 %v5759, 96
        %v6242 = vpop.permute.xlu0 %6241
        %v6248 = vsel %vm2876, %v6227, 0
        %v6251 = vsel %vm2876, %v6228, 0
        %v6254 = vsel %vm2876, %v6229, 0
        %v6257 = vsel %vm2876, %v6230, 0
        %6259 = vmatprep.subr.bf16.mxu0 0
        %6260 = vmatpush1.bf16.msra.mxu0 %v6236
        %6261 = vmatprep.subr.bf16.mxu0 0
        %6262 = vmatpush1.bf16.msra.mxu0 %v6238
        %6263 = vmatprep.subr.bf16.mxu0 0
        %6264 = vmatpush1.bf16.msra.mxu0 %v6240
        %6265 = vmatprep.subr.bf16.mxu0 0
        %6266 = vmatpush1.bf16.msra.mxu0 %v6242
        %6267 = vmatprep.subr.bf16.mxu0 0
        %6268 = vmatpush1.bf16.msra.mxu0 0
        %6269 = vmatprep.subr.bf16.mxu0 0
        %6270 = vmatpush1.bf16.msra.mxu0 0
        %6271 = vmatprep.subr.bf16.mxu0 0
        %6272 = vmatpush1.bf16.msra.mxu0 0
        %6273 = vmatprep.subr.bf16.mxu0 0
        %6274 = vmatpush1.bf16.msra.mxu0 0
        %6275 = vmatprep.subr.bf16.mxu0 0
        %6276 = vmatpush1.bf16.msra.mxu0 0
        %6277 = vmatprep.subr.bf16.mxu0 0
        %6278 = vmatpush1.bf16.msra.mxu0 0
        %6279 = vmatprep.subr.bf16.mxu0 0
        %6280 = vmatpush1.bf16.msra.mxu0 0
        %6281 = vmatprep.subr.bf16.mxu0 0
        %6282 = vmatpush1.bf16.msra.mxu0 0
        %6283 = vmatprep.subr.bf16.mxu0 0
        %6284 = vmatpush1.bf16.msra.mxu0 0
        %6285 = vmatprep.subr.bf16.mxu0 0
        %6286 = vmatpush1.bf16.msra.mxu0 0
        %6287 = vmatprep.subr.bf16.mxu0 0
        %6288 = vmatpush1.bf16.msra.mxu0 0
        %6289 = vmatprep.subr.bf16.mxu0 0
        %6290 = vmatpush1.bf16.msra.mxu0 0
        %6291 = vmatprep.mubr.bf16.mxu0 0
        %6292 = vmatmul.mubr.bf16.gmra.mrb[0].mxu0 %v6248
        %v6293 = vpop.f32.mrb[0].mxu0
        %v6294 = vadd.f32 0.0, %v6293
        %v6295 = vpop.f32.mrb[0].mxu0
        %v6296 = vpop.f32.mrb[0].mxu0
        %v6297 = vadd.f32 0.0, %v6296
        %v6298 = vpop.f32.mrb[0].mxu0
        %6299 = vmatprep.mubr.bf16.mxu0 0
        %6300 = vmatmul.mubr.bf16.gmra.mrb[0].mxu0 %v6251
        %v6301 = vpop.f32.mrb[0].mxu0
        %v6302 = vadd.f32 0.0, %v6301
        %v6303 = vpop.f32.mrb[0].mxu0
        %v6304 = vpop.f32.mrb[0].mxu0
        %v6305 = vadd.f32 0.0, %v6304
        %v6306 = vpop.f32.mrb[0].mxu0
        %6307 = vmatprep.mubr.bf16.mxu0 0
        %6308 = vmatmul.mubr.bf16.gmra.mrb[0].mxu0 %v6254
        %v6309 = vpop.f32.mrb[0].mxu0
        %v6310 = vadd.f32 0.0, %v6309
        %v6311 = vpop.f32.mrb[0].mxu0
        %v6312 = vpop.f32.mrb[0].mxu0
        %v6313 = vadd.f32 0.0, %v6312
        %v6314 = vpop.f32.mrb[0].mxu0
        %6315 = vmatprep.mubr.bf16.mxu0 0
        %6316 = vmatmul.mubr.bf16.gmra.mrb[0].mxu0 %v6257
        %v6317 = vpop.f32.mrb[0].mxu0
        %v6318 = vadd.f32 0.0, %v6317
        %v6319 = vpop.f32.mrb[0].mxu0
        %v6320 = vpop.f32.mrb[0].mxu0
        %v6321 = vadd.f32 0.0, %v6320
        %v6322 = vpop.f32.mrb[0].mxu0
        %6323 = vdwg.mxu0
        %v6324 = vpack.c.bf16 %v6297, %v6294
        %v6325 = vpack.c.bf16 %v6305, %v6302
        %v6326 = vpack.c.bf16 %v6313, %v6310
        %v6327 = vpack.c.bf16 %v6321, %v6318
        %6328 = vrot.lane.b32.xlu0 %v5760, 64
        %v6329 = vpop.permute.xlu0 %6328
        %6330 = vrot.lane.b32.xlu0 %v5761, 64
        %v6331 = vpop.permute.xlu0 %6330
        %6332 = vrot.lane.b32.xlu0 %v5762, 64
        %v6333 = vpop.permute.xlu0 %6332
        %6334 = vrot.lane.b32.xlu0 %v5763, 64
        %v6335 = vpop.permute.xlu0 %6334
        %6336 = vrot.lane.b32.xlu0 %v5752, 64
        %v6337 = vpop.permute.xlu0 %6336
        %6338 = vrot.lane.b32.xlu0 %v5753, 64
        %v6339 = vpop.permute.xlu0 %6338
        %6340 = vrot.lane.b32.xlu0 %v5754, 64
        %v6341 = vpop.permute.xlu0 %6340
        %6342 = vrot.lane.b32.xlu0 %v5755, 64
        %v6343 = vpop.permute.xlu0 %6342
        %v6345 = vsel %vm2786, %v6329, 0
        %v6348 = vsel %vm2786, %v6331, 0
        %v6351 = vsel %vm2786, %v6333, 0
        %v6354 = vsel %vm2786, %v6335, 0
        %v6357 = vsel %vm2786, %v6337, 0
        %v6360 = vsel %vm2786, %v6339, 0
        %v6363 = vsel %vm2786, %v6341, 0
        %v6366 = vsel %vm2786, %v6343, 0
        %6368 = vmatprep.subr.bf16.mxu0 0
        %6369 = vmatpush1.bf16.xpose.msra.mxu0 %v6357
        %6370 = vmatprep.subr.bf16.mxu0 0
        %6371 = vmatpush1.bf16.xpose.msra.mxu0 %v6360
        %6372 = vmatprep.subr.bf16.mxu0 0
        %6373 = vmatpush1.bf16.xpose.msra.mxu0 %v6363
        %6374 = vmatprep.subr.bf16.mxu0 0
        %6375 = vmatpush1.bf16.xpose.msra.mxu0 %v6366
        %6376 = vmatprep.subr.bf16.mxu0 0
        %6377 = vmatpush1.bf16.xpose.msra.mxu0 0
        %6378 = vmatprep.subr.bf16.mxu0 0
        %6379 = vmatpush1.bf16.xpose.msra.mxu0 0
        %6380 = vmatprep.subr.bf16.mxu0 0
        %6381 = vmatpush1.bf16.xpose.msra.mxu0 0
        %6382 = vmatprep.subr.bf16.mxu0 0
        %6383 = vmatpush1.bf16.xpose.msra.mxu0 0
        %6384 = vmatprep.subr.bf16.mxu0 0
        %6385 = vmatpush1.bf16.xpose.msra.mxu0 0
        %6386 = vmatprep.subr.bf16.mxu0 0
        %6387 = vmatpush1.bf16.xpose.msra.mxu0 0
        %6388 = vmatprep.subr.bf16.mxu0 0
        %6389 = vmatpush1.bf16.xpose.msra.mxu0 0
        %6390 = vmatprep.subr.bf16.mxu0 0
        %6391 = vmatpush1.bf16.xpose.msra.mxu0 0
        %6392 = vmatprep.subr.bf16.mxu0 0
        %6393 = vmatpush1.bf16.xpose.msra.mxu0 0
        %6394 = vmatprep.subr.bf16.mxu0 0
        %6395 = vmatpush1.bf16.xpose.msra.mxu0 0
        %6396 = vmatprep.subr.bf16.mxu0 0
        %6397 = vmatpush1.bf16.xpose.msra.mxu0 0
        %6398 = vmatprep.subr.bf16.mxu0 0
        %6399 = vmatpush1.bf16.xpose.msra.mxu0 0
        %6400 = vmatprep.mubr.bf16.mxu0 0
        %6401 = vmatmul.mubr.bf16.gmra.mrb[0].mxu0 %v6345
        %v6402 = vpop.f32.mrb[0].mxu0
        %v6403 = vadd.f32 0.0, %v6402
        %v6404 = vpop.f32.mrb[0].mxu0
        %v6405 = vpop.f32.mrb[0].mxu0
        %v6406 = vadd.f32 0.0, %v6405
        %v6407 = vpop.f32.mrb[0].mxu0
        %6408 = vmatprep.mubr.bf16.mxu0 0
        %6409 = vmatmul.mubr.bf16.gmra.mrb[0].mxu0 %v6348
        %v6410 = vpop.f32.mrb[0].mxu0
        %v6411 = vadd.f32 0.0, %v6410
        %v6412 = vpop.f32.mrb[0].mxu0
        %v6413 = vpop.f32.mrb[0].mxu0
        %v6414 = vadd.f32 0.0, %v6413
        %v6415 = vpop.f32.mrb[0].mxu0
        %6416 = vmatprep.mubr.bf16.mxu0 0
        %6417 = vmatmul.mubr.bf16.gmra.mrb[0].mxu0 %v6351
        %v6418 = vpop.f32.mrb[0].mxu0
        %v6419 = vadd.f32 0.0, %v6418
        %v6420 = vpop.f32.mrb[0].mxu0
        %v6421 = vpop.f32.mrb[0].mxu0
        %v6422 = vadd.f32 0.0, %v6421
        %v6423 = vpop.f32.mrb[0].mxu0
        %6424 = vmatprep.mubr.bf16.mxu0 0
        %6425 = vmatmul.mubr.bf16.gmra.mrb[0].mxu0 %v6354
        %v6426 = vpop.f32.mrb[0].mxu0
        %v6427 = vadd.f32 0.0, %v6426
        %v6428 = vpop.f32.mrb[0].mxu0
        %v6429 = vpop.f32.mrb[0].mxu0
        %v6430 = vadd.f32 0.0, %v6429
        %v6431 = vpop.f32.mrb[0].mxu0
        %6432 = vdwg.mxu0
        %v6433 = vsel %vm2876, %v6403, -inf
        %6434 = vmax.xlane.f32.xlu0 %v6433
        %v6435 = vpop.xlane.xlu0 %6434
        %v6436 = vsel %vm2876, %v6406, -inf
        %6437 = vmax.xlane.f32.xlu0 %v6436
        %v6438 = vpop.xlane.xlu0 %6437
        %v6439 = vsel %vm2876, %v6411, -inf
        %6440 = vmax.xlane.f32.xlu0 %v6439
        %v6441 = vpop.xlane.xlu0 %6440
        %v6442 = vsel %vm2876, %v6414, -inf
        %6443 = vmax.xlane.f32.xlu0 %v6442
        %v6444 = vpop.xlane.xlu0 %6443
        %v6445 = vsel %vm2876, %v6419, -inf
        %6446 = vmax.xlane.f32.xlu0 %v6445
        %v6447 = vpop.xlane.xlu0 %6446
        %v6448 = vsel %vm2876, %v6422, -inf
        %6449 = vmax.xlane.f32.xlu0 %v6448
        %v6450 = vpop.xlane.xlu0 %6449
        %v6451 = vsel %vm2876, %v6427, -inf
        %6452 = vmax.xlane.f32.xlu0 %v6451
        %v6453 = vpop.xlane.xlu0 %6452
        %v6454 = vsel %vm2876, %v6430, -inf
        %6455 = vmax.xlane.f32.xlu0 %v6454
        %v6456 = vpop.xlane.xlu0 %6455
        %v6457 = vsub.f32 %v6403, %v6435
        %v6458 = vsub.f32 %v6406, %v6438
        %v6459 = vsub.f32 %v6411, %v6441
        %v6460 = vsub.f32 %v6414, %v6444
        %v6461 = vsub.f32 %v6419, %v6447
        %v6462 = vsub.f32 %v6422, %v6450
        %v6463 = vsub.f32 %v6427, %v6453
        %v6464 = vsub.f32 %v6430, %v6456
        %v6465 = vmul.f32 %v6457, 1.442695
        %v6466 = vpow.pop %v6465
        %v6467 = vmul.f32 %v6458, 1.442695
        %v6468 = vpow.pop %v6467
        %v6469 = vmul.f32 %v6459, 1.442695
        %v6470 = vpow.pop %v6469
        %v6471 = vmul.f32 %v6460, 1.442695
        %v6472 = vpow.pop %v6471
        %v6473 = vmul.f32 %v6461, 1.442695
        %v6474 = vpow.pop %v6473
        %v6475 = vmul.f32 %v6462, 1.442695
        %v6476 = vpow.pop %v6475
        %v6477 = vmul.f32 %v6463, 1.442695
        %v6478 = vpow.pop %v6477
        %v6479 = vmul.f32 %v6464, 1.442695
        %v6480 = vpow.pop %v6479
        %v6481 = vsel %vm2876, %v6466, 0.0
        %6482 = vadd.xlane.f32.xlu0 %v6481
        %v6483 = vpop.xlane.xlu0 %6482
        %v6484 = vsel %vm2876, %v6468, 0.0
        %6485 = vadd.xlane.f32.xlu0 %v6484
        %v6486 = vpop.xlane.xlu0 %6485
        %v6487 = vsel %vm2876, %v6470, 0.0
        %6488 = vadd.xlane.f32.xlu0 %v6487
        %v6489 = vpop.xlane.xlu0 %6488
        %v6490 = vsel %vm2876, %v6472, 0.0
        %6491 = vadd.xlane.f32.xlu0 %v6490
        %v6492 = vpop.xlane.xlu0 %6491
        %v6493 = vsel %vm2876, %v6474, 0.0
        %6494 = vadd.xlane.f32.xlu0 %v6493
        %v6495 = vpop.xlane.xlu0 %6494
        %v6496 = vsel %vm2876, %v6476, 0.0
        %6497 = vadd.xlane.f32.xlu0 %v6496
        %v6498 = vpop.xlane.xlu0 %6497
        %v6499 = vsel %vm2876, %v6478, 0.0
        %6500 = vadd.xlane.f32.xlu0 %v6499
        %v6501 = vpop.xlane.xlu0 %6500
        %v6502 = vsel %vm2876, %v6480, 0.0
        %6503 = vadd.xlane.f32.xlu0 %v6502
        %v6504 = vpop.xlane.xlu0 %6503
        %v6505 = vrcp.pop %v6483
        %v6506 = vrcp.pop %v6486
        %v6507 = vrcp.pop %v6489
        %v6508 = vrcp.pop %v6492
        %v6509 = vrcp.pop %v6495
        %v6510 = vrcp.pop %v6498
        %v6511 = vrcp.pop %v6501
        %v6512 = vrcp.pop %v6504
        %v6513 = vmul.f32 %v6466, %v6505
        %v6514 = vmul.f32 %v6468, %v6506
        %v6515 = vmul.f32 %v6470, %v6507
        %v6516 = vmul.f32 %v6472, %v6508
        %v6517 = vmul.f32 %v6474, %v6509
        %v6518 = vmul.f32 %v6476, %v6510
        %v6519 = vmul.f32 %v6478, %v6511
        %v6520 = vmul.f32 %v6480, %v6512
        %v6521 = vpack.c.bf16 %v6514, %v6513
        %v6522 = vpack.c.bf16 %v6516, %v6515
        %v6523 = vpack.c.bf16 %v6518, %v6517
        %v6524 = vpack.c.bf16 %v6520, %v6519
        %6525 = vrot.lane.b32.xlu0 %v5756, 64
        %v6526 = vpop.permute.xlu0 %6525
        %6527 = vrot.lane.b32.xlu0 %v5757, 64
        %v6528 = vpop.permute.xlu0 %6527
        %6529 = vrot.lane.b32.xlu0 %v5758, 64
        %v6530 = vpop.permute.xlu0 %6529
        %6531 = vrot.lane.b32.xlu0 %v5759, 64
        %v6532 = vpop.permute.xlu0 %6531
        %v6538 = vsel %vm2876, %v6521, 0
        %v6541 = vsel %vm2876, %v6522, 0
        %v6544 = vsel %vm2876, %v6523, 0
        %v6547 = vsel %vm2876, %v6524, 0
        %6549 = vmatprep.subr.bf16.mxu0 0
        %6550 = vmatpush1.bf16.msra.mxu0 %v6526
        %6551 = vmatprep.subr.bf16.mxu0 0
        %6552 = vmatpush1.bf16.msra.mxu0 %v6528
        %6553 = vmatprep.subr.bf16.mxu0 0
        %6554 = vmatpush1.bf16.msra.mxu0 %v6530
        %6555 = vmatprep.subr.bf16.mxu0 0
        %6556 = vmatpush1.bf16.msra.mxu0 %v6532
        %6557 = vmatprep.subr.bf16.mxu0 0
        %6558 = vmatpush1.bf16.msra.mxu0 0
        %6559 = vmatprep.subr.bf16.mxu0 0
        %6560 = vmatpush1.bf16.msra.mxu0 0
        %6561 = vmatprep.subr.bf16.mxu0 0
        %6562 = vmatpush1.bf16.msra.mxu0 0
        %6563 = vmatprep.subr.bf16.mxu0 0
        %6564 = vmatpush1.bf16.msra.mxu0 0
        %6565 = vmatprep.subr.bf16.mxu0 0
        %6566 = vmatpush1.bf16.msra.mxu0 0
        %6567 = vmatprep.subr.bf16.mxu0 0
        %6568 = vmatpush1.bf16.msra.mxu0 0
        %6569 = vmatprep.subr.bf16.mxu0 0
        %6570 = vmatpush1.bf16.msra.mxu0 0
        %6571 = vmatprep.subr.bf16.mxu0 0
        %6572 = vmatpush1.bf16.msra.mxu0 0
        %6573 = vmatprep.subr.bf16.mxu0 0
        %6574 = vmatpush1.bf16.msra.mxu0 0
        %6575 = vmatprep.subr.bf16.mxu0 0
        %6576 = vmatpush1.bf16.msra.mxu0 0
        %6577 = vmatprep.subr.bf16.mxu0 0
        %6578 = vmatpush1.bf16.msra.mxu0 0
        %6579 = vmatprep.subr.bf16.mxu0 0
        %6580 = vmatpush1.bf16.msra.mxu0 0
        %6581 = vmatprep.mubr.bf16.mxu0 0
        %6582 = vmatmul.mubr.bf16.gmra.mrb[0].mxu0 %v6538
        %v6583 = vpop.f32.mrb[0].mxu0
        %v6584 = vadd.f32 0.0, %v6583
        %v6585 = vpop.f32.mrb[0].mxu0
        %v6586 = vpop.f32.mrb[0].mxu0
        %v6587 = vadd.f32 0.0, %v6586
        %v6588 = vpop.f32.mrb[0].mxu0
        %6589 = vmatprep.mubr.bf16.mxu0 0
        %6590 = vmatmul.mubr.bf16.gmra.mrb[0].mxu0 %v6541
        %v6591 = vpop.f32.mrb[0].mxu0
        %v6592 = vadd.f32 0.0, %v6591
        %v6593 = vpop.f32.mrb[0].mxu0
        %v6594 = vpop.f32.mrb[0].mxu0
        %v6595 = vadd.f32 0.0, %v6594
        %v6596 = vpop.f32.mrb[0].mxu0
        %6597 = vmatprep.mubr.bf16.mxu0 0
        %6598 = vmatmul.mubr.bf16.gmra.mrb[0].mxu0 %v6544
        %v6599 = vpop.f32.mrb[0].mxu0
        %v6600 = vadd.f32 0.0, %v6599
        %v6601 = vpop.f32.mrb[0].mxu0
        %v6602 = vpop.f32.mrb[0].mxu0
        %v6603 = vadd.f32 0.0, %v6602
        %v6604 = vpop.f32.mrb[0].mxu0
        %6605 = vmatprep.mubr.bf16.mxu0 0
        %6606 = vmatmul.mubr.bf16.gmra.mrb[0].mxu0 %v6547
        %v6607 = vpop.f32.mrb[0].mxu0
        %v6608 = vadd.f32 0.0, %v6607
        %v6609 = vpop.f32.mrb[0].mxu0
        %v6610 = vpop.f32.mrb[0].mxu0
        %v6611 = vadd.f32 0.0, %v6610
        %v6612 = vpop.f32.mrb[0].mxu0
        %6613 = vdwg.mxu0
        %v6614 = vpack.c.bf16 %v6587, %v6584
        %v6615 = vpack.c.bf16 %v6595, %v6592
        %v6616 = vpack.c.bf16 %v6603, %v6600
        %v6617 = vpack.c.bf16 %v6611, %v6608
        %6618 = vrot.lane.b32.xlu0 %v5760, 32
        %v6619 = vpop.permute.xlu0 %6618
        %6620 = vrot.lane.b32.xlu0 %v5761, 32
        %v6621 = vpop.permute.xlu0 %6620
        %6622 = vrot.lane.b32.xlu0 %v5762, 32
        %v6623 = vpop.permute.xlu0 %6622
        %6624 = vrot.lane.b32.xlu0 %v5763, 32
        %v6625 = vpop.permute.xlu0 %6624
        %6626 = vrot.lane.b32.xlu0 %v5752, 32
        %v6627 = vpop.permute.xlu0 %6626
        %6628 = vrot.lane.b32.xlu0 %v5753, 32
        %v6629 = vpop.permute.xlu0 %6628
        %6630 = vrot.lane.b32.xlu0 %v5754, 32
        %v6631 = vpop.permute.xlu0 %6630
        %6632 = vrot.lane.b32.xlu0 %v5755, 32
        %v6633 = vpop.permute.xlu0 %6632
        %v6635 = vsel %vm2786, %v6619, 0
        %v6638 = vsel %vm2786, %v6621, 0
        %v6641 = vsel %vm2786, %v6623, 0
        %v6644 = vsel %vm2786, %v6625, 0
        %v6647 = vsel %vm2786, %v6627, 0
        %v6650 = vsel %vm2786, %v6629, 0
        %v6653 = vsel %vm2786, %v6631, 0
        %v6656 = vsel %vm2786, %v6633, 0
        %6658 = vmatprep.subr.bf16.mxu0 0
        %6659 = vmatpush1.bf16.xpose.msra.mxu0 %v6647
        %6660 = vmatprep.subr.bf16.mxu0 0
        %6661 = vmatpush1.bf16.xpose.msra.mxu0 %v6650
        %6662 = vmatprep.subr.bf16.mxu0 0
        %6663 = vmatpush1.bf16.xpose.msra.mxu0 %v6653
        %6664 = vmatprep.subr.bf16.mxu0 0
        %6665 = vmatpush1.bf16.xpose.msra.mxu0 %v6656
        %6666 = vmatprep.subr.bf16.mxu0 0
        %6667 = vmatpush1.bf16.xpose.msra.mxu0 0
        %6668 = vmatprep.subr.bf16.mxu0 0
        %6669 = vmatpush1.bf16.xpose.msra.mxu0 0
        %6670 = vmatprep.subr.bf16.mxu0 0
        %6671 = vmatpush1.bf16.xpose.msra.mxu0 0
        %6672 = vmatprep.subr.bf16.mxu0 0
        %6673 = vmatpush1.bf16.xpose.msra.mxu0 0
        %6674 = vmatprep.subr.bf16.mxu0 0
        %6675 = vmatpush1.bf16.xpose.msra.mxu0 0
        %6676 = vmatprep.subr.bf16.mxu0 0
        %6677 = vmatpush1.bf16.xpose.msra.mxu0 0
        %6678 = vmatprep.subr.bf16.mxu0 0
        %6679 = vmatpush1.bf16.xpose.msra.mxu0 0
        %6680 = vmatprep.subr.bf16.mxu0 0
        %6681 = vmatpush1.bf16.xpose.msra.mxu0 0
        %6682 = vmatprep.subr.bf16.mxu0 0
        %6683 = vmatpush1.bf16.xpose.msra.mxu0 0
        %6684 = vmatprep.subr.bf16.mxu0 0
        %6685 = vmatpush1.bf16.xpose.msra.mxu0 0
        %6686 = vmatprep.subr.bf16.mxu0 0
        %6687 = vmatpush1.bf16.xpose.msra.mxu0 0
        %6688 = vmatprep.subr.bf16.mxu0 0
        %6689 = vmatpush1.bf16.xpose.msra.mxu0 0
        %6690 = vmatprep.mubr.bf16.mxu0 0
        %6691 = vmatmul.mubr.bf16.gmra.mrb[0].mxu0 %v6635
        %v6692 = vpop.f32.mrb[0].mxu0
        %v6693 = vadd.f32 0.0, %v6692
        %v6694 = vpop.f32.mrb[0].mxu0
        %v6695 = vpop.f32.mrb[0].mxu0
        %v6696 = vadd.f32 0.0, %v6695
        %v6697 = vpop.f32.mrb[0].mxu0
        %6698 = vmatprep.mubr.bf16.mxu0 0
        %6699 = vmatmul.mubr.bf16.gmra.mrb[0].mxu0 %v6638
        %v6700 = vpop.f32.mrb[0].mxu0
        %v6701 = vadd.f32 0.0, %v6700
        %v6702 = vpop.f32.mrb[0].mxu0
        %v6703 = vpop.f32.mrb[0].mxu0
        %v6704 = vadd.f32 0.0, %v6703
        %v6705 = vpop.f32.mrb[0].mxu0
        %6706 = vmatprep.mubr.bf16.mxu0 0
        %6707 = vmatmul.mubr.bf16.gmra.mrb[0].mxu0 %v6641
        %v6708 = vpop.f32.mrb[0].mxu0
        %v6709 = vadd.f32 0.0, %v6708
        %v6710 = vpop.f32.mrb[0].mxu0
        %v6711 = vpop.f32.mrb[0].mxu0
        %v6712 = vadd.f32 0.0, %v6711
        %v6713 = vpop.f32.mrb[0].mxu0
        %6714 = vmatprep.mubr.bf16.mxu0 0
        %6715 = vmatmul.mubr.bf16.gmra.mrb[0].mxu0 %v6644
        %v6716 = vpop.f32.mrb[0].mxu0
        %v6717 = vadd.f32 0.0, %v6716
        %v6718 = vpop.f32.mrb[0].mxu0
        %v6719 = vpop.f32.mrb[0].mxu0
        %v6720 = vadd.f32 0.0, %v6719
        %v6721 = vpop.f32.mrb[0].mxu0
        %6722 = vdwg.mxu0
        %v6723 = vsel %vm2876, %v6693, -inf
        %6724 = vmax.xlane.f32.xlu0 %v6723
        %v6725 = vpop.xlane.xlu0 %6724
        %v6726 = vsel %vm2876, %v6696, -inf
        %6727 = vmax.xlane.f32.xlu0 %v6726
        %v6728 = vpop.xlane.xlu0 %6727
        %v6729 = vsel %vm2876, %v6701, -inf
        %6730 = vmax.xlane.f32.xlu0 %v6729
        %v6731 = vpop.xlane.xlu0 %6730
        %v6732 = vsel %vm2876, %v6704, -inf
        %6733 = vmax.xlane.f32.xlu0 %v6732
        %v6734 = vpop.xlane.xlu0 %6733
        %v6735 = vsel %vm2876, %v6709, -inf
        %6736 = vmax.xlane.f32.xlu0 %v6735
        %v6737 = vpop.xlane.xlu0 %6736
        %v6738 = vsel %vm2876, %v6712, -inf
        %6739 = vmax.xlane.f32.xlu0 %v6738
        %v6740 = vpop.xlane.xlu0 %6739
        %v6741 = vsel %vm2876, %v6717, -inf
        %6742 = vmax.xlane.f32.xlu0 %v6741
        %v6743 = vpop.xlane.xlu0 %6742
        %v6744 = vsel %vm2876, %v6720, -inf
        %6745 = vmax.xlane.f32.xlu0 %v6744
        %v6746 = vpop.xlane.xlu0 %6745
        %v6747 = vsub.f32 %v6693, %v6725
        %v6748 = vsub.f32 %v6696, %v6728
        %v6749 = vsub.f32 %v6701, %v6731
        %v6750 = vsub.f32 %v6704, %v6734
        %v6751 = vsub.f32 %v6709, %v6737
        %v6752 = vsub.f32 %v6712, %v6740
        %v6753 = vsub.f32 %v6717, %v6743
        %v6754 = vsub.f32 %v6720, %v6746
        %v6755 = vmul.f32 %v6747, 1.442695
        %v6756 = vpow.pop %v6755
        %v6757 = vmul.f32 %v6748, 1.442695
        %v6758 = vpow.pop %v6757
        %v6759 = vmul.f32 %v6749, 1.442695
        %v6760 = vpow.pop %v6759
        %v6761 = vmul.f32 %v6750, 1.442695
        %v6762 = vpow.pop %v6761
        %v6763 = vmul.f32 %v6751, 1.442695
        %v6764 = vpow.pop %v6763
        %v6765 = vmul.f32 %v6752, 1.442695
        %v6766 = vpow.pop %v6765
        %v6767 = vmul.f32 %v6753, 1.442695
        %v6768 = vpow.pop %v6767
        %v6769 = vmul.f32 %v6754, 1.442695
        %v6770 = vpow.pop %v6769
        %v6771 = vsel %vm2876, %v6756, 0.0
        %6772 = vadd.xlane.f32.xlu0 %v6771
        %v6773 = vpop.xlane.xlu0 %6772
        %v6774 = vsel %vm2876, %v6758, 0.0
        %6775 = vadd.xlane.f32.xlu0 %v6774
        %v6776 = vpop.xlane.xlu0 %6775
        %v6777 = vsel %vm2876, %v6760, 0.0
        %6778 = vadd.xlane.f32.xlu0 %v6777
        %v6779 = vpop.xlane.xlu0 %6778
        %v6780 = vsel %vm2876, %v6762, 0.0
        %6781 = vadd.xlane.f32.xlu0 %v6780
        %v6782 = vpop.xlane.xlu0 %6781
        %v6783 = vsel %vm2876, %v6764, 0.0
        %6784 = vadd.xlane.f32.xlu0 %v6783
        %v6785 = vpop.xlane.xlu0 %6784
        %v6786 = vsel %vm2876, %v6766, 0.0
        %6787 = vadd.xlane.f32.xlu0 %v6786
        %v6788 = vpop.xlane.xlu0 %6787
        %v6789 = vsel %vm2876, %v6768, 0.0
        %6790 = vadd.xlane.f32.xlu0 %v6789
        %v6791 = vpop.xlane.xlu0 %6790
        %v6792 = vsel %vm2876, %v6770, 0.0
        %6793 = vadd.xlane.f32.xlu0 %v6792
        %v6794 = vpop.xlane.xlu0 %6793
        %v6795 = vrcp.pop %v6773
        %v6796 = vrcp.pop %v6776
        %v6797 = vrcp.pop %v6779
        %v6798 = vrcp.pop %v6782
        %v6799 = vrcp.pop %v6785
        %v6800 = vrcp.pop %v6788
        %v6801 = vrcp.pop %v6791
        %v6802 = vrcp.pop %v6794
        %v6803 = vmul.f32 %v6756, %v6795
        %v6804 = vmul.f32 %v6758, %v6796
        %v6805 = vmul.f32 %v6760, %v6797
        %v6806 = vmul.f32 %v6762, %v6798
        %v6807 = vmul.f32 %v6764, %v6799
        %v6808 = vmul.f32 %v6766, %v6800
        %v6809 = vmul.f32 %v6768, %v6801
        %v6810 = vmul.f32 %v6770, %v6802
        %v6811 = vpack.c.bf16 %v6804, %v6803
        %v6812 = vpack.c.bf16 %v6806, %v6805
        %v6813 = vpack.c.bf16 %v6808, %v6807
        %v6814 = vpack.c.bf16 %v6810, %v6809
        %6815 = vrot.lane.b32.xlu0 %v5756, 32
        %v6816 = vpop.permute.xlu0 %6815
        %6817 = vrot.lane.b32.xlu0 %v5757, 32
        %v6818 = vpop.permute.xlu0 %6817
        %6819 = vrot.lane.b32.xlu0 %v5758, 32
        %v6820 = vpop.permute.xlu0 %6819
        %6821 = vrot.lane.b32.xlu0 %v5759, 32
        %v6822 = vpop.permute.xlu0 %6821
        %v6828 = vsel %vm2876, %v6811, 0
        %v6831 = vsel %vm2876, %v6812, 0
        %v6834 = vsel %vm2876, %v6813, 0
        %v6837 = vsel %vm2876, %v6814, 0
        %6839 = vmatprep.subr.bf16.mxu0 0
        %6840 = vmatpush1.bf16.msra.mxu0 %v6816
        %6841 = vmatprep.subr.bf16.mxu0 0
        %6842 = vmatpush1.bf16.msra.mxu0 %v6818
        %6843 = vmatprep.subr.bf16.mxu0 0
        %6844 = vmatpush1.bf16.msra.mxu0 %v6820
        %6845 = vmatprep.subr.bf16.mxu0 0
        %6846 = vmatpush1.bf16.msra.mxu0 %v6822
        %6847 = vmatprep.subr.bf16.mxu0 0
        %6848 = vmatpush1.bf16.msra.mxu0 0
        %6849 = vmatprep.subr.bf16.mxu0 0
        %6850 = vmatpush1.bf16.msra.mxu0 0
        %6851 = vmatprep.subr.bf16.mxu0 0
        %6852 = vmatpush1.bf16.msra.mxu0 0
        %6853 = vmatprep.subr.bf16.mxu0 0
        %6854 = vmatpush1.bf16.msra.mxu0 0
        %6855 = vmatprep.subr.bf16.mxu0 0
        %6856 = vmatpush1.bf16.msra.mxu0 0
        %6857 = vmatprep.subr.bf16.mxu0 0
        %6858 = vmatpush1.bf16.msra.mxu0 0
        %6859 = vmatprep.subr.bf16.mxu0 0
        %6860 = vmatpush1.bf16.msra.mxu0 0
        %6861 = vmatprep.subr.bf16.mxu0 0
        %6862 = vmatpush1.bf16.msra.mxu0 0
        %6863 = vmatprep.subr.bf16.mxu0 0
        %6864 = vmatpush1.bf16.msra.mxu0 0
        %6865 = vmatprep.subr.bf16.mxu0 0
        %6866 = vmatpush1.bf16.msra.mxu0 0
        %6867 = vmatprep.subr.bf16.mxu0 0
        %6868 = vmatpush1.bf16.msra.mxu0 0
        %6869 = vmatprep.subr.bf16.mxu0 0
        %6870 = vmatpush1.bf16.msra.mxu0 0
        %6871 = vmatprep.mubr.bf16.mxu0 0
        %6872 = vmatmul.mubr.bf16.gmra.mrb[0].mxu0 %v6828
        %v6873 = vpop.f32.mrb[0].mxu0
        %v6874 = vadd.f32 0.0, %v6873
        %v6875 = vpop.f32.mrb[0].mxu0
        %v6876 = vpop.f32.mrb[0].mxu0
        %v6877 = vadd.f32 0.0, %v6876
        %v6878 = vpop.f32.mrb[0].mxu0
        %6879 = vmatprep.mubr.bf16.mxu0 0
        %6880 = vmatmul.mubr.bf16.gmra.mrb[0].mxu0 %v6831
        %v6881 = vpop.f32.mrb[0].mxu0
        %v6882 = vadd.f32 0.0, %v6881
        %v6883 = vpop.f32.mrb[0].mxu0
        %v6884 = vpop.f32.mrb[0].mxu0
        %v6885 = vadd.f32 0.0, %v6884
        %v6886 = vpop.f32.mrb[0].mxu0
        %6887 = vmatprep.mubr.bf16.mxu0 0
        %6888 = vmatmul.mubr.bf16.gmra.mrb[0].mxu0 %v6834
        %v6889 = vpop.f32.mrb[0].mxu0
        %v6890 = vadd.f32 0.0, %v6889
        %v6891 = vpop.f32.mrb[0].mxu0
        %v6892 = vpop.f32.mrb[0].mxu0
        %v6893 = vadd.f32 0.0, %v6892
        %v6894 = vpop.f32.mrb[0].mxu0
        %6895 = vmatprep.mubr.bf16.mxu0 0
        %6896 = vmatmul.mubr.bf16.gmra.mrb[0].mxu0 %v6837
        %v6897 = vpop.f32.mrb[0].mxu0
        %v6898 = vadd.f32 0.0, %v6897
        %v6899 = vpop.f32.mrb[0].mxu0
        %v6900 = vpop.f32.mrb[0].mxu0
        %v6901 = vadd.f32 0.0, %v6900
        %v6902 = vpop.f32.mrb[0].mxu0
        %6903 = vdwg.mxu0
        %v6904 = vpack.c.bf16 %v6877, %v6874
        %v6905 = vpack.c.bf16 %v6885, %v6882
        %v6906 = vpack.c.bf16 %v6893, %v6890
        %v6907 = vpack.c.bf16 %v6901, %v6898
        %6912 = vrot.lane.b32.xlu0 %v6324, 32
        %v6913 = vpop.permute.xlu0 %6912
        %6914 = vrot.lane.b32.xlu0 %v6325, 32
        %v6915 = vpop.permute.xlu0 %6914
        %6916 = vrot.lane.b32.xlu0 %v6326, 32
        %v6917 = vpop.permute.xlu0 %6916
        %6918 = vrot.lane.b32.xlu0 %v6327, 32
        %v6919 = vpop.permute.xlu0 %6918
        %6924 = vrot.lane.b32.xlu0 %v6614, 64
        %v6925 = vpop.permute.xlu0 %6924
        %6926 = vrot.lane.b32.xlu0 %v6615, 64
        %v6927 = vpop.permute.xlu0 %6926
        %6928 = vrot.lane.b32.xlu0 %v6616, 64
        %v6929 = vpop.permute.xlu0 %6928
        %6930 = vrot.lane.b32.xlu0 %v6617, 64
        %v6931 = vpop.permute.xlu0 %6930
        %6936 = vrot.lane.b32.xlu0 %v6904, 96
        %v6937 = vpop.permute.xlu0 %6936
        %6938 = vrot.lane.b32.xlu0 %v6905, 96
        %v6939 = vpop.permute.xlu0 %6938
        %6940 = vrot.lane.b32.xlu0 %v6906, 96
        %v6941 = vpop.permute.xlu0 %6940
        %6942 = vrot.lane.b32.xlu0 %v6907, 96
        %v6943 = vpop.permute.xlu0 %6942
        %v6946 = vsel %vm2786, %v6022, %v6913
        %v6949 = vsel %vm2786, %v6023, %v6915
        %v6952 = vsel %vm2786, %v6024, %v6917
        %v6955 = vsel %vm2786, %v6025, %v6919
        %v6957 = vsel %vm2876, %v6946, %v6925
        %v6959 = vsel %vm2876, %v6949, %v6927
        %v6961 = vsel %vm2876, %v6952, %v6929
        %v6963 = vsel %vm2876, %v6955, %v6931
        %v6965 = vsel %vm3988, %v6957, %v6937
        %v6968 = vsel %vm3988, %v6959, %v6939
        %v6971 = vsel %vm3988, %v6961, %v6941
        %v6974 = vsel %vm3988, %v6963, %v6943
        %6976 = vmatprep.subr.bf16.mxu0 0
        %6977 = vmatpush1.bf16.msra.mxu0 %v4033
        %6978 = vmatprep.subr.bf16.mxu0 0
        %6979 = vmatpush1.bf16.msra.mxu0 %v4034
        %6980 = vmatprep.subr.bf16.mxu0 0
        %6981 = vmatpush1.bf16.msra.mxu0 %v4035
        %6982 = vmatprep.subr.bf16.mxu0 0
        %6983 = vmatpush1.bf16.msra.mxu0 %v4036
        %6984 = vmatprep.subr.bf16.mxu0 0
        %6985 = vmatpush1.bf16.msra.mxu0 %v4037
        %6986 = vmatprep.subr.bf16.mxu0 0
        %6987 = vmatpush1.bf16.msra.mxu0 %v4038
        %6988 = vmatprep.subr.bf16.mxu0 0
        %6989 = vmatpush1.bf16.msra.mxu0 %v4039
        %6990 = vmatprep.subr.bf16.mxu0 0
        %6991 = vmatpush1.bf16.msra.mxu0 %v4040
        %6992 = vmatprep.subr.bf16.mxu0 0
        %6993 = vmatpush1.bf16.msra.mxu0 0
        %6994 = vmatprep.subr.bf16.mxu0 0
        %6995 = vmatpush1.bf16.msra.mxu0 0
        %6996 = vmatprep.subr.bf16.mxu0 0
        %6997 = vmatpush1.bf16.msra.mxu0 0
        %6998 = vmatprep.subr.bf16.mxu0 0
        %6999 = vmatpush1.bf16.msra.mxu0 0
        %7000 = vmatprep.subr.bf16.mxu0 0
        %7001 = vmatpush1.bf16.msra.mxu0 0
        %7002 = vmatprep.subr.bf16.mxu0 0
        %7003 = vmatpush1.bf16.msra.mxu0 0
        %7004 = vmatprep.subr.bf16.mxu0 0
        %7005 = vmatpush1.bf16.msra.mxu0 0
        %7006 = vmatprep.subr.bf16.mxu0 0
        %7007 = vmatpush1.bf16.msra.mxu0 0
        %7008 = vmatprep.mubr.bf16.mxu0 0
        %7009 = vmatmul.mubr.bf16.gmra.mrb[0].mxu0 %v6965
        %v7010 = vpop.f32.mrb[0].mxu0
        %v7011 = vadd.f32 0.0, %v7010
        %v7012 = vpop.f32.mrb[0].mxu0
        %v7013 = vpop.f32.mrb[0].mxu0
        %v7014 = vadd.f32 0.0, %v7013
        %v7015 = vpop.f32.mrb[0].mxu0
        %7016 = vmatprep.mubr.bf16.mxu0 0
        %7017 = vmatmul.mubr.bf16.gmra.mrb[0].mxu0 %v6968
        %v7018 = vpop.f32.mrb[0].mxu0
        %v7019 = vadd.f32 0.0, %v7018
        %v7020 = vpop.f32.mrb[0].mxu0
        %v7021 = vpop.f32.mrb[0].mxu0
        %v7022 = vadd.f32 0.0, %v7021
        %v7023 = vpop.f32.mrb[0].mxu0
        %7024 = vmatprep.mubr.bf16.mxu0 0
        %7025 = vmatmul.mubr.bf16.gmra.mrb[0].mxu0 %v6971
        %v7026 = vpop.f32.mrb[0].mxu0
        %v7027 = vadd.f32 0.0, %v7026
        %v7028 = vpop.f32.mrb[0].mxu0
        %v7029 = vpop.f32.mrb[0].mxu0
        %v7030 = vadd.f32 0.0, %v7029
        %v7031 = vpop.f32.mrb[0].mxu0
        %7032 = vmatprep.mubr.bf16.mxu0 0
        %7033 = vmatmul.mubr.bf16.gmra.mrb[0].mxu0 %v6974
        %v7034 = vpop.f32.mrb[0].mxu0
        %v7035 = vadd.f32 0.0, %v7034
        %v7036 = vpop.f32.mrb[0].mxu0
        %v7037 = vpop.f32.mrb[0].mxu0
        %v7038 = vadd.f32 0.0, %v7037
        %v7039 = vpop.f32.mrb[0].mxu0
        %7040 = vdwg.mxu0
        %v7041 = vadd.f32 %v5484, %v7011
        %v7042 = vadd.f32 %v5485, %v7014
        %v7043 = vadd.f32 %v5486, %v7019
        %v7044 = vadd.f32 %v5487, %v7022
        %v7045 = vadd.f32 %v5488, %v7027
        %v7046 = vadd.f32 %v5489, %v7030
        %v7047 = vadd.f32 %v5490, %v7035
        %v7048 = vadd.f32 %v5491, %v7038
        %v7049 = vadd.f32 %v7041, %v4126
        %v7050 = vadd.f32 %v7042, %v4126
        %v7051 = vadd.f32 %v7043, %v4126
        %v7052 = vadd.f32 %v7044, %v4126
        %v7053 = vadd.f32 %v7045, %v4126
        %v7054 = vadd.f32 %v7046, %v4126
        %v7055 = vadd.f32 %v7047, %v4126
        %v7056 = vadd.f32 %v7048, %v4126
        %7057 = vst [vmem:[%s5483] sm:$0xff] %v7049
        %7058 = vst [vmem:[%s5483 + $0x8] sm:$0xff] %v7050
        %7059 = vst [vmem:[%s5483 + $0x10] sm:$0xff] %v7051
        %7060 = vst [vmem:[%s5483 + $0x18] sm:$0xff] %v7052
        %7061 = vst [vmem:[%s5483 + $0x20] sm:$0xff] %v7053
        %7062 = vst [vmem:[%s5483 + $0x28] sm:$0xff] %v7054
        %7063 = vst [vmem:[%s5483 + $0x30] sm:$0xff] %v7055
        %7064 = vst [vmem:[%s5483 + $0x38] sm:$0xff] %v7056
        %v7065 = vld [vmem:[%s5483] sm:$0xff]
        %v7066 = vld [vmem:[%s5483 + $0x8] sm:$0xff]
        %v7067 = vld [vmem:[%s5483 + $0x10] sm:$0xff]
        %v7068 = vld [vmem:[%s5483 + $0x18] sm:$0xff]
        %v7069 = vld [vmem:[%s5483 + $0x20] sm:$0xff]
        %v7070 = vld [vmem:[%s5483 + $0x28] sm:$0xff]
        %v7071 = vld [vmem:[%s5483 + $0x30] sm:$0xff]
        %v7072 = vld [vmem:[%s5483 + $0x38] sm:$0xff]
        %v7073 = vld [vmem:[%s954] sm:$0x1]
        %v7074 = vld [vmem:[%s962] sm:$0x1]
        %7075 = vadd.xlane.f32.xlu0 %v7065
        %v7076 = vpop.xlane.xlu0 %7075
        %7077 = vadd.xlane.f32.xlu0 %v7066
        %v7078 = vpop.xlane.xlu0 %7077
        %7079 = vadd.xlane.f32.xlu0 %v7067
        %v7080 = vpop.xlane.xlu0 %7079
        %7081 = vadd.xlane.f32.xlu0 %v7068
        %v7082 = vpop.xlane.xlu0 %7081
        %7083 = vadd.xlane.f32.xlu0 %v7069
        %v7084 = vpop.xlane.xlu0 %7083
        %7085 = vadd.xlane.f32.xlu0 %v7070
        %v7086 = vpop.xlane.xlu0 %7085
        %7087 = vadd.xlane.f32.xlu0 %v7071
        %v7088 = vpop.xlane.xlu0 %7087
        %7089 = vadd.xlane.f32.xlu0 %v7072
        %v7090 = vpop.xlane.xlu0 %7089
        %v7091 = vmul.f32 %v7076, %v2403
        %v7092 = vmul.f32 %v7078, %v2403
        %v7093 = vmul.f32 %v7080, %v2403
        %v7094 = vmul.f32 %v7082, %v2403
        %v7095 = vmul.f32 %v7084, %v2403
        %v7096 = vmul.f32 %v7086, %v2403
        %v7097 = vmul.f32 %v7088, %v2403
        %v7098 = vmul.f32 %v7090, %v2403
        %v7099 = vsub.f32 %v7065, %v7091
        %v7100 = vsub.f32 %v7066, %v7092
        %v7101 = vsub.f32 %v7067, %v7093
        %v7102 = vsub.f32 %v7068, %v7094
        %v7103 = vsub.f32 %v7069, %v7095
        %v7104 = vsub.f32 %v7070, %v7096
        %v7105 = vsub.f32 %v7071, %v7097
        %v7106 = vsub.f32 %v7072, %v7098
        %v7107 = vmul.f32 %v7099, %v7099
        %v7108 = vmul.f32 %v7100, %v7100
        %v7109 = vmul.f32 %v7101, %v7101
        %v7110 = vmul.f32 %v7102, %v7102
        %v7111 = vmul.f32 %v7103, %v7103
        %v7112 = vmul.f32 %v7104, %v7104
        %v7113 = vmul.f32 %v7105, %v7105
        %v7114 = vmul.f32 %v7106, %v7106
        %7115 = vadd.xlane.f32.xlu0 %v7107
        %v7116 = vpop.xlane.xlu0 %7115
        %7117 = vadd.xlane.f32.xlu0 %v7108
        %v7118 = vpop.xlane.xlu0 %7117
        %7119 = vadd.xlane.f32.xlu0 %v7109
        %v7120 = vpop.xlane.xlu0 %7119
        %7121 = vadd.xlane.f32.xlu0 %v7110
        %v7122 = vpop.xlane.xlu0 %7121
        %7123 = vadd.xlane.f32.xlu0 %v7111
        %v7124 = vpop.xlane.xlu0 %7123
        %7125 = vadd.xlane.f32.xlu0 %v7112
        %v7126 = vpop.xlane.xlu0 %7125
        %7127 = vadd.xlane.f32.xlu0 %v7113
        %v7128 = vpop.xlane.xlu0 %7127
        %7129 = vadd.xlane.f32.xlu0 %v7114
        %v7130 = vpop.xlane.xlu0 %7129
        %v7131 = vmul.f32 %v7116, %v2403
        %v7132 = vmul.f32 %v7118, %v2403
        %v7133 = vmul.f32 %v7120, %v2403
        %v7134 = vmul.f32 %v7122, %v2403
        %v7135 = vmul.f32 %v7124, %v2403
        %v7136 = vmul.f32 %v7126, %v2403
        %v7137 = vmul.f32 %v7128, %v2403
        %v7138 = vmul.f32 %v7130, %v2403
        %v7139 = vadd.f32 %v7131, 1e-05
        %v7140 = vadd.f32 %v7132, 1e-05
        %v7141 = vadd.f32 %v7133, 1e-05
        %v7142 = vadd.f32 %v7134, 1e-05
        %v7143 = vadd.f32 %v7135, 1e-05
        %v7144 = vadd.f32 %v7136, 1e-05
        %v7145 = vadd.f32 %v7137, 1e-05
        %v7146 = vadd.f32 %v7138, 1e-05
        %v7147 = vrsqrt.pop %v7139
        %v7148 = vrsqrt.pop %v7140
        %v7149 = vrsqrt.pop %v7141
        %v7150 = vrsqrt.pop %v7142
        %v7151 = vrsqrt.pop %v7143
        %v7152 = vrsqrt.pop %v7144
        %v7153 = vrsqrt.pop %v7145
        %v7154 = vrsqrt.pop %v7146
        %v7155 = vmul.f32 %v7099, %v7147
        %v7156 = vmul.f32 %v7100, %v7148
        %v7157 = vmul.f32 %v7101, %v7149
        %v7158 = vmul.f32 %v7102, %v7150
        %v7159 = vmul.f32 %v7103, %v7151
        %v7160 = vmul.f32 %v7104, %v7152
        %v7161 = vmul.f32 %v7105, %v7153
        %v7162 = vmul.f32 %v7106, %v7154
        %v7164 = vlaneseq
        %v7165 = vshrl.u32 %v7164, 7
        %v7166 = vsub.s32 0, %v7165
        %v7167 = vrot.slane %v7073, %v7166
        %v7169 = vmul.f32 %v7155, %v7167
        %v7170 = vmul.f32 %v7156, %v7167
        %v7171 = vmul.f32 %v7157, %v7167
        %v7172 = vmul.f32 %v7158, %v7167
        %v7173 = vmul.f32 %v7159, %v7167
        %v7174 = vmul.f32 %v7160, %v7167
        %v7175 = vmul.f32 %v7161, %v7167
        %v7176 = vmul.f32 %v7162, %v7167
        %v7178 = vlaneseq
        %v7179 = vshrl.u32 %v7178, 7
        %v7180 = vsub.s32 0, %v7179
        %v7181 = vrot.slane %v7074, %v7180
        %v7183 = vadd.f32 %v7169, %v7181
        %v7184 = vadd.f32 %v7170, %v7181
        %v7185 = vadd.f32 %v7171, %v7181
        %v7186 = vadd.f32 %v7172, %v7181
        %v7187 = vadd.f32 %v7173, %v7181
        %v7188 = vadd.f32 %v7174, %v7181
        %v7189 = vadd.f32 %v7175, %v7181
        %v7190 = vadd.f32 %v7176, %v7181
        %v7191 = vpack.c.bf16 %v7184, %v7183
        %v7192 = vpack.c.bf16 %v7186, %v7185
        %v7193 = vpack.c.bf16 %v7188, %v7187
        %v7194 = vpack.c.bf16 %v7190, %v7189
        %v7195 = vld [vmem:[%s980] sm:$0xf]
        %v7197 = vlaneseq
        %v7198 = vshrl.u32 %v7197, 7
        %v7199 = vsub.s32 0, %v7198
        %v7200 = vrot.slane %v7195, %v7199
        %v7201 = vlaneseq
        %v7202 = vshrl.u32 %v7201, 7
        %v7203 = vsub.s32 1, %v7202
        %v7204 = vrot.slane %v7195, %v7203
        %v7205 = vlaneseq
        %v7206 = vshrl.u32 %v7205, 7
        %v7207 = vsub.s32 2, %v7206
        %v7208 = vrot.slane %v7195, %v7207
        %v7209 = vlaneseq
        %v7210 = vshrl.u32 %v7209, 7
        %v7211 = vsub.s32 3, %v7210
        %v7212 = vrot.slane %v7195, %v7211
        %7217 = vmatprep.subr.bf16.mxu0 %v4393
        %7218 = vmatpush1.bf16.msra.mxu0 %v4392
        %7219 = vmatprep.subr.bf16.mxu0 %v4397
        %7220 = vmatpush1.bf16.msra.mxu0 %v4396
        %7221 = vmatprep.subr.bf16.mxu0 %v4401
        %7222 = vmatpush1.bf16.msra.mxu0 %v4400
        %7223 = vmatprep.subr.bf16.mxu0 %v4405
        %7224 = vmatpush1.bf16.msra.mxu0 %v4404
        %7225 = vmatprep.subr.bf16.mxu0 %v4409
        %7226 = vmatpush1.bf16.msra.mxu0 %v4408
        %7227 = vmatprep.subr.bf16.mxu0 %v4413
        %7228 = vmatpush1.bf16.msra.mxu0 %v4412
        %7229 = vmatprep.subr.bf16.mxu0 %v4417
        %7230 = vmatpush1.bf16.msra.mxu0 %v4416
        %7231 = vmatprep.subr.bf16.mxu0 %v4421
        %7232 = vmatpush1.bf16.msra.mxu0 %v4420
        %7233 = vmatprep.subr.bf16.mxu0 0
        %7234 = vmatpush1.bf16.msra.mxu0 0
        %7235 = vmatprep.subr.bf16.mxu0 0
        %7236 = vmatpush1.bf16.msra.mxu0 0
        %7237 = vmatprep.subr.bf16.mxu0 0
        %7238 = vmatpush1.bf16.msra.mxu0 0
        %7239 = vmatprep.subr.bf16.mxu0 0
        %7240 = vmatpush1.bf16.msra.mxu0 0
        %7241 = vmatprep.subr.bf16.mxu0 0
        %7242 = vmatpush1.bf16.msra.mxu0 0
        %7243 = vmatprep.subr.bf16.mxu0 0
        %7244 = vmatpush1.bf16.msra.mxu0 0
        %7245 = vmatprep.subr.bf16.mxu0 0
        %7246 = vmatpush1.bf16.msra.mxu0 0
        %7247 = vmatprep.subr.bf16.mxu0 0
        %7248 = vmatpush1.bf16.msra.mxu0 0
        %7249 = vmatprep.mubr.bf16.mxu0 0
        %7250 = vmatmul.mubr.bf16.gmra.mrb[0].mxu0 %v7191
        %v7251 = vpop.f32.mrb[0].mxu0
        %v7252 = vadd.f32 %v7200, %v7251
        %v7253 = vpop.f32.mrb[0].mxu0
        %v7254 = vadd.f32 %v7204, %v7253
        %v7255 = vpop.f32.mrb[0].mxu0
        %v7256 = vadd.f32 %v7200, %v7255
        %v7257 = vpop.f32.mrb[0].mxu0
        %v7258 = vadd.f32 %v7204, %v7257
        %7259 = vmatprep.mubr.bf16.mxu0 0
        %7260 = vmatmul.mubr.bf16.gmra.mrb[0].mxu0 %v7192
        %v7261 = vpop.f32.mrb[0].mxu0
        %v7262 = vadd.f32 %v7200, %v7261
        %v7263 = vpop.f32.mrb[0].mxu0
        %v7264 = vadd.f32 %v7204, %v7263
        %v7265 = vpop.f32.mrb[0].mxu0
        %v7266 = vadd.f32 %v7200, %v7265
        %v7267 = vpop.f32.mrb[0].mxu0
        %v7268 = vadd.f32 %v7204, %v7267
        %7269 = vmatprep.mubr.bf16.mxu0 0
        %7270 = vmatmul.mubr.bf16.gmra.mrb[0].mxu0 %v7193
        %v7271 = vpop.f32.mrb[0].mxu0
        %v7272 = vadd.f32 %v7200, %v7271
        %v7273 = vpop.f32.mrb[0].mxu0
        %v7274 = vadd.f32 %v7204, %v7273
        %v7275 = vpop.f32.mrb[0].mxu0
        %v7276 = vadd.f32 %v7200, %v7275
        %v7277 = vpop.f32.mrb[0].mxu0
        %v7278 = vadd.f32 %v7204, %v7277
        %7279 = vmatprep.mubr.bf16.mxu0 0
        %7280 = vmatmul.mubr.bf16.gmra.mrb[0].mxu0 %v7194
        %v7281 = vpop.f32.mrb[0].mxu0
        %v7282 = vadd.f32 %v7200, %v7281
        %v7283 = vpop.f32.mrb[0].mxu0
        %v7284 = vadd.f32 %v7204, %v7283
        %v7285 = vpop.f32.mrb[0].mxu0
        %v7286 = vadd.f32 %v7200, %v7285
        %v7287 = vpop.f32.mrb[0].mxu0
        %v7288 = vadd.f32 %v7204, %v7287
        %7289 = vdwg.mxu0
        %7290 = vmatprep.subr.bf16.mxu0 %v4395
        %7291 = vmatpush1.bf16.msra.mxu0 %v4394
        %7292 = vmatprep.subr.bf16.mxu0 %v4399
        %7293 = vmatpush1.bf16.msra.mxu0 %v4398
        %7294 = vmatprep.subr.bf16.mxu0 %v4403
        %7295 = vmatpush1.bf16.msra.mxu0 %v4402
        %7296 = vmatprep.subr.bf16.mxu0 %v4407
        %7297 = vmatpush1.bf16.msra.mxu0 %v4406
        %7298 = vmatprep.subr.bf16.mxu0 %v4411
        %7299 = vmatpush1.bf16.msra.mxu0 %v4410
        %7300 = vmatprep.subr.bf16.mxu0 %v4415
        %7301 = vmatpush1.bf16.msra.mxu0 %v4414
        %7302 = vmatprep.subr.bf16.mxu0 %v4419
        %7303 = vmatpush1.bf16.msra.mxu0 %v4418
        %7304 = vmatprep.subr.bf16.mxu0 %v4423
        %7305 = vmatpush1.bf16.msra.mxu0 %v4422
        %7306 = vmatprep.subr.bf16.mxu0 0
        %7307 = vmatpush1.bf16.msra.mxu0 0
        %7308 = vmatprep.subr.bf16.mxu0 0
        %7309 = vmatpush1.bf16.msra.mxu0 0
        %7310 = vmatprep.subr.bf16.mxu0 0
        %7311 = vmatpush1.bf16.msra.mxu0 0
        %7312 = vmatprep.subr.bf16.mxu0 0
        %7313 = vmatpush1.bf16.msra.mxu0 0
        %7314 = vmatprep.subr.bf16.mxu0 0
        %7315 = vmatpush1.bf16.msra.mxu0 0
        %7316 = vmatprep.subr.bf16.mxu0 0
        %7317 = vmatpush1.bf16.msra.mxu0 0
        %7318 = vmatprep.subr.bf16.mxu0 0
        %7319 = vmatpush1.bf16.msra.mxu0 0
        %7320 = vmatprep.subr.bf16.mxu0 0
        %7321 = vmatpush1.bf16.msra.mxu0 0
        %7322 = vmatprep.mubr.bf16.mxu0 0
        %7323 = vmatmul.mubr.bf16.gmra.mrb[0].mxu0 %v7191
        %v7324 = vpop.f32.mrb[0].mxu0
        %v7325 = vadd.f32 %v7208, %v7324
        %v7326 = vpop.f32.mrb[0].mxu0
        %v7327 = vadd.f32 %v7212, %v7326
        %v7328 = vpop.f32.mrb[0].mxu0
        %v7329 = vadd.f32 %v7208, %v7328
        %v7330 = vpop.f32.mrb[0].mxu0
        %v7331 = vadd.f32 %v7212, %v7330
        %7332 = vmatprep.mubr.bf16.mxu0 0
        %7333 = vmatmul.mubr.bf16.gmra.mrb[0].mxu0 %v7192
        %v7334 = vpop.f32.mrb[0].mxu0
        %v7335 = vadd.f32 %v7208, %v7334
        %v7336 = vpop.f32.mrb[0].mxu0
        %v7337 = vadd.f32 %v7212, %v7336
        %v7338 = vpop.f32.mrb[0].mxu0
        %v7339 = vadd.f32 %v7208, %v7338
        %v7340 = vpop.f32.mrb[0].mxu0
        %v7341 = vadd.f32 %v7212, %v7340
        %7342 = vmatprep.mubr.bf16.mxu0 0
        %7343 = vmatmul.mubr.bf16.gmra.mrb[0].mxu0 %v7193
        %v7344 = vpop.f32.mrb[0].mxu0
        %v7345 = vadd.f32 %v7208, %v7344
        %v7346 = vpop.f32.mrb[0].mxu0
        %v7347 = vadd.f32 %v7212, %v7346
        %v7348 = vpop.f32.mrb[0].mxu0
        %v7349 = vadd.f32 %v7208, %v7348
        %v7350 = vpop.f32.mrb[0].mxu0
        %v7351 = vadd.f32 %v7212, %v7350
        %7352 = vmatprep.mubr.bf16.mxu0 0
        %7353 = vmatmul.mubr.bf16.gmra.mrb[0].mxu0 %v7194
        %v7354 = vpop.f32.mrb[0].mxu0
        %v7355 = vadd.f32 %v7208, %v7354
        %v7356 = vpop.f32.mrb[0].mxu0
        %v7357 = vadd.f32 %v7212, %v7356
        %v7358 = vpop.f32.mrb[0].mxu0
        %v7359 = vadd.f32 %v7208, %v7358
        %v7360 = vpop.f32.mrb[0].mxu0
        %v7361 = vadd.f32 %v7212, %v7360
        %7362 = vdwg.mxu0
        %v7363 = vld [vmem:[%s1120] sm:$0xf]
        %v7365 = vlaneseq
        %v7366 = vshrl.u32 %v7365, 7
        %v7367 = vsub.s32 0, %v7366
        %v7368 = vrot.slane %v7363, %v7367
        %v7369 = vlaneseq
        %v7370 = vshrl.u32 %v7369, 7
        %v7371 = vsub.s32 1, %v7370
        %v7372 = vrot.slane %v7363, %v7371
        %v7373 = vlaneseq
        %v7374 = vshrl.u32 %v7373, 7
        %v7375 = vsub.s32 2, %v7374
        %v7376 = vrot.slane %v7363, %v7375
        %v7377 = vlaneseq
        %v7378 = vshrl.u32 %v7377, 7
        %v7379 = vsub.s32 3, %v7378
        %v7380 = vrot.slane %v7363, %v7379
        %7385 = vmatprep.subr.bf16.mxu0 %v4721
        %7386 = vmatpush1.bf16.msra.mxu0 %v4720
        %7387 = vmatprep.subr.bf16.mxu0 %v4725
        %7388 = vmatpush1.bf16.msra.mxu0 %v4724
        %7389 = vmatprep.subr.bf16.mxu0 %v4729
        %7390 = vmatpush1.bf16.msra.mxu0 %v4728
        %7391 = vmatprep.subr.bf16.mxu0 %v4733
        %7392 = vmatpush1.bf16.msra.mxu0 %v4732
        %7393 = vmatprep.subr.bf16.mxu0 %v4737
        %7394 = vmatpush1.bf16.msra.mxu0 %v4736
        %7395 = vmatprep.subr.bf16.mxu0 %v4741
        %7396 = vmatpush1.bf16.msra.mxu0 %v4740
        %7397 = vmatprep.subr.bf16.mxu0 %v4745
        %7398 = vmatpush1.bf16.msra.mxu0 %v4744
        %7399 = vmatprep.subr.bf16.mxu0 %v4749
        %7400 = vmatpush1.bf16.msra.mxu0 %v4748
        %7401 = vmatprep.subr.bf16.mxu0 0
        %7402 = vmatpush1.bf16.msra.mxu0 0
        %7403 = vmatprep.subr.bf16.mxu0 0
        %7404 = vmatpush1.bf16.msra.mxu0 0
        %7405 = vmatprep.subr.bf16.mxu0 0
        %7406 = vmatpush1.bf16.msra.mxu0 0
        %7407 = vmatprep.subr.bf16.mxu0 0
        %7408 = vmatpush1.bf16.msra.mxu0 0
        %7409 = vmatprep.subr.bf16.mxu0 0
        %7410 = vmatpush1.bf16.msra.mxu0 0
        %7411 = vmatprep.subr.bf16.mxu0 0
        %7412 = vmatpush1.bf16.msra.mxu0 0
        %7413 = vmatprep.subr.bf16.mxu0 0
        %7414 = vmatpush1.bf16.msra.mxu0 0
        %7415 = vmatprep.subr.bf16.mxu0 0
        %7416 = vmatpush1.bf16.msra.mxu0 0
        %7417 = vmatprep.mubr.bf16.mxu0 0
        %7418 = vmatmul.mubr.bf16.gmra.mrb[0].mxu0 %v7191
        %v7419 = vpop.f32.mrb[0].mxu0
        %v7420 = vadd.f32 %v7368, %v7419
        %v7421 = vpop.f32.mrb[0].mxu0
        %v7422 = vadd.f32 %v7372, %v7421
        %v7423 = vpop.f32.mrb[0].mxu0
        %v7424 = vadd.f32 %v7368, %v7423
        %v7425 = vpop.f32.mrb[0].mxu0
        %v7426 = vadd.f32 %v7372, %v7425
        %7427 = vmatprep.mubr.bf16.mxu0 0
        %7428 = vmatmul.mubr.bf16.gmra.mrb[0].mxu0 %v7192
        %v7429 = vpop.f32.mrb[0].mxu0
        %v7430 = vadd.f32 %v7368, %v7429
        %v7431 = vpop.f32.mrb[0].mxu0
        %v7432 = vadd.f32 %v7372, %v7431
        %v7433 = vpop.f32.mrb[0].mxu0
        %v7434 = vadd.f32 %v7368, %v7433
        %v7435 = vpop.f32.mrb[0].mxu0
        %v7436 = vadd.f32 %v7372, %v7435
        %7437 = vmatprep.mubr.bf16.mxu0 0
        %7438 = vmatmul.mubr.bf16.gmra.mrb[0].mxu0 %v7193
        %v7439 = vpop.f32.mrb[0].mxu0
        %v7440 = vadd.f32 %v7368, %v7439
        %v7441 = vpop.f32.mrb[0].mxu0
        %v7442 = vadd.f32 %v7372, %v7441
        %v7443 = vpop.f32.mrb[0].mxu0
        %v7444 = vadd.f32 %v7368, %v7443
        %v7445 = vpop.f32.mrb[0].mxu0
        %v7446 = vadd.f32 %v7372, %v7445
        %7447 = vmatprep.mubr.bf16.mxu0 0
        %7448 = vmatmul.mubr.bf16.gmra.mrb[0].mxu0 %v7194
        %v7449 = vpop.f32.mrb[0].mxu0
        %v7450 = vadd.f32 %v7368, %v7449
        %v7451 = vpop.f32.mrb[0].mxu0
        %v7452 = vadd.f32 %v7372, %v7451
        %v7453 = vpop.f32.mrb[0].mxu0
        %v7454 = vadd.f32 %v7368, %v7453
        %v7455 = vpop.f32.mrb[0].mxu0
        %v7456 = vadd.f32 %v7372, %v7455
        %7457 = vdwg.mxu0
        %7458 = vmatprep.subr.bf16.mxu0 %v4723
        %7459 = vmatpush1.bf16.msra.mxu0 %v4722
        %7460 = vmatprep.subr.bf16.mxu0 %v4727
        %7461 = vmatpush1.bf16.msra.mxu0 %v4726
        %7462 = vmatprep.subr.bf16.mxu0 %v4731
        %7463 = vmatpush1.bf16.msra.mxu0 %v4730
        %7464 = vmatprep.subr.bf16.mxu0 %v4735
        %7465 = vmatpush1.bf16.msra.mxu0 %v4734
        %7466 = vmatprep.subr.bf16.mxu0 %v4739
        %7467 = vmatpush1.bf16.msra.mxu0 %v4738
        %7468 = vmatprep.subr.bf16.mxu0 %v4743
        %7469 = vmatpush1.bf16.msra.mxu0 %v4742
        %7470 = vmatprep.subr.bf16.mxu0 %v4747
        %7471 = vmatpush1.bf16.msra.mxu0 %v4746
        %7472 = vmatprep.subr.bf16.mxu0 %v4751
        %7473 = vmatpush1.bf16.msra.mxu0 %v4750
        %7474 = vmatprep.subr.bf16.mxu0 0
        %7475 = vmatpush1.bf16.msra.mxu0 0
        %7476 = vmatprep.subr.bf16.mxu0 0
        %7477 = vmatpush1.bf16.msra.mxu0 0
        %7478 = vmatprep.subr.bf16.mxu0 0
        %7479 = vmatpush1.bf16.msra.mxu0 0
        %7480 = vmatprep.subr.bf16.mxu0 0
        %7481 = vmatpush1.bf16.msra.mxu0 0
        %7482 = vmatprep.subr.bf16.mxu0 0
        %7483 = vmatpush1.bf16.msra.mxu0 0
        %7484 = vmatprep.subr.bf16.mxu0 0
        %7485 = vmatpush1.bf16.msra.mxu0 0
        %7486 = vmatprep.subr.bf16.mxu0 0
        %7487 = vmatpush1.bf16.msra.mxu0 0
        %7488 = vmatprep.subr.bf16.mxu0 0
        %7489 = vmatpush1.bf16.msra.mxu0 0
        %7490 = vmatprep.mubr.bf16.mxu0 0
        %7491 = vmatmul.mubr.bf16.gmra.mrb[0].mxu0 %v7191
        %v7492 = vpop.f32.mrb[0].mxu0
        %v7493 = vadd.f32 %v7376, %v7492
        %v7494 = vpop.f32.mrb[0].mxu0
        %v7495 = vadd.f32 %v7380, %v7494
        %v7496 = vpop.f32.mrb[0].mxu0
        %v7497 = vadd.f32 %v7376, %v7496
        %v7498 = vpop.f32.mrb[0].mxu0
        %v7499 = vadd.f32 %v7380, %v7498
        %7500 = vmatprep.mubr.bf16.mxu0 0
        %7501 = vmatmul.mubr.bf16.gmra.mrb[0].mxu0 %v7192
        %v7502 = vpop.f32.mrb[0].mxu0
        %v7503 = vadd.f32 %v7376, %v7502
        %v7504 = vpop.f32.mrb[0].mxu0
        %v7505 = vadd.f32 %v7380, %v7504
        %v7506 = vpop.f32.mrb[0].mxu0
        %v7507 = vadd.f32 %v7376, %v7506
        %v7508 = vpop.f32.mrb[0].mxu0
        %v7509 = vadd.f32 %v7380, %v7508
        %7510 = vmatprep.mubr.bf16.mxu0 0
        %7511 = vmatmul.mubr.bf16.gmra.mrb[0].mxu0 %v7193
        %v7512 = vpop.f32.mrb[0].mxu0
        %v7513 = vadd.f32 %v7376, %v7512
        %v7514 = vpop.f32.mrb[0].mxu0
        %v7515 = vadd.f32 %v7380, %v7514
        %v7516 = vpop.f32.mrb[0].mxu0
        %v7517 = vadd.f32 %v7376, %v7516
        %v7518 = vpop.f32.mrb[0].mxu0
        %v7519 = vadd.f32 %v7380, %v7518
        %7520 = vmatprep.mubr.bf16.mxu0 0
        %7521 = vmatmul.mubr.bf16.gmra.mrb[0].mxu0 %v7194
        %v7522 = vpop.f32.mrb[0].mxu0
        %v7523 = vadd.f32 %v7376, %v7522
        %v7524 = vpop.f32.mrb[0].mxu0
        %v7525 = vadd.f32 %v7380, %v7524
        %v7526 = vpop.f32.mrb[0].mxu0
        %v7527 = vadd.f32 %v7376, %v7526
        %v7528 = vpop.f32.mrb[0].mxu0
        %v7529 = vadd.f32 %v7380, %v7528
        %7530 = vdwg.mxu0
        %v7531 = vmul.f32 %v7420, 0.5
        %v7532 = vmul.f32 %v7422, 0.5
        %v7533 = vmul.f32 %v7493, 0.5
        %v7534 = vmul.f32 %v7495, 0.5
        %v7535 = vmul.f32 %v7424, 0.5
        %v7536 = vmul.f32 %v7426, 0.5
        %v7537 = vmul.f32 %v7497, 0.5
        %v7538 = vmul.f32 %v7499, 0.5
        %v7539 = vmul.f32 %v7430, 0.5
        %v7540 = vmul.f32 %v7432, 0.5
        %v7541 = vmul.f32 %v7503, 0.5
        %v7542 = vmul.f32 %v7505, 0.5
        %v7543 = vmul.f32 %v7434, 0.5
        %v7544 = vmul.f32 %v7436, 0.5
        %v7545 = vmul.f32 %v7507, 0.5
        %v7546 = vmul.f32 %v7509, 0.5
        %v7547 = vmul.f32 %v7440, 0.5
        %v7548 = vmul.f32 %v7442, 0.5
        %v7549 = vmul.f32 %v7513, 0.5
        %v7550 = vmul.f32 %v7515, 0.5
        %v7551 = vmul.f32 %v7444, 0.5
        %v7552 = vmul.f32 %v7446, 0.5
        %v7553 = vmul.f32 %v7517, 0.5
        %v7554 = vmul.f32 %v7519, 0.5
        %v7555 = vmul.f32 %v7450, 0.5
        %v7556 = vmul.f32 %v7452, 0.5
        %v7557 = vmul.f32 %v7523, 0.5
        %v7558 = vmul.f32 %v7525, 0.5
        %v7559 = vmul.f32 %v7454, 0.5
        %v7560 = vmul.f32 %v7456, 0.5
        %v7561 = vmul.f32 %v7527, 0.5
        %v7562 = vmul.f32 %v7529, 0.5
        %v7563 = vmul.f32 %v7420, 0.70710677
        %v7564 = vmul.f32 %v7422, 0.70710677
        %v7565 = vmul.f32 %v7493, 0.70710677
        %v7566 = vmul.f32 %v7495, 0.70710677
        %v7567 = vmul.f32 %v7424, 0.70710677
        %v7568 = vmul.f32 %v7426, 0.70710677
        %v7569 = vmul.f32 %v7497, 0.70710677
        %v7570 = vmul.f32 %v7499, 0.70710677
        %v7571 = vmul.f32 %v7430, 0.70710677
        %v7572 = vmul.f32 %v7432, 0.70710677
        %v7573 = vmul.f32 %v7503, 0.70710677
        %v7574 = vmul.f32 %v7505, 0.70710677
        %v7575 = vmul.f32 %v7434, 0.70710677
        %v7576 = vmul.f32 %v7436, 0.70710677
        %v7577 = vmul.f32 %v7507, 0.70710677
        %v7578 = vmul.f32 %v7509, 0.70710677
        %v7579 = vmul.f32 %v7440, 0.70710677
        %v7580 = vmul.f32 %v7442, 0.70710677
        %v7581 = vmul.f32 %v7513, 0.70710677
        %v7582 = vmul.f32 %v7515, 0.70710677
        %v7583 = vmul.f32 %v7444, 0.70710677
        %v7584 = vmul.f32 %v7446, 0.70710677
        %v7585 = vmul.f32 %v7517, 0.70710677
        %v7586 = vmul.f32 %v7519, 0.70710677
        %v7587 = vmul.f32 %v7450, 0.70710677
        %v7588 = vmul.f32 %v7452, 0.70710677
        %v7589 = vmul.f32 %v7523, 0.70710677
        %v7590 = vmul.f32 %v7525, 0.70710677
        %v7591 = vmul.f32 %v7454, 0.70710677
        %v7592 = vmul.f32 %v7456, 0.70710677
        %v7593 = vmul.f32 %v7527, 0.70710677
        %v7594 = vmul.f32 %v7529, 0.70710677
        %v7595 = verf.f32.pop %v7563
        %v7596 = verf.f32.pop %v7564
        %v7597 = verf.f32.pop %v7565
        %v7598 = verf.f32.pop %v7566
        %v7599 = verf.f32.pop %v7567
        %v7600 = verf.f32.pop %v7568
        %v7601 = verf.f32.pop %v7569
        %v7602 = verf.f32.pop %v7570
        %v7603 = verf.f32.pop %v7571
        %v7604 = verf.f32.pop %v7572
        %v7605 = verf.f32.pop %v7573
        %v7606 = verf.f32.pop %v7574
        %v7607 = verf.f32.pop %v7575
        %v7608 = verf.f32.pop %v7576
        %v7609 = verf.f32.pop %v7577
        %v7610 = verf.f32.pop %v7578
        %v7611 = verf.f32.pop %v7579
        %v7612 = verf.f32.pop %v7580
        %v7613 = verf.f32.pop %v7581
        %v7614 = verf.f32.pop %v7582
        %v7615 = verf.f32.pop %v7583
        %v7616 = verf.f32.pop %v7584
        %v7617 = verf.f32.pop %v7585
        %v7618 = verf.f32.pop %v7586
        %v7619 = verf.f32.pop %v7587
        %v7620 = verf.f32.pop %v7588
        %v7621 = verf.f32.pop %v7589
        %v7622 = verf.f32.pop %v7590
        %v7623 = verf.f32.pop %v7591
        %v7624 = verf.f32.pop %v7592
        %v7625 = verf.f32.pop %v7593
        %v7626 = verf.f32.pop %v7594
        %v7627 = vadd.f32 %v7595, 1.0
        %v7628 = vadd.f32 %v7596, 1.0
        %v7629 = vadd.f32 %v7597, 1.0
        %v7630 = vadd.f32 %v7598, 1.0
        %v7631 = vadd.f32 %v7599, 1.0
        %v7632 = vadd.f32 %v7600, 1.0
        %v7633 = vadd.f32 %v7601, 1.0
        %v7634 = vadd.f32 %v7602, 1.0
        %v7635 = vadd.f32 %v7603, 1.0
        %v7636 = vadd.f32 %v7604, 1.0
        %v7637 = vadd.f32 %v7605, 1.0
        %v7638 = vadd.f32 %v7606, 1.0
        %v7639 = vadd.f32 %v7607, 1.0
        %v7640 = vadd.f32 %v7608, 1.0
        %v7641 = vadd.f32 %v7609, 1.0
        %v7642 = vadd.f32 %v7610, 1.0
        %v7643 = vadd.f32 %v7611, 1.0
        %v7644 = vadd.f32 %v7612, 1.0
        %v7645 = vadd.f32 %v7613, 1.0
        %v7646 = vadd.f32 %v7614, 1.0
        %v7647 = vadd.f32 %v7615, 1.0
        %v7648 = vadd.f32 %v7616, 1.0
        %v7649 = vadd.f32 %v7617, 1.0
        %v7650 = vadd.f32 %v7618, 1.0
        %v7651 = vadd.f32 %v7619, 1.0
        %v7652 = vadd.f32 %v7620, 1.0
        %v7653 = vadd.f32 %v7621, 1.0
        %v7654 = vadd.f32 %v7622, 1.0
        %v7655 = vadd.f32 %v7623, 1.0
        %v7656 = vadd.f32 %v7624, 1.0
        %v7657 = vadd.f32 %v7625, 1.0
        %v7658 = vadd.f32 %v7626, 1.0
        %v7659 = vmul.f32 %v7531, %v7627
        %v7660 = vmul.f32 %v7532, %v7628
        %v7661 = vmul.f32 %v7533, %v7629
        %v7662 = vmul.f32 %v7534, %v7630
        %v7663 = vmul.f32 %v7535, %v7631
        %v7664 = vmul.f32 %v7536, %v7632
        %v7665 = vmul.f32 %v7537, %v7633
        %v7666 = vmul.f32 %v7538, %v7634
        %v7667 = vmul.f32 %v7539, %v7635
        %v7668 = vmul.f32 %v7540, %v7636
        %v7669 = vmul.f32 %v7541, %v7637
        %v7670 = vmul.f32 %v7542, %v7638
        %v7671 = vmul.f32 %v7543, %v7639
        %v7672 = vmul.f32 %v7544, %v7640
        %v7673 = vmul.f32 %v7545, %v7641
        %v7674 = vmul.f32 %v7546, %v7642
        %v7675 = vmul.f32 %v7547, %v7643
        %v7676 = vmul.f32 %v7548, %v7644
        %v7677 = vmul.f32 %v7549, %v7645
        %v7678 = vmul.f32 %v7550, %v7646
        %v7679 = vmul.f32 %v7551, %v7647
        %v7680 = vmul.f32 %v7552, %v7648
        %v7681 = vmul.f32 %v7553, %v7649
        %v7682 = vmul.f32 %v7554, %v7650
        %v7683 = vmul.f32 %v7555, %v7651
        %v7684 = vmul.f32 %v7556, %v7652
        %v7685 = vmul.f32 %v7557, %v7653
        %v7686 = vmul.f32 %v7558, %v7654
        %v7687 = vmul.f32 %v7559, %v7655
        %v7688 = vmul.f32 %v7560, %v7656
        %v7689 = vmul.f32 %v7561, %v7657
        %v7690 = vmul.f32 %v7562, %v7658
        %v7691 = vmul.f32 %v7252, %v7659
        %v7692 = vmul.f32 %v7254, %v7660
        %v7693 = vmul.f32 %v7325, %v7661
        %v7694 = vmul.f32 %v7327, %v7662
        %v7695 = vmul.f32 %v7256, %v7663
        %v7696 = vmul.f32 %v7258, %v7664
        %v7697 = vmul.f32 %v7329, %v7665
        %v7698 = vmul.f32 %v7331, %v7666
        %v7699 = vmul.f32 %v7262, %v7667
        %v7700 = vmul.f32 %v7264, %v7668
        %v7701 = vmul.f32 %v7335, %v7669
        %v7702 = vmul.f32 %v7337, %v7670
        %v7703 = vmul.f32 %v7266, %v7671
        %v7704 = vmul.f32 %v7268, %v7672
        %v7705 = vmul.f32 %v7339, %v7673
        %v7706 = vmul.f32 %v7341, %v7674
        %v7707 = vmul.f32 %v7272, %v7675
        %v7708 = vmul.f32 %v7274, %v7676
        %v7709 = vmul.f32 %v7345, %v7677
        %v7710 = vmul.f32 %v7347, %v7678
        %v7711 = vmul.f32 %v7276, %v7679
        %v7712 = vmul.f32 %v7278, %v7680
        %v7713 = vmul.f32 %v7349, %v7681
        %v7714 = vmul.f32 %v7351, %v7682
        %v7715 = vmul.f32 %v7282, %v7683
        %v7716 = vmul.f32 %v7284, %v7684
        %v7717 = vmul.f32 %v7355, %v7685
        %v7718 = vmul.f32 %v7357, %v7686
        %v7719 = vmul.f32 %v7286, %v7687
        %v7720 = vmul.f32 %v7288, %v7688
        %v7721 = vmul.f32 %v7359, %v7689
        %v7722 = vmul.f32 %v7361, %v7690
        %v7723 = vpack.c.bf16 %v7695, %v7691
        %v7724 = vpack.c.bf16 %v7696, %v7692
        %v7725 = vpack.c.bf16 %v7697, %v7693
        %v7726 = vpack.c.bf16 %v7698, %v7694
        %v7727 = vpack.c.bf16 %v7703, %v7699
        %v7728 = vpack.c.bf16 %v7704, %v7700
        %v7729 = vpack.c.bf16 %v7705, %v7701
        %v7730 = vpack.c.bf16 %v7706, %v7702
        %v7731 = vpack.c.bf16 %v7711, %v7707
        %v7732 = vpack.c.bf16 %v7712, %v7708
        %v7733 = vpack.c.bf16 %v7713, %v7709
        %v7734 = vpack.c.bf16 %v7714, %v7710
        %v7735 = vpack.c.bf16 %v7719, %v7715
        %v7736 = vpack.c.bf16 %v7720, %v7716
        %v7737 = vpack.c.bf16 %v7721, %v7717
        %v7738 = vpack.c.bf16 %v7722, %v7718
        %v7739 = vld [vmem:[%s1123] sm:$0x1]
        %v7741 = vlaneseq
        %v7742 = vshrl.u32 %v7741, 7
        %v7743 = vsub.s32 0, %v7742
        %v7744 = vrot.slane %v7739, %v7743
        %7746 = vmatprep.subr.bf16.mxu0 0
        %7747 = vmatpush1.bf16.msra.mxu0 %v5273
        %7748 = vmatprep.subr.bf16.mxu0 0
        %7749 = vmatpush1.bf16.msra.mxu0 %v5274
        %7750 = vmatprep.subr.bf16.mxu0 0
        %7751 = vmatpush1.bf16.msra.mxu0 %v5275
        %7752 = vmatprep.subr.bf16.mxu0 0
        %7753 = vmatpush1.bf16.msra.mxu0 %v5276
        %7754 = vmatprep.subr.bf16.mxu0 0
        %7755 = vmatpush1.bf16.msra.mxu0 %v5277
        %7756 = vmatprep.subr.bf16.mxu0 0
        %7757 = vmatpush1.bf16.msra.mxu0 %v5278
        %7758 = vmatprep.subr.bf16.mxu0 0
        %7759 = vmatpush1.bf16.msra.mxu0 %v5279
        %7760 = vmatprep.subr.bf16.mxu0 0
        %7761 = vmatpush1.bf16.msra.mxu0 %v5280
        %7762 = vmatprep.subr.bf16.mxu0 0
        %7763 = vmatpush1.bf16.msra.mxu0 %v5281
        %7764 = vmatprep.subr.bf16.mxu0 0
        %7765 = vmatpush1.bf16.msra.mxu0 %v5282
        %7766 = vmatprep.subr.bf16.mxu0 0
        %7767 = vmatpush1.bf16.msra.mxu0 %v5283
        %7768 = vmatprep.subr.bf16.mxu0 0
        %7769 = vmatpush1.bf16.msra.mxu0 %v5284
        %7770 = vmatprep.subr.bf16.mxu0 0
        %7771 = vmatpush1.bf16.msra.mxu0 %v5285
        %7772 = vmatprep.subr.bf16.mxu0 0
        %7773 = vmatpush1.bf16.msra.mxu0 %v5286
        %7774 = vmatprep.subr.bf16.mxu0 0
        %7775 = vmatpush1.bf16.msra.mxu0 %v5287
        %7776 = vmatprep.subr.bf16.mxu0 0
        %7777 = vmatpush1.bf16.msra.mxu0 %v5288
        %7778 = vmatprep.mubr.bf16.mxu0 %v7724
        %7779 = vmatmul.mubr.bf16.gmra.mrb[0].mxu0 %v7723
        %v7780 = vpop.f32.mrb[0].mxu0
        %v7781 = vadd.f32 %v7744, %v7780
        %v7782 = vpop.f32.mrb[0].mxu0
        %v7783 = vpop.f32.mrb[0].mxu0
        %v7784 = vadd.f32 %v7744, %v7783
        %v7785 = vpop.f32.mrb[0].mxu0
        %7786 = vmatprep.mubr.bf16.mxu0 %v7728
        %7787 = vmatmul.mubr.bf16.gmra.mrb[0].mxu0 %v7727
        %v7788 = vpop.f32.mrb[0].mxu0
        %v7789 = vadd.f32 %v7744, %v7788
        %v7790 = vpop.f32.mrb[0].mxu0
        %v7791 = vpop.f32.mrb[0].mxu0
        %v7792 = vadd.f32 %v7744, %v7791
        %v7793 = vpop.f32.mrb[0].mxu0
        %7794 = vmatprep.mubr.bf16.mxu0 %v7732
        %7795 = vmatmul.mubr.bf16.gmra.mrb[0].mxu0 %v7731
        %v7796 = vpop.f32.mrb[0].mxu0
        %v7797 = vadd.f32 %v7744, %v7796
        %v7798 = vpop.f32.mrb[0].mxu0
        %v7799 = vpop.f32.mrb[0].mxu0
        %v7800 = vadd.f32 %v7744, %v7799
        %v7801 = vpop.f32.mrb[0].mxu0
        %7802 = vmatprep.mubr.bf16.mxu0 %v7736
        %7803 = vmatmul.mubr.bf16.gmra.mrb[0].mxu0 %v7735
        %v7804 = vpop.f32.mrb[0].mxu0
        %v7805 = vadd.f32 %v7744, %v7804
        %v7806 = vpop.f32.mrb[0].mxu0
        %v7807 = vpop.f32.mrb[0].mxu0
        %v7808 = vadd.f32 %v7744, %v7807
        %v7809 = vpop.f32.mrb[0].mxu0
        %7810 = vdwg.mxu0
        %7811 = vmatprep.subr.bf16.mxu0 0
        %7812 = vmatpush1.bf16.msra.mxu0 %v5289
        %7813 = vmatprep.subr.bf16.mxu0 0
        %7814 = vmatpush1.bf16.msra.mxu0 %v5290
        %7815 = vmatprep.subr.bf16.mxu0 0
        %7816 = vmatpush1.bf16.msra.mxu0 %v5291
        %7817 = vmatprep.subr.bf16.mxu0 0
        %7818 = vmatpush1.bf16.msra.mxu0 %v5292
        %7819 = vmatprep.subr.bf16.mxu0 0
        %7820 = vmatpush1.bf16.msra.mxu0 %v5293
        %7821 = vmatprep.subr.bf16.mxu0 0
        %7822 = vmatpush1.bf16.msra.mxu0 %v5294
        %7823 = vmatprep.subr.bf16.mxu0 0
        %7824 = vmatpush1.bf16.msra.mxu0 %v5295
        %7825 = vmatprep.subr.bf16.mxu0 0
        %7826 = vmatpush1.bf16.msra.mxu0 %v5296
        %7827 = vmatprep.subr.bf16.mxu0 0
        %7828 = vmatpush1.bf16.msra.mxu0 %v5297
        %7829 = vmatprep.subr.bf16.mxu0 0
        %7830 = vmatpush1.bf16.msra.mxu0 %v5298
        %7831 = vmatprep.subr.bf16.mxu0 0
        %7832 = vmatpush1.bf16.msra.mxu0 %v5299
        %7833 = vmatprep.subr.bf16.mxu0 0
        %7834 = vmatpush1.bf16.msra.mxu0 %v5300
        %7835 = vmatprep.subr.bf16.mxu0 0
        %7836 = vmatpush1.bf16.msra.mxu0 %v5301
        %7837 = vmatprep.subr.bf16.mxu0 0
        %7838 = vmatpush1.bf16.msra.mxu0 %v5302
        %7839 = vmatprep.subr.bf16.mxu0 0
        %7840 = vmatpush1.bf16.msra.mxu0 %v5303
        %7841 = vmatprep.subr.bf16.mxu0 0
        %7842 = vmatpush1.bf16.msra.mxu0 %v5304
        %7843 = vmatprep.mubr.bf16.mxu0 %v7726
        %7844 = vmatmul.mubr.bf16.gmra.mrb[0].mxu0 %v7725
        %v7845 = vpop.f32.mrb[0].mxu0
        %v7846 = vadd.f32 %v7781, %v7845
        %v7847 = vpop.f32.mrb[0].mxu0
        %v7848 = vpop.f32.mrb[0].mxu0
        %v7849 = vadd.f32 %v7784, %v7848
        %v7850 = vpop.f32.mrb[0].mxu0
        %7851 = vmatprep.mubr.bf16.mxu0 %v7730
        %7852 = vmatmul.mubr.bf16.gmra.mrb[0].mxu0 %v7729
        %v7853 = vpop.f32.mrb[0].mxu0
        %v7854 = vadd.f32 %v7789, %v7853
        %v7855 = vpop.f32.mrb[0].mxu0
        %v7856 = vpop.f32.mrb[0].mxu0
        %v7857 = vadd.f32 %v7792, %v7856
        %v7858 = vpop.f32.mrb[0].mxu0
        %7859 = vmatprep.mubr.bf16.mxu0 %v7734
        %7860 = vmatmul.mubr.bf16.gmra.mrb[0].mxu0 %v7733
        %v7861 = vpop.f32.mrb[0].mxu0
        %v7862 = vadd.f32 %v7797, %v7861
        %v7863 = vpop.f32.mrb[0].mxu0
        %v7864 = vpop.f32.mrb[0].mxu0
        %v7865 = vadd.f32 %v7800, %v7864
        %v7866 = vpop.f32.mrb[0].mxu0
        %7867 = vmatprep.mubr.bf16.mxu0 %v7738
        %7868 = vmatmul.mubr.bf16.gmra.mrb[0].mxu0 %v7737
        %v7869 = vpop.f32.mrb[0].mxu0
        %v7870 = vadd.f32 %v7805, %v7869
        %v7871 = vpop.f32.mrb[0].mxu0
        %v7872 = vpop.f32.mrb[0].mxu0
        %v7873 = vadd.f32 %v7808, %v7872
        %v7874 = vpop.f32.mrb[0].mxu0
        %7875 = vdwg.mxu0
        %v7876 = vadd.f32 %v7065, %v7846
        %v7877 = vadd.f32 %v7066, %v7849
        %v7878 = vadd.f32 %v7067, %v7854
        %v7879 = vadd.f32 %v7068, %v7857
        %v7880 = vadd.f32 %v7069, %v7862
        %v7881 = vadd.f32 %v7070, %v7865
        %v7882 = vadd.f32 %v7071, %v7870
        %v7883 = vadd.f32 %v7072, %v7873
        %7884 = vst [vmem:[%s5483] sm:$0xff] %v7876
        %7885 = vst [vmem:[%s5483 + $0x8] sm:$0xff] %v7877
        %7886 = vst [vmem:[%s5483 + $0x10] sm:$0xff] %v7878
        %7887 = vst [vmem:[%s5483 + $0x18] sm:$0xff] %v7879
        %7888 = vst [vmem:[%s5483 + $0x20] sm:$0xff] %v7880
        %7889 = vst [vmem:[%s5483 + $0x28] sm:$0xff] %v7881
        %7890 = vst [vmem:[%s5483 + $0x30] sm:$0xff] %v7882
        %7891 = vst [vmem:[%s5483 + $0x38] sm:$0xff] %v7883
        %p7892 = scmp.eq.s32.totalorder %s41, 1
        // Predicated region
        $region169: #{tpu_custom_call.1} parent=103 // pred_check
          %p7893 = pneg %p7892
        $region170: #{tpu_custom_call.1} parent=103 // pred_check_branch
          %7895 = sbr.rel (%p7893) target = $region172
        $region171: #{tpu_custom_call.1} parent=103 // pred_region
          %v7896 = vld [vmem:[%s19] sm:$0xf]
          %v7897 = vld [vmem:[%s19 + $0x4] sm:$0xf]
          %v7898 = vld [vmem:[%s19 + $0x8] sm:$0xf]
          %v7899 = vld [vmem:[%s19 + $0xc] sm:$0xf]
          %v7900 = vld [vmem:[%s19 + $0x10] sm:$0xf]
          %v7901 = vld [vmem:[%s19 + $0x14] sm:$0xf]
          %v7902 = vld [vmem:[%s19 + $0x18] sm:$0xf]
          %v7903 = vld [vmem:[%s19 + $0x1c] sm:$0xf]
          %v7904 = vld [vmem:[%s19 + $0x20] sm:$0xf]
          %v7905 = vld [vmem:[%s19 + $0x24] sm:$0xf]
          %v7906 = vld [vmem:[%s19 + $0x28] sm:$0xf]
          %v7907 = vld [vmem:[%s19 + $0x2c] sm:$0xf]
          %v7908 = vld [vmem:[%s19 + $0x30] sm:$0xf]
          %v7909 = vld [vmem:[%s19 + $0x34] sm:$0xf]
          %v7910 = vld [vmem:[%s19 + $0x38] sm:$0xf]
          %v7911 = vld [vmem:[%s19 + $0x3c] sm:$0xf]
          %v7912 = vld [vmem:[#allocation2] sm:$0xff]
          %v7913 = vld [vmem:[#allocation2 + $0x8] sm:$0xff]
          %v7914 = vld [vmem:[#allocation2 + $0x10] sm:$0xff]
          %v7915 = vld [vmem:[#allocation2 + $0x18] sm:$0xff]
          %v7916 = vld [vmem:[#allocation2 + $0x20] sm:$0xff]
          %v7917 = vld [vmem:[#allocation2 + $0x28] sm:$0xff]
          %v7918 = vld [vmem:[#allocation2 + $0x30] sm:$0xff]
          %v7919 = vld [vmem:[#allocation2 + $0x38] sm:$0xff]
          %v7920 = vpack.c.bf16 %v7913, %v7912
          %v7921 = vpack.c.bf16 %v7915, %v7914
          %v7922 = vpack.c.bf16 %v7917, %v7916
          %v7923 = vpack.c.bf16 %v7919, %v7918
          %v7924 = vld [vmem:[%s20] sm:$0x1]
          %v7926 = vlaneseq
          %v7927 = vshrl.u32 %v7926, 7
          %v7928 = vsub.s32 0, %v7927
          %v7929 = vrot.slane %v7924, %v7928
          %v7947 = vunpack.c.l.b16 %v7896
          %v7948 = vunpack.c.l.b16 %v7897
          %v7949 = vunpack.c.l.b16 %v7898
          %v7950 = vunpack.c.l.b16 %v7899
          %v7951 = vunpack.c.l.b16 %v7900
          %v7952 = vunpack.c.l.b16 %v7901
          %v7953 = vunpack.c.l.b16 %v7902
          %v7954 = vunpack.c.l.b16 %v7903
          %v7955 = vunpack.c.l.b16 %v7904
          %v7956 = vunpack.c.l.b16 %v7905
          %v7957 = vunpack.c.l.b16 %v7906
          %v7958 = vunpack.c.l.b16 %v7907
          %v7959 = vunpack.c.l.b16 %v7908
          %v7960 = vunpack.c.l.b16 %v7909
          %v7961 = vunpack.c.l.b16 %v7910
          %v7962 = vunpack.c.l.b16 %v7911
          %v7963 = vpack.c.b16 %v7948, %v7947
          %v7964 = vpack.c.b16 %v7950, %v7949
          %v7965 = vpack.c.b16 %v7952, %v7951
          %v7966 = vpack.c.b16 %v7954, %v7953
          %v7967 = vpack.c.b16 %v7956, %v7955
          %v7968 = vpack.c.b16 %v7958, %v7957
          %v7969 = vpack.c.b16 %v7960, %v7959
          %v7970 = vpack.c.b16 %v7962, %v7961
          %7979 = vmatprep.subr.bf16.mxu0 0
          %7980 = vmatpush1.bf16.msra.mxu0 %v7963
          %7981 = vmatprep.subr.bf16.mxu0 0
          %7982 = vmatpush1.bf16.msra.mxu0 %v7964
          %7983 = vmatprep.subr.bf16.mxu0 0
          %7984 = vmatpush1.bf16.msra.mxu0 %v7965
          %7985 = vmatprep.subr.bf16.mxu0 0
          %7986 = vmatpush1.bf16.msra.mxu0 %v7966
          %7987 = vmatprep.subr.bf16.mxu0 0
          %7988 = vmatpush1.bf16.msra.mxu0 %v7967
          %7989 = vmatprep.subr.bf16.mxu0 0
          %7990 = vmatpush1.bf16.msra.mxu0 %v7968
          %7991 = vmatprep.subr.bf16.mxu0 0
          %7992 = vmatpush1.bf16.msra.mxu0 %v7969
          %7993 = vmatprep.subr.bf16.mxu0 0
          %7994 = vmatpush1.bf16.msra.mxu0 %v7970
          %7995 = vmatprep.subr.bf16.mxu0 0
          %7996 = vmatpush1.bf16.msra.mxu0 0
          %7997 = vmatprep.subr.bf16.mxu0 0
          %7998 = vmatpush1.bf16.msra.mxu0 0
          %7999 = vmatprep.subr.bf16.mxu0 0
          %8000 = vmatpush1.bf16.msra.mxu0 0
          %8001 = vmatprep.subr.bf16.mxu0 0
          %8002 = vmatpush1.bf16.msra.mxu0 0
          %8003 = vmatprep.subr.bf16.mxu0 0
          %8004 = vmatpush1.bf16.msra.mxu0 0
          %8005 = vmatprep.subr.bf16.mxu0 0
          %8006 = vmatpush1.bf16.msra.mxu0 0
          %8007 = vmatprep.subr.bf16.mxu0 0
          %8008 = vmatpush1.bf16.msra.mxu0 0
          %8009 = vmatprep.subr.bf16.mxu0 0
          %8010 = vmatpush1.bf16.msra.mxu0 0
          %8011 = vmatprep.mubr.bf16.mxu0 0
          %8012 = vmatmul.mubr.bf16.gmra.mrb[0].mxu0 %v7920
          %v8013 = vpop.f32.mrb[0].mxu0
          %v8014 = vadd.f32 %v7929, %v8013
          %v8015 = vpop.f32.mrb[0].mxu0
          %v8016 = vpop.f32.mrb[0].mxu0
          %v8017 = vadd.f32 %v7929, %v8016
          %v8018 = vpop.f32.mrb[0].mxu0
          %8019 = vmatprep.mubr.bf16.mxu0 0
          %8020 = vmatmul.mubr.bf16.gmra.mrb[0].mxu0 %v7921
          %v8021 = vpop.f32.mrb[0].mxu0
          %v8022 = vadd.f32 %v7929, %v8021
          %v8023 = vpop.f32.mrb[0].mxu0
          %v8024 = vpop.f32.mrb[0].mxu0
          %v8025 = vadd.f32 %v7929, %v8024
          %v8026 = vpop.f32.mrb[0].mxu0
          %8027 = vmatprep.mubr.bf16.mxu0 0
          %8028 = vmatmul.mubr.bf16.gmra.mrb[0].mxu0 %v7922
          %v8029 = vpop.f32.mrb[0].mxu0
          %v8030 = vadd.f32 %v7929, %v8029
          %v8031 = vpop.f32.mrb[0].mxu0
          %v8032 = vpop.f32.mrb[0].mxu0
          %v8033 = vadd.f32 %v7929, %v8032
          %v8034 = vpop.f32.mrb[0].mxu0
          %8035 = vmatprep.mubr.bf16.mxu0 0
          %8036 = vmatmul.mubr.bf16.gmra.mrb[0].mxu0 %v7923
          %v8037 = vpop.f32.mrb[0].mxu0
          %v8038 = vadd.f32 %v7929, %v8037
          %v8039 = vpop.f32.mrb[0].mxu0
          %v8040 = vpop.f32.mrb[0].mxu0
          %v8041 = vadd.f32 %v7929, %v8040
          %v8042 = vpop.f32.mrb[0].mxu0
          %8043 = vdwg.mxu0
          %v8044 = vld [vmem:[%s1115] sm:$0xff]
          %v8045 = vld [vmem:[%s1115 + $0x8] sm:$0xff]
          %v8046 = vld [vmem:[%s1115 + $0x10] sm:$0xff]
          %v8047 = vld [vmem:[%s1115 + $0x18] sm:$0xff]
          %v8048 = vld [vmem:[%s1115 + $0x20] sm:$0xff]
          %v8049 = vld [vmem:[%s1115 + $0x28] sm:$0xff]
          %v8050 = vld [vmem:[%s1115 + $0x30] sm:$0xff]
          %v8051 = vld [vmem:[%s1115 + $0x38] sm:$0xff]
          %v8052 = vadd.f32 %v8014, %v8044
          %v8053 = vadd.f32 %v8017, %v8045
          %v8054 = vadd.f32 %v8022, %v8046
          %v8055 = vadd.f32 %v8025, %v8047
          %v8056 = vadd.f32 %v8030, %v8048
          %v8057 = vadd.f32 %v8033, %v8049
          %v8058 = vadd.f32 %v8038, %v8050
          %v8059 = vadd.f32 %v8041, %v8051
          %8060 = vst [vmem:[#allocation22] sm:$0xff] %v8052
          %8061 = vst [vmem:[#allocation22 + $0x8] sm:$0xff] %v8053
          %8062 = vst [vmem:[#allocation22 + $0x10] sm:$0xff] %v8054
          %8063 = vst [vmem:[#allocation22 + $0x18] sm:$0xff] %v8055
          %8064 = vst [vmem:[#allocation22 + $0x20] sm:$0xff] %v8056
          %8065 = vst [vmem:[#allocation22 + $0x28] sm:$0xff] %v8057
          %8066 = vst [vmem:[#allocation22 + $0x30] sm:$0xff] %v8058
          %8067 = vst [vmem:[#allocation22 + $0x38] sm:$0xff] %v8059
          %v8068 = vld [vmem:[%s5483] sm:$0xff]
          %v8069 = vld [vmem:[%s5483 + $0x8] sm:$0xff]
          %v8070 = vld [vmem:[%s5483 + $0x10] sm:$0xff]
          %v8071 = vld [vmem:[%s5483 + $0x18] sm:$0xff]
          %v8072 = vld [vmem:[%s5483 + $0x20] sm:$0xff]
          %v8073 = vld [vmem:[%s5483 + $0x28] sm:$0xff]
          %v8074 = vld [vmem:[%s5483 + $0x30] sm:$0xff]
          %v8075 = vld [vmem:[%s5483 + $0x38] sm:$0xff]
          %v8076 = vpack.c.bf16 %v8069, %v8068
          %v8077 = vpack.c.bf16 %v8071, %v8070
          %v8078 = vpack.c.bf16 %v8073, %v8072
          %v8079 = vpack.c.bf16 %v8075, %v8074
          %v8080 = vld [vmem:[%s20] sm:$0x1]
          %v8082 = vlaneseq
          %v8083 = vshrl.u32 %v8082, 7
          %v8084 = vsub.s32 0, %v8083
          %v8085 = vrot.slane %v8080, %v8084
          %8087 = vmatprep.subr.bf16.mxu0 0
          %8088 = vmatpush1.bf16.msra.mxu0 %v7963
          %8089 = vmatprep.subr.bf16.mxu0 0
          %8090 = vmatpush1.bf16.msra.mxu0 %v7964
          %8091 = vmatprep.subr.bf16.mxu0 0
          %8092 = vmatpush1.bf16.msra.mxu0 %v7965
          %8093 = vmatprep.subr.bf16.mxu0 0
          %8094 = vmatpush1.bf16.msra.mxu0 %v7966
          %8095 = vmatprep.subr.bf16.mxu0 0
          %8096 = vmatpush1.bf16.msra.mxu0 %v7967
          %8097 = vmatprep.subr.bf16.mxu0 0
          %8098 = vmatpush1.bf16.msra.mxu0 %v7968
          %8099 = vmatprep.subr.bf16.mxu0 0
          %8100 = vmatpush1.bf16.msra.mxu0 %v7969
          %8101 = vmatprep.subr.bf16.mxu0 0
          %8102 = vmatpush1.bf16.msra.mxu0 %v7970
          %8103 = vmatprep.subr.bf16.mxu0 0
          %8104 = vmatpush1.bf16.msra.mxu0 0
          %8105 = vmatprep.subr.bf16.mxu0 0
          %8106 = vmatpush1.bf16.msra.mxu0 0
          %8107 = vmatprep.subr.bf16.mxu0 0
          %8108 = vmatpush1.bf16.msra.mxu0 0
          %8109 = vmatprep.subr.bf16.mxu0 0
          %8110 = vmatpush1.bf16.msra.mxu0 0
          %8111 = vmatprep.subr.bf16.mxu0 0
          %8112 = vmatpush1.bf16.msra.mxu0 0
          %8113 = vmatprep.subr.bf16.mxu0 0
          %8114 = vmatpush1.bf16.msra.mxu0 0
          %8115 = vmatprep.subr.bf16.mxu0 0
          %8116 = vmatpush1.bf16.msra.mxu0 0
          %8117 = vmatprep.subr.bf16.mxu0 0
          %8118 = vmatpush1.bf16.msra.mxu0 0
          %8119 = vmatprep.mubr.bf16.mxu0 0
          %8120 = vmatmul.mubr.bf16.gmra.mrb[0].mxu0 %v8076
          %v8121 = vpop.f32.mrb[0].mxu0
          %v8122 = vadd.f32 %v8085, %v8121
          %v8123 = vpop.f32.mrb[0].mxu0
          %v8124 = vpop.f32.mrb[0].mxu0
          %v8125 = vadd.f32 %v8085, %v8124
          %v8126 = vpop.f32.mrb[0].mxu0
          %8127 = vmatprep.mubr.bf16.mxu0 0
          %8128 = vmatmul.mubr.bf16.gmra.mrb[0].mxu0 %v8077
          %v8129 = vpop.f32.mrb[0].mxu0
          %v8130 = vadd.f32 %v8085, %v8129
          %v8131 = vpop.f32.mrb[0].mxu0
          %v8132 = vpop.f32.mrb[0].mxu0
          %v8133 = vadd.f32 %v8085, %v8132
          %v8134 = vpop.f32.mrb[0].mxu0
          %8135 = vmatprep.mubr.bf16.mxu0 0
          %8136 = vmatmul.mubr.bf16.gmra.mrb[0].mxu0 %v8078
          %v8137 = vpop.f32.mrb[0].mxu0
          %v8138 = vadd.f32 %v8085, %v8137
          %v8139 = vpop.f32.mrb[0].mxu0
          %v8140 = vpop.f32.mrb[0].mxu0
          %v8141 = vadd.f32 %v8085, %v8140
          %v8142 = vpop.f32.mrb[0].mxu0
          %8143 = vmatprep.mubr.bf16.mxu0 0
          %8144 = vmatmul.mubr.bf16.gmra.mrb[0].mxu0 %v8079
          %v8145 = vpop.f32.mrb[0].mxu0
          %v8146 = vadd.f32 %v8085, %v8145
          %v8147 = vpop.f32.mrb[0].mxu0
          %v8148 = vpop.f32.mrb[0].mxu0
          %v8149 = vadd.f32 %v8085, %v8148
          %v8150 = vpop.f32.mrb[0].mxu0
          %8151 = vdwg.mxu0
          %s8152 = scalar_lea.vmem %s1115, 64
          %v8153 = vld [vmem:[%s8152] sm:$0xff]
          %v8154 = vld [vmem:[%s8152 + $0x8] sm:$0xff]
          %v8155 = vld [vmem:[%s8152 + $0x10] sm:$0xff]
          %v8156 = vld [vmem:[%s8152 + $0x18] sm:$0xff]
          %v8157 = vld [vmem:[%s8152 + $0x20] sm:$0xff]
          %v8158 = vld [vmem:[%s8152 + $0x28] sm:$0xff]
          %v8159 = vld [vmem:[%s8152 + $0x30] sm:$0xff]
          %v8160 = vld [vmem:[%s8152 + $0x38] sm:$0xff]
          %v8161 = vadd.f32 %v8122, %v8153
          %v8162 = vadd.f32 %v8125, %v8154
          %v8163 = vadd.f32 %v8130, %v8155
          %v8164 = vadd.f32 %v8133, %v8156
          %v8165 = vadd.f32 %v8138, %v8157
          %v8166 = vadd.f32 %v8141, %v8158
          %v8167 = vadd.f32 %v8146, %v8159
          %v8168 = vadd.f32 %v8149, %v8160
          %s8169 = scalar_lea.vmem [#allocation22], 64
          %8170 = vst [vmem:[%s8169] sm:$0xff] %v8161
          %8171 = vst [vmem:[%s8169 + $0x8] sm:$0xff] %v8162
          %8172 = vst [vmem:[%s8169 + $0x10] sm:$0xff] %v8163
          %8173 = vst [vmem:[%s8169 + $0x18] sm:$0xff] %v8164
          %8174 = vst [vmem:[%s8169 + $0x20] sm:$0xff] %v8165
          %8175 = vst [vmem:[%s8169 + $0x28] sm:$0xff] %v8166
          %8176 = vst [vmem:[%s8169 + $0x30] sm:$0xff] %v8167
          %8177 = vst [vmem:[%s8169 + $0x38] sm:$0xff] %v8168
        $region172: #{tpu_custom_call.1} parent=103 // pred_fallthru
          _
        // Predicated region
        $region173: #{tpu_custom_call.1} parent=103 // pred_check
          %p8178 = pneg %p577
        $region174: #{tpu_custom_call.1} parent=103 // pred_check_branch
          %8180 = sbr.rel (%p8178) target = $region176
        $region175: #{tpu_custom_call.1} parent=103 // pred_region
          %s8181 = smul.u32 2, %s40
          %s8183 = ssub.s32 2048, 2048
          %8184 = vsyncadd [#allocation5], %s8183
          %s8185 = smul.addr %s8181, 8
          %s8186 = smul.addr %s8185, 128
          %s8187 = scalar_lea.hbm %s21, %s8186
          %s8188 = sshll.u32 [#allocation22], 4
          %s8189 = int_to_ptr.vmem [resolvable:$true] %s8188
          %8194 = dma.vmem_to_hbm [thread:$0]  %s8189, 2048, %s8187, [#allocation5], 128, 128, 8
        $region176: #{tpu_custom_call.1} parent=103 // pred_fallthru
          _
        // Predicated region
        $region177: #{tpu_custom_call.1} parent=103 // pred_check
          %p8195 = pneg %p577
        $region178: #{tpu_custom_call.1} parent=103 // pred_check_branch
          %8197 = sbr.rel (%p8195) target = $region180
        $region179: #{tpu_custom_call.1} parent=103 // pred_region
          %8198 = dma.done [#allocation5], 2048
        $region180: #{tpu_custom_call.1} parent=103 // pred_fallthru
          _
      $region104: #{tpu_custom_call.1} parent=5 // pred_fallthru
        _
      %p8199 = scmp.le.s32.totalorder 2, %s31
      // Predicated region
      $region181: #{tpu_custom_call.1} parent=5 // pred_check
        %p8200 = pneg %p8199
      $region182: #{tpu_custom_call.1} parent=5 // pred_check_branch
        %8202 = sbr.rel (%p8200) target = $region184
      $region183: #{tpu_custom_call.1} parent=5 // pred_region
        %s8203 = ssub.s32 %s31, 2
      $region184: #{tpu_custom_call.1} parent=5 // pred_fallthru
        _
    $region6: #{tpu_custom_call.1} parent=1 // loop_footer
      %s35 = sadd.s32 1, %s31
    $region7: #{tpu_custom_call.1} parent=1 // loop_footer_branch
      %30 = sbr.rel target = $region3
    $region8: #{tpu_custom_call.1} parent=1 // loop_exit
      _
    %8204 = vsyncpa [#allocation4], 1
    %s8205 = scalar_lea.sflag [#allocation4], 1
    %8206 = vsyncpa %s8205, 1
    %8207 = vsyncpa [#allocation7], 1
    %8208 = vsyncpa [#allocation10], 1
    %8209 = vsyncpa [#allocation5], 1
    %s8210 = scalar_lea.sflag [#allocation5], 1
    %8211 = vsyncpa %s8210, 1

</llo_original>
